<compile_context>
chip_gen: v7x
topology: tpu7x:2x2x1
jax: 0.10.0
libtpu: 0.0.40
codegen_flags: <defaults>
</compile_context>

<pallas_src>
import functools
import math

import jax
import jax.numpy as jnp
from jax import lax
from jax.experimental import pallas as pl
from jax.experimental.pallas import tpu as pltpu

EPS = 1e-5


# ----------------------------------------------------------------------------
# Fused ResBlock3D kernel
# ----------------------------------------------------------------------------
def _resblock3d_kernel(x_ref, w1_ref, s1_ref, b1_ref, w2_ref, s2_ref, b2_ref,
                       w3_ref, s3_ref, b3_ref, out_ref, c1_ref, acc_ref,
                       *, D, H, W):
    """One output depth plane of the fused ResBlock3D.

    x_ref   : (D+2, H+2, W+2, Cin)   zero-padded input volume for this batch el.
    w1_ref  : (Cin, Cmid)            1x1x1 conv1 weights (bf16)
    w2_ref  : (27, Cmid, Cmid)       3x3x3 conv2 weights, taps flattened (bf16)
    w3_ref  : (Cmid, Cout)           1x1x1 conv3 weights (bf16)
    s*/b*   : (1, C)                 folded-BN scale / shift (f32)
    out_ref : (H, W, Cout)
    c1_ref  : (3, H+2, W+2, Cmid)    rolling cache of conv1+bn1+relu planes
    acc_ref : (H*W, Cmid) f32        conv2 accumulator
    """
    d = pl.program_id(1)                       # output depth plane index
    last = pl.num_programs(1) - 1
    Cin = x_ref.shape[-1]
    Cmid = w1_ref.shape[-1]
    Cout = w3_ref.shape[-1]
    cdt = w1_ref.dtype                         # compute (matmul input) dtype

    # conv2 zero-pads conv1's output; H/W borders of every cached plane (and
    # entire depth-pad planes) must therefore contribute zero.
    hi = lax.broadcasted_iota(jnp.int32, (H + 2, W + 2, 1), 0)
    wi = lax.broadcasted_iota(jnp.int32, (H + 2, W + 2, 1), 1)
    hw_mask = ((hi >= 1) & (hi <= H) & (wi >= 1) & (wi <= W)).astype(jnp.float32)

    zero_plane = jnp.zeros((H + 2, W + 2, Cmid), c1_ref.dtype)

    def conv1_into_slot(p):
        """conv1 + bn1 + relu on padded input plane p; cache in slot p % 3."""
        plane = x_ref[p]                                     # (H+2, W+2, Cin)
        y1 = jnp.dot(plane.reshape((H + 2) * (W + 2), Cin), w1_ref[...],
                     preferred_element_type=jnp.float32)
        y1 = jnp.maximum(y1 * s1_ref[...] + b1_ref[...], 0.0)
        y1 = y1.reshape(H + 2, W + 2, Cmid) * hw_mask        # zero H/W halo
        c1_ref[p % 3] = y1.astype(c1_ref.dtype)

    # --- maintain the 3-slot rolling conv1 cache -----------------------------
    @pl.when(d == 0)
    def _():                               # prologue for this batch element
        c1_ref[0] = zero_plane             # leading depth-pad plane
        conv1_into_slot(1)

    @pl.when(d < last)
    def _():                               # newly exposed plane d + 2
        conv1_into_slot(d + 2)

    @pl.when(d == last)
    def _():
        c1_ref[(d + 2) % 3] = zero_plane   # trailing depth-pad plane

    # --- conv2 (3x3x3): 27 in-register taps, f32 accumulation ----------------
    acc_ref[...] = jnp.zeros_like(acc_ref)

    def accumulate_taps(kd):
        y1 = c1_ref[(d + kd) % 3]                            # (H+2, W+2, Cmid)
        part = jnp.zeros((H * W, Cmid), jnp.float32)
        for kh in range(3):
            for kw in range(3):
                tap = y1[kh:kh + H, kw:kw + W, :].reshape(H * W, Cmid)
                part = part + jnp.dot(tap, w2_ref[kd * 9 + kh * 3 + kw],
                                      preferred_element_type=jnp.float32)
        acc_ref[...] += part

    @pl.when(d > 0)          # plane d is conv2's depth padding at d == 0
    def _():
        accumulate_taps(0)

    accumulate_taps(1)       # plane d + 1 is always a real plane

    @pl.when(d < last)       # plane d + 2 is conv2's depth padding at d == last
    def _():
        accumulate_taps(2)

    # --- bn2 + relu, conv3 (1x1x1) + bn3, residual add, final relu -----------
    y2 = jnp.maximum(acc_ref[...] * s2_ref[...] + b2_ref[...], 0.0).astype(cdt)
    y3 = jnp.dot(y2, w3_ref[...], preferred_element_type=jnp.float32)
    y3 = y3 * s3_ref[...] + b3_ref[...]
    res = x_ref[d + 1][1:H + 1, 1:W + 1, :].reshape(H * W, Cin)
    out = jnp.maximum(y3 + res.astype(jnp.float32), 0.0)
    out_ref[...] = out.reshape(H, W, Cout).astype(out_ref.dtype)


@functools.partial(jax.jit, static_argnames=("compute_dtype",))
def resblock3d_forward(params, x, *, compute_dtype=jnp.bfloat16):
    """ResBlock3D forward (stride=1, ds=None).  x is NDHWC."""
    N, D, H, W, Cin = x.shape
    w1 = params["conv1"]["w"]
    w2 = params["conv2"]["w"]
    w3 = params["conv3"]["w"]
    Cmid = w1.shape[-1]
    Cout = w3.shape[-1]
    assert Cin == Cout, "ds=None residual requires in_ch == out_ch"

    # TODO(synk): stride>1 / ds (downsample) residual path is not implemented;
    # the module defaults (stride=1, ds=None) are covered.
    # TODO(synk): for volumes whose padded slab does not fit VMEM, tile the
    # depth axis with a haloed manual DMA (pl.ANY + make_async_copy) instead of
    # keeping the whole padded volume resident per batch element.

    # Zero-pad D/H/W by 1 once (conv2's ConstantPad3d, hoisted so the kernel
    # only ever reads one array); cast activations/weights to bf16.
    xp = jnp.pad(x, ((0, 0), (1, 1), (1, 1), (1, 1), (0, 0))).astype(compute_dtype)
    w1c = w1.reshape(Cin, Cmid).astype(compute_dtype)
    w2c = w2.reshape(27, Cmid, Cmid).astype(compute_dtype)
    w3c = w3.reshape(Cmid, Cout).astype(compute_dtype)
    s1 = params["conv1"]["scale"].reshape(1, Cmid).astype(jnp.float32)
    b1 = params["conv1"]["shift"].reshape(1, Cmid).astype(jnp.float32)
    s2 = params["conv2"]["scale"].reshape(1, Cmid).astype(jnp.float32)
    b2 = params["conv2"]["shift"].reshape(1, Cmid).astype(jnp.float32)
    s3 = params["conv3"]["scale"].reshape(1, Cout).astype(jnp.float32)
    b3 = params["conv3"]["shift"].reshape(1, Cout).astype(jnp.float32)

    kernel = functools.partial(_resblock3d_kernel, D=D, H=H, W=W)
    const_spec = lambda shape: pl.BlockSpec(shape, lambda n, d: (0,) * len(shape))

    out = pl.pallas_call(
        kernel,
        out_shape=jax.ShapeDtypeStruct((N, D, H, W, Cout), x.dtype),
        grid=(N, D),
        in_specs=[
            # Whole padded volume of batch n; block index is constant across d,
            # so it is fetched from HBM once per batch element.
            pl.BlockSpec((None, D + 2, H + 2, W + 2, Cin),
                         lambda n, d: (n, 0, 0, 0, 0)),
            const_spec((Cin, Cmid)),        # w1
            const_spec((1, Cmid)),          # bn1 scale
            const_spec((1, Cmid)),          # bn1 shift
            const_spec((27, Cmid, Cmid)),   # w2
            const_spec((1, Cmid)),          # bn2 scale
            const_spec((1, Cmid)),          # bn2 shift
            const_spec((Cmid, Cout)),       # w3
            const_spec((1, Cout)),          # bn3 scale
            const_spec((1, Cout)),          # bn3 shift
        ],
        out_specs=pl.BlockSpec((None, None, H, W, Cout),
                               lambda n, d: (n, d, 0, 0, 0)),
        scratch_shapes=[
            pltpu.VMEM((3, H + 2, W + 2, Cmid), compute_dtype),   # conv1 cache
            pltpu.VMEM((H * W, Cmid), jnp.float32),               # conv2 acc
        ],
        compiler_params=pltpu.CompilerParams(
            dimension_semantics=("parallel", "arbitrary")),
    )(xp, w1c, s1, b1, w2c, s2, b2, w3c, s3, b3)
    return out


# ----------------------------------------------------------------------------
# Parameters + pure-JAX reference (for correctness check)
# ----------------------------------------------------------------------------
def _init_conv_bn(key, kd, kh, kw, cin, cout):
    ks = jax.random.split(key, 5)
    fan_in = kd * kh * kw * cin
    w = jax.random.normal(ks[0], (kd, kh, kw, cin, cout), jnp.float32)
    w = w * (1.0 / math.sqrt(fan_in))
    gamma = 1.0 + 0.1 * jax.random.normal(ks[1], (cout,), jnp.float32)
    beta = 0.1 * jax.random.normal(ks[2], (cout,), jnp.float32)
    rmean = 0.1 * jax.random.normal(ks[3], (cout,), jnp.float32)
    rvar = jnp.abs(1.0 + 0.1 * jax.random.normal(ks[4], (cout,), jnp.float32))
    scale = gamma / jnp.sqrt(rvar + EPS)       # bn=True -> conv has no bias
    shift = beta - scale * rmean
    return {"w": w, "scale": scale, "shift": shift}


def init_resblock3d_params(key, in_ch, itm_ch, out_ch):
    k1, k2, k3 = jax.random.split(key, 3)
    return {
        "conv1": _init_conv_bn(k1, 1, 1, 1, in_ch, itm_ch),
        "conv2": _init_conv_bn(k2, 3, 3, 3, itm_ch, itm_ch),
        "conv3": _init_conv_bn(k3, 1, 1, 1, itm_ch, out_ch),
    }


def resblock3d_reference(params, x, *, compute_dtype=jnp.bfloat16):
    """Plain-JAX reference (inputs/weights rounded like the kernel)."""
    def conv_bn(y, p, pad, relu):
        w = p["w"].astype(compute_dtype).astype(jnp.float32)
        y = lax.conv_general_dilated(
            y, w, window_strides=(1, 1, 1), padding=[(pad, pad)] * 3,
            dimension_numbers=("NDHWC", "DHWIO", "NDHWC"))
        y = y * p["scale"] + p["shift"]
        return jnp.maximum(y, 0.0) if relu else y

    xr = x.astype(compute_dtype).astype(jnp.float32)
    y = conv_bn(xr, params["conv1"], 0, True)
    y = conv_bn(y, params["conv2"], 1, True)
    y = conv_bn(y, params["conv3"], 0, False)
    return jnp.maximum(y + xr, 0.0)


if __name__ == "__main__":
    N, D, H, W = 2, 8, 8, 8
    in_ch, itm_ch, out_ch = 32, 16, 32        # ds=None => in_ch == out_ch

    root = jax.random.PRNGKey(0)
    kp, kx = jax.random.split(root)
    params = init_resblock3d_params(kp, in_ch, itm_ch, out_ch)
    x = jax.random.normal(kx, (N, D, H, W, in_ch), jnp.float32)

    out = resblock3d_forward(params, x)
    out = jax.block_until_ready(out)

    ref = resblock3d_reference(params, x)
    assert out.shape == (N, D, H, W, out_ch)
    assert bool(jnp.all(jnp.isfinite(out)))
    err = float(jnp.max(jnp.abs(out - ref)))
    assert err < 5e-2, f"max abs err {err}"
    print("KERNEL_OK")
</pallas_src>

<mosaic_0001>
module attributes {stable_mosaic.version = 11 : i64} {
  func.func @_resblock3d_kernel(%arg0: i32, %arg1: i32, %arg2: memref<1x10x10x10x32xbf16, #tpu.memory_space<vmem>>, %arg3: memref<32x16xbf16, #tpu.memory_space<vmem>>, %arg4: memref<1x16xf32, #tpu.memory_space<vmem>>, %arg5: memref<1x16xf32, #tpu.memory_space<vmem>>, %arg6: memref<27x16x16xbf16, #tpu.memory_space<vmem>>, %arg7: memref<1x16xf32, #tpu.memory_space<vmem>>, %arg8: memref<1x16xf32, #tpu.memory_space<vmem>>, %arg9: memref<16x32xbf16, #tpu.memory_space<vmem>>, %arg10: memref<1x32xf32, #tpu.memory_space<vmem>>, %arg11: memref<1x32xf32, #tpu.memory_space<vmem>>, %arg12: memref<1x1x8x8x32xf32, #tpu.memory_space<vmem>>, %arg13: memref<3x10x10x16xbf16, #tpu.memory_space<vmem>>, %arg14: memref<64x16xf32, #tpu.memory_space<vmem>>) attributes {dimension_semantics = [#tpu.dimension_semantics<parallel>, #tpu.dimension_semantics<arbitrary>], iteration_bounds = array<i64: 2, 8>, scalar_prefetch = 0 : i64, scratch_operands = 2 : i64, tpu.core_type = #tpu.core_type<tc>, window_params = [{transform_indices = @transform_0, window_bounds = array<i64: 1, 10, 10, 10, 32>}, {pipeline_mode = #tpu.pipeline_mode<synchronous>, transform_indices = @transform_1, window_bounds = array<i64: 32, 16>}, {pipeline_mode = #tpu.pipeline_mode<synchronous>, transform_indices = @transform_2, window_bounds = array<i64: 1, 16>}, {pipeline_mode = #tpu.pipeline_mode<synchronous>, transform_indices = @transform_3, window_bounds = array<i64: 1, 16>}, {pipeline_mode = #tpu.pipeline_mode<synchronous>, transform_indices = @transform_4, window_bounds = array<i64: 27, 16, 16>}, {pipeline_mode = #tpu.pipeline_mode<synchronous>, transform_indices = @transform_5, window_bounds = array<i64: 1, 16>}, {pipeline_mode = #tpu.pipeline_mode<synchronous>, transform_indices = @transform_6, window_bounds = array<i64: 1, 16>}, {pipeline_mode = #tpu.pipeline_mode<synchronous>, transform_indices = @transform_7, window_bounds = array<i64: 16, 32>}, {pipeline_mode = #tpu.pipeline_mode<synchronous>, transform_indices = @transform_8, window_bounds = array<i64: 1, 32>}, {pipeline_mode = #tpu.pipeline_mode<synchronous>, transform_indices = @transform_9, window_bounds = array<i64: 1, 32>}, {transform_indices = @transform_10, window_bounds = array<i64: 1, 1, 8, 8, 32>}]} {
    %0 = tpu.iota {dimensions = array<i32: 0>} : vector<10x10x1xi32>
    %1 = tpu.iota {dimensions = array<i32: 1>} : vector<10x10x1xi32>
    %c1_i32 = arith.constant 1 : i32
    %2 = vector.broadcast %c1_i32 : i32 to vector<10x10x1xi32>
    %3 = arith.cmpi sge, %0, %2 : vector<10x10x1xi32>
    %c8_i32 = arith.constant 8 : i32
    %4 = vector.broadcast %c8_i32 : i32 to vector<10x10x1xi32>
    %5 = arith.cmpi sle, %0, %4 : vector<10x10x1xi32>
    %6 = arith.andi %3, %5 : vector<10x10x1xi1>
    %c1_i32_0 = arith.constant 1 : i32
    %7 = vector.broadcast %c1_i32_0 : i32 to vector<10x10x1xi32>
    %8 = arith.cmpi sge, %1, %7 : vector<10x10x1xi32>
    %9 = arith.andi %6, %8 : vector<10x10x1xi1>
    %c8_i32_1 = arith.constant 8 : i32
    %10 = vector.broadcast %c8_i32_1 : i32 to vector<10x10x1xi32>
    %11 = arith.cmpi sle, %1, %10 : vector<10x10x1xi32>
    %12 = arith.andi %9, %11 : vector<10x10x1xi1>
    %13 = arith.extui %12 : vector<10x10x1xi1> to vector<10x10x1xi32>
    %14 = arith.sitofp %13 : vector<10x10x1xi32> to vector<10x10x1xf32>
    %cst = arith.constant 0.000000e+00 : bf16
    %15 = vector.broadcast %cst : bf16 to vector<10x10x16xbf16>
    %c0_i32 = arith.constant 0 : i32
    %16 = arith.cmpi eq, %arg1, %c0_i32 : i32
    %17 = arith.extui %16 : i1 to i32
    %c0_i32_2 = arith.constant 0 : i32
    %18 = arith.cmpi ne, %17, %c0_i32_2 : i32
    scf.if %18 {
      %c0_78 = arith.constant 0 : index
      %c0_79 = arith.constant 0 : index
      %c0_80 = arith.constant 0 : index
      %c0_81 = arith.constant 0 : index
      %137 = vector.load %arg13[%c0_78, %c0_79, %c0_80, %c0_81] : memref<3x10x10x16xbf16, #tpu.memory_space<vmem>>, vector<1x10x10x16xbf16>
      %138 = vector.shape_cast %137 : vector<1x10x10x16xbf16> to vector<10x10x16xbf16>
      %139 = vector.shape_cast %15 : vector<10x10x16xbf16> to vector<1x10x10x16xbf16>
      tpu.vector_store %arg13[%c0_78, %c0_79, %c0_80, %c0_81], %139 {strides = array<i32>} : memref<3x10x10x16xbf16, #tpu.memory_space<vmem>>, vector<1x10x10x16xbf16>,
      %c0_82 = arith.constant 0 : index
      %c1 = arith.constant 1 : index
      %c0_83 = arith.constant 0 : index
      %c0_84 = arith.constant 0 : index
      %c0_85 = arith.constant 0 : index
      %140 = vector.load %arg2[%c0_82, %c1, %c0_83, %c0_84, %c0_85] : memref<1x10x10x10x32xbf16, #tpu.memory_space<vmem>>, vector<1x1x10x10x32xbf16>
      %141 = vector.shape_cast %140 : vector<1x1x10x10x32xbf16> to vector<10x10x32xbf16>
      %142 = vector.shape_cast %141 : vector<10x10x32xbf16> to vector<100x32xbf16>
      %c0_86 = arith.constant 0 : index
      %c0_87 = arith.constant 0 : index
      %143 = vector.load %arg3[%c0_86, %c0_87] : memref<32x16xbf16, #tpu.memory_space<vmem>>, vector<32x16xbf16>
      %cst_88 = arith.constant dense<0.000000e+00> : vector<100x16xf32>
      %144 = tpu.matmul %142, %143, %cst_88 {dimension_numbers = #tpu.dot_dimension_numbers<[1], [0], [0], [1], [0, 0, 1, 1], [], []>} : vector<100x32xbf16>, vector<32x16xbf16>, vector<100x16xf32> -> vector<100x16xf32>
      %c0_89 = arith.constant 0 : index
      %c0_90 = arith.constant 0 : index
      %145 = vector.load %arg4[%c0_89, %c0_90] : memref<1x16xf32, #tpu.memory_space<vmem>>, vector<1x16xf32>
      %146 = vector.broadcast %145 : vector<1x16xf32> to vector<100x16xf32>
      %147 = arith.mulf %144, %146 : vector<100x16xf32>
      %c0_91 = arith.constant 0 : index
      %c0_92 = arith.constant 0 : index
      %148 = vector.load %arg5[%c0_91, %c0_92] : memref<1x16xf32, #tpu.memory_space<vmem>>, vector<1x16xf32>
      %149 = vector.broadcast %148 : vector<1x16xf32> to vector<100x16xf32>
      %150 = arith.addf %147, %149 : vector<100x16xf32>
      %cst_93 = arith.constant 0.000000e+00 : f32
      %151 = vector.broadcast %cst_93 : f32 to vector<100x16xf32>
      %152 = arith.maximumf %150, %151 : vector<100x16xf32>
      %153 = vector.shape_cast %152 : vector<100x16xf32> to vector<10x10x16xf32>
      %154 = vector.broadcast %14 : vector<10x10x1xf32> to vector<10x10x16xf32>
      %155 = arith.mulf %153, %154 : vector<10x10x16xf32>
      %156 = arith.truncf %155 : vector<10x10x16xf32> to vector<10x10x16xbf16>
      %c1_94 = arith.constant 1 : index
      %c0_95 = arith.constant 0 : index
      %c0_96 = arith.constant 0 : index
      %c0_97 = arith.constant 0 : index
      %157 = vector.load %arg13[%c1_94, %c0_95, %c0_96, %c0_97] : memref<3x10x10x16xbf16, #tpu.memory_space<vmem>>, vector<1x10x10x16xbf16>
      %158 = vector.shape_cast %157 : vector<1x10x10x16xbf16> to vector<10x10x16xbf16>
      %159 = vector.shape_cast %156 : vector<10x10x16xbf16> to vector<1x10x10x16xbf16>
      tpu.vector_store %arg13[%c1_94, %c0_95, %c0_96, %c0_97], %159 {strides = array<i32>} : memref<3x10x10x16xbf16, #tpu.memory_space<vmem>>, vector<1x10x10x16xbf16>,
    } else {
    }
    %c7_i32 = arith.constant 7 : i32
    %19 = arith.cmpi slt, %arg1, %c7_i32 : i32
    %20 = arith.extui %19 : i1 to i32
    %c0_i32_3 = arith.constant 0 : i32
    %21 = arith.cmpi ne, %20, %c0_i32_3 : i32
    scf.if %21 {
      %c2_i32 = arith.constant 2 : i32
      %137 = arith.addi %arg1, %c2_i32 : i32
      %c0_78 = arith.constant 0 : index
      %138 = arith.index_cast %137 : i32 to index
      %c0_79 = arith.constant 0 : index
      %c0_80 = arith.constant 0 : index
      %c0_81 = arith.constant 0 : index
      %139 = vector.load %arg2[%c0_78, %138, %c0_79, %c0_80, %c0_81] : memref<1x10x10x10x32xbf16, #tpu.memory_space<vmem>>, vector<1x1x10x10x32xbf16>
      %140 = vector.shape_cast %139 : vector<1x1x10x10x32xbf16> to vector<10x10x32xbf16>
      %141 = vector.shape_cast %140 : vector<10x10x32xbf16> to vector<100x32xbf16>
      %c0_82 = arith.constant 0 : index
      %c0_83 = arith.constant 0 : index
      %142 = vector.load %arg3[%c0_82, %c0_83] : memref<32x16xbf16, #tpu.memory_space<vmem>>, vector<32x16xbf16>
      %cst_84 = arith.constant dense<0.000000e+00> : vector<100x16xf32>
      %143 = tpu.matmul %141, %142, %cst_84 {dimension_numbers = #tpu.dot_dimension_numbers<[1], [0], [0], [1], [0, 0, 1, 1], [], []>} : vector<100x32xbf16>, vector<32x16xbf16>, vector<100x16xf32> -> vector<100x16xf32>
      %c0_85 = arith.constant 0 : index
      %c0_86 = arith.constant 0 : index
      %144 = vector.load %arg4[%c0_85, %c0_86] : memref<1x16xf32, #tpu.memory_space<vmem>>, vector<1x16xf32>
      %145 = vector.broadcast %144 : vector<1x16xf32> to vector<100x16xf32>
      %146 = arith.mulf %143, %145 : vector<100x16xf32>
      %c0_87 = arith.constant 0 : index
      %c0_88 = arith.constant 0 : index
      %147 = vector.load %arg5[%c0_87, %c0_88] : memref<1x16xf32, #tpu.memory_space<vmem>>, vector<1x16xf32>
      %148 = vector.broadcast %147 : vector<1x16xf32> to vector<100x16xf32>
      %149 = arith.addf %146, %148 : vector<100x16xf32>
      %cst_89 = arith.constant 0.000000e+00 : f32
      %150 = vector.broadcast %cst_89 : f32 to vector<100x16xf32>
      %151 = arith.maximumf %149, %150 : vector<100x16xf32>
      %152 = vector.shape_cast %151 : vector<100x16xf32> to vector<10x10x16xf32>
      %153 = vector.broadcast %14 : vector<10x10x1xf32> to vector<10x10x16xf32>
      %154 = arith.mulf %152, %153 : vector<10x10x16xf32>
      %155 = arith.truncf %154 : vector<10x10x16xf32> to vector<10x10x16xbf16>
      %c3_i32_90 = arith.constant 3 : i32
      %c0_i32_91 = arith.constant 0 : i32
      %156 = arith.cmpi eq, %c3_i32_90, %c0_i32_91 : i32
      %c1_i32_92 = arith.constant 1 : i32
      %157 = arith.select %156, %c1_i32_92, %c3_i32_90 : i32
      %158 = arith.remsi %137, %157 : i32
      %c0_i32_93 = arith.constant 0 : i32
      %159 = arith.cmpi ne, %158, %c0_i32_93 : i32
      %c0_i32_94 = arith.constant 0 : i32
      %160 = arith.cmpi slt, %158, %c0_i32_94 : i32
      %c0_i32_95 = arith.constant 0 : i32
      %161 = arith.cmpi slt, %157, %c0_i32_95 : i32
      %162 = arith.xori %160, %161 : i1
      %163 = arith.andi %162, %159 : i1
      %164 = arith.addi %158, %157 : i32
      %165 = arith.select %163, %164, %158 : i32
      %166 = arith.index_cast %165 : i32 to index
      %c0_96 = arith.constant 0 : index
      %c0_97 = arith.constant 0 : index
      %c0_98 = arith.constant 0 : index
      %167 = vector.load %arg13[%166, %c0_96, %c0_97, %c0_98] : memref<3x10x10x16xbf16, #tpu.memory_space<vmem>>, vector<1x10x10x16xbf16>
      %168 = vector.shape_cast %167 : vector<1x10x10x16xbf16> to vector<10x10x16xbf16>
      %169 = vector.shape_cast %155 : vector<10x10x16xbf16> to vector<1x10x10x16xbf16>
      tpu.vector_store %arg13[%166, %c0_96, %c0_97, %c0_98], %169 {strides = array<i32>} : memref<3x10x10x16xbf16, #tpu.memory_space<vmem>>, vector<1x10x10x16xbf16>,
    } else {
    }
    %c7_i32_4 = arith.constant 7 : i32
    %22 = arith.cmpi eq, %arg1, %c7_i32_4 : i32
    %23 = arith.extui %22 : i1 to i32
    %c0_i32_5 = arith.constant 0 : i32
    %24 = arith.cmpi ne, %23, %c0_i32_5 : i32
    scf.if %24 {
      %c2_i32 = arith.constant 2 : i32
      %137 = arith.addi %arg1, %c2_i32 : i32
      %c3_i32_78 = arith.constant 3 : i32
      %c0_i32_79 = arith.constant 0 : i32
      %138 = arith.cmpi eq, %c3_i32_78, %c0_i32_79 : i32
      %c1_i32_80 = arith.constant 1 : i32
      %139 = arith.select %138, %c1_i32_80, %c3_i32_78 : i32
      %140 = arith.remsi %137, %139 : i32
      %c0_i32_81 = arith.constant 0 : i32
      %141 = arith.cmpi ne, %140, %c0_i32_81 : i32
      %c0_i32_82 = arith.constant 0 : i32
      %142 = arith.cmpi slt, %140, %c0_i32_82 : i32
      %c0_i32_83 = arith.constant 0 : i32
      %143 = arith.cmpi slt, %139, %c0_i32_83 : i32
      %144 = arith.xori %142, %143 : i1
      %145 = arith.andi %144, %141 : i1
      %146 = arith.addi %140, %139 : i32
      %147 = arith.select %145, %146, %140 : i32
      %148 = arith.index_cast %147 : i32 to index
      %c0_84 = arith.constant 0 : index
      %c0_85 = arith.constant 0 : index
      %c0_86 = arith.constant 0 : index
      %149 = vector.load %arg13[%148, %c0_84, %c0_85, %c0_86] : memref<3x10x10x16xbf16, #tpu.memory_space<vmem>>, vector<1x10x10x16xbf16>
      %150 = vector.shape_cast %149 : vector<1x10x10x16xbf16> to vector<10x10x16xbf16>
      %151 = vector.shape_cast %15 : vector<10x10x16xbf16> to vector<1x10x10x16xbf16>
      tpu.vector_store %arg13[%148, %c0_84, %c0_85, %c0_86], %151 {strides = array<i32>} : memref<3x10x10x16xbf16, #tpu.memory_space<vmem>>, vector<1x10x10x16xbf16>,
    } else {
    }
    %cst_6 = arith.constant 0.000000e+00 : f32
    %25 = vector.broadcast %cst_6 : f32 to vector<64x16xf32>
    %c0 = arith.constant 0 : index
    %c0_7 = arith.constant 0 : index
    %26 = vector.load %arg14[%c0, %c0_7] : memref<64x16xf32, #tpu.memory_space<vmem>>, vector<64x16xf32>
    tpu.vector_store %arg14[%c0, %c0_7], %25 {strides = array<i32>} : memref<64x16xf32, #tpu.memory_space<vmem>>, vector<64x16xf32>,
    %c0_i32_8 = arith.constant 0 : i32
    %27 = arith.cmpi sgt, %arg1, %c0_i32_8 : i32
    %28 = arith.extui %27 : i1 to i32
    %c0_i32_9 = arith.constant 0 : i32
    %29 = arith.cmpi ne, %28, %c0_i32_9 : i32
    scf.if %29 {
      %c0_i32_78 = arith.constant 0 : i32
      %137 = arith.addi %arg1, %c0_i32_78 : i32
      %c3_i32_79 = arith.constant 3 : i32
      %c0_i32_80 = arith.constant 0 : i32
      %138 = arith.cmpi eq, %c3_i32_79, %c0_i32_80 : i32
      %c1_i32_81 = arith.constant 1 : i32
      %139 = arith.select %138, %c1_i32_81, %c3_i32_79 : i32
      %140 = arith.remsi %137, %139 : i32
      %c0_i32_82 = arith.constant 0 : i32
      %141 = arith.cmpi ne, %140, %c0_i32_82 : i32
      %c0_i32_83 = arith.constant 0 : i32
      %142 = arith.cmpi slt, %140, %c0_i32_83 : i32
      %c0_i32_84 = arith.constant 0 : i32
      %143 = arith.cmpi slt, %139, %c0_i32_84 : i32
      %144 = arith.xori %142, %143 : i1
      %145 = arith.andi %144, %141 : i1
      %146 = arith.addi %140, %139 : i32
      %147 = arith.select %145, %146, %140 : i32
      %148 = arith.index_cast %147 : i32 to index
      %c0_85 = arith.constant 0 : index
      %c0_86 = arith.constant 0 : index
      %c0_87 = arith.constant 0 : index
      %149 = vector.load %arg13[%148, %c0_85, %c0_86, %c0_87] : memref<3x10x10x16xbf16, #tpu.memory_space<vmem>>, vector<1x10x10x16xbf16>
      %150 = vector.shape_cast %149 : vector<1x10x10x16xbf16> to vector<10x10x16xbf16>
      %cst_88 = arith.constant 0.000000e+00 : f32
      %151 = vector.broadcast %cst_88 : f32 to vector<64x16xf32>
      %152 = vector.extract_strided_slice %150 {offsets = [0, 0, 0], sizes = [8, 8, 16], strides = [1, 1, 1]} : vector<10x10x16xbf16> to vector<8x8x16xbf16>
      %153 = vector.shape_cast %152 : vector<8x8x16xbf16> to vector<64x16xbf16>
      %c0_89 = arith.constant 0 : index
      %c0_90 = arith.constant 0 : index
      %c0_91 = arith.constant 0 : index
      %154 = vector.load %arg6[%c0_89, %c0_90, %c0_91] : memref<27x16x16xbf16, #tpu.memory_space<vmem>>, vector<1x16x16xbf16>
      %155 = vector.shape_cast %154 : vector<1x16x16xbf16> to vector<16x16xbf16>
      %cst_92 = arith.constant dense<0.000000e+00> : vector<64x16xf32>
      %156 = tpu.matmul %153, %155, %cst_92 {dimension_numbers = #tpu.dot_dimension_numbers<[1], [0], [0], [1], [0, 0, 1, 1], [], []>} : vector<64x16xbf16>, vector<16x16xbf16>, vector<64x16xf32> -> vector<64x16xf32>
      %157 = arith.addf %151, %156 : vector<64x16xf32>
      %158 = vector.extract_strided_slice %150 {offsets = [0, 1, 0], sizes = [8, 8, 16], strides = [1, 1, 1]} : vector<10x10x16xbf16> to vector<8x8x16xbf16>
      %159 = vector.shape_cast %158 : vector<8x8x16xbf16> to vector<64x16xbf16>
      %c1 = arith.constant 1 : index
      %c0_93 = arith.constant 0 : index
      %c0_94 = arith.constant 0 : index
      %160 = vector.load %arg6[%c1, %c0_93, %c0_94] : memref<27x16x16xbf16, #tpu.memory_space<vmem>>, vector<1x16x16xbf16>
      %161 = vector.shape_cast %160 : vector<1x16x16xbf16> to vector<16x16xbf16>
      %cst_95 = arith.constant dense<0.000000e+00> : vector<64x16xf32>
      %162 = tpu.matmul %159, %161, %cst_95 {dimension_numbers = #tpu.dot_dimension_numbers<[1], [0], [0], [1], [0, 0, 1, 1], [], []>} : vector<64x16xbf16>, vector<16x16xbf16>, vector<64x16xf32> -> vector<64x16xf32>
      %163 = arith.addf %157, %162 : vector<64x16xf32>
      %164 = vector.extract_strided_slice %150 {offsets = [0, 2, 0], sizes = [8, 8, 16], strides = [1, 1, 1]} : vector<10x10x16xbf16> to vector<8x8x16xbf16>
      %165 = vector.shape_cast %164 : vector<8x8x16xbf16> to vector<64x16xbf16>
      %c2 = arith.constant 2 : index
      %c0_96 = arith.constant 0 : index
      %c0_97 = arith.constant 0 : index
      %166 = vector.load %arg6[%c2, %c0_96, %c0_97] : memref<27x16x16xbf16, #tpu.memory_space<vmem>>, vector<1x16x16xbf16>
      %167 = vector.shape_cast %166 : vector<1x16x16xbf16> to vector<16x16xbf16>
      %cst_98 = arith.constant dense<0.000000e+00> : vector<64x16xf32>
      %168 = tpu.matmul %165, %167, %cst_98 {dimension_numbers = #tpu.dot_dimension_numbers<[1], [0], [0], [1], [0, 0, 1, 1], [], []>} : vector<64x16xbf16>, vector<16x16xbf16>, vector<64x16xf32> -> vector<64x16xf32>
      %169 = arith.addf %163, %168 : vector<64x16xf32>
      %170 = vector.extract_strided_slice %150 {offsets = [1, 0, 0], sizes = [8, 8, 16], strides = [1, 1, 1]} : vector<10x10x16xbf16> to vector<8x8x16xbf16>
      %171 = vector.shape_cast %170 : vector<8x8x16xbf16> to vector<64x16xbf16>
      %c3 = arith.constant 3 : index
      %c0_99 = arith.constant 0 : index
      %c0_100 = arith.constant 0 : index
      %172 = vector.load %arg6[%c3, %c0_99, %c0_100] : memref<27x16x16xbf16, #tpu.memory_space<vmem>>, vector<1x16x16xbf16>
      %173 = vector.shape_cast %172 : vector<1x16x16xbf16> to vector<16x16xbf16>
      %cst_101 = arith.constant dense<0.000000e+00> : vector<64x16xf32>
      %174 = tpu.matmul %171, %173, %cst_101 {dimension_numbers = #tpu.dot_dimension_numbers<[1], [0], [0], [1], [0, 0, 1, 1], [], []>} : vector<64x16xbf16>, vector<16x16xbf16>, vector<64x16xf32> -> vector<64x16xf32>
      %175 = arith.addf %169, %174 : vector<64x16xf32>
      %176 = vector.extract_strided_slice %150 {offsets = [1, 1, 0], sizes = [8, 8, 16], strides = [1, 1, 1]} : vector<10x10x16xbf16> to vector<8x8x16xbf16>
      %177 = vector.shape_cast %176 : vector<8x8x16xbf16> to vector<64x16xbf16>
      %c4 = arith.constant 4 : index
      %c0_102 = arith.constant 0 : index
      %c0_103 = arith.constant 0 : index
      %178 = vector.load %arg6[%c4, %c0_102, %c0_103] : memref<27x16x16xbf16, #tpu.memory_space<vmem>>, vector<1x16x16xbf16>
      %179 = vector.shape_cast %178 : vector<1x16x16xbf16> to vector<16x16xbf16>
      %cst_104 = arith.constant dense<0.000000e+00> : vector<64x16xf32>
      %180 = tpu.matmul %177, %179, %cst_104 {dimension_numbers = #tpu.dot_dimension_numbers<[1], [0], [0], [1], [0, 0, 1, 1], [], []>} : vector<64x16xbf16>, vector<16x16xbf16>, vector<64x16xf32> -> vector<64x16xf32>
      %181 = arith.addf %175, %180 : vector<64x16xf32>
      %182 = vector.extract_strided_slice %150 {offsets = [1, 2, 0], sizes = [8, 8, 16], strides = [1, 1, 1]} : vector<10x10x16xbf16> to vector<8x8x16xbf16>
      %183 = vector.shape_cast %182 : vector<8x8x16xbf16> to vector<64x16xbf16>
      %c5 = arith.constant 5 : index
      %c0_105 = arith.constant 0 : index
      %c0_106 = arith.constant 0 : index
      %184 = vector.load %arg6[%c5, %c0_105, %c0_106] : memref<27x16x16xbf16, #tpu.memory_space<vmem>>, vector<1x16x16xbf16>
      %185 = vector.shape_cast %184 : vector<1x16x16xbf16> to vector<16x16xbf16>
      %cst_107 = arith.constant dense<0.000000e+00> : vector<64x16xf32>
      %186 = tpu.matmul %183, %185, %cst_107 {dimension_numbers = #tpu.dot_dimension_numbers<[1], [0], [0], [1], [0, 0, 1, 1], [], []>} : vector<64x16xbf16>, vector<16x16xbf16>, vector<64x16xf32> -> vector<64x16xf32>
      %187 = arith.addf %181, %186 : vector<64x16xf32>
      %188 = vector.extract_strided_slice %150 {offsets = [2, 0, 0], sizes = [8, 8, 16], strides = [1, 1, 1]} : vector<10x10x16xbf16> to vector<8x8x16xbf16>
      %189 = vector.shape_cast %188 : vector<8x8x16xbf16> to vector<64x16xbf16>
      %c6 = arith.constant 6 : index
      %c0_108 = arith.constant 0 : index
      %c0_109 = arith.constant 0 : index
      %190 = vector.load %arg6[%c6, %c0_108, %c0_109] : memref<27x16x16xbf16, #tpu.memory_space<vmem>>, vector<1x16x16xbf16>
      %191 = vector.shape_cast %190 : vector<1x16x16xbf16> to vector<16x16xbf16>
      %cst_110 = arith.constant dense<0.000000e+00> : vector<64x16xf32>
      %192 = tpu.matmul %189, %191, %cst_110 {dimension_numbers = #tpu.dot_dimension_numbers<[1], [0], [0], [1], [0, 0, 1, 1], [], []>} : vector<64x16xbf16>, vector<16x16xbf16>, vector<64x16xf32> -> vector<64x16xf32>
      %193 = arith.addf %187, %192 : vector<64x16xf32>
      %194 = vector.extract_strided_slice %150 {offsets = [2, 1, 0], sizes = [8, 8, 16], strides = [1, 1, 1]} : vector<10x10x16xbf16> to vector<8x8x16xbf16>
      %195 = vector.shape_cast %194 : vector<8x8x16xbf16> to vector<64x16xbf16>
      %c7 = arith.constant 7 : index
      %c0_111 = arith.constant 0 : index
      %c0_112 = arith.constant 0 : index
      %196 = vector.load %arg6[%c7, %c0_111, %c0_112] : memref<27x16x16xbf16, #tpu.memory_space<vmem>>, vector<1x16x16xbf16>
      %197 = vector.shape_cast %196 : vector<1x16x16xbf16> to vector<16x16xbf16>
      %cst_113 = arith.constant dense<0.000000e+00> : vector<64x16xf32>
      %198 = tpu.matmul %195, %197, %cst_113 {dimension_numbers = #tpu.dot_dimension_numbers<[1], [0], [0], [1], [0, 0, 1, 1], [], []>} : vector<64x16xbf16>, vector<16x16xbf16>, vector<64x16xf32> -> vector<64x16xf32>
      %199 = arith.addf %193, %198 : vector<64x16xf32>
      %200 = vector.extract_strided_slice %150 {offsets = [2, 2, 0], sizes = [8, 8, 16], strides = [1, 1, 1]} : vector<10x10x16xbf16> to vector<8x8x16xbf16>
      %201 = vector.shape_cast %200 : vector<8x8x16xbf16> to vector<64x16xbf16>
      %c8 = arith.constant 8 : index
      %c0_114 = arith.constant 0 : index
      %c0_115 = arith.constant 0 : index
      %202 = vector.load %arg6[%c8, %c0_114, %c0_115] : memref<27x16x16xbf16, #tpu.memory_space<vmem>>, vector<1x16x16xbf16>
      %203 = vector.shape_cast %202 : vector<1x16x16xbf16> to vector<16x16xbf16>
      %cst_116 = arith.constant dense<0.000000e+00> : vector<64x16xf32>
      %204 = tpu.matmul %201, %203, %cst_116 {dimension_numbers = #tpu.dot_dimension_numbers<[1], [0], [0], [1], [0, 0, 1, 1], [], []>} : vector<64x16xbf16>, vector<16x16xbf16>, vector<64x16xf32> -> vector<64x16xf32>
      %205 = arith.addf %199, %204 : vector<64x16xf32>
      %c0_117 = arith.constant 0 : index
      %c0_118 = arith.constant 0 : index
      %206 = vector.load %arg14[%c0_117, %c0_118] : memref<64x16xf32, #tpu.memory_space<vmem>>, vector<64x16xf32>
      %207 = arith.addf %206, %205 : vector<64x16xf32>
      %c0_119 = arith.constant 0 : index
      %c0_120 = arith.constant 0 : index
      %208 = vector.load %arg14[%c0_119, %c0_120] : memref<64x16xf32, #tpu.memory_space<vmem>>, vector<64x16xf32>
      tpu.vector_store %arg14[%c0_119, %c0_120], %207 {strides = array<i32>} : memref<64x16xf32, #tpu.memory_space<vmem>>, vector<64x16xf32>,
    } else {
    }
    %c1_i32_10 = arith.constant 1 : i32
    %30 = arith.addi %arg1, %c1_i32_10 : i32
    %c3_i32 = arith.constant 3 : i32
    %c0_i32_11 = arith.constant 0 : i32
    %31 = arith.cmpi eq, %c3_i32, %c0_i32_11 : i32
    %c1_i32_12 = arith.constant 1 : i32
    %32 = arith.select %31, %c1_i32_12, %c3_i32 : i32
    %33 = arith.remsi %30, %32 : i32
    %c0_i32_13 = arith.constant 0 : i32
    %34 = arith.cmpi ne, %33, %c0_i32_13 : i32
    %c0_i32_14 = arith.constant 0 : i32
    %35 = arith.cmpi slt, %33, %c0_i32_14 : i32
    %c0_i32_15 = arith.constant 0 : i32
    %36 = arith.cmpi slt, %32, %c0_i32_15 : i32
    %37 = arith.xori %35, %36 : i1
    %38 = arith.andi %37, %34 : i1
    %39 = arith.addi %33, %32 : i32
    %40 = arith.select %38, %39, %33 : i32
    %41 = arith.index_cast %40 : i32 to index
    %c0_16 = arith.constant 0 : index
    %c0_17 = arith.constant 0 : index
    %c0_18 = arith.constant 0 : index
    %42 = vector.load %arg13[%41, %c0_16, %c0_17, %c0_18] : memref<3x10x10x16xbf16, #tpu.memory_space<vmem>>, vector<1x10x10x16xbf16>
    %43 = vector.shape_cast %42 : vector<1x10x10x16xbf16> to vector<10x10x16xbf16>
    %cst_19 = arith.constant 0.000000e+00 : f32
    %44 = vector.broadcast %cst_19 : f32 to vector<64x16xf32>
    %45 = vector.extract_strided_slice %43 {offsets = [0, 0, 0], sizes = [8, 8, 16], strides = [1, 1, 1]} : vector<10x10x16xbf16> to vector<8x8x16xbf16>
    %46 = vector.shape_cast %45 : vector<8x8x16xbf16> to vector<64x16xbf16>
    %c9 = arith.constant 9 : index
    %c0_20 = arith.constant 0 : index
    %c0_21 = arith.constant 0 : index
    %47 = vector.load %arg6[%c9, %c0_20, %c0_21] : memref<27x16x16xbf16, #tpu.memory_space<vmem>>, vector<1x16x16xbf16>
    %48 = vector.shape_cast %47 : vector<1x16x16xbf16> to vector<16x16xbf16>
    %cst_22 = arith.constant dense<0.000000e+00> : vector<64x16xf32>
    %49 = tpu.matmul %46, %48, %cst_22 {dimension_numbers = #tpu.dot_dimension_numbers<[1], [0], [0], [1], [0, 0, 1, 1], [], []>} : vector<64x16xbf16>, vector<16x16xbf16>, vector<64x16xf32> -> vector<64x16xf32>
    %50 = arith.addf %44, %49 : vector<64x16xf32>
    %51 = vector.extract_strided_slice %43 {offsets = [0, 1, 0], sizes = [8, 8, 16], strides = [1, 1, 1]} : vector<10x10x16xbf16> to vector<8x8x16xbf16>
    %52 = vector.shape_cast %51 : vector<8x8x16xbf16> to vector<64x16xbf16>
    %c10 = arith.constant 10 : index
    %c0_23 = arith.constant 0 : index
    %c0_24 = arith.constant 0 : index
    %53 = vector.load %arg6[%c10, %c0_23, %c0_24] : memref<27x16x16xbf16, #tpu.memory_space<vmem>>, vector<1x16x16xbf16>
    %54 = vector.shape_cast %53 : vector<1x16x16xbf16> to vector<16x16xbf16>
    %cst_25 = arith.constant dense<0.000000e+00> : vector<64x16xf32>
    %55 = tpu.matmul %52, %54, %cst_25 {dimension_numbers = #tpu.dot_dimension_numbers<[1], [0], [0], [1], [0, 0, 1, 1], [], []>} : vector<64x16xbf16>, vector<16x16xbf16>, vector<64x16xf32> -> vector<64x16xf32>
    %56 = arith.addf %50, %55 : vector<64x16xf32>
    %57 = vector.extract_strided_slice %43 {offsets = [0, 2, 0], sizes = [8, 8, 16], strides = [1, 1, 1]} : vector<10x10x16xbf16> to vector<8x8x16xbf16>
    %58 = vector.shape_cast %57 : vector<8x8x16xbf16> to vector<64x16xbf16>
    %c11 = arith.constant 11 : index
    %c0_26 = arith.constant 0 : index
    %c0_27 = arith.constant 0 : index
    %59 = vector.load %arg6[%c11, %c0_26, %c0_27] : memref<27x16x16xbf16, #tpu.memory_space<vmem>>, vector<1x16x16xbf16>
    %60 = vector.shape_cast %59 : vector<1x16x16xbf16> to vector<16x16xbf16>
    %cst_28 = arith.constant dense<0.000000e+00> : vector<64x16xf32>
    %61 = tpu.matmul %58, %60, %cst_28 {dimension_numbers = #tpu.dot_dimension_numbers<[1], [0], [0], [1], [0, 0, 1, 1], [], []>} : vector<64x16xbf16>, vector<16x16xbf16>, vector<64x16xf32> -> vector<64x16xf32>
    %62 = arith.addf %56, %61 : vector<64x16xf32>
    %63 = vector.extract_strided_slice %43 {offsets = [1, 0, 0], sizes = [8, 8, 16], strides = [1, 1, 1]} : vector<10x10x16xbf16> to vector<8x8x16xbf16>
    %64 = vector.shape_cast %63 : vector<8x8x16xbf16> to vector<64x16xbf16>
    %c12 = arith.constant 12 : index
    %c0_29 = arith.constant 0 : index
    %c0_30 = arith.constant 0 : index
    %65 = vector.load %arg6[%c12, %c0_29, %c0_30] : memref<27x16x16xbf16, #tpu.memory_space<vmem>>, vector<1x16x16xbf16>
    %66 = vector.shape_cast %65 : vector<1x16x16xbf16> to vector<16x16xbf16>
    %cst_31 = arith.constant dense<0.000000e+00> : vector<64x16xf32>
    %67 = tpu.matmul %64, %66, %cst_31 {dimension_numbers = #tpu.dot_dimension_numbers<[1], [0], [0], [1], [0, 0, 1, 1], [], []>} : vector<64x16xbf16>, vector<16x16xbf16>, vector<64x16xf32> -> vector<64x16xf32>
    %68 = arith.addf %62, %67 : vector<64x16xf32>
    %69 = vector.extract_strided_slice %43 {offsets = [1, 1, 0], sizes = [8, 8, 16], strides = [1, 1, 1]} : vector<10x10x16xbf16> to vector<8x8x16xbf16>
    %70 = vector.shape_cast %69 : vector<8x8x16xbf16> to vector<64x16xbf16>
    %c13 = arith.constant 13 : index
    %c0_32 = arith.constant 0 : index
    %c0_33 = arith.constant 0 : index
    %71 = vector.load %arg6[%c13, %c0_32, %c0_33] : memref<27x16x16xbf16, #tpu.memory_space<vmem>>, vector<1x16x16xbf16>
    %72 = vector.shape_cast %71 : vector<1x16x16xbf16> to vector<16x16xbf16>
    %cst_34 = arith.constant dense<0.000000e+00> : vector<64x16xf32>
    %73 = tpu.matmul %70, %72, %cst_34 {dimension_numbers = #tpu.dot_dimension_numbers<[1], [0], [0], [1], [0, 0, 1, 1], [], []>} : vector<64x16xbf16>, vector<16x16xbf16>, vector<64x16xf32> -> vector<64x16xf32>
    %74 = arith.addf %68, %73 : vector<64x16xf32>
    %75 = vector.extract_strided_slice %43 {offsets = [1, 2, 0], sizes = [8, 8, 16], strides = [1, 1, 1]} : vector<10x10x16xbf16> to vector<8x8x16xbf16>
    %76 = vector.shape_cast %75 : vector<8x8x16xbf16> to vector<64x16xbf16>
    %c14 = arith.constant 14 : index
    %c0_35 = arith.constant 0 : index
    %c0_36 = arith.constant 0 : index
    %77 = vector.load %arg6[%c14, %c0_35, %c0_36] : memref<27x16x16xbf16, #tpu.memory_space<vmem>>, vector<1x16x16xbf16>
    %78 = vector.shape_cast %77 : vector<1x16x16xbf16> to vector<16x16xbf16>
    %cst_37 = arith.constant dense<0.000000e+00> : vector<64x16xf32>
    %79 = tpu.matmul %76, %78, %cst_37 {dimension_numbers = #tpu.dot_dimension_numbers<[1], [0], [0], [1], [0, 0, 1, 1], [], []>} : vector<64x16xbf16>, vector<16x16xbf16>, vector<64x16xf32> -> vector<64x16xf32>
    %80 = arith.addf %74, %79 : vector<64x16xf32>
    %81 = vector.extract_strided_slice %43 {offsets = [2, 0, 0], sizes = [8, 8, 16], strides = [1, 1, 1]} : vector<10x10x16xbf16> to vector<8x8x16xbf16>
    %82 = vector.shape_cast %81 : vector<8x8x16xbf16> to vector<64x16xbf16>
    %c15 = arith.constant 15 : index
    %c0_38 = arith.constant 0 : index
    %c0_39 = arith.constant 0 : index
    %83 = vector.load %arg6[%c15, %c0_38, %c0_39] : memref<27x16x16xbf16, #tpu.memory_space<vmem>>, vector<1x16x16xbf16>
    %84 = vector.shape_cast %83 : vector<1x16x16xbf16> to vector<16x16xbf16>
    %cst_40 = arith.constant dense<0.000000e+00> : vector<64x16xf32>
    %85 = tpu.matmul %82, %84, %cst_40 {dimension_numbers = #tpu.dot_dimension_numbers<[1], [0], [0], [1], [0, 0, 1, 1], [], []>} : vector<64x16xbf16>, vector<16x16xbf16>, vector<64x16xf32> -> vector<64x16xf32>
    %86 = arith.addf %80, %85 : vector<64x16xf32>
    %87 = vector.extract_strided_slice %43 {offsets = [2, 1, 0], sizes = [8, 8, 16], strides = [1, 1, 1]} : vector<10x10x16xbf16> to vector<8x8x16xbf16>
    %88 = vector.shape_cast %87 : vector<8x8x16xbf16> to vector<64x16xbf16>
    %c16 = arith.constant 16 : index
    %c0_41 = arith.constant 0 : index
    %c0_42 = arith.constant 0 : index
    %89 = vector.load %arg6[%c16, %c0_41, %c0_42] : memref<27x16x16xbf16, #tpu.memory_space<vmem>>, vector<1x16x16xbf16>
    %90 = vector.shape_cast %89 : vector<1x16x16xbf16> to vector<16x16xbf16>
    %cst_43 = arith.constant dense<0.000000e+00> : vector<64x16xf32>
    %91 = tpu.matmul %88, %90, %cst_43 {dimension_numbers = #tpu.dot_dimension_numbers<[1], [0], [0], [1], [0, 0, 1, 1], [], []>} : vector<64x16xbf16>, vector<16x16xbf16>, vector<64x16xf32> -> vector<64x16xf32>
    %92 = arith.addf %86, %91 : vector<64x16xf32>
    %93 = vector.extract_strided_slice %43 {offsets = [2, 2, 0], sizes = [8, 8, 16], strides = [1, 1, 1]} : vector<10x10x16xbf16> to vector<8x8x16xbf16>
    %94 = vector.shape_cast %93 : vector<8x8x16xbf16> to vector<64x16xbf16>
    %c17 = arith.constant 17 : index
    %c0_44 = arith.constant 0 : index
    %c0_45 = arith.constant 0 : index
    %95 = vector.load %arg6[%c17, %c0_44, %c0_45] : memref<27x16x16xbf16, #tpu.memory_space<vmem>>, vector<1x16x16xbf16>
    %96 = vector.shape_cast %95 : vector<1x16x16xbf16> to vector<16x16xbf16>
    %cst_46 = arith.constant dense<0.000000e+00> : vector<64x16xf32>
    %97 = tpu.matmul %94, %96, %cst_46 {dimension_numbers = #tpu.dot_dimension_numbers<[1], [0], [0], [1], [0, 0, 1, 1], [], []>} : vector<64x16xbf16>, vector<16x16xbf16>, vector<64x16xf32> -> vector<64x16xf32>
    %98 = arith.addf %92, %97 : vector<64x16xf32>
    %c0_47 = arith.constant 0 : index
    %c0_48 = arith.constant 0 : index
    %99 = vector.load %arg14[%c0_47, %c0_48] : memref<64x16xf32, #tpu.memory_space<vmem>>, vector<64x16xf32>
    %100 = arith.addf %99, %98 : vector<64x16xf32>
    %c0_49 = arith.constant 0 : index
    %c0_50 = arith.constant 0 : index
    %101 = vector.load %arg14[%c0_49, %c0_50] : memref<64x16xf32, #tpu.memory_space<vmem>>, vector<64x16xf32>
    tpu.vector_store %arg14[%c0_49, %c0_50], %100 {strides = array<i32>} : memref<64x16xf32, #tpu.memory_space<vmem>>, vector<64x16xf32>,
    %c7_i32_51 = arith.constant 7 : i32
    %102 = arith.cmpi slt, %arg1, %c7_i32_51 : i32
    %103 = arith.extui %102 : i1 to i32
    %c0_i32_52 = arith.constant 0 : i32
    %104 = arith.cmpi ne, %103, %c0_i32_52 : i32
    scf.if %104 {
      %c2_i32 = arith.constant 2 : i32
      %137 = arith.addi %arg1, %c2_i32 : i32
      %c3_i32_78 = arith.constant 3 : i32
      %c0_i32_79 = arith.constant 0 : i32
      %138 = arith.cmpi eq, %c3_i32_78, %c0_i32_79 : i32
      %c1_i32_80 = arith.constant 1 : i32
      %139 = arith.select %138, %c1_i32_80, %c3_i32_78 : i32
      %140 = arith.remsi %137, %139 : i32
      %c0_i32_81 = arith.constant 0 : i32
      %141 = arith.cmpi ne, %140, %c0_i32_81 : i32
      %c0_i32_82 = arith.constant 0 : i32
      %142 = arith.cmpi slt, %140, %c0_i32_82 : i32
      %c0_i32_83 = arith.constant 0 : i32
      %143 = arith.cmpi slt, %139, %c0_i32_83 : i32
      %144 = arith.xori %142, %143 : i1
      %145 = arith.andi %144, %141 : i1
      %146 = arith.addi %140, %139 : i32
      %147 = arith.select %145, %146, %140 : i32
      %148 = arith.index_cast %147 : i32 to index
      %c0_84 = arith.constant 0 : index
      %c0_85 = arith.constant 0 : index
      %c0_86 = arith.constant 0 : index
      %149 = vector.load %arg13[%148, %c0_84, %c0_85, %c0_86] : memref<3x10x10x16xbf16, #tpu.memory_space<vmem>>, vector<1x10x10x16xbf16>
      %150 = vector.shape_cast %149 : vector<1x10x10x16xbf16> to vector<10x10x16xbf16>
      %cst_87 = arith.constant 0.000000e+00 : f32
      %151 = vector.broadcast %cst_87 : f32 to vector<64x16xf32>
      %152 = vector.extract_strided_slice %150 {offsets = [0, 0, 0], sizes = [8, 8, 16], strides = [1, 1, 1]} : vector<10x10x16xbf16> to vector<8x8x16xbf16>
      %153 = vector.shape_cast %152 : vector<8x8x16xbf16> to vector<64x16xbf16>
      %c18 = arith.constant 18 : index
      %c0_88 = arith.constant 0 : index
      %c0_89 = arith.constant 0 : index
      %154 = vector.load %arg6[%c18, %c0_88, %c0_89] : memref<27x16x16xbf16, #tpu.memory_space<vmem>>, vector<1x16x16xbf16>
      %155 = vector.shape_cast %154 : vector<1x16x16xbf16> to vector<16x16xbf16>
      %cst_90 = arith.constant dense<0.000000e+00> : vector<64x16xf32>
      %156 = tpu.matmul %153, %155, %cst_90 {dimension_numbers = #tpu.dot_dimension_numbers<[1], [0], [0], [1], [0, 0, 1, 1], [], []>} : vector<64x16xbf16>, vector<16x16xbf16>, vector<64x16xf32> -> vector<64x16xf32>
      %157 = arith.addf %151, %156 : vector<64x16xf32>
      %158 = vector.extract_strided_slice %150 {offsets = [0, 1, 0], sizes = [8, 8, 16], strides = [1, 1, 1]} : vector<10x10x16xbf16> to vector<8x8x16xbf16>
      %159 = vector.shape_cast %158 : vector<8x8x16xbf16> to vector<64x16xbf16>
      %c19 = arith.constant 19 : index
      %c0_91 = arith.constant 0 : index
      %c0_92 = arith.constant 0 : index
      %160 = vector.load %arg6[%c19, %c0_91, %c0_92] : memref<27x16x16xbf16, #tpu.memory_space<vmem>>, vector<1x16x16xbf16>
      %161 = vector.shape_cast %160 : vector<1x16x16xbf16> to vector<16x16xbf16>
      %cst_93 = arith.constant dense<0.000000e+00> : vector<64x16xf32>
      %162 = tpu.matmul %159, %161, %cst_93 {dimension_numbers = #tpu.dot_dimension_numbers<[1], [0], [0], [1], [0, 0, 1, 1], [], []>} : vector<64x16xbf16>, vector<16x16xbf16>, vector<64x16xf32> -> vector<64x16xf32>
      %163 = arith.addf %157, %162 : vector<64x16xf32>
      %164 = vector.extract_strided_slice %150 {offsets = [0, 2, 0], sizes = [8, 8, 16], strides = [1, 1, 1]} : vector<10x10x16xbf16> to vector<8x8x16xbf16>
      %165 = vector.shape_cast %164 : vector<8x8x16xbf16> to vector<64x16xbf16>
      %c20 = arith.constant 20 : index
      %c0_94 = arith.constant 0 : index
      %c0_95 = arith.constant 0 : index
      %166 = vector.load %arg6[%c20, %c0_94, %c0_95] : memref<27x16x16xbf16, #tpu.memory_space<vmem>>, vector<1x16x16xbf16>
      %167 = vector.shape_cast %166 : vector<1x16x16xbf16> to vector<16x16xbf16>
      %cst_96 = arith.constant dense<0.000000e+00> : vector<64x16xf32>
      %168 = tpu.matmul %165, %167, %cst_96 {dimension_numbers = #tpu.dot_dimension_numbers<[1], [0], [0], [1], [0, 0, 1, 1], [], []>} : vector<64x16xbf16>, vector<16x16xbf16>, vector<64x16xf32> -> vector<64x16xf32>
      %169 = arith.addf %163, %168 : vector<64x16xf32>
      %170 = vector.extract_strided_slice %150 {offsets = [1, 0, 0], sizes = [8, 8, 16], strides = [1, 1, 1]} : vector<10x10x16xbf16> to vector<8x8x16xbf16>
      %171 = vector.shape_cast %170 : vector<8x8x16xbf16> to vector<64x16xbf16>
      %c21 = arith.constant 21 : index
      %c0_97 = arith.constant 0 : index
      %c0_98 = arith.constant 0 : index
      %172 = vector.load %arg6[%c21, %c0_97, %c0_98] : memref<27x16x16xbf16, #tpu.memory_space<vmem>>, vector<1x16x16xbf16>
      %173 = vector.shape_cast %172 : vector<1x16x16xbf16> to vector<16x16xbf16>
      %cst_99 = arith.constant dense<0.000000e+00> : vector<64x16xf32>
      %174 = tpu.matmul %171, %173, %cst_99 {dimension_numbers = #tpu.dot_dimension_numbers<[1], [0], [0], [1], [0, 0, 1, 1], [], []>} : vector<64x16xbf16>, vector<16x16xbf16>, vector<64x16xf32> -> vector<64x16xf32>
      %175 = arith.addf %169, %174 : vector<64x16xf32>
      %176 = vector.extract_strided_slice %150 {offsets = [1, 1, 0], sizes = [8, 8, 16], strides = [1, 1, 1]} : vector<10x10x16xbf16> to vector<8x8x16xbf16>
      %177 = vector.shape_cast %176 : vector<8x8x16xbf16> to vector<64x16xbf16>
      %c22 = arith.constant 22 : index
      %c0_100 = arith.constant 0 : index
      %c0_101 = arith.constant 0 : index
      %178 = vector.load %arg6[%c22, %c0_100, %c0_101] : memref<27x16x16xbf16, #tpu.memory_space<vmem>>, vector<1x16x16xbf16>
      %179 = vector.shape_cast %178 : vector<1x16x16xbf16> to vector<16x16xbf16>
      %cst_102 = arith.constant dense<0.000000e+00> : vector<64x16xf32>
      %180 = tpu.matmul %177, %179, %cst_102 {dimension_numbers = #tpu.dot_dimension_numbers<[1], [0], [0], [1], [0, 0, 1, 1], [], []>} : vector<64x16xbf16>, vector<16x16xbf16>, vector<64x16xf32> -> vector<64x16xf32>
      %181 = arith.addf %175, %180 : vector<64x16xf32>
      %182 = vector.extract_strided_slice %150 {offsets = [1, 2, 0], sizes = [8, 8, 16], strides = [1, 1, 1]} : vector<10x10x16xbf16> to vector<8x8x16xbf16>
      %183 = vector.shape_cast %182 : vector<8x8x16xbf16> to vector<64x16xbf16>
      %c23 = arith.constant 23 : index
      %c0_103 = arith.constant 0 : index
      %c0_104 = arith.constant 0 : index
      %184 = vector.load %arg6[%c23, %c0_103, %c0_104] : memref<27x16x16xbf16, #tpu.memory_space<vmem>>, vector<1x16x16xbf16>
      %185 = vector.shape_cast %184 : vector<1x16x16xbf16> to vector<16x16xbf16>
      %cst_105 = arith.constant dense<0.000000e+00> : vector<64x16xf32>
      %186 = tpu.matmul %183, %185, %cst_105 {dimension_numbers = #tpu.dot_dimension_numbers<[1], [0], [0], [1], [0, 0, 1, 1], [], []>} : vector<64x16xbf16>, vector<16x16xbf16>, vector<64x16xf32> -> vector<64x16xf32>
      %187 = arith.addf %181, %186 : vector<64x16xf32>
      %188 = vector.extract_strided_slice %150 {offsets = [2, 0, 0], sizes = [8, 8, 16], strides = [1, 1, 1]} : vector<10x10x16xbf16> to vector<8x8x16xbf16>
      %189 = vector.shape_cast %188 : vector<8x8x16xbf16> to vector<64x16xbf16>
      %c24 = arith.constant 24 : index
      %c0_106 = arith.constant 0 : index
      %c0_107 = arith.constant 0 : index
      %190 = vector.load %arg6[%c24, %c0_106, %c0_107] : memref<27x16x16xbf16, #tpu.memory_space<vmem>>, vector<1x16x16xbf16>
      %191 = vector.shape_cast %190 : vector<1x16x16xbf16> to vector<16x16xbf16>
      %cst_108 = arith.constant dense<0.000000e+00> : vector<64x16xf32>
      %192 = tpu.matmul %189, %191, %cst_108 {dimension_numbers = #tpu.dot_dimension_numbers<[1], [0], [0], [1], [0, 0, 1, 1], [], []>} : vector<64x16xbf16>, vector<16x16xbf16>, vector<64x16xf32> -> vector<64x16xf32>
      %193 = arith.addf %187, %192 : vector<64x16xf32>
      %194 = vector.extract_strided_slice %150 {offsets = [2, 1, 0], sizes = [8, 8, 16], strides = [1, 1, 1]} : vector<10x10x16xbf16> to vector<8x8x16xbf16>
      %195 = vector.shape_cast %194 : vector<8x8x16xbf16> to vector<64x16xbf16>
      %c25 = arith.constant 25 : index
      %c0_109 = arith.constant 0 : index
      %c0_110 = arith.constant 0 : index
      %196 = vector.load %arg6[%c25, %c0_109, %c0_110] : memref<27x16x16xbf16, #tpu.memory_space<vmem>>, vector<1x16x16xbf16>
      %197 = vector.shape_cast %196 : vector<1x16x16xbf16> to vector<16x16xbf16>
      %cst_111 = arith.constant dense<0.000000e+00> : vector<64x16xf32>
      %198 = tpu.matmul %195, %197, %cst_111 {dimension_numbers = #tpu.dot_dimension_numbers<[1], [0], [0], [1], [0, 0, 1, 1], [], []>} : vector<64x16xbf16>, vector<16x16xbf16>, vector<64x16xf32> -> vector<64x16xf32>
      %199 = arith.addf %193, %198 : vector<64x16xf32>
      %200 = vector.extract_strided_slice %150 {offsets = [2, 2, 0], sizes = [8, 8, 16], strides = [1, 1, 1]} : vector<10x10x16xbf16> to vector<8x8x16xbf16>
      %201 = vector.shape_cast %200 : vector<8x8x16xbf16> to vector<64x16xbf16>
      %c26 = arith.constant 26 : index
      %c0_112 = arith.constant 0 : index
      %c0_113 = arith.constant 0 : index
      %202 = vector.load %arg6[%c26, %c0_112, %c0_113] : memref<27x16x16xbf16, #tpu.memory_space<vmem>>, vector<1x16x16xbf16>
      %203 = vector.shape_cast %202 : vector<1x16x16xbf16> to vector<16x16xbf16>
      %cst_114 = arith.constant dense<0.000000e+00> : vector<64x16xf32>
      %204 = tpu.matmul %201, %203, %cst_114 {dimension_numbers = #tpu.dot_dimension_numbers<[1], [0], [0], [1], [0, 0, 1, 1], [], []>} : vector<64x16xbf16>, vector<16x16xbf16>, vector<64x16xf32> -> vector<64x16xf32>
      %205 = arith.addf %199, %204 : vector<64x16xf32>
      %c0_115 = arith.constant 0 : index
      %c0_116 = arith.constant 0 : index
      %206 = vector.load %arg14[%c0_115, %c0_116] : memref<64x16xf32, #tpu.memory_space<vmem>>, vector<64x16xf32>
      %207 = arith.addf %206, %205 : vector<64x16xf32>
      %c0_117 = arith.constant 0 : index
      %c0_118 = arith.constant 0 : index
      %208 = vector.load %arg14[%c0_117, %c0_118] : memref<64x16xf32, #tpu.memory_space<vmem>>, vector<64x16xf32>
      tpu.vector_store %arg14[%c0_117, %c0_118], %207 {strides = array<i32>} : memref<64x16xf32, #tpu.memory_space<vmem>>, vector<64x16xf32>,
    } else {
    }
    %c0_53 = arith.constant 0 : index
    %c0_54 = arith.constant 0 : index
    %105 = vector.load %arg14[%c0_53, %c0_54] : memref<64x16xf32, #tpu.memory_space<vmem>>, vector<64x16xf32>
    %c0_55 = arith.constant 0 : index
    %c0_56 = arith.constant 0 : index
    %106 = vector.load %arg7[%c0_55, %c0_56] : memref<1x16xf32, #tpu.memory_space<vmem>>, vector<1x16xf32>
    %107 = vector.broadcast %106 : vector<1x16xf32> to vector<64x16xf32>
    %108 = arith.mulf %105, %107 : vector<64x16xf32>
    %c0_57 = arith.constant 0 : index
    %c0_58 = arith.constant 0 : index
    %109 = vector.load %arg8[%c0_57, %c0_58] : memref<1x16xf32, #tpu.memory_space<vmem>>, vector<1x16xf32>
    %110 = vector.broadcast %109 : vector<1x16xf32> to vector<64x16xf32>
    %111 = arith.addf %108, %110 : vector<64x16xf32>
    %cst_59 = arith.constant 0.000000e+00 : f32
    %112 = vector.broadcast %cst_59 : f32 to vector<64x16xf32>
    %113 = arith.maximumf %111, %112 : vector<64x16xf32>
    %114 = arith.truncf %113 : vector<64x16xf32> to vector<64x16xbf16>
    %c0_60 = arith.constant 0 : index
    %c0_61 = arith.constant 0 : index
    %115 = vector.load %arg9[%c0_60, %c0_61] : memref<16x32xbf16, #tpu.memory_space<vmem>>, vector<16x32xbf16>
    %cst_62 = arith.constant dense<0.000000e+00> : vector<64x32xf32>
    %116 = tpu.matmul %114, %115, %cst_62 {dimension_numbers = #tpu.dot_dimension_numbers<[1], [0], [0], [1], [0, 0, 1, 1], [], []>} : vector<64x16xbf16>, vector<16x32xbf16>, vector<64x32xf32> -> vector<64x32xf32>
    %c0_63 = arith.constant 0 : index
    %c0_64 = arith.constant 0 : index
    %117 = vector.load %arg10[%c0_63, %c0_64] : memref<1x32xf32, #tpu.memory_space<vmem>>, vector<1x32xf32>
    %118 = vector.broadcast %117 : vector<1x32xf32> to vector<64x32xf32>
    %119 = arith.mulf %116, %118 : vector<64x32xf32>
    %c0_65 = arith.constant 0 : index
    %c0_66 = arith.constant 0 : index
    %120 = vector.load %arg11[%c0_65, %c0_66] : memref<1x32xf32, #tpu.memory_space<vmem>>, vector<1x32xf32>
    %121 = vector.broadcast %120 : vector<1x32xf32> to vector<64x32xf32>
    %122 = arith.addf %119, %121 : vector<64x32xf32>
    %c1_i32_67 = arith.constant 1 : i32
    %123 = arith.addi %arg1, %c1_i32_67 : i32
    %c0_68 = arith.constant 0 : index
    %124 = arith.index_cast %123 : i32 to index
    %c0_69 = arith.constant 0 : index
    %c0_70 = arith.constant 0 : index
    %c0_71 = arith.constant 0 : index
    %125 = vector.load %arg2[%c0_68, %124, %c0_69, %c0_70, %c0_71] : memref<1x10x10x10x32xbf16, #tpu.memory_space<vmem>>, vector<1x1x10x10x32xbf16>
    %126 = vector.shape_cast %125 : vector<1x1x10x10x32xbf16> to vector<10x10x32xbf16>
    %127 = vector.extract_strided_slice %126 {offsets = [1, 1, 0], sizes = [8, 8, 32], strides = [1, 1, 1]} : vector<10x10x32xbf16> to vector<8x8x32xbf16>
    %128 = vector.shape_cast %127 : vector<8x8x32xbf16> to vector<64x32xbf16>
    %129 = arith.extf %128 : vector<64x32xbf16> to vector<64x32xf32>
    %130 = arith.addf %122, %129 : vector<64x32xf32>
    %cst_72 = arith.constant 0.000000e+00 : f32
    %131 = vector.broadcast %cst_72 : f32 to vector<64x32xf32>
    %132 = arith.maximumf %130, %131 : vector<64x32xf32>
    %133 = vector.shape_cast %132 : vector<64x32xf32> to vector<8x8x32xf32>
    %c0_73 = arith.constant 0 : index
    %c0_74 = arith.constant 0 : index
    %c0_75 = arith.constant 0 : index
    %c0_76 = arith.constant 0 : index
    %c0_77 = arith.constant 0 : index
    %134 = vector.load %arg12[%c0_73, %c0_74, %c0_75, %c0_76, %c0_77] : memref<1x1x8x8x32xf32, #tpu.memory_space<vmem>>, vector<1x1x8x8x32xf32>
    %135 = vector.shape_cast %134 : vector<1x1x8x8x32xf32> to vector<8x8x32xf32>
    %136 = vector.shape_cast %133 : vector<8x8x32xf32> to vector<1x1x8x8x32xf32>
    tpu.vector_store %arg12[%c0_73, %c0_74, %c0_75, %c0_76, %c0_77], %136 {strides = array<i32>} : memref<1x1x8x8x32xf32, #tpu.memory_space<vmem>>, vector<1x1x8x8x32xf32>,
    return
  }
  func.func @transform_0(%arg0: i32, %arg1: i32) -> (i32, i32, i32, i32, i32) {
    %c0_i32 = arith.constant 0 : i32
    %c0_i32_0 = arith.constant 0 : i32
    %c0_i32_1 = arith.constant 0 : i32
    %c0_i32_2 = arith.constant 0 : i32
    %c0_i32_3 = arith.constant 0 : i32
    return %arg0, %c0_i32, %c0_i32_0, %c0_i32_1, %c0_i32_2 : i32, i32, i32, i32, i32
  }
  func.func @transform_1(%arg0: i32, %arg1: i32) -> (i32, i32) {
    %c0_i32 = arith.constant 0 : i32
    %c0_i32_0 = arith.constant 0 : i32
    %c0_i32_1 = arith.constant 0 : i32
    return %c0_i32, %c0_i32_0 : i32, i32
  }
  func.func @transform_2(%arg0: i32, %arg1: i32) -> (i32, i32) {
    %c0_i32 = arith.constant 0 : i32
    %c0_i32_0 = arith.constant 0 : i32
    %c0_i32_1 = arith.constant 0 : i32
    return %c0_i32, %c0_i32_0 : i32, i32
  }
  func.func @transform_3(%arg0: i32, %arg1: i32) -> (i32, i32) {
    %c0_i32 = arith.constant 0 : i32
    %c0_i32_0 = arith.constant 0 : i32
    %c0_i32_1 = arith.constant 0 : i32
    return %c0_i32, %c0_i32_0 : i32, i32
  }
  func.func @transform_4(%arg0: i32, %arg1: i32) -> (i32, i32, i32) {
    %c0_i32 = arith.constant 0 : i32
    %c0_i32_0 = arith.constant 0 : i32
    %c0_i32_1 = arith.constant 0 : i32
    %c0_i32_2 = arith.constant 0 : i32
    return %c0_i32, %c0_i32_0, %c0_i32_1 : i32, i32, i32
  }
  func.func @transform_5(%arg0: i32, %arg1: i32) -> (i32, i32) {
    %c0_i32 = arith.constant 0 : i32
    %c0_i32_0 = arith.constant 0 : i32
    %c0_i32_1 = arith.constant 0 : i32
    return %c0_i32, %c0_i32_0 : i32, i32
  }
  func.func @transform_6(%arg0: i32, %arg1: i32) -> (i32, i32) {
    %c0_i32 = arith.constant 0 : i32
    %c0_i32_0 = arith.constant 0 : i32
    %c0_i32_1 = arith.constant 0 : i32
    return %c0_i32, %c0_i32_0 : i32, i32
  }
  func.func @transform_7(%arg0: i32, %arg1: i32) -> (i32, i32) {
    %c0_i32 = arith.constant 0 : i32
    %c0_i32_0 = arith.constant 0 : i32
    %c0_i32_1 = arith.constant 0 : i32
    return %c0_i32, %c0_i32_0 : i32, i32
  }
  func.func @transform_8(%arg0: i32, %arg1: i32) -> (i32, i32) {
    %c0_i32 = arith.constant 0 : i32
    %c0_i32_0 = arith.constant 0 : i32
    %c0_i32_1 = arith.constant 0 : i32
    return %c0_i32, %c0_i32_0 : i32, i32
  }
  func.func @transform_9(%arg0: i32, %arg1: i32) -> (i32, i32) {
    %c0_i32 = arith.constant 0 : i32
    %c0_i32_0 = arith.constant 0 : i32
    %c0_i32_1 = arith.constant 0 : i32
    return %c0_i32, %c0_i32_0 : i32, i32
  }
  func.func @transform_10(%arg0: i32, %arg1: i32) -> (i32, i32, i32, i32, i32) {
    %c0_i32 = arith.constant 0 : i32
    %c0_i32_0 = arith.constant 0 : i32
    %c0_i32_1 = arith.constant 0 : i32
    %c0_i32_2 = arith.constant 0 : i32
    return %arg0, %arg1, %c0_i32, %c0_i32_0, %c0_i32_1 : i32, i32, i32, i32, i32
  }
}

</mosaic_0001>

<llo_original>
// kernel: resblock3d_forward.1
$region0: #{resblock3d_forward.1}
  #allocation0 [shape = 'u32[]', space=smem, size = 0x4, offset = 0x4, fixed_abs, tag = 'smem constant byte address 0x4 - core index']
  #allocation1 [shape = 'u32[144,128]{1,0:T(1,128)}', space=vmem, size = 0x12000, scoped, tag = 'internal scratch']
  #allocation2 [shape = 'bf16[3,10,10,16]{3,2,1,0:T(8,128)(2,1)}', space=vmem, size = 0x1e000, scoped, tag = 'scratch operand']
  #allocation3 [shape = 'f32[64,16]{1,0:T(8,128)}', space=vmem, size = 0x8000, scoped, tag = 'scratch operand']
  %s0 = inlined_call_operand.vmem [shape: bf16[2,10,10,10,32], index: 0, kind: input, shape index: {}]
  %s1 = inlined_call_operand.vmem [shape: bf16[32,16], index: 1, kind: input, shape index: {}]
  %s2 = inlined_call_operand.vmem [shape: f32[1,16], index: 2, kind: input, shape index: {}]
  %s3 = inlined_call_operand.vmem [shape: f32[1,16], index: 3, kind: input, shape index: {}]
  %s4 = inlined_call_operand.vmem [shape: bf16[27,16,16], index: 4, kind: input, shape index: {}]
  %s5 = inlined_call_operand.vmem [shape: f32[1,16], index: 5, kind: input, shape index: {}]
  %s6 = inlined_call_operand.vmem [shape: f32[1,16], index: 6, kind: input, shape index: {}]
  %s7 = inlined_call_operand.vmem [shape: bf16[16,32], index: 7, kind: input, shape index: {}]
  %s8 = inlined_call_operand.vmem [shape: f32[1,32], index: 8, kind: input, shape index: {}]
  %s9 = inlined_call_operand.vmem [shape: f32[1,32], index: 9, kind: input, shape index: {}]
  %s10 = inlined_call_operand.hbm [shape: f32[2,8,8,8,32], index: 10, kind: output, shape index: {}]
  %s11 = sld [smem:[#allocation0]]
  $region93: #{resblock3d_forward.1} parent=0
    _
  %s13 = ssub.s32 1, %s11
  %s14 = scalar_select 0, %s13, %s11
  $region1: #{resblock3d_forward.1} parent=0
    #allocation4 [shape = 'u8[65536]{0}', space=vmem, size = 0x10000, scoped, tag = 'output window, operand 0']
    #allocation5 [shape = 's32[2]{0}', space=sflag, size = 0x8, scoped, tag = 'scoped memory for resblock3d_forward.1']
    %15 = vsyncpa [#allocation5], 0
    %s16 = scalar_lea.sflag [#allocation5], 1
    %17 = vsyncpa %s16, 0
    loop: start=0, step=1, limit=18
    $region2: #{resblock3d_forward.1} parent=1 // loop_pre_header
      _
    $region3: #{resblock3d_forward.1} parent=1 // loop_header
      %s19 = sphi 0, %s23
      %p20 = scmp.ge.s32.totalorder %s19, 18
      %s26 = sphi 0, %s38
      %s27 = sphi 0, %s34
      %s28 = sphi 0, %s26
      %s29 = sphi 0, %s27
      %s30 = sphi 0, %s28
      %s31 = sphi 0, %s29
      %s41 = sphi 0, %s43
      %s44 = sphi 0, %s41
      %s45 = sphi 0, %s44
      %s61 = sphi 0, %s45
      %s65 = sphi 0, %s65
      %s67 = sphi 0, %s65
      %s68 = sphi 0, %s67
      %s82 = sphi 0, %s68
      %s86 = sphi 0, %s86
      %s88 = sphi 0, %s86
      %s89 = sphi 0, %s88
      %s103 = sphi 0, %s89
      %s107 = sphi 0, %s107
      %s109 = sphi 0, %s107
      %s110 = sphi 0, %s109
      %s124 = sphi 0, %s110
      %s128 = sphi 0, %s128
      %s130 = sphi 0, %s128
      %s131 = sphi 0, %s130
      %s145 = sphi 0, %s131
      %s149 = sphi 0, %s149
      %s151 = sphi 0, %s149
      %s152 = sphi 0, %s151
      %s166 = sphi 0, %s152
      %s170 = sphi 0, %s170
      %s172 = sphi 0, %s170
      %s173 = sphi 0, %s172
      %s187 = sphi 0, %s173
      %s191 = sphi 0, %s191
      %s193 = sphi 0, %s191
      %s194 = sphi 0, %s193
      %s208 = sphi 0, %s194
      %s212 = sphi 0, %s212
      %s214 = sphi 0, %s212
      %s215 = sphi 0, %s214
      %s229 = sphi 0, %s215
      %s233 = sphi 0, %s233
      %s235 = sphi 0, %s233
      %s236 = sphi 0, %s235
      %s250 = sphi 0, %s236
      %s258 = sphi 0, %s260
      %s261 = sphi 0, %s258
      %s262 = sphi 0, %s261
      %s278 = sphi 0, %s262
    $region4: #{resblock3d_forward.1} parent=1 // loop_header_branch
      %22 = sbr.rel (%p20) target = $region8
    $region5: #{resblock3d_forward.1} parent=1 // loop_body
      %s24 = ssub.s32 %s19, 1
      %s25 = ssub.s32 %s19, 2
      %s32 = sadd.s32 1, %s27
      %p33 = scmp.ge.s32.totalorder %s32, 8
      %s34 = scalar_select %p33, 0, %s32
      %s35 = sadd.s32 1, %s26
      %s36 = scalar_select %p33, %s35, %s26
      %p37 = scmp.ge.s32.totalorder %s36, 2
      %s38 = scalar_select %p37, 0, %s36
      %s39 = ssub.s32 %s26, %s38
      %p40 = scmp.eq.s32.totalorder %s39, 0
      %s42 = sadd.s32 %s41, 1
      %s43 = scalar_select %p40, %s41, %s42
      %p46 = pneg %p40
      %p47 = scmp.eq.s32.totalorder %s19, 15
      %p48 = por %p46, %p47
      %p49 = scmp.ne.s32.totalorder %s41, %s44
      %p50 = scmp.eq.s32.totalorder %s19, 0
      %p51 = por %p49, %p50
      %p52 = scmp.ne.s32.totalorder %s41, %s44
      %p53 = scmp.eq.s32.totalorder %s24, 15
      %p54 = por %p52, %p53
      %p55 = scmp.ne.s32.totalorder %s44, %s45
      %p56 = scmp.eq.s32.totalorder %s24, 0
      %p57 = por %p55, %p56
      %p58 = scmp.ne.s32.totalorder %s44, %s45
      %p59 = scmp.eq.s32.totalorder %s25, 15
      %p60 = por %p58, %p59
      %p62 = scmp.ne.s32.totalorder %s45, %s61
      %p63 = scmp.eq.s32.totalorder %s25, 0
      %p64 = por %p62, %p63
      %s66 = sadd.s32 %s65, 1
      %p69 = scmp.eq.s32.totalorder %s19, 15
      %p70 = scmp.ne.s32.totalorder %s65, %s67
      %p71 = scmp.eq.s32.totalorder %s19, 0
      %p72 = por %p70, %p71
      %p73 = scmp.ne.s32.totalorder %s65, %s67
      %p74 = scmp.eq.s32.totalorder %s24, 15
      %p75 = por %p73, %p74
      %p76 = scmp.ne.s32.totalorder %s67, %s68
      %p77 = scmp.eq.s32.totalorder %s24, 0
      %p78 = por %p76, %p77
      %p79 = scmp.ne.s32.totalorder %s67, %s68
      %p80 = scmp.eq.s32.totalorder %s25, 15
      %p81 = por %p79, %p80
      %p83 = scmp.ne.s32.totalorder %s68, %s82
      %p84 = scmp.eq.s32.totalorder %s25, 0
      %p85 = por %p83, %p84
      %s87 = sadd.s32 %s86, 1
      %p90 = scmp.eq.s32.totalorder %s19, 15
      %p91 = scmp.ne.s32.totalorder %s86, %s88
      %p92 = scmp.eq.s32.totalorder %s19, 0
      %p93 = por %p91, %p92
      %p94 = scmp.ne.s32.totalorder %s86, %s88
      %p95 = scmp.eq.s32.totalorder %s24, 15
      %p96 = por %p94, %p95
      %p97 = scmp.ne.s32.totalorder %s88, %s89
      %p98 = scmp.eq.s32.totalorder %s24, 0
      %p99 = por %p97, %p98
      %p100 = scmp.ne.s32.totalorder %s88, %s89
      %p101 = scmp.eq.s32.totalorder %s25, 15
      %p102 = por %p100, %p101
      %p104 = scmp.ne.s32.totalorder %s89, %s103
      %p105 = scmp.eq.s32.totalorder %s25, 0
      %p106 = por %p104, %p105
      %s108 = sadd.s32 %s107, 1
      %p111 = scmp.eq.s32.totalorder %s19, 15
      %p112 = scmp.ne.s32.totalorder %s107, %s109
      %p113 = scmp.eq.s32.totalorder %s19, 0
      %p114 = por %p112, %p113
      %p115 = scmp.ne.s32.totalorder %s107, %s109
      %p116 = scmp.eq.s32.totalorder %s24, 15
      %p117 = por %p115, %p116
      %p118 = scmp.ne.s32.totalorder %s109, %s110
      %p119 = scmp.eq.s32.totalorder %s24, 0
      %p120 = por %p118, %p119
      %p121 = scmp.ne.s32.totalorder %s109, %s110
      %p122 = scmp.eq.s32.totalorder %s25, 15
      %p123 = por %p121, %p122
      %p125 = scmp.ne.s32.totalorder %s110, %s124
      %p126 = scmp.eq.s32.totalorder %s25, 0
      %p127 = por %p125, %p126
      %s129 = sadd.s32 %s128, 1
      %p132 = scmp.eq.s32.totalorder %s19, 15
      %p133 = scmp.ne.s32.totalorder %s128, %s130
      %p134 = scmp.eq.s32.totalorder %s19, 0
      %p135 = por %p133, %p134
      %p136 = scmp.ne.s32.totalorder %s128, %s130
      %p137 = scmp.eq.s32.totalorder %s24, 15
      %p138 = por %p136, %p137
      %p139 = scmp.ne.s32.totalorder %s130, %s131
      %p140 = scmp.eq.s32.totalorder %s24, 0
      %p141 = por %p139, %p140
      %p142 = scmp.ne.s32.totalorder %s130, %s131
      %p143 = scmp.eq.s32.totalorder %s25, 15
      %p144 = por %p142, %p143
      %p146 = scmp.ne.s32.totalorder %s131, %s145
      %p147 = scmp.eq.s32.totalorder %s25, 0
      %p148 = por %p146, %p147
      %s150 = sadd.s32 %s149, 1
      %p153 = scmp.eq.s32.totalorder %s19, 15
      %p154 = scmp.ne.s32.totalorder %s149, %s151
      %p155 = scmp.eq.s32.totalorder %s19, 0
      %p156 = por %p154, %p155
      %p157 = scmp.ne.s32.totalorder %s149, %s151
      %p158 = scmp.eq.s32.totalorder %s24, 15
      %p159 = por %p157, %p158
      %p160 = scmp.ne.s32.totalorder %s151, %s152
      %p161 = scmp.eq.s32.totalorder %s24, 0
      %p162 = por %p160, %p161
      %p163 = scmp.ne.s32.totalorder %s151, %s152
      %p164 = scmp.eq.s32.totalorder %s25, 15
      %p165 = por %p163, %p164
      %p167 = scmp.ne.s32.totalorder %s152, %s166
      %p168 = scmp.eq.s32.totalorder %s25, 0
      %p169 = por %p167, %p168
      %s171 = sadd.s32 %s170, 1
      %p174 = scmp.eq.s32.totalorder %s19, 15
      %p175 = scmp.ne.s32.totalorder %s170, %s172
      %p176 = scmp.eq.s32.totalorder %s19, 0
      %p177 = por %p175, %p176
      %p178 = scmp.ne.s32.totalorder %s170, %s172
      %p179 = scmp.eq.s32.totalorder %s24, 15
      %p180 = por %p178, %p179
      %p181 = scmp.ne.s32.totalorder %s172, %s173
      %p182 = scmp.eq.s32.totalorder %s24, 0
      %p183 = por %p181, %p182
      %p184 = scmp.ne.s32.totalorder %s172, %s173
      %p185 = scmp.eq.s32.totalorder %s25, 15
      %p186 = por %p184, %p185
      %p188 = scmp.ne.s32.totalorder %s173, %s187
      %p189 = scmp.eq.s32.totalorder %s25, 0
      %p190 = por %p188, %p189
      %s192 = sadd.s32 %s191, 1
      %p195 = scmp.eq.s32.totalorder %s19, 15
      %p196 = scmp.ne.s32.totalorder %s191, %s193
      %p197 = scmp.eq.s32.totalorder %s19, 0
      %p198 = por %p196, %p197
      %p199 = scmp.ne.s32.totalorder %s191, %s193
      %p200 = scmp.eq.s32.totalorder %s24, 15
      %p201 = por %p199, %p200
      %p202 = scmp.ne.s32.totalorder %s193, %s194
      %p203 = scmp.eq.s32.totalorder %s24, 0
      %p204 = por %p202, %p203
      %p205 = scmp.ne.s32.totalorder %s193, %s194
      %p206 = scmp.eq.s32.totalorder %s25, 15
      %p207 = por %p205, %p206
      %p209 = scmp.ne.s32.totalorder %s194, %s208
      %p210 = scmp.eq.s32.totalorder %s25, 0
      %p211 = por %p209, %p210
      %s213 = sadd.s32 %s212, 1
      %p216 = scmp.eq.s32.totalorder %s19, 15
      %p217 = scmp.ne.s32.totalorder %s212, %s214
      %p218 = scmp.eq.s32.totalorder %s19, 0
      %p219 = por %p217, %p218
      %p220 = scmp.ne.s32.totalorder %s212, %s214
      %p221 = scmp.eq.s32.totalorder %s24, 15
      %p222 = por %p220, %p221
      %p223 = scmp.ne.s32.totalorder %s214, %s215
      %p224 = scmp.eq.s32.totalorder %s24, 0
      %p225 = por %p223, %p224
      %p226 = scmp.ne.s32.totalorder %s214, %s215
      %p227 = scmp.eq.s32.totalorder %s25, 15
      %p228 = por %p226, %p227
      %p230 = scmp.ne.s32.totalorder %s215, %s229
      %p231 = scmp.eq.s32.totalorder %s25, 0
      %p232 = por %p230, %p231
      %s234 = sadd.s32 %s233, 1
      %p237 = scmp.eq.s32.totalorder %s19, 15
      %p238 = scmp.ne.s32.totalorder %s233, %s235
      %p239 = scmp.eq.s32.totalorder %s19, 0
      %p240 = por %p238, %p239
      %p241 = scmp.ne.s32.totalorder %s233, %s235
      %p242 = scmp.eq.s32.totalorder %s24, 15
      %p243 = por %p241, %p242
      %p244 = scmp.ne.s32.totalorder %s235, %s236
      %p245 = scmp.eq.s32.totalorder %s24, 0
      %p246 = por %p244, %p245
      %p247 = scmp.ne.s32.totalorder %s235, %s236
      %p248 = scmp.eq.s32.totalorder %s25, 15
      %p249 = por %p247, %p248
      %p251 = scmp.ne.s32.totalorder %s236, %s250
      %p252 = scmp.eq.s32.totalorder %s25, 0
      %p253 = por %p251, %p252
      %s254 = ssub.s32 %s26, %s38
      %s255 = ssub.s32 %s27, %s34
      %s256 = sor.u32 %s254, %s255
      %p257 = scmp.eq.s32.totalorder %s256, 0
      %s259 = sadd.s32 %s258, 1
      %s260 = scalar_select %p257, %s258, %s259
      %p263 = pneg %p257
      %p264 = scmp.eq.s32.totalorder %s19, 15
      %p265 = por %p263, %p264
      %p266 = scmp.ne.s32.totalorder %s258, %s261
      %p267 = scmp.eq.s32.totalorder %s19, 0
      %p268 = por %p266, %p267
      %p269 = scmp.ne.s32.totalorder %s258, %s261
      %p270 = scmp.eq.s32.totalorder %s24, 15
      %p271 = por %p269, %p270
      %p272 = scmp.ne.s32.totalorder %s261, %s262
      %p273 = scmp.eq.s32.totalorder %s24, 0
      %p274 = por %p272, %p273
      %p275 = scmp.ne.s32.totalorder %s261, %s262
      %p276 = scmp.eq.s32.totalorder %s25, 15
      %p277 = por %p275, %p276
      %p279 = scmp.ne.s32.totalorder %s262, %s278
      %p280 = scmp.eq.s32.totalorder %s25, 0
      %p281 = por %p279, %p280
      %p282 = scmp.le.s32.totalorder 1, %s19
      %p283 = scmp.lt.s32.totalorder %s19, 17
      %p284 = pnand %p282, %p283
      %p285 = pneg %p284
      // Predicated region
      $region9: #{resblock3d_forward.1} parent=5 // pred_check
        _
      $region10: #{resblock3d_forward.1} parent=5 // pred_check_branch
        %287 = sbr.rel (%p284) target = $region12
      $region11: #{resblock3d_forward.1} parent=5 // pred_region
        %s288 = ssub.s32 %s19, 1
        // Predicated region
        $region13: #{resblock3d_forward.1} parent=11 // pred_check
          %p289 = pneg %p78
        $region14: #{resblock3d_forward.1} parent=11 // pred_check_branch
          %291 = sbr.rel (%p289) target = $region16
        $region15: #{resblock3d_forward.1} parent=11 // pred_region
          _
        $region16: #{resblock3d_forward.1} parent=11 // pred_fallthru
          _
        // Predicated region
        $region17: #{resblock3d_forward.1} parent=11 // pred_check
          %p292 = pneg %p99
        $region18: #{resblock3d_forward.1} parent=11 // pred_check_branch
          %294 = sbr.rel (%p292) target = $region20
        $region19: #{resblock3d_forward.1} parent=11 // pred_region
          _
        $region20: #{resblock3d_forward.1} parent=11 // pred_fallthru
          _
        // Predicated region
        $region21: #{resblock3d_forward.1} parent=11 // pred_check
          %p295 = pneg %p120
        $region22: #{resblock3d_forward.1} parent=11 // pred_check_branch
          %297 = sbr.rel (%p295) target = $region24
        $region23: #{resblock3d_forward.1} parent=11 // pred_region
          _
        $region24: #{resblock3d_forward.1} parent=11 // pred_fallthru
          _
        // Predicated region
        $region25: #{resblock3d_forward.1} parent=11 // pred_check
          %p298 = pneg %p141
        $region26: #{resblock3d_forward.1} parent=11 // pred_check_branch
          %300 = sbr.rel (%p298) target = $region28
        $region27: #{resblock3d_forward.1} parent=11 // pred_region
          _
        $region28: #{resblock3d_forward.1} parent=11 // pred_fallthru
          _
        // Predicated region
        $region29: #{resblock3d_forward.1} parent=11 // pred_check
          %p301 = pneg %p162
        $region30: #{resblock3d_forward.1} parent=11 // pred_check_branch
          %303 = sbr.rel (%p301) target = $region32
        $region31: #{resblock3d_forward.1} parent=11 // pred_region
          _
        $region32: #{resblock3d_forward.1} parent=11 // pred_fallthru
          _
        // Predicated region
        $region33: #{resblock3d_forward.1} parent=11 // pred_check
          %p304 = pneg %p183
        $region34: #{resblock3d_forward.1} parent=11 // pred_check_branch
          %306 = sbr.rel (%p304) target = $region36
        $region35: #{resblock3d_forward.1} parent=11 // pred_region
          _
        $region36: #{resblock3d_forward.1} parent=11 // pred_fallthru
          _
        // Predicated region
        $region37: #{resblock3d_forward.1} parent=11 // pred_check
          %p307 = pneg %p204
        $region38: #{resblock3d_forward.1} parent=11 // pred_check_branch
          %309 = sbr.rel (%p307) target = $region40
        $region39: #{resblock3d_forward.1} parent=11 // pred_region
          _
        $region40: #{resblock3d_forward.1} parent=11 // pred_fallthru
          _
        // Predicated region
        $region41: #{resblock3d_forward.1} parent=11 // pred_check
          %p310 = pneg %p225
        $region42: #{resblock3d_forward.1} parent=11 // pred_check_branch
          %312 = sbr.rel (%p310) target = $region44
        $region43: #{resblock3d_forward.1} parent=11 // pred_region
          _
        $region44: #{resblock3d_forward.1} parent=11 // pred_fallthru
          _
        // Predicated region
        $region45: #{resblock3d_forward.1} parent=11 // pred_check
          %p313 = pneg %p246
        $region46: #{resblock3d_forward.1} parent=11 // pred_check_branch
          %315 = sbr.rel (%p313) target = $region48
        $region47: #{resblock3d_forward.1} parent=11 // pred_region
          _
        $region48: #{resblock3d_forward.1} parent=11 // pred_fallthru
          _
      $region12: #{resblock3d_forward.1} parent=5 // pred_fallthru
        _
      %p316 = scmp.lt.s32.totalorder %s19, 16
      // Predicated region
      $region49: #{resblock3d_forward.1} parent=5 // pred_check
        %p317 = pneg %p316
      $region50: #{resblock3d_forward.1} parent=5 // pred_check_branch
        %319 = sbr.rel (%p317) target = $region52
      $region51: #{resblock3d_forward.1} parent=5 // pred_region
        // Predicated region
        $region53: #{resblock3d_forward.1} parent=51 // pred_check
          %p320 = pneg %p51
        $region54: #{resblock3d_forward.1} parent=51 // pred_check_branch
          %322 = sbr.rel (%p320) target = $region56
        $region55: #{resblock3d_forward.1} parent=51 // pred_region
          %p323 = scmp.lt.s32.totalorder %s26, 1
          %s324 = scalar_select %p323, %s26, 1
          %s325 = smul.addr %s324, 200
          %s326 = smul.addr %s325, 4
          %s327 = scalar_lea.vmem %s0, %s326
        $region56: #{resblock3d_forward.1} parent=51 // pred_fallthru
          _
      $region52: #{resblock3d_forward.1} parent=5 // pred_fallthru
        _
      %p328 = scmp.le.s32.totalorder 1, %s19
      %p329 = scmp.lt.s32.totalorder %s19, 17
      %p330 = pnand %p328, %p329
      %p331 = pneg %p330
      // Predicated region
      $region57: #{resblock3d_forward.1} parent=5 // pred_check
        _
      $region58: #{resblock3d_forward.1} parent=5 // pred_check_branch
        %333 = sbr.rel (%p330) target = $region60
      $region59: #{resblock3d_forward.1} parent=5 // pred_region
        %s334 = ssub.s32 %s19, 1
        %p335 = scmp.lt.s32.totalorder %s28, 1
        %s336 = scalar_select %p335, %s28, 1
        %s337 = smul.addr %s336, 200
        %s338 = smul.addr %s337, 4
        %s339 = scalar_lea.vmem %s0, %s338
        %p340 = pneg %p57
        %p341 = pneg %p54
        %p342 = pneg %p78
        %p343 = pneg %p75
        %p344 = pneg %p99
        %p345 = pneg %p96
        %p346 = pneg %p120
        %p347 = pneg %p117
        %p348 = pneg %p141
        %p349 = pneg %p138
        %p350 = pneg %p162
        %p351 = pneg %p159
        %p352 = pneg %p183
        %p353 = pneg %p180
        %p354 = pneg %p204
        %p355 = pneg %p201
        %p356 = pneg %p225
        %p357 = pneg %p222
        %p358 = pneg %p246
        %p359 = pneg %p243
        %p360 = pneg %p274
        %p361 = pneg %p271
        %s362 = sand.u32 %s261, 1
        %s363 = scalar_lea.sflag [#allocation5], %s362
        %s364 = sand.u32 %s261, 1
        %s365 = smul.addr %s364, 64
        %s366 = scalar_lea.vmem [#allocation4], %s365
        %p367 = scmp.lt.s32.totalorder %s28, 1
        %s368 = scalar_select %p367, %s28, 1
        %s369 = smul.addr %s368, 200
        %s370 = smul.addr %s369, 4
        %s371 = scalar_lea.vmem %s0, %s370
        %v373 = vlaneseq
        %v374 = vshrl.u32 %v373, 7
        %v375 = vadd.s32 %v374, 8
        %vm376 = vcmp.ge.s32.totalorder %v374, 1
        %vm377 = vcmp.ge.s32.totalorder %v375, 1
        %vm378 = vmand 0, %vm376
        %vm379 = vmand 0, %vm377
        %vm380 = vmand 1, %vm376
        %vm381 = vmand 1, %vm377
        %vm382 = vcmp.le.s32.totalorder %v374, 8
        %vm383 = vcmp.le.s32.totalorder %v375, 8
        %vm384 = vmand %vm378, %vm382
        %vm385 = vmand %vm379, %vm383
        %vm386 = vmand %vm380, %vm382
        %vm387 = vmand %vm381, %vm383
        %v388 = vsel %vm384, 1, 0
        %v389 = vsel %vm385, 1, 0
        %v390 = vsel %vm386, 1, 0
        %v391 = vsel %vm387, 1, 0
        %v392 = vcvt.s32.f32 %v388
        %v393 = vcvt.s32.f32 %v389
        %v394 = vcvt.s32.f32 %v390
        %v395 = vcvt.s32.f32 %v391
        %p396 = scmp.eq.s32.totalorder %s29, 0
        // Predicated region
        $region61: #{resblock3d_forward.1} parent=59 // pred_check
          %p397 = pneg %p396
        $region62: #{resblock3d_forward.1} parent=59 // pred_check_branch
          %399 = sbr.rel (%p397) target = $region64
        $region63: #{resblock3d_forward.1} parent=59 // pred_region
          %vm400 = vcmask 125952
          %401 = vst.msk [vmem:[#allocation2] sm:$0xf] %vm400, 0
          %vm402 = vcmask 122880
          %403 = vst.msk [vmem:[#allocation2 + $0x4] sm:$0x1] %vm402, 0
          %404 = vst.msk [vmem:[#allocation2 + $0x8] sm:$0xf] %vm400, 0
          %405 = vst.msk [vmem:[#allocation2 + $0xc] sm:$0x1] %vm402, 0
          %406 = vst.msk [vmem:[#allocation2 + $0x10] sm:$0xf] %vm400, 0
          %407 = vst.msk [vmem:[#allocation2 + $0x14] sm:$0x1] %vm402, 0
          %408 = vst.msk [vmem:[#allocation2 + $0x18] sm:$0xf] %vm400, 0
          %409 = vst.msk [vmem:[#allocation2 + $0x1c] sm:$0x1] %vm402, 0
          %410 = vst.msk [vmem:[#allocation2 + $0x20] sm:$0xf] %vm400, 0
          %411 = vst.msk [vmem:[#allocation2 + $0x24] sm:$0x1] %vm402, 0
          %412 = vst.msk [vmem:[#allocation2 + $0x28] sm:$0xf] %vm400, 0
          %413 = vst.msk [vmem:[#allocation2 + $0x2c] sm:$0x1] %vm402, 0
          %414 = vst.msk [vmem:[#allocation2 + $0x30] sm:$0xf] %vm400, 0
          %415 = vst.msk [vmem:[#allocation2 + $0x34] sm:$0x1] %vm402, 0
          %416 = vst.msk [vmem:[#allocation2 + $0x38] sm:$0xf] %vm400, 0
          %417 = vst.msk [vmem:[#allocation2 + $0x3c] sm:$0x1] %vm402, 0
          %418 = vst.msk [vmem:[#allocation2 + $0x40] sm:$0xf] %vm400, 0
          %419 = vst.msk [vmem:[#allocation2 + $0x44] sm:$0x1] %vm402, 0
          %420 = vst.msk [vmem:[#allocation2 + $0x48] sm:$0xf] %vm400, 0
          %421 = vst.msk [vmem:[#allocation2 + $0x4c] sm:$0x1] %vm402, 0
          %s422 = scalar_lea.vmem %s371, 80
          %v423 = vld [vmem:[%s422] sm:$0xf]
          %v424 = vld [vmem:[%s422 + $0x4] sm:$0x1]
          %v425 = vld [vmem:[%s422 + $0x8] sm:$0xf]
          %v426 = vld [vmem:[%s422 + $0xc] sm:$0x1]
          %v427 = vld [vmem:[%s422 + $0x10] sm:$0xf]
          %v428 = vld [vmem:[%s422 + $0x14] sm:$0x1]
          %v429 = vld [vmem:[%s422 + $0x18] sm:$0xf]
          %v430 = vld [vmem:[%s422 + $0x1c] sm:$0x1]
          %v431 = vld [vmem:[%s422 + $0x20] sm:$0xf]
          %v432 = vld [vmem:[%s422 + $0x24] sm:$0x1]
          %v433 = vld [vmem:[%s422 + $0x28] sm:$0xf]
          %v434 = vld [vmem:[%s422 + $0x2c] sm:$0x1]
          %v435 = vld [vmem:[%s422 + $0x30] sm:$0xf]
          %v436 = vld [vmem:[%s422 + $0x34] sm:$0x1]
          %v437 = vld [vmem:[%s422 + $0x38] sm:$0xf]
          %v438 = vld [vmem:[%s422 + $0x3c] sm:$0x1]
          %v439 = vld [vmem:[%s422 + $0x40] sm:$0xf]
          %v440 = vld [vmem:[%s422 + $0x44] sm:$0x1]
          %v441 = vld [vmem:[%s422 + $0x48] sm:$0xf]
          %v442 = vld [vmem:[%s422 + $0x4c] sm:$0x1]
          %v464 = vunpack.c.l.s4 1966171168
          %v465 = vunpack.c.0.s8 %v464
          %v466 = vlaneseq
          %v467 = vshrl.u32 %v466, 7
          %v468 = vsub.s32 %v465, %v467
          %v469 = vrot.slane %v423, %v468
          %v470 = vcombine.high %v469, %v469
          %v472 = vunpack.c.l.s4 1966171168
          %v473 = vunpack.c.0.s8 %v472
          %v474 = vlaneseq
          %v475 = vshrl.u32 %v474, 7
          %v476 = vsub.s32 %v473, %v475
          %v477 = vrot.slane %v469, %v476
          %v479 = vunpack.c.l.s4 1966171168
          %v480 = vunpack.c.0.s8 %v479
          %v481 = vlaneseq
          %v482 = vshrl.u32 %v481, 7
          %v483 = vsub.s32 %v480, %v482
          %v484 = vrot.slane %v470, %v483
          %v485 = vcombine.high %v477, %v477
          %v486 = vcombine.high %v484, %v484
          %v488 = vunpack.c.l.s4 1966171168
          %v489 = vunpack.c.0.s8 %v488
          %v490 = vlaneseq
          %v491 = vshrl.u32 %v490, 7
          %v492 = vsub.s32 %v489, %v491
          %v493 = vrot.slane %v424, %v492
          %v495 = vunpack.c.l.s4 1966171168
          %v496 = vunpack.c.0.s8 %v495
          %v497 = vlaneseq
          %v498 = vshrl.u32 %v497, 7
          %v499 = vsub.s32 %v496, %v498
          %v500 = vrot.slane %v493, %v499
          %v502 = vunpack.c.l.s4 1966171168
          %v503 = vunpack.c.0.s8 %v502
          %v504 = vlaneseq
          %v505 = vshrl.u32 %v504, 7
          %v506 = vsub.s32 %v503, %v505
          %v507 = vrot.slane %v425, %v506
          %v508 = vcombine.high %v507, %v507
          %v510 = vunpack.c.l.s4 1966171168
          %v511 = vunpack.c.0.s8 %v510
          %v512 = vlaneseq
          %v513 = vshrl.u32 %v512, 7
          %v514 = vsub.s32 %v511, %v513
          %v515 = vrot.slane %v507, %v514
          %v517 = vunpack.c.l.s4 1966171168
          %v518 = vunpack.c.0.s8 %v517
          %v519 = vlaneseq
          %v520 = vshrl.u32 %v519, 7
          %v521 = vsub.s32 %v518, %v520
          %v522 = vrot.slane %v508, %v521
          %v523 = vcombine.high %v515, %v515
          %v524 = vcombine.high %v522, %v522
          %v526 = vunpack.c.l.s4 1966171168
          %v527 = vunpack.c.0.s8 %v526
          %v528 = vlaneseq
          %v529 = vshrl.u32 %v528, 7
          %v530 = vsub.s32 %v527, %v529
          %v531 = vrot.slane %v426, %v530
          %v533 = vunpack.c.l.s4 1966171168
          %v534 = vunpack.c.0.s8 %v533
          %v535 = vlaneseq
          %v536 = vshrl.u32 %v535, 7
          %v537 = vsub.s32 %v534, %v536
          %v538 = vrot.slane %v531, %v537
          %v540 = vunpack.c.l.s4 1966171168
          %v541 = vunpack.c.0.s8 %v540
          %v542 = vlaneseq
          %v543 = vshrl.u32 %v542, 7
          %v544 = vsub.s32 %v541, %v543
          %v545 = vrot.slane %v427, %v544
          %v546 = vcombine.high %v545, %v545
          %v548 = vunpack.c.l.s4 1966171168
          %v549 = vunpack.c.0.s8 %v548
          %v550 = vlaneseq
          %v551 = vshrl.u32 %v550, 7
          %v552 = vsub.s32 %v549, %v551
          %v553 = vrot.slane %v545, %v552
          %v555 = vunpack.c.l.s4 1966171168
          %v556 = vunpack.c.0.s8 %v555
          %v557 = vlaneseq
          %v558 = vshrl.u32 %v557, 7
          %v559 = vsub.s32 %v556, %v558
          %v560 = vrot.slane %v546, %v559
          %v561 = vcombine.high %v553, %v553
          %v562 = vcombine.high %v560, %v560
          %v564 = vunpack.c.l.s4 1966171168
          %v565 = vunpack.c.0.s8 %v564
          %v566 = vlaneseq
          %v567 = vshrl.u32 %v566, 7
          %v568 = vsub.s32 %v565, %v567
          %v569 = vrot.slane %v428, %v568
          %v571 = vunpack.c.l.s4 1966171168
          %v572 = vunpack.c.0.s8 %v571
          %v573 = vlaneseq
          %v574 = vshrl.u32 %v573, 7
          %v575 = vsub.s32 %v572, %v574
          %v576 = vrot.slane %v569, %v575
          %v578 = vunpack.c.l.s4 1966171168
          %v579 = vunpack.c.0.s8 %v578
          %v580 = vlaneseq
          %v581 = vshrl.u32 %v580, 7
          %v582 = vsub.s32 %v579, %v581
          %v583 = vrot.slane %v429, %v582
          %v584 = vcombine.high %v583, %v583
          %v586 = vunpack.c.l.s4 1966171168
          %v587 = vunpack.c.0.s8 %v586
          %v588 = vlaneseq
          %v589 = vshrl.u32 %v588, 7
          %v590 = vsub.s32 %v587, %v589
          %v591 = vrot.slane %v583, %v590
          %v593 = vunpack.c.l.s4 1966171168
          %v594 = vunpack.c.0.s8 %v593
          %v595 = vlaneseq
          %v596 = vshrl.u32 %v595, 7
          %v597 = vsub.s32 %v594, %v596
          %v598 = vrot.slane %v584, %v597
          %v599 = vcombine.high %v591, %v591
          %v600 = vcombine.high %v598, %v598
          %v602 = vunpack.c.l.s4 1966171168
          %v603 = vunpack.c.0.s8 %v602
          %v604 = vlaneseq
          %v605 = vshrl.u32 %v604, 7
          %v606 = vsub.s32 %v603, %v605
          %v607 = vrot.slane %v430, %v606
          %v609 = vunpack.c.l.s4 1966171168
          %v610 = vunpack.c.0.s8 %v609
          %v611 = vlaneseq
          %v612 = vshrl.u32 %v611, 7
          %v613 = vsub.s32 %v610, %v612
          %v614 = vrot.slane %v607, %v613
          %v616 = vunpack.c.l.s4 1966171168
          %v617 = vunpack.c.0.s8 %v616
          %v618 = vlaneseq
          %v619 = vshrl.u32 %v618, 7
          %v620 = vsub.s32 %v617, %v619
          %v621 = vrot.slane %v431, %v620
          %v622 = vcombine.high %v621, %v621
          %v624 = vunpack.c.l.s4 1966171168
          %v625 = vunpack.c.0.s8 %v624
          %v626 = vlaneseq
          %v627 = vshrl.u32 %v626, 7
          %v628 = vsub.s32 %v625, %v627
          %v629 = vrot.slane %v621, %v628
          %v631 = vunpack.c.l.s4 1966171168
          %v632 = vunpack.c.0.s8 %v631
          %v633 = vlaneseq
          %v634 = vshrl.u32 %v633, 7
          %v635 = vsub.s32 %v632, %v634
          %v636 = vrot.slane %v622, %v635
          %v637 = vcombine.high %v629, %v629
          %v638 = vcombine.high %v636, %v636
          %v640 = vunpack.c.l.s4 1966171168
          %v641 = vunpack.c.0.s8 %v640
          %v642 = vlaneseq
          %v643 = vshrl.u32 %v642, 7
          %v644 = vsub.s32 %v641, %v643
          %v645 = vrot.slane %v432, %v644
          %v647 = vunpack.c.l.s4 1966171168
          %v648 = vunpack.c.0.s8 %v647
          %v649 = vlaneseq
          %v650 = vshrl.u32 %v649, 7
          %v651 = vsub.s32 %v648, %v650
          %v652 = vrot.slane %v645, %v651
          %v654 = vunpack.c.l.s4 1966171168
          %v655 = vunpack.c.0.s8 %v654
          %v656 = vlaneseq
          %v657 = vshrl.u32 %v656, 7
          %v658 = vsub.s32 %v655, %v657
          %v659 = vrot.slane %v433, %v658
          %v660 = vcombine.high %v659, %v659
          %v662 = vunpack.c.l.s4 1966171168
          %v663 = vunpack.c.0.s8 %v662
          %v664 = vlaneseq
          %v665 = vshrl.u32 %v664, 7
          %v666 = vsub.s32 %v663, %v665
          %v667 = vrot.slane %v659, %v666
          %v669 = vunpack.c.l.s4 1966171168
          %v670 = vunpack.c.0.s8 %v669
          %v671 = vlaneseq
          %v672 = vshrl.u32 %v671, 7
          %v673 = vsub.s32 %v670, %v672
          %v674 = vrot.slane %v660, %v673
          %v675 = vcombine.high %v667, %v667
          %v676 = vcombine.high %v674, %v674
          %v678 = vunpack.c.l.s4 1966171168
          %v679 = vunpack.c.0.s8 %v678
          %v680 = vlaneseq
          %v681 = vshrl.u32 %v680, 7
          %v682 = vsub.s32 %v679, %v681
          %v683 = vrot.slane %v434, %v682
          %v685 = vunpack.c.l.s4 1966171168
          %v686 = vunpack.c.0.s8 %v685
          %v687 = vlaneseq
          %v688 = vshrl.u32 %v687, 7
          %v689 = vsub.s32 %v686, %v688
          %v690 = vrot.slane %v683, %v689
          %v692 = vunpack.c.l.s4 1966171168
          %v693 = vunpack.c.0.s8 %v692
          %v694 = vlaneseq
          %v695 = vshrl.u32 %v694, 7
          %v696 = vsub.s32 %v693, %v695
          %v697 = vrot.slane %v435, %v696
          %v698 = vcombine.high %v697, %v697
          %v700 = vunpack.c.l.s4 1966171168
          %v701 = vunpack.c.0.s8 %v700
          %v702 = vlaneseq
          %v703 = vshrl.u32 %v702, 7
          %v704 = vsub.s32 %v701, %v703
          %v705 = vrot.slane %v697, %v704
          %v707 = vunpack.c.l.s4 1966171168
          %v708 = vunpack.c.0.s8 %v707
          %v709 = vlaneseq
          %v710 = vshrl.u32 %v709, 7
          %v711 = vsub.s32 %v708, %v710
          %v712 = vrot.slane %v698, %v711
          %v713 = vcombine.high %v705, %v705
          %v714 = vcombine.high %v712, %v712
          %v716 = vunpack.c.l.s4 1966171168
          %v717 = vunpack.c.0.s8 %v716
          %v718 = vlaneseq
          %v719 = vshrl.u32 %v718, 7
          %v720 = vsub.s32 %v717, %v719
          %v721 = vrot.slane %v436, %v720
          %v723 = vunpack.c.l.s4 1966171168
          %v724 = vunpack.c.0.s8 %v723
          %v725 = vlaneseq
          %v726 = vshrl.u32 %v725, 7
          %v727 = vsub.s32 %v724, %v726
          %v728 = vrot.slane %v721, %v727
          %v730 = vunpack.c.l.s4 1966171168
          %v731 = vunpack.c.0.s8 %v730
          %v732 = vlaneseq
          %v733 = vshrl.u32 %v732, 7
          %v734 = vsub.s32 %v731, %v733
          %v735 = vrot.slane %v437, %v734
          %v736 = vcombine.high %v735, %v735
          %v738 = vunpack.c.l.s4 1966171168
          %v739 = vunpack.c.0.s8 %v738
          %v740 = vlaneseq
          %v741 = vshrl.u32 %v740, 7
          %v742 = vsub.s32 %v739, %v741
          %v743 = vrot.slane %v735, %v742
          %v745 = vunpack.c.l.s4 1966171168
          %v746 = vunpack.c.0.s8 %v745
          %v747 = vlaneseq
          %v748 = vshrl.u32 %v747, 7
          %v749 = vsub.s32 %v746, %v748
          %v750 = vrot.slane %v736, %v749
          %v751 = vcombine.high %v743, %v743
          %v752 = vcombine.high %v750, %v750
          %v754 = vunpack.c.l.s4 1966171168
          %v755 = vunpack.c.0.s8 %v754
          %v756 = vlaneseq
          %v757 = vshrl.u32 %v756, 7
          %v758 = vsub.s32 %v755, %v757
          %v759 = vrot.slane %v438, %v758
          %v761 = vunpack.c.l.s4 1966171168
          %v762 = vunpack.c.0.s8 %v761
          %v763 = vlaneseq
          %v764 = vshrl.u32 %v763, 7
          %v765 = vsub.s32 %v762, %v764
          %v766 = vrot.slane %v759, %v765
          %v768 = vunpack.c.l.s4 1966171168
          %v769 = vunpack.c.0.s8 %v768
          %v770 = vlaneseq
          %v771 = vshrl.u32 %v770, 7
          %v772 = vsub.s32 %v769, %v771
          %v773 = vrot.slane %v439, %v772
          %v774 = vcombine.high %v773, %v773
          %v776 = vunpack.c.l.s4 1966171168
          %v777 = vunpack.c.0.s8 %v776
          %v778 = vlaneseq
          %v779 = vshrl.u32 %v778, 7
          %v780 = vsub.s32 %v777, %v779
          %v781 = vrot.slane %v773, %v780
          %v783 = vunpack.c.l.s4 1966171168
          %v784 = vunpack.c.0.s8 %v783
          %v785 = vlaneseq
          %v786 = vshrl.u32 %v785, 7
          %v787 = vsub.s32 %v784, %v786
          %v788 = vrot.slane %v774, %v787
          %v789 = vcombine.high %v781, %v781
          %v790 = vcombine.high %v788, %v788
          %v792 = vunpack.c.l.s4 1966171168
          %v793 = vunpack.c.0.s8 %v792
          %v794 = vlaneseq
          %v795 = vshrl.u32 %v794, 7
          %v796 = vsub.s32 %v793, %v795
          %v797 = vrot.slane %v440, %v796
          %v799 = vunpack.c.l.s4 1966171168
          %v800 = vunpack.c.0.s8 %v799
          %v801 = vlaneseq
          %v802 = vshrl.u32 %v801, 7
          %v803 = vsub.s32 %v800, %v802
          %v804 = vrot.slane %v797, %v803
          %v806 = vunpack.c.l.s4 1966171168
          %v807 = vunpack.c.0.s8 %v806
          %v808 = vlaneseq
          %v809 = vshrl.u32 %v808, 7
          %v810 = vsub.s32 %v807, %v809
          %v811 = vrot.slane %v441, %v810
          %v812 = vcombine.high %v811, %v811
          %v814 = vunpack.c.l.s4 1966171168
          %v815 = vunpack.c.0.s8 %v814
          %v816 = vlaneseq
          %v817 = vshrl.u32 %v816, 7
          %v818 = vsub.s32 %v815, %v817
          %v819 = vrot.slane %v811, %v818
          %v821 = vunpack.c.l.s4 1966171168
          %v822 = vunpack.c.0.s8 %v821
          %v823 = vlaneseq
          %v824 = vshrl.u32 %v823, 7
          %v825 = vsub.s32 %v822, %v824
          %v826 = vrot.slane %v812, %v825
          %v827 = vcombine.high %v819, %v819
          %v828 = vcombine.high %v826, %v826
          %v830 = vunpack.c.l.s4 1966171168
          %v831 = vunpack.c.0.s8 %v830
          %v832 = vlaneseq
          %v833 = vshrl.u32 %v832, 7
          %v834 = vsub.s32 %v831, %v833
          %v835 = vrot.slane %v442, %v834
          %v837 = vunpack.c.l.s4 1966171168
          %v838 = vunpack.c.0.s8 %v837
          %v839 = vlaneseq
          %v840 = vshrl.u32 %v839, 7
          %v841 = vsub.s32 %v838, %v840
          %v842 = vrot.slane %v835, %v841
          %v843 = vld [vmem:[%s1] sm:$0xf]
          %v844 = vld [vmem:[%s1 + $0x4] sm:$0xf]
          %v845 = vld [vmem:[%s1 + $0x8] sm:$0xf]
          %v846 = vld [vmem:[%s1 + $0xc] sm:$0xf]
          %v847 = vcombine.low %v477, %v484
          %v848 = vcombine.low %v485, %v486
          %v849 = vcombine.low %v500, %v515
          %v850 = vcombine.low %v522, %v523
          %v852 = vunpack.c.l.s4 1966171168
          %v853 = vunpack.c.0.s8 %v852
          %v854 = vlaneseq
          %v855 = vshrl.u32 %v854, 7
          %v856 = vsub.s32 %v853, %v855
          %v857 = vrot.slane %v847, %v856
          %v859 = vunpack.c.l.s4 1966171168
          %v860 = vunpack.c.0.s8 %v859
          %v861 = vlaneseq
          %v862 = vshrl.u32 %v861, 7
          %v863 = vsub.s32 %v860, %v862
          %v864 = vrot.slane %v848, %v863
          %v866 = vunpack.c.l.s4 1966171168
          %v867 = vunpack.c.0.s8 %v866
          %v868 = vlaneseq
          %v869 = vshrl.u32 %v868, 7
          %v870 = vsub.s32 %v867, %v869
          %v871 = vrot.slane %v849, %v870
          %v873 = vunpack.c.l.s4 1966171168
          %v874 = vunpack.c.0.s8 %v873
          %v875 = vlaneseq
          %v876 = vshrl.u32 %v875, 7
          %v877 = vsub.s32 %v874, %v876
          %v878 = vrot.slane %v850, %v877
          %v879 = vcombine.low %v857, %v864
          %v880 = vcombine.low %v871, %v878
          %v882 = vunpack.c.l.s4 1966171168
          %v883 = vunpack.c.0.s8 %v882
          %v884 = vlaneseq
          %v885 = vshrl.u32 %v884, 7
          %v886 = vsub.s32 %v883, %v885
          %v887 = vrot.slane %v879, %v886
          %v889 = vunpack.c.l.s4 1966171168
          %v890 = vunpack.c.0.s8 %v889
          %v891 = vlaneseq
          %v892 = vshrl.u32 %v891, 7
          %v893 = vsub.s32 %v890, %v892
          %v894 = vrot.slane %v880, %v893
          %v895 = vcombine.low %v887, %v894
          %v896 = vcombine.low %v524, %v538
          %v897 = vcombine.low %v553, %v560
          %v898 = vcombine.low %v561, %v562
          %v899 = vcombine.low %v576, %v591
          %v901 = vunpack.c.l.s4 1966171168
          %v902 = vunpack.c.0.s8 %v901
          %v903 = vlaneseq
          %v904 = vshrl.u32 %v903, 7
          %v905 = vsub.s32 %v902, %v904
          %v906 = vrot.slane %v896, %v905
          %v908 = vunpack.c.l.s4 1966171168
          %v909 = vunpack.c.0.s8 %v908
          %v910 = vlaneseq
          %v911 = vshrl.u32 %v910, 7
          %v912 = vsub.s32 %v909, %v911
          %v913 = vrot.slane %v897, %v912
          %v915 = vunpack.c.l.s4 1966171168
          %v916 = vunpack.c.0.s8 %v915
          %v917 = vlaneseq
          %v918 = vshrl.u32 %v917, 7
          %v919 = vsub.s32 %v916, %v918
          %v920 = vrot.slane %v898, %v919
          %v922 = vunpack.c.l.s4 1966171168
          %v923 = vunpack.c.0.s8 %v922
          %v924 = vlaneseq
          %v925 = vshrl.u32 %v924, 7
          %v926 = vsub.s32 %v923, %v925
          %v927 = vrot.slane %v899, %v926
          %v928 = vcombine.low %v906, %v913
          %v929 = vcombine.low %v920, %v927
          %v931 = vunpack.c.l.s4 1966171168
          %v932 = vunpack.c.0.s8 %v931
          %v933 = vlaneseq
          %v934 = vshrl.u32 %v933, 7
          %v935 = vsub.s32 %v932, %v934
          %v936 = vrot.slane %v928, %v935
          %v938 = vunpack.c.l.s4 1966171168
          %v939 = vunpack.c.0.s8 %v938
          %v940 = vlaneseq
          %v941 = vshrl.u32 %v940, 7
          %v942 = vsub.s32 %v939, %v941
          %v943 = vrot.slane %v929, %v942
          %v944 = vcombine.low %v936, %v943
          %v945 = vcombine.low %v598, %v599
          %v946 = vcombine.low %v600, %v614
          %v947 = vcombine.low %v629, %v636
          %v948 = vcombine.low %v637, %v638
          %v950 = vunpack.c.l.s4 1966171168
          %v951 = vunpack.c.0.s8 %v950
          %v952 = vlaneseq
          %v953 = vshrl.u32 %v952, 7
          %v954 = vsub.s32 %v951, %v953
          %v955 = vrot.slane %v945, %v954
          %v957 = vunpack.c.l.s4 1966171168
          %v958 = vunpack.c.0.s8 %v957
          %v959 = vlaneseq
          %v960 = vshrl.u32 %v959, 7
          %v961 = vsub.s32 %v958, %v960
          %v962 = vrot.slane %v946, %v961
          %v964 = vunpack.c.l.s4 1966171168
          %v965 = vunpack.c.0.s8 %v964
          %v966 = vlaneseq
          %v967 = vshrl.u32 %v966, 7
          %v968 = vsub.s32 %v965, %v967
          %v969 = vrot.slane %v947, %v968
          %v971 = vunpack.c.l.s4 1966171168
          %v972 = vunpack.c.0.s8 %v971
          %v973 = vlaneseq
          %v974 = vshrl.u32 %v973, 7
          %v975 = vsub.s32 %v972, %v974
          %v976 = vrot.slane %v948, %v975
          %v977 = vcombine.low %v955, %v962
          %v978 = vcombine.low %v969, %v976
          %v980 = vunpack.c.l.s4 1966171168
          %v981 = vunpack.c.0.s8 %v980
          %v982 = vlaneseq
          %v983 = vshrl.u32 %v982, 7
          %v984 = vsub.s32 %v981, %v983
          %v985 = vrot.slane %v977, %v984
          %v987 = vunpack.c.l.s4 1966171168
          %v988 = vunpack.c.0.s8 %v987
          %v989 = vlaneseq
          %v990 = vshrl.u32 %v989, 7
          %v991 = vsub.s32 %v988, %v990
          %v992 = vrot.slane %v978, %v991
          %v993 = vcombine.low %v985, %v992
          %v994 = vcombine.low %v652, %v667
          %v995 = vcombine.low %v674, %v675
          %v996 = vcombine.low %v676, %v690
          %v997 = vcombine.low %v705, %v712
          %v999 = vunpack.c.l.s4 1966171168
          %v1000 = vunpack.c.0.s8 %v999
          %v1001 = vlaneseq
          %v1002 = vshrl.u32 %v1001, 7
          %v1003 = vsub.s32 %v1000, %v1002
          %v1004 = vrot.slane %v994, %v1003
          %v1006 = vunpack.c.l.s4 1966171168
          %v1007 = vunpack.c.0.s8 %v1006
          %v1008 = vlaneseq
          %v1009 = vshrl.u32 %v1008, 7
          %v1010 = vsub.s32 %v1007, %v1009
          %v1011 = vrot.slane %v995, %v1010
          %v1013 = vunpack.c.l.s4 1966171168
          %v1014 = vunpack.c.0.s8 %v1013
          %v1015 = vlaneseq
          %v1016 = vshrl.u32 %v1015, 7
          %v1017 = vsub.s32 %v1014, %v1016
          %v1018 = vrot.slane %v996, %v1017
          %v1020 = vunpack.c.l.s4 1966171168
          %v1021 = vunpack.c.0.s8 %v1020
          %v1022 = vlaneseq
          %v1023 = vshrl.u32 %v1022, 7
          %v1024 = vsub.s32 %v1021, %v1023
          %v1025 = vrot.slane %v997, %v1024
          %v1026 = vcombine.low %v1004, %v1011
          %v1027 = vcombine.low %v1018, %v1025
          %v1029 = vunpack.c.l.s4 1966171168
          %v1030 = vunpack.c.0.s8 %v1029
          %v1031 = vlaneseq
          %v1032 = vshrl.u32 %v1031, 7
          %v1033 = vsub.s32 %v1030, %v1032
          %v1034 = vrot.slane %v1026, %v1033
          %v1036 = vunpack.c.l.s4 1966171168
          %v1037 = vunpack.c.0.s8 %v1036
          %v1038 = vlaneseq
          %v1039 = vshrl.u32 %v1038, 7
          %v1040 = vsub.s32 %v1037, %v1039
          %v1041 = vrot.slane %v1027, %v1040
          %v1042 = vcombine.low %v1034, %v1041
          %v1043 = vcombine.low %v713, %v714
          %v1044 = vcombine.low %v728, %v743
          %v1045 = vcombine.low %v750, %v751
          %v1046 = vcombine.low %v752, %v766
          %v1048 = vunpack.c.l.s4 1966171168
          %v1049 = vunpack.c.0.s8 %v1048
          %v1050 = vlaneseq
          %v1051 = vshrl.u32 %v1050, 7
          %v1052 = vsub.s32 %v1049, %v1051
          %v1053 = vrot.slane %v1043, %v1052
          %v1055 = vunpack.c.l.s4 1966171168
          %v1056 = vunpack.c.0.s8 %v1055
          %v1057 = vlaneseq
          %v1058 = vshrl.u32 %v1057, 7
          %v1059 = vsub.s32 %v1056, %v1058
          %v1060 = vrot.slane %v1044, %v1059
          %v1062 = vunpack.c.l.s4 1966171168
          %v1063 = vunpack.c.0.s8 %v1062
          %v1064 = vlaneseq
          %v1065 = vshrl.u32 %v1064, 7
          %v1066 = vsub.s32 %v1063, %v1065
          %v1067 = vrot.slane %v1045, %v1066
          %v1069 = vunpack.c.l.s4 1966171168
          %v1070 = vunpack.c.0.s8 %v1069
          %v1071 = vlaneseq
          %v1072 = vshrl.u32 %v1071, 7
          %v1073 = vsub.s32 %v1070, %v1072
          %v1074 = vrot.slane %v1046, %v1073
          %v1075 = vcombine.low %v1053, %v1060
          %v1076 = vcombine.low %v1067, %v1074
          %v1078 = vunpack.c.l.s4 1966171168
          %v1079 = vunpack.c.0.s8 %v1078
          %v1080 = vlaneseq
          %v1081 = vshrl.u32 %v1080, 7
          %v1082 = vsub.s32 %v1079, %v1081
          %v1083 = vrot.slane %v1075, %v1082
          %v1085 = vunpack.c.l.s4 1966171168
          %v1086 = vunpack.c.0.s8 %v1085
          %v1087 = vlaneseq
          %v1088 = vshrl.u32 %v1087, 7
          %v1089 = vsub.s32 %v1086, %v1088
          %v1090 = vrot.slane %v1076, %v1089
          %v1091 = vcombine.low %v1083, %v1090
          %v1092 = vcombine.low %v781, %v788
          %v1093 = vcombine.low %v789, %v790
          %v1094 = vcombine.low %v804, %v819
          %v1095 = vcombine.low %v826, %v827
          %v1097 = vunpack.c.l.s4 1966171168
          %v1098 = vunpack.c.0.s8 %v1097
          %v1099 = vlaneseq
          %v1100 = vshrl.u32 %v1099, 7
          %v1101 = vsub.s32 %v1098, %v1100
          %v1102 = vrot.slane %v1092, %v1101
          %v1104 = vunpack.c.l.s4 1966171168
          %v1105 = vunpack.c.0.s8 %v1104
          %v1106 = vlaneseq
          %v1107 = vshrl.u32 %v1106, 7
          %v1108 = vsub.s32 %v1105, %v1107
          %v1109 = vrot.slane %v1093, %v1108
          %v1111 = vunpack.c.l.s4 1966171168
          %v1112 = vunpack.c.0.s8 %v1111
          %v1113 = vlaneseq
          %v1114 = vshrl.u32 %v1113, 7
          %v1115 = vsub.s32 %v1112, %v1114
          %v1116 = vrot.slane %v1094, %v1115
          %v1118 = vunpack.c.l.s4 1966171168
          %v1119 = vunpack.c.0.s8 %v1118
          %v1120 = vlaneseq
          %v1121 = vshrl.u32 %v1120, 7
          %v1122 = vsub.s32 %v1119, %v1121
          %v1123 = vrot.slane %v1095, %v1122
          %v1124 = vcombine.low %v1102, %v1109
          %v1125 = vcombine.low %v1116, %v1123
          %v1127 = vunpack.c.l.s4 1966171168
          %v1128 = vunpack.c.0.s8 %v1127
          %v1129 = vlaneseq
          %v1130 = vshrl.u32 %v1129, 7
          %v1131 = vsub.s32 %v1128, %v1130
          %v1132 = vrot.slane %v1124, %v1131
          %v1134 = vunpack.c.l.s4 1966171168
          %v1135 = vunpack.c.0.s8 %v1134
          %v1136 = vlaneseq
          %v1137 = vshrl.u32 %v1136, 7
          %v1138 = vsub.s32 %v1135, %v1137
          %v1139 = vrot.slane %v1125, %v1138
          %v1140 = vcombine.low %v1132, %v1139
          %v1141 = vcombine.low %v828, %v842
          %v1143 = vunpack.c.l.s4 1966171168
          %v1144 = vunpack.c.0.s8 %v1143
          %v1145 = vlaneseq
          %v1146 = vshrl.u32 %v1145, 7
          %v1147 = vsub.s32 %v1144, %v1146
          %v1148 = vrot.slane %v1141, %v1147
          %v1150 = vunpack.c.l.s4 1966171168
          %v1151 = vunpack.c.0.s8 %v1150
          %v1152 = vlaneseq
          %v1153 = vshrl.u32 %v1152, 7
          %v1154 = vsub.s32 %v1151, %v1153
          %v1155 = vrot.slane %v1148, %v1154
          %v1160 = vunpack.c.l.b16 %v843
          %v1161 = vunpack.c.l.b16 %v844
          %v1162 = vunpack.c.l.b16 %v845
          %v1163 = vunpack.c.l.b16 %v846
          %v1164 = vpack.c.b16 %v1161, %v1160
          %v1165 = vpack.c.b16 %v1163, %v1162
          %vm1168 = vcmask 261120
          %v1170 = vsel %vm1168, %v895, 0
          %v1173 = vsel %vm1168, %v944, 0
          %v1176 = vsel %vm1168, %v993, 0
          %v1179 = vsel %vm1168, %v1042, 0
          %v1182 = vsel %vm1168, %v1091, 0
          %v1185 = vsel %vm1168, %v1140, 0
          %v1188 = vsel %vm1168, %v1155, 0
          %1190 = vmatprep.subr.bf16.mxu0 0
          %1191 = vmatpush1.bf16.msra.mxu0 %v1164
          %1192 = vmatprep.subr.bf16.mxu0 0
          %1193 = vmatpush1.bf16.msra.mxu0 %v1165
          %1194 = vmatprep.subr.bf16.mxu0 0
          %1195 = vmatpush1.bf16.msra.mxu0 0
          %1196 = vmatprep.subr.bf16.mxu0 0
          %1197 = vmatpush1.bf16.msra.mxu0 0
          %1198 = vmatprep.subr.bf16.mxu0 0
          %1199 = vmatpush1.bf16.msra.mxu0 0
          %1200 = vmatprep.subr.bf16.mxu0 0
          %1201 = vmatpush1.bf16.msra.mxu0 0
          %1202 = vmatprep.subr.bf16.mxu0 0
          %1203 = vmatpush1.bf16.msra.mxu0 0
          %1204 = vmatprep.subr.bf16.mxu0 0
          %1205 = vmatpush1.bf16.msra.mxu0 0
          %1206 = vmatprep.subr.bf16.mxu0 0
          %1207 = vmatpush1.bf16.msra.mxu0 0
          %1208 = vmatprep.subr.bf16.mxu0 0
          %1209 = vmatpush1.bf16.msra.mxu0 0
          %1210 = vmatprep.subr.bf16.mxu0 0
          %1211 = vmatpush1.bf16.msra.mxu0 0
          %1212 = vmatprep.subr.bf16.mxu0 0
          %1213 = vmatpush1.bf16.msra.mxu0 0
          %1214 = vmatprep.subr.bf16.mxu0 0
          %1215 = vmatpush1.bf16.msra.mxu0 0
          %1216 = vmatprep.subr.bf16.mxu0 0
          %1217 = vmatpush1.bf16.msra.mxu0 0
          %1218 = vmatprep.subr.bf16.mxu0 0
          %1219 = vmatpush1.bf16.msra.mxu0 0
          %1220 = vmatprep.subr.bf16.mxu0 0
          %1221 = vmatpush1.bf16.msra.mxu0 0
          %1222 = vmatprep.mubr.bf16.mxu0 0
          %1223 = vmatmul.mubr.bf16.gmra.mrb[0].mxu0 %v1170
          %v1224 = vpop.f32.mrb[0].mxu0
          %v1225 = vadd.f32 0.0, %v1224
          %v1226 = vpop.f32.mrb[0].mxu0
          %v1227 = vpop.f32.mrb[0].mxu0
          %v1228 = vadd.f32 0.0, %v1227
          %v1229 = vpop.f32.mrb[0].mxu0
          %1230 = vmatprep.mubr.bf16.mxu0 0
          %1231 = vmatmul.mubr.bf16.gmra.mrb[0].mxu0 %v1173
          %v1232 = vpop.f32.mrb[0].mxu0
          %v1233 = vadd.f32 0.0, %v1232
          %v1234 = vpop.f32.mrb[0].mxu0
          %v1235 = vpop.f32.mrb[0].mxu0
          %v1236 = vadd.f32 0.0, %v1235
          %v1237 = vpop.f32.mrb[0].mxu0
          %1238 = vmatprep.mubr.bf16.mxu0 0
          %1239 = vmatmul.mubr.bf16.gmra.mrb[0].mxu0 %v1176
          %v1240 = vpop.f32.mrb[0].mxu0
          %v1241 = vadd.f32 0.0, %v1240
          %v1242 = vpop.f32.mrb[0].mxu0
          %v1243 = vpop.f32.mrb[0].mxu0
          %v1244 = vadd.f32 0.0, %v1243
          %v1245 = vpop.f32.mrb[0].mxu0
          %1246 = vmatprep.mubr.bf16.mxu0 0
          %1247 = vmatmul.mubr.bf16.gmra.mrb[0].mxu0 %v1179
          %v1248 = vpop.f32.mrb[0].mxu0
          %v1249 = vadd.f32 0.0, %v1248
          %v1250 = vpop.f32.mrb[0].mxu0
          %v1251 = vpop.f32.mrb[0].mxu0
          %v1252 = vadd.f32 0.0, %v1251
          %v1253 = vpop.f32.mrb[0].mxu0
          %1254 = vmatprep.mubr.bf16.mxu0 0
          %1255 = vmatmul.mubr.bf16.gmra.mrb[0].mxu0 %v1182
          %v1256 = vpop.f32.mrb[0].mxu0
          %v1257 = vadd.f32 0.0, %v1256
          %v1258 = vpop.f32.mrb[0].mxu0
          %v1259 = vpop.f32.mrb[0].mxu0
          %v1260 = vadd.f32 0.0, %v1259
          %v1261 = vpop.f32.mrb[0].mxu0
          %1262 = vmatprep.mubr.bf16.mxu0 0
          %1263 = vmatmul.mubr.bf16.gmra.mrb[0].mxu0 %v1185
          %v1264 = vpop.f32.mrb[0].mxu0
          %v1265 = vadd.f32 0.0, %v1264
          %v1266 = vpop.f32.mrb[0].mxu0
          %v1267 = vpop.f32.mrb[0].mxu0
          %v1268 = vadd.f32 0.0, %v1267
          %v1269 = vpop.f32.mrb[0].mxu0
          %1270 = vmatprep.mubr.bf16.mxu0 0
          %1271 = vmatmul.mubr.bf16.gmra.mrb[0].mxu0 %v1188
          %v1272 = vpop.f32.mrb[0].mxu0
          %v1273 = vadd.f32 0.0, %v1272
          %v1274 = vpop.f32.mrb[0].mxu0
          %v1275 = vpop.f32.mrb[0].mxu0
          %v1276 = vpop.f32.mrb[0].mxu0
          %1277 = vdwg.mxu0
          %v1278 = vld [vmem:[%s2] sm:$0x1]
          %v1280 = vlaneseq
          %v1281 = vshrl.u32 %v1280, 7
          %v1282 = vsub.s32 0, %v1281
          %v1283 = vrot.slane %v1278, %v1282
          %v1285 = vmul.f32 %v1225, %v1283
          %v1286 = vmul.f32 %v1228, %v1283
          %v1287 = vmul.f32 %v1233, %v1283
          %v1288 = vmul.f32 %v1236, %v1283
          %v1289 = vmul.f32 %v1241, %v1283
          %v1290 = vmul.f32 %v1244, %v1283
          %v1291 = vmul.f32 %v1249, %v1283
          %v1292 = vmul.f32 %v1252, %v1283
          %v1293 = vmul.f32 %v1257, %v1283
          %v1294 = vmul.f32 %v1260, %v1283
          %v1295 = vmul.f32 %v1265, %v1283
          %v1296 = vmul.f32 %v1268, %v1283
          %v1297 = vmul.f32 %v1273, %v1283
          %v1298 = vld [vmem:[%s3] sm:$0x1]
          %v1300 = vlaneseq
          %v1301 = vshrl.u32 %v1300, 7
          %v1302 = vsub.s32 0, %v1301
          %v1303 = vrot.slane %v1298, %v1302
          %v1305 = vadd.f32 %v1285, %v1303
          %v1306 = vadd.f32 %v1286, %v1303
          %v1307 = vadd.f32 %v1287, %v1303
          %v1308 = vadd.f32 %v1288, %v1303
          %v1309 = vadd.f32 %v1289, %v1303
          %v1310 = vadd.f32 %v1290, %v1303
          %v1311 = vadd.f32 %v1291, %v1303
          %v1312 = vadd.f32 %v1292, %v1303
          %v1313 = vadd.f32 %v1293, %v1303
          %v1314 = vadd.f32 %v1294, %v1303
          %v1315 = vadd.f32 %v1295, %v1303
          %v1316 = vadd.f32 %v1296, %v1303
          %v1317 = vadd.f32 %v1297, %v1303
          %v1318 = vmax.f32 %v1305, 0.0
          %v1319 = vmax.f32 %v1306, 0.0
          %v1320 = vmax.f32 %v1307, 0.0
          %v1321 = vmax.f32 %v1308, 0.0
          %v1322 = vmax.f32 %v1309, 0.0
          %v1323 = vmax.f32 %v1310, 0.0
          %v1324 = vmax.f32 %v1311, 0.0
          %v1325 = vmax.f32 %v1312, 0.0
          %v1326 = vmax.f32 %v1313, 0.0
          %v1327 = vmax.f32 %v1314, 0.0
          %v1328 = vmax.f32 %v1315, 0.0
          %v1329 = vmax.f32 %v1316, 0.0
          %v1330 = vmax.f32 %v1317, 0.0
          %v1344 = vcombine.high %v1318, %v1318
          %v1346 = vunpack.c.l.s4 1983009808
          %v1347 = vunpack.c.0.s8 %v1346
          %v1348 = vlaneseq
          %v1349 = vshrl.u32 %v1348, 7
          %v1350 = vsub.s32 %v1347, %v1349
          %v1351 = vrot.slane %v1318, %v1350
          %v1353 = vunpack.c.l.s4 1983009808
          %v1354 = vunpack.c.0.s8 %v1353
          %v1355 = vlaneseq
          %v1356 = vshrl.u32 %v1355, 7
          %v1357 = vsub.s32 %v1354, %v1356
          %v1358 = vrot.slane %v1344, %v1357
          %v1359 = vcombine.high %v1351, %v1351
          %v1360 = vcombine.high %v1358, %v1358
          %v1361 = vcombine.high %v1319, %v1319
          %v1363 = vunpack.c.l.s4 1983009808
          %v1364 = vunpack.c.0.s8 %v1363
          %v1365 = vlaneseq
          %v1366 = vshrl.u32 %v1365, 7
          %v1367 = vsub.s32 %v1364, %v1366
          %v1368 = vrot.slane %v1319, %v1367
          %v1370 = vunpack.c.l.s4 1983009808
          %v1371 = vunpack.c.0.s8 %v1370
          %v1372 = vlaneseq
          %v1373 = vshrl.u32 %v1372, 7
          %v1374 = vsub.s32 %v1371, %v1373
          %v1375 = vrot.slane %v1361, %v1374
          %v1376 = vcombine.high %v1368, %v1368
          %v1377 = vcombine.high %v1375, %v1375
          %v1378 = vcombine.high %v1320, %v1320
          %v1380 = vunpack.c.l.s4 1983009808
          %v1381 = vunpack.c.0.s8 %v1380
          %v1382 = vlaneseq
          %v1383 = vshrl.u32 %v1382, 7
          %v1384 = vsub.s32 %v1381, %v1383
          %v1385 = vrot.slane %v1320, %v1384
          %v1387 = vunpack.c.l.s4 1983009808
          %v1388 = vunpack.c.0.s8 %v1387
          %v1389 = vlaneseq
          %v1390 = vshrl.u32 %v1389, 7
          %v1391 = vsub.s32 %v1388, %v1390
          %v1392 = vrot.slane %v1378, %v1391
          %v1393 = vcombine.high %v1385, %v1385
          %v1394 = vcombine.high %v1392, %v1392
          %v1395 = vcombine.high %v1321, %v1321
          %v1397 = vunpack.c.l.s4 1983009808
          %v1398 = vunpack.c.0.s8 %v1397
          %v1399 = vlaneseq
          %v1400 = vshrl.u32 %v1399, 7
          %v1401 = vsub.s32 %v1398, %v1400
          %v1402 = vrot.slane %v1321, %v1401
          %v1404 = vunpack.c.l.s4 1983009808
          %v1405 = vunpack.c.0.s8 %v1404
          %v1406 = vlaneseq
          %v1407 = vshrl.u32 %v1406, 7
          %v1408 = vsub.s32 %v1405, %v1407
          %v1409 = vrot.slane %v1395, %v1408
          %v1410 = vcombine.high %v1402, %v1402
          %v1411 = vcombine.high %v1409, %v1409
          %v1412 = vcombine.high %v1322, %v1322
          %v1414 = vunpack.c.l.s4 1983009808
          %v1415 = vunpack.c.0.s8 %v1414
          %v1416 = vlaneseq
          %v1417 = vshrl.u32 %v1416, 7
          %v1418 = vsub.s32 %v1415, %v1417
          %v1419 = vrot.slane %v1322, %v1418
          %v1421 = vunpack.c.l.s4 1983009808
          %v1422 = vunpack.c.0.s8 %v1421
          %v1423 = vlaneseq
          %v1424 = vshrl.u32 %v1423, 7
          %v1425 = vsub.s32 %v1422, %v1424
          %v1426 = vrot.slane %v1412, %v1425
          %v1427 = vcombine.high %v1419, %v1419
          %v1428 = vcombine.high %v1426, %v1426
          %v1429 = vcombine.high %v1323, %v1323
          %v1431 = vunpack.c.l.s4 1983009808
          %v1432 = vunpack.c.0.s8 %v1431
          %v1433 = vlaneseq
          %v1434 = vshrl.u32 %v1433, 7
          %v1435 = vsub.s32 %v1432, %v1434
          %v1436 = vrot.slane %v1323, %v1435
          %v1438 = vunpack.c.l.s4 1983009808
          %v1439 = vunpack.c.0.s8 %v1438
          %v1440 = vlaneseq
          %v1441 = vshrl.u32 %v1440, 7
          %v1442 = vsub.s32 %v1439, %v1441
          %v1443 = vrot.slane %v1429, %v1442
          %v1444 = vcombine.high %v1436, %v1436
          %v1445 = vcombine.high %v1443, %v1443
          %v1446 = vcombine.high %v1324, %v1324
          %v1448 = vunpack.c.l.s4 1983009808
          %v1449 = vunpack.c.0.s8 %v1448
          %v1450 = vlaneseq
          %v1451 = vshrl.u32 %v1450, 7
          %v1452 = vsub.s32 %v1449, %v1451
          %v1453 = vrot.slane %v1324, %v1452
          %v1455 = vunpack.c.l.s4 1983009808
          %v1456 = vunpack.c.0.s8 %v1455
          %v1457 = vlaneseq
          %v1458 = vshrl.u32 %v1457, 7
          %v1459 = vsub.s32 %v1456, %v1458
          %v1460 = vrot.slane %v1446, %v1459
          %v1461 = vcombine.high %v1453, %v1453
          %v1462 = vcombine.high %v1460, %v1460
          %v1463 = vcombine.high %v1325, %v1325
          %v1465 = vunpack.c.l.s4 1983009808
          %v1466 = vunpack.c.0.s8 %v1465
          %v1467 = vlaneseq
          %v1468 = vshrl.u32 %v1467, 7
          %v1469 = vsub.s32 %v1466, %v1468
          %v1470 = vrot.slane %v1325, %v1469
          %v1472 = vunpack.c.l.s4 1983009808
          %v1473 = vunpack.c.0.s8 %v1472
          %v1474 = vlaneseq
          %v1475 = vshrl.u32 %v1474, 7
          %v1476 = vsub.s32 %v1473, %v1475
          %v1477 = vrot.slane %v1463, %v1476
          %v1478 = vcombine.high %v1470, %v1470
          %v1479 = vcombine.high %v1477, %v1477
          %v1480 = vcombine.high %v1326, %v1326
          %v1482 = vunpack.c.l.s4 1983009808
          %v1483 = vunpack.c.0.s8 %v1482
          %v1484 = vlaneseq
          %v1485 = vshrl.u32 %v1484, 7
          %v1486 = vsub.s32 %v1483, %v1485
          %v1487 = vrot.slane %v1326, %v1486
          %v1489 = vunpack.c.l.s4 1983009808
          %v1490 = vunpack.c.0.s8 %v1489
          %v1491 = vlaneseq
          %v1492 = vshrl.u32 %v1491, 7
          %v1493 = vsub.s32 %v1490, %v1492
          %v1494 = vrot.slane %v1480, %v1493
          %v1495 = vcombine.high %v1487, %v1487
          %v1496 = vcombine.high %v1494, %v1494
          %v1497 = vcombine.high %v1327, %v1327
          %v1499 = vunpack.c.l.s4 1983009808
          %v1500 = vunpack.c.0.s8 %v1499
          %v1501 = vlaneseq
          %v1502 = vshrl.u32 %v1501, 7
          %v1503 = vsub.s32 %v1500, %v1502
          %v1504 = vrot.slane %v1327, %v1503
          %v1506 = vunpack.c.l.s4 1983009808
          %v1507 = vunpack.c.0.s8 %v1506
          %v1508 = vlaneseq
          %v1509 = vshrl.u32 %v1508, 7
          %v1510 = vsub.s32 %v1507, %v1509
          %v1511 = vrot.slane %v1497, %v1510
          %v1512 = vcombine.high %v1504, %v1504
          %v1513 = vcombine.high %v1511, %v1511
          %v1514 = vcombine.high %v1328, %v1328
          %v1516 = vunpack.c.l.s4 1983009808
          %v1517 = vunpack.c.0.s8 %v1516
          %v1518 = vlaneseq
          %v1519 = vshrl.u32 %v1518, 7
          %v1520 = vsub.s32 %v1517, %v1519
          %v1521 = vrot.slane %v1328, %v1520
          %v1523 = vunpack.c.l.s4 1983009808
          %v1524 = vunpack.c.0.s8 %v1523
          %v1525 = vlaneseq
          %v1526 = vshrl.u32 %v1525, 7
          %v1527 = vsub.s32 %v1524, %v1526
          %v1528 = vrot.slane %v1514, %v1527
          %v1529 = vcombine.high %v1521, %v1521
          %v1530 = vcombine.high %v1528, %v1528
          %v1531 = vcombine.high %v1329, %v1329
          %v1533 = vunpack.c.l.s4 1983009808
          %v1534 = vunpack.c.0.s8 %v1533
          %v1535 = vlaneseq
          %v1536 = vshrl.u32 %v1535, 7
          %v1537 = vsub.s32 %v1534, %v1536
          %v1538 = vrot.slane %v1329, %v1537
          %v1540 = vunpack.c.l.s4 1983009808
          %v1541 = vunpack.c.0.s8 %v1540
          %v1542 = vlaneseq
          %v1543 = vshrl.u32 %v1542, 7
          %v1544 = vsub.s32 %v1541, %v1543
          %v1545 = vrot.slane %v1531, %v1544
          %v1546 = vcombine.high %v1538, %v1538
          %v1547 = vcombine.high %v1545, %v1545
          %v1549 = vunpack.c.l.s4 1983009808
          %v1550 = vunpack.c.0.s8 %v1549
          %v1551 = vlaneseq
          %v1552 = vshrl.u32 %v1551, 7
          %v1553 = vsub.s32 %v1550, %v1552
          %v1554 = vrot.slane %v1330, %v1553
          %v1555 = vcombine.high %v1554, %v1554
          %v1611 = vunpack.c.l.s4 269488144
          %v1612 = vunpack.c.0.s8 %v1611
          %v1613 = vlaneseq
          %v1614 = vshrl.u32 %v1613, 7
          %v1615 = vsub.s32 %v1612, %v1614
          %v1616 = vrot.slane %v392, %v1615
          %v1618 = vunpack.c.l.s4 842150450
          %v1619 = vunpack.c.0.s8 %v1618
          %v1620 = vlaneseq
          %v1621 = vshrl.u32 %v1620, 7
          %v1622 = vsub.s32 %v1619, %v1621
          %v1623 = vrot.slane %v392, %v1622
          %v1625 = vunpack.c.l.s4 1414812756
          %v1626 = vunpack.c.0.s8 %v1625
          %v1627 = vlaneseq
          %v1628 = vshrl.u32 %v1627, 7
          %v1629 = vsub.s32 %v1626, %v1628
          %v1630 = vrot.slane %v392, %v1629
          %v1632 = vunpack.c.l.s4 1987475062
          %v1633 = vunpack.c.0.s8 %v1632
          %v1634 = vlaneseq
          %v1635 = vshrl.u32 %v1634, 7
          %v1636 = vsub.s32 %v1633, %v1635
          %v1637 = vrot.slane %v392, %v1636
          %v1639 = vunpack.c.l.s4 269488144
          %v1640 = vunpack.c.0.s8 %v1639
          %v1641 = vlaneseq
          %v1642 = vshrl.u32 %v1641, 7
          %v1643 = vsub.s32 %v1640, %v1642
          %v1644 = vrot.slane %v393, %v1643
          %v1646 = vunpack.c.l.s4 269488144
          %v1647 = vunpack.c.0.s8 %v1646
          %v1648 = vlaneseq
          %v1649 = vshrl.u32 %v1648, 7
          %v1650 = vsub.s32 %v1647, %v1649
          %v1651 = vrot.slane %v394, %v1650
          %v1653 = vunpack.c.l.s4 842150450
          %v1654 = vunpack.c.0.s8 %v1653
          %v1655 = vlaneseq
          %v1656 = vshrl.u32 %v1655, 7
          %v1657 = vsub.s32 %v1654, %v1656
          %v1658 = vrot.slane %v394, %v1657
          %v1660 = vunpack.c.l.s4 1414812756
          %v1661 = vunpack.c.0.s8 %v1660
          %v1662 = vlaneseq
          %v1663 = vshrl.u32 %v1662, 7
          %v1664 = vsub.s32 %v1661, %v1663
          %v1665 = vrot.slane %v394, %v1664
          %v1667 = vunpack.c.l.s4 1987475062
          %v1668 = vunpack.c.0.s8 %v1667
          %v1669 = vlaneseq
          %v1670 = vshrl.u32 %v1669, 7
          %v1671 = vsub.s32 %v1668, %v1670
          %v1672 = vrot.slane %v394, %v1671
          %v1674 = vunpack.c.l.s4 269488144
          %v1675 = vunpack.c.0.s8 %v1674
          %v1676 = vlaneseq
          %v1677 = vshrl.u32 %v1676, 7
          %v1678 = vsub.s32 %v1675, %v1677
          %v1679 = vrot.slane %v395, %v1678
          %v1690 = vmul.f32 %v1351, %v1616
          %v1691 = vmul.f32 %v1359, %v1623
          %v1692 = vmul.f32 %v1358, %v1630
          %v1693 = vmul.f32 %v1360, %v1637
          %v1694 = vmul.f32 %v1368, %v1644
          %v1695 = vmul.f32 %v1376, %v1651
          %v1696 = vmul.f32 %v1375, %v1658
          %v1697 = vmul.f32 %v1377, %v1665
          %v1698 = vmul.f32 %v1385, %v1672
          %v1699 = vmul.f32 %v1393, %v1679
          %v1700 = vmul.f32 %v1392, %v1651
          %v1701 = vmul.f32 %v1394, %v1658
          %v1702 = vmul.f32 %v1402, %v1665
          %v1703 = vmul.f32 %v1410, %v1672
          %v1704 = vmul.f32 %v1409, %v1679
          %v1705 = vmul.f32 %v1411, %v1651
          %v1706 = vmul.f32 %v1419, %v1658
          %v1707 = vmul.f32 %v1427, %v1665
          %v1708 = vmul.f32 %v1426, %v1672
          %v1709 = vmul.f32 %v1428, %v1679
          %v1710 = vmul.f32 %v1436, %v1651
          %v1711 = vmul.f32 %v1444, %v1658
          %v1712 = vmul.f32 %v1443, %v1665
          %v1713 = vmul.f32 %v1445, %v1672
          %v1714 = vmul.f32 %v1453, %v1679
          %v1715 = vmul.f32 %v1461, %v1651
          %v1716 = vmul.f32 %v1460, %v1658
          %v1717 = vmul.f32 %v1462, %v1665
          %v1718 = vmul.f32 %v1470, %v1672
          %v1719 = vmul.f32 %v1478, %v1679
          %v1720 = vmul.f32 %v1477, %v1651
          %v1721 = vmul.f32 %v1479, %v1658
          %v1722 = vmul.f32 %v1487, %v1665
          %v1723 = vmul.f32 %v1495, %v1672
          %v1724 = vmul.f32 %v1494, %v1679
          %v1725 = vmul.f32 %v1496, %v1651
          %v1726 = vmul.f32 %v1504, %v1658
          %v1727 = vmul.f32 %v1512, %v1665
          %v1728 = vmul.f32 %v1511, %v1672
          %v1729 = vmul.f32 %v1513, %v1679
          %v1730 = vmul.f32 %v1521, %v1651
          %v1731 = vmul.f32 %v1529, %v1658
          %v1732 = vmul.f32 %v1528, %v1665
          %v1733 = vmul.f32 %v1530, %v1672
          %v1734 = vmul.f32 %v1538, %v1679
          %v1735 = vmul.f32 %v1546, %v1616
          %v1736 = vmul.f32 %v1545, %v1623
          %v1737 = vmul.f32 %v1547, %v1630
          %v1738 = vmul.f32 %v1554, %v1637
          %v1739 = vmul.f32 %v1555, %v1644
          %v1790 = vcombine.low %v1690, %v1691
          %v1791 = vcombine.low %v1692, %v1693
          %v1793 = vunpack.c.l.s4 1983009808
          %v1794 = vunpack.c.0.s8 %v1793
          %v1795 = vlaneseq
          %v1796 = vshrl.u32 %v1795, 7
          %v1797 = vsub.s32 %v1794, %v1796
          %v1798 = vrot.slane %v1790, %v1797
          %v1800 = vunpack.c.l.s4 1983009808
          %v1801 = vunpack.c.0.s8 %v1800
          %v1802 = vlaneseq
          %v1803 = vshrl.u32 %v1802, 7
          %v1804 = vsub.s32 %v1801, %v1803
          %v1805 = vrot.slane %v1791, %v1804
          %v1806 = vcombine.low %v1798, %v1805
          %v1808 = vunpack.c.l.s4 1983009808
          %v1809 = vunpack.c.0.s8 %v1808
          %v1810 = vlaneseq
          %v1811 = vshrl.u32 %v1810, 7
          %v1812 = vsub.s32 %v1809, %v1811
          %v1813 = vrot.slane %v1694, %v1812
          %v1814 = vcombine.low %v1695, %v1696
          %v1815 = vcombine.low %v1697, %v1698
          %v1817 = vunpack.c.l.s4 1983009808
          %v1818 = vunpack.c.0.s8 %v1817
          %v1819 = vlaneseq
          %v1820 = vshrl.u32 %v1819, 7
          %v1821 = vsub.s32 %v1818, %v1820
          %v1822 = vrot.slane %v1814, %v1821
          %v1824 = vunpack.c.l.s4 1983009808
          %v1825 = vunpack.c.0.s8 %v1824
          %v1826 = vlaneseq
          %v1827 = vshrl.u32 %v1826, 7
          %v1828 = vsub.s32 %v1825, %v1827
          %v1829 = vrot.slane %v1815, %v1828
          %v1830 = vcombine.low %v1822, %v1829
          %v1832 = vunpack.c.l.s4 1983009808
          %v1833 = vunpack.c.0.s8 %v1832
          %v1834 = vlaneseq
          %v1835 = vshrl.u32 %v1834, 7
          %v1836 = vsub.s32 %v1833, %v1835
          %v1837 = vrot.slane %v1699, %v1836
          %v1838 = vcombine.low %v1700, %v1701
          %v1839 = vcombine.low %v1702, %v1703
          %v1841 = vunpack.c.l.s4 1983009808
          %v1842 = vunpack.c.0.s8 %v1841
          %v1843 = vlaneseq
          %v1844 = vshrl.u32 %v1843, 7
          %v1845 = vsub.s32 %v1842, %v1844
          %v1846 = vrot.slane %v1838, %v1845
          %v1848 = vunpack.c.l.s4 1983009808
          %v1849 = vunpack.c.0.s8 %v1848
          %v1850 = vlaneseq
          %v1851 = vshrl.u32 %v1850, 7
          %v1852 = vsub.s32 %v1849, %v1851
          %v1853 = vrot.slane %v1839, %v1852
          %v1854 = vcombine.low %v1846, %v1853
          %v1856 = vunpack.c.l.s4 1983009808
          %v1857 = vunpack.c.0.s8 %v1856
          %v1858 = vlaneseq
          %v1859 = vshrl.u32 %v1858, 7
          %v1860 = vsub.s32 %v1857, %v1859
          %v1861 = vrot.slane %v1704, %v1860
          %v1862 = vcombine.low %v1705, %v1706
          %v1863 = vcombine.low %v1707, %v1708
          %v1865 = vunpack.c.l.s4 1983009808
          %v1866 = vunpack.c.0.s8 %v1865
          %v1867 = vlaneseq
          %v1868 = vshrl.u32 %v1867, 7
          %v1869 = vsub.s32 %v1866, %v1868
          %v1870 = vrot.slane %v1862, %v1869
          %v1872 = vunpack.c.l.s4 1983009808
          %v1873 = vunpack.c.0.s8 %v1872
          %v1874 = vlaneseq
          %v1875 = vshrl.u32 %v1874, 7
          %v1876 = vsub.s32 %v1873, %v1875
          %v1877 = vrot.slane %v1863, %v1876
          %v1878 = vcombine.low %v1870, %v1877
          %v1880 = vunpack.c.l.s4 1983009808
          %v1881 = vunpack.c.0.s8 %v1880
          %v1882 = vlaneseq
          %v1883 = vshrl.u32 %v1882, 7
          %v1884 = vsub.s32 %v1881, %v1883
          %v1885 = vrot.slane %v1709, %v1884
          %v1886 = vcombine.low %v1710, %v1711
          %v1887 = vcombine.low %v1712, %v1713
          %v1889 = vunpack.c.l.s4 1983009808
          %v1890 = vunpack.c.0.s8 %v1889
          %v1891 = vlaneseq
          %v1892 = vshrl.u32 %v1891, 7
          %v1893 = vsub.s32 %v1890, %v1892
          %v1894 = vrot.slane %v1886, %v1893
          %v1896 = vunpack.c.l.s4 1983009808
          %v1897 = vunpack.c.0.s8 %v1896
          %v1898 = vlaneseq
          %v1899 = vshrl.u32 %v1898, 7
          %v1900 = vsub.s32 %v1897, %v1899
          %v1901 = vrot.slane %v1887, %v1900
          %v1902 = vcombine.low %v1894, %v1901
          %v1904 = vunpack.c.l.s4 1983009808
          %v1905 = vunpack.c.0.s8 %v1904
          %v1906 = vlaneseq
          %v1907 = vshrl.u32 %v1906, 7
          %v1908 = vsub.s32 %v1905, %v1907
          %v1909 = vrot.slane %v1714, %v1908
          %v1910 = vcombine.low %v1715, %v1716
          %v1911 = vcombine.low %v1717, %v1718
          %v1913 = vunpack.c.l.s4 1983009808
          %v1914 = vunpack.c.0.s8 %v1913
          %v1915 = vlaneseq
          %v1916 = vshrl.u32 %v1915, 7
          %v1917 = vsub.s32 %v1914, %v1916
          %v1918 = vrot.slane %v1910, %v1917
          %v1920 = vunpack.c.l.s4 1983009808
          %v1921 = vunpack.c.0.s8 %v1920
          %v1922 = vlaneseq
          %v1923 = vshrl.u32 %v1922, 7
          %v1924 = vsub.s32 %v1921, %v1923
          %v1925 = vrot.slane %v1911, %v1924
          %v1926 = vcombine.low %v1918, %v1925
          %v1928 = vunpack.c.l.s4 1983009808
          %v1929 = vunpack.c.0.s8 %v1928
          %v1930 = vlaneseq
          %v1931 = vshrl.u32 %v1930, 7
          %v1932 = vsub.s32 %v1929, %v1931
          %v1933 = vrot.slane %v1719, %v1932
          %v1934 = vcombine.low %v1720, %v1721
          %v1935 = vcombine.low %v1722, %v1723
          %v1937 = vunpack.c.l.s4 1983009808
          %v1938 = vunpack.c.0.s8 %v1937
          %v1939 = vlaneseq
          %v1940 = vshrl.u32 %v1939, 7
          %v1941 = vsub.s32 %v1938, %v1940
          %v1942 = vrot.slane %v1934, %v1941
          %v1944 = vunpack.c.l.s4 1983009808
          %v1945 = vunpack.c.0.s8 %v1944
          %v1946 = vlaneseq
          %v1947 = vshrl.u32 %v1946, 7
          %v1948 = vsub.s32 %v1945, %v1947
          %v1949 = vrot.slane %v1935, %v1948
          %v1950 = vcombine.low %v1942, %v1949
          %v1952 = vunpack.c.l.s4 1983009808
          %v1953 = vunpack.c.0.s8 %v1952
          %v1954 = vlaneseq
          %v1955 = vshrl.u32 %v1954, 7
          %v1956 = vsub.s32 %v1953, %v1955
          %v1957 = vrot.slane %v1724, %v1956
          %v1958 = vcombine.low %v1725, %v1726
          %v1959 = vcombine.low %v1727, %v1728
          %v1961 = vunpack.c.l.s4 1983009808
          %v1962 = vunpack.c.0.s8 %v1961
          %v1963 = vlaneseq
          %v1964 = vshrl.u32 %v1963, 7
          %v1965 = vsub.s32 %v1962, %v1964
          %v1966 = vrot.slane %v1958, %v1965
          %v1968 = vunpack.c.l.s4 1983009808
          %v1969 = vunpack.c.0.s8 %v1968
          %v1970 = vlaneseq
          %v1971 = vshrl.u32 %v1970, 7
          %v1972 = vsub.s32 %v1969, %v1971
          %v1973 = vrot.slane %v1959, %v1972
          %v1974 = vcombine.low %v1966, %v1973
          %v1976 = vunpack.c.l.s4 1983009808
          %v1977 = vunpack.c.0.s8 %v1976
          %v1978 = vlaneseq
          %v1979 = vshrl.u32 %v1978, 7
          %v1980 = vsub.s32 %v1977, %v1979
          %v1981 = vrot.slane %v1729, %v1980
          %v1982 = vcombine.low %v1730, %v1731
          %v1983 = vcombine.low %v1732, %v1733
          %v1985 = vunpack.c.l.s4 1983009808
          %v1986 = vunpack.c.0.s8 %v1985
          %v1987 = vlaneseq
          %v1988 = vshrl.u32 %v1987, 7
          %v1989 = vsub.s32 %v1986, %v1988
          %v1990 = vrot.slane %v1982, %v1989
          %v1992 = vunpack.c.l.s4 1983009808
          %v1993 = vunpack.c.0.s8 %v1992
          %v1994 = vlaneseq
          %v1995 = vshrl.u32 %v1994, 7
          %v1996 = vsub.s32 %v1993, %v1995
          %v1997 = vrot.slane %v1983, %v1996
          %v1998 = vcombine.low %v1990, %v1997
          %v2000 = vunpack.c.l.s4 1983009808
          %v2001 = vunpack.c.0.s8 %v2000
          %v2002 = vlaneseq
          %v2003 = vshrl.u32 %v2002, 7
          %v2004 = vsub.s32 %v2001, %v2003
          %v2005 = vrot.slane %v1734, %v2004
          %v2006 = vcombine.low %v1735, %v1736
          %v2007 = vcombine.low %v1737, %v1738
          %v2009 = vunpack.c.l.s4 1983009808
          %v2010 = vunpack.c.0.s8 %v2009
          %v2011 = vlaneseq
          %v2012 = vshrl.u32 %v2011, 7
          %v2013 = vsub.s32 %v2010, %v2012
          %v2014 = vrot.slane %v2006, %v2013
          %v2016 = vunpack.c.l.s4 1983009808
          %v2017 = vunpack.c.0.s8 %v2016
          %v2018 = vlaneseq
          %v2019 = vshrl.u32 %v2018, 7
          %v2020 = vsub.s32 %v2017, %v2019
          %v2021 = vrot.slane %v2007, %v2020
          %v2022 = vcombine.low %v2014, %v2021
          %v2024 = vunpack.c.l.s4 1983009808
          %v2025 = vunpack.c.0.s8 %v2024
          %v2026 = vlaneseq
          %v2027 = vshrl.u32 %v2026, 7
          %v2028 = vsub.s32 %v2025, %v2027
          %v2029 = vrot.slane %v1739, %v2028
          %v2050 = vpack.c.bf16 %v1813, %v1806
          %v2051 = vpack.c.bf16 %v1837, %v1830
          %v2052 = vpack.c.bf16 %v1861, %v1854
          %v2053 = vpack.c.bf16 %v1885, %v1878
          %v2054 = vpack.c.bf16 %v1909, %v1902
          %v2055 = vpack.c.bf16 %v1933, %v1926
          %v2056 = vpack.c.bf16 %v1957, %v1950
          %v2057 = vpack.c.bf16 %v1981, %v1974
          %v2058 = vpack.c.bf16 %v2005, %v1998
          %v2059 = vpack.c.bf16 %v2029, %v2022
          %v2070 = vunpack.c.l.b16 %v2050
          %v2071 = vunpack.c.h.b16 %v2050
          %v2072 = vunpack.c.l.b16 %v2051
          %v2073 = vunpack.c.h.b16 %v2051
          %v2074 = vunpack.c.l.b16 %v2052
          %v2075 = vunpack.c.h.b16 %v2052
          %v2076 = vunpack.c.l.b16 %v2053
          %v2077 = vunpack.c.h.b16 %v2053
          %v2078 = vunpack.c.l.b16 %v2054
          %v2079 = vunpack.c.h.b16 %v2054
          %v2080 = vunpack.c.l.b16 %v2055
          %v2081 = vunpack.c.h.b16 %v2055
          %v2082 = vunpack.c.l.b16 %v2056
          %v2083 = vunpack.c.h.b16 %v2056
          %v2084 = vunpack.c.l.b16 %v2057
          %v2085 = vunpack.c.h.b16 %v2057
          %v2086 = vunpack.c.l.b16 %v2058
          %v2087 = vunpack.c.h.b16 %v2058
          %v2088 = vunpack.c.l.b16 %v2059
          %v2089 = vunpack.c.h.b16 %v2059
          %v2090 = vpack.c.b16 %v2070, %v2070
          %v2091 = vpack.c.b16 %v2071, %v2071
          %v2092 = vpack.c.b16 %v2072, %v2072
          %v2093 = vpack.c.b16 %v2073, %v2073
          %v2094 = vpack.c.b16 %v2074, %v2074
          %v2095 = vpack.c.b16 %v2075, %v2075
          %v2096 = vpack.c.b16 %v2076, %v2076
          %v2097 = vpack.c.b16 %v2077, %v2077
          %v2098 = vpack.c.b16 %v2078, %v2078
          %v2099 = vpack.c.b16 %v2079, %v2079
          %v2100 = vpack.c.b16 %v2080, %v2080
          %v2101 = vpack.c.b16 %v2081, %v2081
          %v2102 = vpack.c.b16 %v2082, %v2082
          %v2103 = vpack.c.b16 %v2083, %v2083
          %v2104 = vpack.c.b16 %v2084, %v2084
          %v2105 = vpack.c.b16 %v2085, %v2085
          %v2106 = vpack.c.b16 %v2086, %v2086
          %v2107 = vpack.c.b16 %v2087, %v2087
          %v2108 = vpack.c.b16 %v2088, %v2088
          %v2109 = vpack.c.b16 %v2089, %v2089
          %s2130 = scalar_lea.vmem [#allocation2], 80
          %2131 = vst.msk [vmem:[%s2130] sm:$0xf] %vm400, %v2090
          %2132 = vst.msk [vmem:[%s2130 + $0x4] sm:$0x1] %vm402, %v2091
          %2133 = vst.msk [vmem:[%s2130 + $0x8] sm:$0xf] %vm400, %v2092
          %2134 = vst.msk [vmem:[%s2130 + $0xc] sm:$0x1] %vm402, %v2093
          %2135 = vst.msk [vmem:[%s2130 + $0x10] sm:$0xf] %vm400, %v2094
          %2136 = vst.msk [vmem:[%s2130 + $0x14] sm:$0x1] %vm402, %v2095
          %2137 = vst.msk [vmem:[%s2130 + $0x18] sm:$0xf] %vm400, %v2096
          %2138 = vst.msk [vmem:[%s2130 + $0x1c] sm:$0x1] %vm402, %v2097
          %2139 = vst.msk [vmem:[%s2130 + $0x20] sm:$0xf] %vm400, %v2098
          %2140 = vst.msk [vmem:[%s2130 + $0x24] sm:$0x1] %vm402, %v2099
          %2141 = vst.msk [vmem:[%s2130 + $0x28] sm:$0xf] %vm400, %v2100
          %2142 = vst.msk [vmem:[%s2130 + $0x2c] sm:$0x1] %vm402, %v2101
          %2143 = vst.msk [vmem:[%s2130 + $0x30] sm:$0xf] %vm400, %v2102
          %2144 = vst.msk [vmem:[%s2130 + $0x34] sm:$0x1] %vm402, %v2103
          %2145 = vst.msk [vmem:[%s2130 + $0x38] sm:$0xf] %vm400, %v2104
          %2146 = vst.msk [vmem:[%s2130 + $0x3c] sm:$0x1] %vm402, %v2105
          %2147 = vst.msk [vmem:[%s2130 + $0x40] sm:$0xf] %vm400, %v2106
          %2148 = vst.msk [vmem:[%s2130 + $0x44] sm:$0x1] %vm402, %v2107
          %2149 = vst.msk [vmem:[%s2130 + $0x48] sm:$0xf] %vm400, %v2108
          %2150 = vst.msk [vmem:[%s2130 + $0x4c] sm:$0x1] %vm402, %v2109
        $region64: #{resblock3d_forward.1} parent=59 // pred_fallthru
          _
        %p2151 = scmp.lt.s32.totalorder %s29, 7
        // Predicated region
        $region65: #{resblock3d_forward.1} parent=59 // pred_check
          %p2152 = pneg %p2151
        $region66: #{resblock3d_forward.1} parent=59 // pred_check_branch
          %2154 = sbr.rel (%p2152) target = $region68
        $region67: #{resblock3d_forward.1} parent=59 // pred_region
          %s2155 = sadd.s32 %s29, 2
          %s2156 = smul.u32 %s2155, 20
          %s2157 = smul.addr %s2156, 4
          %s2158 = scalar_lea.vmem %s371, %s2157
          %v2159 = vld [vmem:[%s2158] sm:$0xf]
          %v2160 = vld [vmem:[%s2158 + $0x4] sm:$0x1]
          %v2161 = vld [vmem:[%s2158 + $0x8] sm:$0xf]
          %v2162 = vld [vmem:[%s2158 + $0xc] sm:$0x1]
          %v2163 = vld [vmem:[%s2158 + $0x10] sm:$0xf]
          %v2164 = vld [vmem:[%s2158 + $0x14] sm:$0x1]
          %v2165 = vld [vmem:[%s2158 + $0x18] sm:$0xf]
          %v2166 = vld [vmem:[%s2158 + $0x1c] sm:$0x1]
          %v2167 = vld [vmem:[%s2158 + $0x20] sm:$0xf]
          %v2168 = vld [vmem:[%s2158 + $0x24] sm:$0x1]
          %v2169 = vld [vmem:[%s2158 + $0x28] sm:$0xf]
          %v2170 = vld [vmem:[%s2158 + $0x2c] sm:$0x1]
          %v2171 = vld [vmem:[%s2158 + $0x30] sm:$0xf]
          %v2172 = vld [vmem:[%s2158 + $0x34] sm:$0x1]
          %v2173 = vld [vmem:[%s2158 + $0x38] sm:$0xf]
          %v2174 = vld [vmem:[%s2158 + $0x3c] sm:$0x1]
          %v2175 = vld [vmem:[%s2158 + $0x40] sm:$0xf]
          %v2176 = vld [vmem:[%s2158 + $0x44] sm:$0x1]
          %v2177 = vld [vmem:[%s2158 + $0x48] sm:$0xf]
          %v2178 = vld [vmem:[%s2158 + $0x4c] sm:$0x1]
          %v2200 = vunpack.c.l.s4 1966171168
          %v2201 = vunpack.c.0.s8 %v2200
          %v2202 = vlaneseq
          %v2203 = vshrl.u32 %v2202, 7
          %v2204 = vsub.s32 %v2201, %v2203
          %v2205 = vrot.slane %v2159, %v2204
          %v2206 = vcombine.high %v2205, %v2205
          %v2208 = vunpack.c.l.s4 1966171168
          %v2209 = vunpack.c.0.s8 %v2208
          %v2210 = vlaneseq
          %v2211 = vshrl.u32 %v2210, 7
          %v2212 = vsub.s32 %v2209, %v2211
          %v2213 = vrot.slane %v2205, %v2212
          %v2215 = vunpack.c.l.s4 1966171168
          %v2216 = vunpack.c.0.s8 %v2215
          %v2217 = vlaneseq
          %v2218 = vshrl.u32 %v2217, 7
          %v2219 = vsub.s32 %v2216, %v2218
          %v2220 = vrot.slane %v2206, %v2219
          %v2221 = vcombine.high %v2213, %v2213
          %v2222 = vcombine.high %v2220, %v2220
          %v2224 = vunpack.c.l.s4 1966171168
          %v2225 = vunpack.c.0.s8 %v2224
          %v2226 = vlaneseq
          %v2227 = vshrl.u32 %v2226, 7
          %v2228 = vsub.s32 %v2225, %v2227
          %v2229 = vrot.slane %v2160, %v2228
          %v2231 = vunpack.c.l.s4 1966171168
          %v2232 = vunpack.c.0.s8 %v2231
          %v2233 = vlaneseq
          %v2234 = vshrl.u32 %v2233, 7
          %v2235 = vsub.s32 %v2232, %v2234
          %v2236 = vrot.slane %v2229, %v2235
          %v2238 = vunpack.c.l.s4 1966171168
          %v2239 = vunpack.c.0.s8 %v2238
          %v2240 = vlaneseq
          %v2241 = vshrl.u32 %v2240, 7
          %v2242 = vsub.s32 %v2239, %v2241
          %v2243 = vrot.slane %v2161, %v2242
          %v2244 = vcombine.high %v2243, %v2243
          %v2246 = vunpack.c.l.s4 1966171168
          %v2247 = vunpack.c.0.s8 %v2246
          %v2248 = vlaneseq
          %v2249 = vshrl.u32 %v2248, 7
          %v2250 = vsub.s32 %v2247, %v2249
          %v2251 = vrot.slane %v2243, %v2250
          %v2253 = vunpack.c.l.s4 1966171168
          %v2254 = vunpack.c.0.s8 %v2253
          %v2255 = vlaneseq
          %v2256 = vshrl.u32 %v2255, 7
          %v2257 = vsub.s32 %v2254, %v2256
          %v2258 = vrot.slane %v2244, %v2257
          %v2259 = vcombine.high %v2251, %v2251
          %v2260 = vcombine.high %v2258, %v2258
          %v2262 = vunpack.c.l.s4 1966171168
          %v2263 = vunpack.c.0.s8 %v2262
          %v2264 = vlaneseq
          %v2265 = vshrl.u32 %v2264, 7
          %v2266 = vsub.s32 %v2263, %v2265
          %v2267 = vrot.slane %v2162, %v2266
          %v2269 = vunpack.c.l.s4 1966171168
          %v2270 = vunpack.c.0.s8 %v2269
          %v2271 = vlaneseq
          %v2272 = vshrl.u32 %v2271, 7
          %v2273 = vsub.s32 %v2270, %v2272
          %v2274 = vrot.slane %v2267, %v2273
          %v2276 = vunpack.c.l.s4 1966171168
          %v2277 = vunpack.c.0.s8 %v2276
          %v2278 = vlaneseq
          %v2279 = vshrl.u32 %v2278, 7
          %v2280 = vsub.s32 %v2277, %v2279
          %v2281 = vrot.slane %v2163, %v2280
          %v2282 = vcombine.high %v2281, %v2281
          %v2284 = vunpack.c.l.s4 1966171168
          %v2285 = vunpack.c.0.s8 %v2284
          %v2286 = vlaneseq
          %v2287 = vshrl.u32 %v2286, 7
          %v2288 = vsub.s32 %v2285, %v2287
          %v2289 = vrot.slane %v2281, %v2288
          %v2291 = vunpack.c.l.s4 1966171168
          %v2292 = vunpack.c.0.s8 %v2291
          %v2293 = vlaneseq
          %v2294 = vshrl.u32 %v2293, 7
          %v2295 = vsub.s32 %v2292, %v2294
          %v2296 = vrot.slane %v2282, %v2295
          %v2297 = vcombine.high %v2289, %v2289
          %v2298 = vcombine.high %v2296, %v2296
          %v2300 = vunpack.c.l.s4 1966171168
          %v2301 = vunpack.c.0.s8 %v2300
          %v2302 = vlaneseq
          %v2303 = vshrl.u32 %v2302, 7
          %v2304 = vsub.s32 %v2301, %v2303
          %v2305 = vrot.slane %v2164, %v2304
          %v2307 = vunpack.c.l.s4 1966171168
          %v2308 = vunpack.c.0.s8 %v2307
          %v2309 = vlaneseq
          %v2310 = vshrl.u32 %v2309, 7
          %v2311 = vsub.s32 %v2308, %v2310
          %v2312 = vrot.slane %v2305, %v2311
          %v2314 = vunpack.c.l.s4 1966171168
          %v2315 = vunpack.c.0.s8 %v2314
          %v2316 = vlaneseq
          %v2317 = vshrl.u32 %v2316, 7
          %v2318 = vsub.s32 %v2315, %v2317
          %v2319 = vrot.slane %v2165, %v2318
          %v2320 = vcombine.high %v2319, %v2319
          %v2322 = vunpack.c.l.s4 1966171168
          %v2323 = vunpack.c.0.s8 %v2322
          %v2324 = vlaneseq
          %v2325 = vshrl.u32 %v2324, 7
          %v2326 = vsub.s32 %v2323, %v2325
          %v2327 = vrot.slane %v2319, %v2326
          %v2329 = vunpack.c.l.s4 1966171168
          %v2330 = vunpack.c.0.s8 %v2329
          %v2331 = vlaneseq
          %v2332 = vshrl.u32 %v2331, 7
          %v2333 = vsub.s32 %v2330, %v2332
          %v2334 = vrot.slane %v2320, %v2333
          %v2335 = vcombine.high %v2327, %v2327
          %v2336 = vcombine.high %v2334, %v2334
          %v2338 = vunpack.c.l.s4 1966171168
          %v2339 = vunpack.c.0.s8 %v2338
          %v2340 = vlaneseq
          %v2341 = vshrl.u32 %v2340, 7
          %v2342 = vsub.s32 %v2339, %v2341
          %v2343 = vrot.slane %v2166, %v2342
          %v2345 = vunpack.c.l.s4 1966171168
          %v2346 = vunpack.c.0.s8 %v2345
          %v2347 = vlaneseq
          %v2348 = vshrl.u32 %v2347, 7
          %v2349 = vsub.s32 %v2346, %v2348
          %v2350 = vrot.slane %v2343, %v2349
          %v2352 = vunpack.c.l.s4 1966171168
          %v2353 = vunpack.c.0.s8 %v2352
          %v2354 = vlaneseq
          %v2355 = vshrl.u32 %v2354, 7
          %v2356 = vsub.s32 %v2353, %v2355
          %v2357 = vrot.slane %v2167, %v2356
          %v2358 = vcombine.high %v2357, %v2357
          %v2360 = vunpack.c.l.s4 1966171168
          %v2361 = vunpack.c.0.s8 %v2360
          %v2362 = vlaneseq
          %v2363 = vshrl.u32 %v2362, 7
          %v2364 = vsub.s32 %v2361, %v2363
          %v2365 = vrot.slane %v2357, %v2364
          %v2367 = vunpack.c.l.s4 1966171168
          %v2368 = vunpack.c.0.s8 %v2367
          %v2369 = vlaneseq
          %v2370 = vshrl.u32 %v2369, 7
          %v2371 = vsub.s32 %v2368, %v2370
          %v2372 = vrot.slane %v2358, %v2371
          %v2373 = vcombine.high %v2365, %v2365
          %v2374 = vcombine.high %v2372, %v2372
          %v2376 = vunpack.c.l.s4 1966171168
          %v2377 = vunpack.c.0.s8 %v2376
          %v2378 = vlaneseq
          %v2379 = vshrl.u32 %v2378, 7
          %v2380 = vsub.s32 %v2377, %v2379
          %v2381 = vrot.slane %v2168, %v2380
          %v2383 = vunpack.c.l.s4 1966171168
          %v2384 = vunpack.c.0.s8 %v2383
          %v2385 = vlaneseq
          %v2386 = vshrl.u32 %v2385, 7
          %v2387 = vsub.s32 %v2384, %v2386
          %v2388 = vrot.slane %v2381, %v2387
          %v2390 = vunpack.c.l.s4 1966171168
          %v2391 = vunpack.c.0.s8 %v2390
          %v2392 = vlaneseq
          %v2393 = vshrl.u32 %v2392, 7
          %v2394 = vsub.s32 %v2391, %v2393
          %v2395 = vrot.slane %v2169, %v2394
          %v2396 = vcombine.high %v2395, %v2395
          %v2398 = vunpack.c.l.s4 1966171168
          %v2399 = vunpack.c.0.s8 %v2398
          %v2400 = vlaneseq
          %v2401 = vshrl.u32 %v2400, 7
          %v2402 = vsub.s32 %v2399, %v2401
          %v2403 = vrot.slane %v2395, %v2402
          %v2405 = vunpack.c.l.s4 1966171168
          %v2406 = vunpack.c.0.s8 %v2405
          %v2407 = vlaneseq
          %v2408 = vshrl.u32 %v2407, 7
          %v2409 = vsub.s32 %v2406, %v2408
          %v2410 = vrot.slane %v2396, %v2409
          %v2411 = vcombine.high %v2403, %v2403
          %v2412 = vcombine.high %v2410, %v2410
          %v2414 = vunpack.c.l.s4 1966171168
          %v2415 = vunpack.c.0.s8 %v2414
          %v2416 = vlaneseq
          %v2417 = vshrl.u32 %v2416, 7
          %v2418 = vsub.s32 %v2415, %v2417
          %v2419 = vrot.slane %v2170, %v2418
          %v2421 = vunpack.c.l.s4 1966171168
          %v2422 = vunpack.c.0.s8 %v2421
          %v2423 = vlaneseq
          %v2424 = vshrl.u32 %v2423, 7
          %v2425 = vsub.s32 %v2422, %v2424
          %v2426 = vrot.slane %v2419, %v2425
          %v2428 = vunpack.c.l.s4 1966171168
          %v2429 = vunpack.c.0.s8 %v2428
          %v2430 = vlaneseq
          %v2431 = vshrl.u32 %v2430, 7
          %v2432 = vsub.s32 %v2429, %v2431
          %v2433 = vrot.slane %v2171, %v2432
          %v2434 = vcombine.high %v2433, %v2433
          %v2436 = vunpack.c.l.s4 1966171168
          %v2437 = vunpack.c.0.s8 %v2436
          %v2438 = vlaneseq
          %v2439 = vshrl.u32 %v2438, 7
          %v2440 = vsub.s32 %v2437, %v2439
          %v2441 = vrot.slane %v2433, %v2440
          %v2443 = vunpack.c.l.s4 1966171168
          %v2444 = vunpack.c.0.s8 %v2443
          %v2445 = vlaneseq
          %v2446 = vshrl.u32 %v2445, 7
          %v2447 = vsub.s32 %v2444, %v2446
          %v2448 = vrot.slane %v2434, %v2447
          %v2449 = vcombine.high %v2441, %v2441
          %v2450 = vcombine.high %v2448, %v2448
          %v2452 = vunpack.c.l.s4 1966171168
          %v2453 = vunpack.c.0.s8 %v2452
          %v2454 = vlaneseq
          %v2455 = vshrl.u32 %v2454, 7
          %v2456 = vsub.s32 %v2453, %v2455
          %v2457 = vrot.slane %v2172, %v2456
          %v2459 = vunpack.c.l.s4 1966171168
          %v2460 = vunpack.c.0.s8 %v2459
          %v2461 = vlaneseq
          %v2462 = vshrl.u32 %v2461, 7
          %v2463 = vsub.s32 %v2460, %v2462
          %v2464 = vrot.slane %v2457, %v2463
          %v2466 = vunpack.c.l.s4 1966171168
          %v2467 = vunpack.c.0.s8 %v2466
          %v2468 = vlaneseq
          %v2469 = vshrl.u32 %v2468, 7
          %v2470 = vsub.s32 %v2467, %v2469
          %v2471 = vrot.slane %v2173, %v2470
          %v2472 = vcombine.high %v2471, %v2471
          %v2474 = vunpack.c.l.s4 1966171168
          %v2475 = vunpack.c.0.s8 %v2474
          %v2476 = vlaneseq
          %v2477 = vshrl.u32 %v2476, 7
          %v2478 = vsub.s32 %v2475, %v2477
          %v2479 = vrot.slane %v2471, %v2478
          %v2481 = vunpack.c.l.s4 1966171168
          %v2482 = vunpack.c.0.s8 %v2481
          %v2483 = vlaneseq
          %v2484 = vshrl.u32 %v2483, 7
          %v2485 = vsub.s32 %v2482, %v2484
          %v2486 = vrot.slane %v2472, %v2485
          %v2487 = vcombine.high %v2479, %v2479
          %v2488 = vcombine.high %v2486, %v2486
          %v2490 = vunpack.c.l.s4 1966171168
          %v2491 = vunpack.c.0.s8 %v2490
          %v2492 = vlaneseq
          %v2493 = vshrl.u32 %v2492, 7
          %v2494 = vsub.s32 %v2491, %v2493
          %v2495 = vrot.slane %v2174, %v2494
          %v2497 = vunpack.c.l.s4 1966171168
          %v2498 = vunpack.c.0.s8 %v2497
          %v2499 = vlaneseq
          %v2500 = vshrl.u32 %v2499, 7
          %v2501 = vsub.s32 %v2498, %v2500
          %v2502 = vrot.slane %v2495, %v2501
          %v2504 = vunpack.c.l.s4 1966171168
          %v2505 = vunpack.c.0.s8 %v2504
          %v2506 = vlaneseq
          %v2507 = vshrl.u32 %v2506, 7
          %v2508 = vsub.s32 %v2505, %v2507
          %v2509 = vrot.slane %v2175, %v2508
          %v2510 = vcombine.high %v2509, %v2509
          %v2512 = vunpack.c.l.s4 1966171168
          %v2513 = vunpack.c.0.s8 %v2512
          %v2514 = vlaneseq
          %v2515 = vshrl.u32 %v2514, 7
          %v2516 = vsub.s32 %v2513, %v2515
          %v2517 = vrot.slane %v2509, %v2516
          %v2519 = vunpack.c.l.s4 1966171168
          %v2520 = vunpack.c.0.s8 %v2519
          %v2521 = vlaneseq
          %v2522 = vshrl.u32 %v2521, 7
          %v2523 = vsub.s32 %v2520, %v2522
          %v2524 = vrot.slane %v2510, %v2523
          %v2525 = vcombine.high %v2517, %v2517
          %v2526 = vcombine.high %v2524, %v2524
          %v2528 = vunpack.c.l.s4 1966171168
          %v2529 = vunpack.c.0.s8 %v2528
          %v2530 = vlaneseq
          %v2531 = vshrl.u32 %v2530, 7
          %v2532 = vsub.s32 %v2529, %v2531
          %v2533 = vrot.slane %v2176, %v2532
          %v2535 = vunpack.c.l.s4 1966171168
          %v2536 = vunpack.c.0.s8 %v2535
          %v2537 = vlaneseq
          %v2538 = vshrl.u32 %v2537, 7
          %v2539 = vsub.s32 %v2536, %v2538
          %v2540 = vrot.slane %v2533, %v2539
          %v2542 = vunpack.c.l.s4 1966171168
          %v2543 = vunpack.c.0.s8 %v2542
          %v2544 = vlaneseq
          %v2545 = vshrl.u32 %v2544, 7
          %v2546 = vsub.s32 %v2543, %v2545
          %v2547 = vrot.slane %v2177, %v2546
          %v2548 = vcombine.high %v2547, %v2547
          %v2550 = vunpack.c.l.s4 1966171168
          %v2551 = vunpack.c.0.s8 %v2550
          %v2552 = vlaneseq
          %v2553 = vshrl.u32 %v2552, 7
          %v2554 = vsub.s32 %v2551, %v2553
          %v2555 = vrot.slane %v2547, %v2554
          %v2557 = vunpack.c.l.s4 1966171168
          %v2558 = vunpack.c.0.s8 %v2557
          %v2559 = vlaneseq
          %v2560 = vshrl.u32 %v2559, 7
          %v2561 = vsub.s32 %v2558, %v2560
          %v2562 = vrot.slane %v2548, %v2561
          %v2563 = vcombine.high %v2555, %v2555
          %v2564 = vcombine.high %v2562, %v2562
          %v2566 = vunpack.c.l.s4 1966171168
          %v2567 = vunpack.c.0.s8 %v2566
          %v2568 = vlaneseq
          %v2569 = vshrl.u32 %v2568, 7
          %v2570 = vsub.s32 %v2567, %v2569
          %v2571 = vrot.slane %v2178, %v2570
          %v2573 = vunpack.c.l.s4 1966171168
          %v2574 = vunpack.c.0.s8 %v2573
          %v2575 = vlaneseq
          %v2576 = vshrl.u32 %v2575, 7
          %v2577 = vsub.s32 %v2574, %v2576
          %v2578 = vrot.slane %v2571, %v2577
          %v2579 = vld [vmem:[%s1] sm:$0xf]
          %v2580 = vld [vmem:[%s1 + $0x4] sm:$0xf]
          %v2581 = vld [vmem:[%s1 + $0x8] sm:$0xf]
          %v2582 = vld [vmem:[%s1 + $0xc] sm:$0xf]
          %v2583 = vcombine.low %v2213, %v2220
          %v2584 = vcombine.low %v2221, %v2222
          %v2585 = vcombine.low %v2236, %v2251
          %v2586 = vcombine.low %v2258, %v2259
          %v2588 = vunpack.c.l.s4 1966171168
          %v2589 = vunpack.c.0.s8 %v2588
          %v2590 = vlaneseq
          %v2591 = vshrl.u32 %v2590, 7
          %v2592 = vsub.s32 %v2589, %v2591
          %v2593 = vrot.slane %v2583, %v2592
          %v2595 = vunpack.c.l.s4 1966171168
          %v2596 = vunpack.c.0.s8 %v2595
          %v2597 = vlaneseq
          %v2598 = vshrl.u32 %v2597, 7
          %v2599 = vsub.s32 %v2596, %v2598
          %v2600 = vrot.slane %v2584, %v2599
          %v2602 = vunpack.c.l.s4 1966171168
          %v2603 = vunpack.c.0.s8 %v2602
          %v2604 = vlaneseq
          %v2605 = vshrl.u32 %v2604, 7
          %v2606 = vsub.s32 %v2603, %v2605
          %v2607 = vrot.slane %v2585, %v2606
          %v2609 = vunpack.c.l.s4 1966171168
          %v2610 = vunpack.c.0.s8 %v2609
          %v2611 = vlaneseq
          %v2612 = vshrl.u32 %v2611, 7
          %v2613 = vsub.s32 %v2610, %v2612
          %v2614 = vrot.slane %v2586, %v2613
          %v2615 = vcombine.low %v2593, %v2600
          %v2616 = vcombine.low %v2607, %v2614
          %v2618 = vunpack.c.l.s4 1966171168
          %v2619 = vunpack.c.0.s8 %v2618
          %v2620 = vlaneseq
          %v2621 = vshrl.u32 %v2620, 7
          %v2622 = vsub.s32 %v2619, %v2621
          %v2623 = vrot.slane %v2615, %v2622
          %v2625 = vunpack.c.l.s4 1966171168
          %v2626 = vunpack.c.0.s8 %v2625
          %v2627 = vlaneseq
          %v2628 = vshrl.u32 %v2627, 7
          %v2629 = vsub.s32 %v2626, %v2628
          %v2630 = vrot.slane %v2616, %v2629
          %v2631 = vcombine.low %v2623, %v2630
          %v2632 = vcombine.low %v2260, %v2274
          %v2633 = vcombine.low %v2289, %v2296
          %v2634 = vcombine.low %v2297, %v2298
          %v2635 = vcombine.low %v2312, %v2327
          %v2637 = vunpack.c.l.s4 1966171168
          %v2638 = vunpack.c.0.s8 %v2637
          %v2639 = vlaneseq
          %v2640 = vshrl.u32 %v2639, 7
          %v2641 = vsub.s32 %v2638, %v2640
          %v2642 = vrot.slane %v2632, %v2641
          %v2644 = vunpack.c.l.s4 1966171168
          %v2645 = vunpack.c.0.s8 %v2644
          %v2646 = vlaneseq
          %v2647 = vshrl.u32 %v2646, 7
          %v2648 = vsub.s32 %v2645, %v2647
          %v2649 = vrot.slane %v2633, %v2648
          %v2651 = vunpack.c.l.s4 1966171168
          %v2652 = vunpack.c.0.s8 %v2651
          %v2653 = vlaneseq
          %v2654 = vshrl.u32 %v2653, 7
          %v2655 = vsub.s32 %v2652, %v2654
          %v2656 = vrot.slane %v2634, %v2655
          %v2658 = vunpack.c.l.s4 1966171168
          %v2659 = vunpack.c.0.s8 %v2658
          %v2660 = vlaneseq
          %v2661 = vshrl.u32 %v2660, 7
          %v2662 = vsub.s32 %v2659, %v2661
          %v2663 = vrot.slane %v2635, %v2662
          %v2664 = vcombine.low %v2642, %v2649
          %v2665 = vcombine.low %v2656, %v2663
          %v2667 = vunpack.c.l.s4 1966171168
          %v2668 = vunpack.c.0.s8 %v2667
          %v2669 = vlaneseq
          %v2670 = vshrl.u32 %v2669, 7
          %v2671 = vsub.s32 %v2668, %v2670
          %v2672 = vrot.slane %v2664, %v2671
          %v2674 = vunpack.c.l.s4 1966171168
          %v2675 = vunpack.c.0.s8 %v2674
          %v2676 = vlaneseq
          %v2677 = vshrl.u32 %v2676, 7
          %v2678 = vsub.s32 %v2675, %v2677
          %v2679 = vrot.slane %v2665, %v2678
          %v2680 = vcombine.low %v2672, %v2679
          %v2681 = vcombine.low %v2334, %v2335
          %v2682 = vcombine.low %v2336, %v2350
          %v2683 = vcombine.low %v2365, %v2372
          %v2684 = vcombine.low %v2373, %v2374
          %v2686 = vunpack.c.l.s4 1966171168
          %v2687 = vunpack.c.0.s8 %v2686
          %v2688 = vlaneseq
          %v2689 = vshrl.u32 %v2688, 7
          %v2690 = vsub.s32 %v2687, %v2689
          %v2691 = vrot.slane %v2681, %v2690
          %v2693 = vunpack.c.l.s4 1966171168
          %v2694 = vunpack.c.0.s8 %v2693
          %v2695 = vlaneseq
          %v2696 = vshrl.u32 %v2695, 7
          %v2697 = vsub.s32 %v2694, %v2696
          %v2698 = vrot.slane %v2682, %v2697
          %v2700 = vunpack.c.l.s4 1966171168
          %v2701 = vunpack.c.0.s8 %v2700
          %v2702 = vlaneseq
          %v2703 = vshrl.u32 %v2702, 7
          %v2704 = vsub.s32 %v2701, %v2703
          %v2705 = vrot.slane %v2683, %v2704
          %v2707 = vunpack.c.l.s4 1966171168
          %v2708 = vunpack.c.0.s8 %v2707
          %v2709 = vlaneseq
          %v2710 = vshrl.u32 %v2709, 7
          %v2711 = vsub.s32 %v2708, %v2710
          %v2712 = vrot.slane %v2684, %v2711
          %v2713 = vcombine.low %v2691, %v2698
          %v2714 = vcombine.low %v2705, %v2712
          %v2716 = vunpack.c.l.s4 1966171168
          %v2717 = vunpack.c.0.s8 %v2716
          %v2718 = vlaneseq
          %v2719 = vshrl.u32 %v2718, 7
          %v2720 = vsub.s32 %v2717, %v2719
          %v2721 = vrot.slane %v2713, %v2720
          %v2723 = vunpack.c.l.s4 1966171168
          %v2724 = vunpack.c.0.s8 %v2723
          %v2725 = vlaneseq
          %v2726 = vshrl.u32 %v2725, 7
          %v2727 = vsub.s32 %v2724, %v2726
          %v2728 = vrot.slane %v2714, %v2727
          %v2729 = vcombine.low %v2721, %v2728
          %v2730 = vcombine.low %v2388, %v2403
          %v2731 = vcombine.low %v2410, %v2411
          %v2732 = vcombine.low %v2412, %v2426
          %v2733 = vcombine.low %v2441, %v2448
          %v2735 = vunpack.c.l.s4 1966171168
          %v2736 = vunpack.c.0.s8 %v2735
          %v2737 = vlaneseq
          %v2738 = vshrl.u32 %v2737, 7
          %v2739 = vsub.s32 %v2736, %v2738
          %v2740 = vrot.slane %v2730, %v2739
          %v2742 = vunpack.c.l.s4 1966171168
          %v2743 = vunpack.c.0.s8 %v2742
          %v2744 = vlaneseq
          %v2745 = vshrl.u32 %v2744, 7
          %v2746 = vsub.s32 %v2743, %v2745
          %v2747 = vrot.slane %v2731, %v2746
          %v2749 = vunpack.c.l.s4 1966171168
          %v2750 = vunpack.c.0.s8 %v2749
          %v2751 = vlaneseq
          %v2752 = vshrl.u32 %v2751, 7
          %v2753 = vsub.s32 %v2750, %v2752
          %v2754 = vrot.slane %v2732, %v2753
          %v2756 = vunpack.c.l.s4 1966171168
          %v2757 = vunpack.c.0.s8 %v2756
          %v2758 = vlaneseq
          %v2759 = vshrl.u32 %v2758, 7
          %v2760 = vsub.s32 %v2757, %v2759
          %v2761 = vrot.slane %v2733, %v2760
          %v2762 = vcombine.low %v2740, %v2747
          %v2763 = vcombine.low %v2754, %v2761
          %v2765 = vunpack.c.l.s4 1966171168
          %v2766 = vunpack.c.0.s8 %v2765
          %v2767 = vlaneseq
          %v2768 = vshrl.u32 %v2767, 7
          %v2769 = vsub.s32 %v2766, %v2768
          %v2770 = vrot.slane %v2762, %v2769
          %v2772 = vunpack.c.l.s4 1966171168
          %v2773 = vunpack.c.0.s8 %v2772
          %v2774 = vlaneseq
          %v2775 = vshrl.u32 %v2774, 7
          %v2776 = vsub.s32 %v2773, %v2775
          %v2777 = vrot.slane %v2763, %v2776
          %v2778 = vcombine.low %v2770, %v2777
          %v2779 = vcombine.low %v2449, %v2450
          %v2780 = vcombine.low %v2464, %v2479
          %v2781 = vcombine.low %v2486, %v2487
          %v2782 = vcombine.low %v2488, %v2502
          %v2784 = vunpack.c.l.s4 1966171168
          %v2785 = vunpack.c.0.s8 %v2784
          %v2786 = vlaneseq
          %v2787 = vshrl.u32 %v2786, 7
          %v2788 = vsub.s32 %v2785, %v2787
          %v2789 = vrot.slane %v2779, %v2788
          %v2791 = vunpack.c.l.s4 1966171168
          %v2792 = vunpack.c.0.s8 %v2791
          %v2793 = vlaneseq
          %v2794 = vshrl.u32 %v2793, 7
          %v2795 = vsub.s32 %v2792, %v2794
          %v2796 = vrot.slane %v2780, %v2795
          %v2798 = vunpack.c.l.s4 1966171168
          %v2799 = vunpack.c.0.s8 %v2798
          %v2800 = vlaneseq
          %v2801 = vshrl.u32 %v2800, 7
          %v2802 = vsub.s32 %v2799, %v2801
          %v2803 = vrot.slane %v2781, %v2802
          %v2805 = vunpack.c.l.s4 1966171168
          %v2806 = vunpack.c.0.s8 %v2805
          %v2807 = vlaneseq
          %v2808 = vshrl.u32 %v2807, 7
          %v2809 = vsub.s32 %v2806, %v2808
          %v2810 = vrot.slane %v2782, %v2809
          %v2811 = vcombine.low %v2789, %v2796
          %v2812 = vcombine.low %v2803, %v2810
          %v2814 = vunpack.c.l.s4 1966171168
          %v2815 = vunpack.c.0.s8 %v2814
          %v2816 = vlaneseq
          %v2817 = vshrl.u32 %v2816, 7
          %v2818 = vsub.s32 %v2815, %v2817
          %v2819 = vrot.slane %v2811, %v2818
          %v2821 = vunpack.c.l.s4 1966171168
          %v2822 = vunpack.c.0.s8 %v2821
          %v2823 = vlaneseq
          %v2824 = vshrl.u32 %v2823, 7
          %v2825 = vsub.s32 %v2822, %v2824
          %v2826 = vrot.slane %v2812, %v2825
          %v2827 = vcombine.low %v2819, %v2826
          %v2828 = vcombine.low %v2517, %v2524
          %v2829 = vcombine.low %v2525, %v2526
          %v2830 = vcombine.low %v2540, %v2555
          %v2831 = vcombine.low %v2562, %v2563
          %v2833 = vunpack.c.l.s4 1966171168
          %v2834 = vunpack.c.0.s8 %v2833
          %v2835 = vlaneseq
          %v2836 = vshrl.u32 %v2835, 7
          %v2837 = vsub.s32 %v2834, %v2836
          %v2838 = vrot.slane %v2828, %v2837
          %v2840 = vunpack.c.l.s4 1966171168
          %v2841 = vunpack.c.0.s8 %v2840
          %v2842 = vlaneseq
          %v2843 = vshrl.u32 %v2842, 7
          %v2844 = vsub.s32 %v2841, %v2843
          %v2845 = vrot.slane %v2829, %v2844
          %v2847 = vunpack.c.l.s4 1966171168
          %v2848 = vunpack.c.0.s8 %v2847
          %v2849 = vlaneseq
          %v2850 = vshrl.u32 %v2849, 7
          %v2851 = vsub.s32 %v2848, %v2850
          %v2852 = vrot.slane %v2830, %v2851
          %v2854 = vunpack.c.l.s4 1966171168
          %v2855 = vunpack.c.0.s8 %v2854
          %v2856 = vlaneseq
          %v2857 = vshrl.u32 %v2856, 7
          %v2858 = vsub.s32 %v2855, %v2857
          %v2859 = vrot.slane %v2831, %v2858
          %v2860 = vcombine.low %v2838, %v2845
          %v2861 = vcombine.low %v2852, %v2859
          %v2863 = vunpack.c.l.s4 1966171168
          %v2864 = vunpack.c.0.s8 %v2863
          %v2865 = vlaneseq
          %v2866 = vshrl.u32 %v2865, 7
          %v2867 = vsub.s32 %v2864, %v2866
          %v2868 = vrot.slane %v2860, %v2867
          %v2870 = vunpack.c.l.s4 1966171168
          %v2871 = vunpack.c.0.s8 %v2870
          %v2872 = vlaneseq
          %v2873 = vshrl.u32 %v2872, 7
          %v2874 = vsub.s32 %v2871, %v2873
          %v2875 = vrot.slane %v2861, %v2874
          %v2876 = vcombine.low %v2868, %v2875
          %v2877 = vcombine.low %v2564, %v2578
          %v2879 = vunpack.c.l.s4 1966171168
          %v2880 = vunpack.c.0.s8 %v2879
          %v2881 = vlaneseq
          %v2882 = vshrl.u32 %v2881, 7
          %v2883 = vsub.s32 %v2880, %v2882
          %v2884 = vrot.slane %v2877, %v2883
          %v2886 = vunpack.c.l.s4 1966171168
          %v2887 = vunpack.c.0.s8 %v2886
          %v2888 = vlaneseq
          %v2889 = vshrl.u32 %v2888, 7
          %v2890 = vsub.s32 %v2887, %v2889
          %v2891 = vrot.slane %v2884, %v2890
          %v2896 = vunpack.c.l.b16 %v2579
          %v2897 = vunpack.c.l.b16 %v2580
          %v2898 = vunpack.c.l.b16 %v2581
          %v2899 = vunpack.c.l.b16 %v2582
          %v2900 = vpack.c.b16 %v2897, %v2896
          %v2901 = vpack.c.b16 %v2899, %v2898
          %vm2904 = vcmask 261120
          %v2906 = vsel %vm2904, %v2631, 0
          %v2909 = vsel %vm2904, %v2680, 0
          %v2912 = vsel %vm2904, %v2729, 0
          %v2915 = vsel %vm2904, %v2778, 0
          %v2918 = vsel %vm2904, %v2827, 0
          %v2921 = vsel %vm2904, %v2876, 0
          %v2924 = vsel %vm2904, %v2891, 0
          %2926 = vmatprep.subr.bf16.mxu0 0
          %2927 = vmatpush1.bf16.msra.mxu0 %v2900
          %2928 = vmatprep.subr.bf16.mxu0 0
          %2929 = vmatpush1.bf16.msra.mxu0 %v2901
          %2930 = vmatprep.subr.bf16.mxu0 0
          %2931 = vmatpush1.bf16.msra.mxu0 0
          %2932 = vmatprep.subr.bf16.mxu0 0
          %2933 = vmatpush1.bf16.msra.mxu0 0
          %2934 = vmatprep.subr.bf16.mxu0 0
          %2935 = vmatpush1.bf16.msra.mxu0 0
          %2936 = vmatprep.subr.bf16.mxu0 0
          %2937 = vmatpush1.bf16.msra.mxu0 0
          %2938 = vmatprep.subr.bf16.mxu0 0
          %2939 = vmatpush1.bf16.msra.mxu0 0
          %2940 = vmatprep.subr.bf16.mxu0 0
          %2941 = vmatpush1.bf16.msra.mxu0 0
          %2942 = vmatprep.subr.bf16.mxu0 0
          %2943 = vmatpush1.bf16.msra.mxu0 0
          %2944 = vmatprep.subr.bf16.mxu0 0
          %2945 = vmatpush1.bf16.msra.mxu0 0
          %2946 = vmatprep.subr.bf16.mxu0 0
          %2947 = vmatpush1.bf16.msra.mxu0 0
          %2948 = vmatprep.subr.bf16.mxu0 0
          %2949 = vmatpush1.bf16.msra.mxu0 0
          %2950 = vmatprep.subr.bf16.mxu0 0
          %2951 = vmatpush1.bf16.msra.mxu0 0
          %2952 = vmatprep.subr.bf16.mxu0 0
          %2953 = vmatpush1.bf16.msra.mxu0 0
          %2954 = vmatprep.subr.bf16.mxu0 0
          %2955 = vmatpush1.bf16.msra.mxu0 0
          %2956 = vmatprep.subr.bf16.mxu0 0
          %2957 = vmatpush1.bf16.msra.mxu0 0
          %2958 = vmatprep.mubr.bf16.mxu0 0
          %2959 = vmatmul.mubr.bf16.gmra.mrb[0].mxu0 %v2906
          %v2960 = vpop.f32.mrb[0].mxu0
          %v2961 = vadd.f32 0.0, %v2960
          %v2962 = vpop.f32.mrb[0].mxu0
          %v2963 = vpop.f32.mrb[0].mxu0
          %v2964 = vadd.f32 0.0, %v2963
          %v2965 = vpop.f32.mrb[0].mxu0
          %2966 = vmatprep.mubr.bf16.mxu0 0
          %2967 = vmatmul.mubr.bf16.gmra.mrb[0].mxu0 %v2909
          %v2968 = vpop.f32.mrb[0].mxu0
          %v2969 = vadd.f32 0.0, %v2968
          %v2970 = vpop.f32.mrb[0].mxu0
          %v2971 = vpop.f32.mrb[0].mxu0
          %v2972 = vadd.f32 0.0, %v2971
          %v2973 = vpop.f32.mrb[0].mxu0
          %2974 = vmatprep.mubr.bf16.mxu0 0
          %2975 = vmatmul.mubr.bf16.gmra.mrb[0].mxu0 %v2912
          %v2976 = vpop.f32.mrb[0].mxu0
          %v2977 = vadd.f32 0.0, %v2976
          %v2978 = vpop.f32.mrb[0].mxu0
          %v2979 = vpop.f32.mrb[0].mxu0
          %v2980 = vadd.f32 0.0, %v2979
          %v2981 = vpop.f32.mrb[0].mxu0
          %2982 = vmatprep.mubr.bf16.mxu0 0
          %2983 = vmatmul.mubr.bf16.gmra.mrb[0].mxu0 %v2915
          %v2984 = vpop.f32.mrb[0].mxu0
          %v2985 = vadd.f32 0.0, %v2984
          %v2986 = vpop.f32.mrb[0].mxu0
          %v2987 = vpop.f32.mrb[0].mxu0
          %v2988 = vadd.f32 0.0, %v2987
          %v2989 = vpop.f32.mrb[0].mxu0
          %2990 = vmatprep.mubr.bf16.mxu0 0
          %2991 = vmatmul.mubr.bf16.gmra.mrb[0].mxu0 %v2918
          %v2992 = vpop.f32.mrb[0].mxu0
          %v2993 = vadd.f32 0.0, %v2992
          %v2994 = vpop.f32.mrb[0].mxu0
          %v2995 = vpop.f32.mrb[0].mxu0
          %v2996 = vadd.f32 0.0, %v2995
          %v2997 = vpop.f32.mrb[0].mxu0
          %2998 = vmatprep.mubr.bf16.mxu0 0
          %2999 = vmatmul.mubr.bf16.gmra.mrb[0].mxu0 %v2921
          %v3000 = vpop.f32.mrb[0].mxu0
          %v3001 = vadd.f32 0.0, %v3000
          %v3002 = vpop.f32.mrb[0].mxu0
          %v3003 = vpop.f32.mrb[0].mxu0
          %v3004 = vadd.f32 0.0, %v3003
          %v3005 = vpop.f32.mrb[0].mxu0
          %3006 = vmatprep.mubr.bf16.mxu0 0
          %3007 = vmatmul.mubr.bf16.gmra.mrb[0].mxu0 %v2924
          %v3008 = vpop.f32.mrb[0].mxu0
          %v3009 = vadd.f32 0.0, %v3008
          %v3010 = vpop.f32.mrb[0].mxu0
          %v3011 = vpop.f32.mrb[0].mxu0
          %v3012 = vpop.f32.mrb[0].mxu0
          %3013 = vdwg.mxu0
          %v3014 = vld [vmem:[%s2] sm:$0x1]
          %v3016 = vlaneseq
          %v3017 = vshrl.u32 %v3016, 7
          %v3018 = vsub.s32 0, %v3017
          %v3019 = vrot.slane %v3014, %v3018
          %v3021 = vmul.f32 %v2961, %v3019
          %v3022 = vmul.f32 %v2964, %v3019
          %v3023 = vmul.f32 %v2969, %v3019
          %v3024 = vmul.f32 %v2972, %v3019
          %v3025 = vmul.f32 %v2977, %v3019
          %v3026 = vmul.f32 %v2980, %v3019
          %v3027 = vmul.f32 %v2985, %v3019
          %v3028 = vmul.f32 %v2988, %v3019
          %v3029 = vmul.f32 %v2993, %v3019
          %v3030 = vmul.f32 %v2996, %v3019
          %v3031 = vmul.f32 %v3001, %v3019
          %v3032 = vmul.f32 %v3004, %v3019
          %v3033 = vmul.f32 %v3009, %v3019
          %v3034 = vld [vmem:[%s3] sm:$0x1]
          %v3036 = vlaneseq
          %v3037 = vshrl.u32 %v3036, 7
          %v3038 = vsub.s32 0, %v3037
          %v3039 = vrot.slane %v3034, %v3038
          %v3041 = vadd.f32 %v3021, %v3039
          %v3042 = vadd.f32 %v3022, %v3039
          %v3043 = vadd.f32 %v3023, %v3039
          %v3044 = vadd.f32 %v3024, %v3039
          %v3045 = vadd.f32 %v3025, %v3039
          %v3046 = vadd.f32 %v3026, %v3039
          %v3047 = vadd.f32 %v3027, %v3039
          %v3048 = vadd.f32 %v3028, %v3039
          %v3049 = vadd.f32 %v3029, %v3039
          %v3050 = vadd.f32 %v3030, %v3039
          %v3051 = vadd.f32 %v3031, %v3039
          %v3052 = vadd.f32 %v3032, %v3039
          %v3053 = vadd.f32 %v3033, %v3039
          %v3054 = vmax.f32 %v3041, 0.0
          %v3055 = vmax.f32 %v3042, 0.0
          %v3056 = vmax.f32 %v3043, 0.0
          %v3057 = vmax.f32 %v3044, 0.0
          %v3058 = vmax.f32 %v3045, 0.0
          %v3059 = vmax.f32 %v3046, 0.0
          %v3060 = vmax.f32 %v3047, 0.0
          %v3061 = vmax.f32 %v3048, 0.0
          %v3062 = vmax.f32 %v3049, 0.0
          %v3063 = vmax.f32 %v3050, 0.0
          %v3064 = vmax.f32 %v3051, 0.0
          %v3065 = vmax.f32 %v3052, 0.0
          %v3066 = vmax.f32 %v3053, 0.0
          %v3080 = vcombine.high %v3054, %v3054
          %v3082 = vunpack.c.l.s4 1983009808
          %v3083 = vunpack.c.0.s8 %v3082
          %v3084 = vlaneseq
          %v3085 = vshrl.u32 %v3084, 7
          %v3086 = vsub.s32 %v3083, %v3085
          %v3087 = vrot.slane %v3054, %v3086
          %v3089 = vunpack.c.l.s4 1983009808
          %v3090 = vunpack.c.0.s8 %v3089
          %v3091 = vlaneseq
          %v3092 = vshrl.u32 %v3091, 7
          %v3093 = vsub.s32 %v3090, %v3092
          %v3094 = vrot.slane %v3080, %v3093
          %v3095 = vcombine.high %v3087, %v3087
          %v3096 = vcombine.high %v3094, %v3094
          %v3097 = vcombine.high %v3055, %v3055
          %v3099 = vunpack.c.l.s4 1983009808
          %v3100 = vunpack.c.0.s8 %v3099
          %v3101 = vlaneseq
          %v3102 = vshrl.u32 %v3101, 7
          %v3103 = vsub.s32 %v3100, %v3102
          %v3104 = vrot.slane %v3055, %v3103
          %v3106 = vunpack.c.l.s4 1983009808
          %v3107 = vunpack.c.0.s8 %v3106
          %v3108 = vlaneseq
          %v3109 = vshrl.u32 %v3108, 7
          %v3110 = vsub.s32 %v3107, %v3109
          %v3111 = vrot.slane %v3097, %v3110
          %v3112 = vcombine.high %v3104, %v3104
          %v3113 = vcombine.high %v3111, %v3111
          %v3114 = vcombine.high %v3056, %v3056
          %v3116 = vunpack.c.l.s4 1983009808
          %v3117 = vunpack.c.0.s8 %v3116
          %v3118 = vlaneseq
          %v3119 = vshrl.u32 %v3118, 7
          %v3120 = vsub.s32 %v3117, %v3119
          %v3121 = vrot.slane %v3056, %v3120
          %v3123 = vunpack.c.l.s4 1983009808
          %v3124 = vunpack.c.0.s8 %v3123
          %v3125 = vlaneseq
          %v3126 = vshrl.u32 %v3125, 7
          %v3127 = vsub.s32 %v3124, %v3126
          %v3128 = vrot.slane %v3114, %v3127
          %v3129 = vcombine.high %v3121, %v3121
          %v3130 = vcombine.high %v3128, %v3128
          %v3131 = vcombine.high %v3057, %v3057
          %v3133 = vunpack.c.l.s4 1983009808
          %v3134 = vunpack.c.0.s8 %v3133
          %v3135 = vlaneseq
          %v3136 = vshrl.u32 %v3135, 7
          %v3137 = vsub.s32 %v3134, %v3136
          %v3138 = vrot.slane %v3057, %v3137
          %v3140 = vunpack.c.l.s4 1983009808
          %v3141 = vunpack.c.0.s8 %v3140
          %v3142 = vlaneseq
          %v3143 = vshrl.u32 %v3142, 7
          %v3144 = vsub.s32 %v3141, %v3143
          %v3145 = vrot.slane %v3131, %v3144
          %v3146 = vcombine.high %v3138, %v3138
          %v3147 = vcombine.high %v3145, %v3145
          %v3148 = vcombine.high %v3058, %v3058
          %v3150 = vunpack.c.l.s4 1983009808
          %v3151 = vunpack.c.0.s8 %v3150
          %v3152 = vlaneseq
          %v3153 = vshrl.u32 %v3152, 7
          %v3154 = vsub.s32 %v3151, %v3153
          %v3155 = vrot.slane %v3058, %v3154
          %v3157 = vunpack.c.l.s4 1983009808
          %v3158 = vunpack.c.0.s8 %v3157
          %v3159 = vlaneseq
          %v3160 = vshrl.u32 %v3159, 7
          %v3161 = vsub.s32 %v3158, %v3160
          %v3162 = vrot.slane %v3148, %v3161
          %v3163 = vcombine.high %v3155, %v3155
          %v3164 = vcombine.high %v3162, %v3162
          %v3165 = vcombine.high %v3059, %v3059
          %v3167 = vunpack.c.l.s4 1983009808
          %v3168 = vunpack.c.0.s8 %v3167
          %v3169 = vlaneseq
          %v3170 = vshrl.u32 %v3169, 7
          %v3171 = vsub.s32 %v3168, %v3170
          %v3172 = vrot.slane %v3059, %v3171
          %v3174 = vunpack.c.l.s4 1983009808
          %v3175 = vunpack.c.0.s8 %v3174
          %v3176 = vlaneseq
          %v3177 = vshrl.u32 %v3176, 7
          %v3178 = vsub.s32 %v3175, %v3177
          %v3179 = vrot.slane %v3165, %v3178
          %v3180 = vcombine.high %v3172, %v3172
          %v3181 = vcombine.high %v3179, %v3179
          %v3182 = vcombine.high %v3060, %v3060
          %v3184 = vunpack.c.l.s4 1983009808
          %v3185 = vunpack.c.0.s8 %v3184
          %v3186 = vlaneseq
          %v3187 = vshrl.u32 %v3186, 7
          %v3188 = vsub.s32 %v3185, %v3187
          %v3189 = vrot.slane %v3060, %v3188
          %v3191 = vunpack.c.l.s4 1983009808
          %v3192 = vunpack.c.0.s8 %v3191
          %v3193 = vlaneseq
          %v3194 = vshrl.u32 %v3193, 7
          %v3195 = vsub.s32 %v3192, %v3194
          %v3196 = vrot.slane %v3182, %v3195
          %v3197 = vcombine.high %v3189, %v3189
          %v3198 = vcombine.high %v3196, %v3196
          %v3199 = vcombine.high %v3061, %v3061
          %v3201 = vunpack.c.l.s4 1983009808
          %v3202 = vunpack.c.0.s8 %v3201
          %v3203 = vlaneseq
          %v3204 = vshrl.u32 %v3203, 7
          %v3205 = vsub.s32 %v3202, %v3204
          %v3206 = vrot.slane %v3061, %v3205
          %v3208 = vunpack.c.l.s4 1983009808
          %v3209 = vunpack.c.0.s8 %v3208
          %v3210 = vlaneseq
          %v3211 = vshrl.u32 %v3210, 7
          %v3212 = vsub.s32 %v3209, %v3211
          %v3213 = vrot.slane %v3199, %v3212
          %v3214 = vcombine.high %v3206, %v3206
          %v3215 = vcombine.high %v3213, %v3213
          %v3216 = vcombine.high %v3062, %v3062
          %v3218 = vunpack.c.l.s4 1983009808
          %v3219 = vunpack.c.0.s8 %v3218
          %v3220 = vlaneseq
          %v3221 = vshrl.u32 %v3220, 7
          %v3222 = vsub.s32 %v3219, %v3221
          %v3223 = vrot.slane %v3062, %v3222
          %v3225 = vunpack.c.l.s4 1983009808
          %v3226 = vunpack.c.0.s8 %v3225
          %v3227 = vlaneseq
          %v3228 = vshrl.u32 %v3227, 7
          %v3229 = vsub.s32 %v3226, %v3228
          %v3230 = vrot.slane %v3216, %v3229
          %v3231 = vcombine.high %v3223, %v3223
          %v3232 = vcombine.high %v3230, %v3230
          %v3233 = vcombine.high %v3063, %v3063
          %v3235 = vunpack.c.l.s4 1983009808
          %v3236 = vunpack.c.0.s8 %v3235
          %v3237 = vlaneseq
          %v3238 = vshrl.u32 %v3237, 7
          %v3239 = vsub.s32 %v3236, %v3238
          %v3240 = vrot.slane %v3063, %v3239
          %v3242 = vunpack.c.l.s4 1983009808
          %v3243 = vunpack.c.0.s8 %v3242
          %v3244 = vlaneseq
          %v3245 = vshrl.u32 %v3244, 7
          %v3246 = vsub.s32 %v3243, %v3245
          %v3247 = vrot.slane %v3233, %v3246
          %v3248 = vcombine.high %v3240, %v3240
          %v3249 = vcombine.high %v3247, %v3247
          %v3250 = vcombine.high %v3064, %v3064
          %v3252 = vunpack.c.l.s4 1983009808
          %v3253 = vunpack.c.0.s8 %v3252
          %v3254 = vlaneseq
          %v3255 = vshrl.u32 %v3254, 7
          %v3256 = vsub.s32 %v3253, %v3255
          %v3257 = vrot.slane %v3064, %v3256
          %v3259 = vunpack.c.l.s4 1983009808
          %v3260 = vunpack.c.0.s8 %v3259
          %v3261 = vlaneseq
          %v3262 = vshrl.u32 %v3261, 7
          %v3263 = vsub.s32 %v3260, %v3262
          %v3264 = vrot.slane %v3250, %v3263
          %v3265 = vcombine.high %v3257, %v3257
          %v3266 = vcombine.high %v3264, %v3264
          %v3267 = vcombine.high %v3065, %v3065
          %v3269 = vunpack.c.l.s4 1983009808
          %v3270 = vunpack.c.0.s8 %v3269
          %v3271 = vlaneseq
          %v3272 = vshrl.u32 %v3271, 7
          %v3273 = vsub.s32 %v3270, %v3272
          %v3274 = vrot.slane %v3065, %v3273
          %v3276 = vunpack.c.l.s4 1983009808
          %v3277 = vunpack.c.0.s8 %v3276
          %v3278 = vlaneseq
          %v3279 = vshrl.u32 %v3278, 7
          %v3280 = vsub.s32 %v3277, %v3279
          %v3281 = vrot.slane %v3267, %v3280
          %v3282 = vcombine.high %v3274, %v3274
          %v3283 = vcombine.high %v3281, %v3281
          %v3285 = vunpack.c.l.s4 1983009808
          %v3286 = vunpack.c.0.s8 %v3285
          %v3287 = vlaneseq
          %v3288 = vshrl.u32 %v3287, 7
          %v3289 = vsub.s32 %v3286, %v3288
          %v3290 = vrot.slane %v3066, %v3289
          %v3291 = vcombine.high %v3290, %v3290
          %v3347 = vunpack.c.l.s4 269488144
          %v3348 = vunpack.c.0.s8 %v3347
          %v3349 = vlaneseq
          %v3350 = vshrl.u32 %v3349, 7
          %v3351 = vsub.s32 %v3348, %v3350
          %v3352 = vrot.slane %v392, %v3351
          %v3354 = vunpack.c.l.s4 842150450
          %v3355 = vunpack.c.0.s8 %v3354
          %v3356 = vlaneseq
          %v3357 = vshrl.u32 %v3356, 7
          %v3358 = vsub.s32 %v3355, %v3357
          %v3359 = vrot.slane %v392, %v3358
          %v3361 = vunpack.c.l.s4 1414812756
          %v3362 = vunpack.c.0.s8 %v3361
          %v3363 = vlaneseq
          %v3364 = vshrl.u32 %v3363, 7
          %v3365 = vsub.s32 %v3362, %v3364
          %v3366 = vrot.slane %v392, %v3365
          %v3368 = vunpack.c.l.s4 1987475062
          %v3369 = vunpack.c.0.s8 %v3368
          %v3370 = vlaneseq
          %v3371 = vshrl.u32 %v3370, 7
          %v3372 = vsub.s32 %v3369, %v3371
          %v3373 = vrot.slane %v392, %v3372
          %v3375 = vunpack.c.l.s4 269488144
          %v3376 = vunpack.c.0.s8 %v3375
          %v3377 = vlaneseq
          %v3378 = vshrl.u32 %v3377, 7
          %v3379 = vsub.s32 %v3376, %v3378
          %v3380 = vrot.slane %v393, %v3379
          %v3382 = vunpack.c.l.s4 269488144
          %v3383 = vunpack.c.0.s8 %v3382
          %v3384 = vlaneseq
          %v3385 = vshrl.u32 %v3384, 7
          %v3386 = vsub.s32 %v3383, %v3385
          %v3387 = vrot.slane %v394, %v3386
          %v3389 = vunpack.c.l.s4 842150450
          %v3390 = vunpack.c.0.s8 %v3389
          %v3391 = vlaneseq
          %v3392 = vshrl.u32 %v3391, 7
          %v3393 = vsub.s32 %v3390, %v3392
          %v3394 = vrot.slane %v394, %v3393
          %v3396 = vunpack.c.l.s4 1414812756
          %v3397 = vunpack.c.0.s8 %v3396
          %v3398 = vlaneseq
          %v3399 = vshrl.u32 %v3398, 7
          %v3400 = vsub.s32 %v3397, %v3399
          %v3401 = vrot.slane %v394, %v3400
          %v3403 = vunpack.c.l.s4 1987475062
          %v3404 = vunpack.c.0.s8 %v3403
          %v3405 = vlaneseq
          %v3406 = vshrl.u32 %v3405, 7
          %v3407 = vsub.s32 %v3404, %v3406
          %v3408 = vrot.slane %v394, %v3407
          %v3410 = vunpack.c.l.s4 269488144
          %v3411 = vunpack.c.0.s8 %v3410
          %v3412 = vlaneseq
          %v3413 = vshrl.u32 %v3412, 7
          %v3414 = vsub.s32 %v3411, %v3413
          %v3415 = vrot.slane %v395, %v3414
          %v3426 = vmul.f32 %v3087, %v3352
          %v3427 = vmul.f32 %v3095, %v3359
          %v3428 = vmul.f32 %v3094, %v3366
          %v3429 = vmul.f32 %v3096, %v3373
          %v3430 = vmul.f32 %v3104, %v3380
          %v3431 = vmul.f32 %v3112, %v3387
          %v3432 = vmul.f32 %v3111, %v3394
          %v3433 = vmul.f32 %v3113, %v3401
          %v3434 = vmul.f32 %v3121, %v3408
          %v3435 = vmul.f32 %v3129, %v3415
          %v3436 = vmul.f32 %v3128, %v3387
          %v3437 = vmul.f32 %v3130, %v3394
          %v3438 = vmul.f32 %v3138, %v3401
          %v3439 = vmul.f32 %v3146, %v3408
          %v3440 = vmul.f32 %v3145, %v3415
          %v3441 = vmul.f32 %v3147, %v3387
          %v3442 = vmul.f32 %v3155, %v3394
          %v3443 = vmul.f32 %v3163, %v3401
          %v3444 = vmul.f32 %v3162, %v3408
          %v3445 = vmul.f32 %v3164, %v3415
          %v3446 = vmul.f32 %v3172, %v3387
          %v3447 = vmul.f32 %v3180, %v3394
          %v3448 = vmul.f32 %v3179, %v3401
          %v3449 = vmul.f32 %v3181, %v3408
          %v3450 = vmul.f32 %v3189, %v3415
          %v3451 = vmul.f32 %v3197, %v3387
          %v3452 = vmul.f32 %v3196, %v3394
          %v3453 = vmul.f32 %v3198, %v3401
          %v3454 = vmul.f32 %v3206, %v3408
          %v3455 = vmul.f32 %v3214, %v3415
          %v3456 = vmul.f32 %v3213, %v3387
          %v3457 = vmul.f32 %v3215, %v3394
          %v3458 = vmul.f32 %v3223, %v3401
          %v3459 = vmul.f32 %v3231, %v3408
          %v3460 = vmul.f32 %v3230, %v3415
          %v3461 = vmul.f32 %v3232, %v3387
          %v3462 = vmul.f32 %v3240, %v3394
          %v3463 = vmul.f32 %v3248, %v3401
          %v3464 = vmul.f32 %v3247, %v3408
          %v3465 = vmul.f32 %v3249, %v3415
          %v3466 = vmul.f32 %v3257, %v3387
          %v3467 = vmul.f32 %v3265, %v3394
          %v3468 = vmul.f32 %v3264, %v3401
          %v3469 = vmul.f32 %v3266, %v3408
          %v3470 = vmul.f32 %v3274, %v3415
          %v3471 = vmul.f32 %v3282, %v3352
          %v3472 = vmul.f32 %v3281, %v3359
          %v3473 = vmul.f32 %v3283, %v3366
          %v3474 = vmul.f32 %v3290, %v3373
          %v3475 = vmul.f32 %v3291, %v3380
          %v3526 = vcombine.low %v3426, %v3427
          %v3527 = vcombine.low %v3428, %v3429
          %v3529 = vunpack.c.l.s4 1983009808
          %v3530 = vunpack.c.0.s8 %v3529
          %v3531 = vlaneseq
          %v3532 = vshrl.u32 %v3531, 7
          %v3533 = vsub.s32 %v3530, %v3532
          %v3534 = vrot.slane %v3526, %v3533
          %v3536 = vunpack.c.l.s4 1983009808
          %v3537 = vunpack.c.0.s8 %v3536
          %v3538 = vlaneseq
          %v3539 = vshrl.u32 %v3538, 7
          %v3540 = vsub.s32 %v3537, %v3539
          %v3541 = vrot.slane %v3527, %v3540
          %v3542 = vcombine.low %v3534, %v3541
          %v3544 = vunpack.c.l.s4 1983009808
          %v3545 = vunpack.c.0.s8 %v3544
          %v3546 = vlaneseq
          %v3547 = vshrl.u32 %v3546, 7
          %v3548 = vsub.s32 %v3545, %v3547
          %v3549 = vrot.slane %v3430, %v3548
          %v3550 = vcombine.low %v3431, %v3432
          %v3551 = vcombine.low %v3433, %v3434
          %v3553 = vunpack.c.l.s4 1983009808
          %v3554 = vunpack.c.0.s8 %v3553
          %v3555 = vlaneseq
          %v3556 = vshrl.u32 %v3555, 7
          %v3557 = vsub.s32 %v3554, %v3556
          %v3558 = vrot.slane %v3550, %v3557
          %v3560 = vunpack.c.l.s4 1983009808
          %v3561 = vunpack.c.0.s8 %v3560
          %v3562 = vlaneseq
          %v3563 = vshrl.u32 %v3562, 7
          %v3564 = vsub.s32 %v3561, %v3563
          %v3565 = vrot.slane %v3551, %v3564
          %v3566 = vcombine.low %v3558, %v3565
          %v3568 = vunpack.c.l.s4 1983009808
          %v3569 = vunpack.c.0.s8 %v3568
          %v3570 = vlaneseq
          %v3571 = vshrl.u32 %v3570, 7
          %v3572 = vsub.s32 %v3569, %v3571
          %v3573 = vrot.slane %v3435, %v3572
          %v3574 = vcombine.low %v3436, %v3437
          %v3575 = vcombine.low %v3438, %v3439
          %v3577 = vunpack.c.l.s4 1983009808
          %v3578 = vunpack.c.0.s8 %v3577
          %v3579 = vlaneseq
          %v3580 = vshrl.u32 %v3579, 7
          %v3581 = vsub.s32 %v3578, %v3580
          %v3582 = vrot.slane %v3574, %v3581
          %v3584 = vunpack.c.l.s4 1983009808
          %v3585 = vunpack.c.0.s8 %v3584
          %v3586 = vlaneseq
          %v3587 = vshrl.u32 %v3586, 7
          %v3588 = vsub.s32 %v3585, %v3587
          %v3589 = vrot.slane %v3575, %v3588
          %v3590 = vcombine.low %v3582, %v3589
          %v3592 = vunpack.c.l.s4 1983009808
          %v3593 = vunpack.c.0.s8 %v3592
          %v3594 = vlaneseq
          %v3595 = vshrl.u32 %v3594, 7
          %v3596 = vsub.s32 %v3593, %v3595
          %v3597 = vrot.slane %v3440, %v3596
          %v3598 = vcombine.low %v3441, %v3442
          %v3599 = vcombine.low %v3443, %v3444
          %v3601 = vunpack.c.l.s4 1983009808
          %v3602 = vunpack.c.0.s8 %v3601
          %v3603 = vlaneseq
          %v3604 = vshrl.u32 %v3603, 7
          %v3605 = vsub.s32 %v3602, %v3604
          %v3606 = vrot.slane %v3598, %v3605
          %v3608 = vunpack.c.l.s4 1983009808
          %v3609 = vunpack.c.0.s8 %v3608
          %v3610 = vlaneseq
          %v3611 = vshrl.u32 %v3610, 7
          %v3612 = vsub.s32 %v3609, %v3611
          %v3613 = vrot.slane %v3599, %v3612
          %v3614 = vcombine.low %v3606, %v3613
          %v3616 = vunpack.c.l.s4 1983009808
          %v3617 = vunpack.c.0.s8 %v3616
          %v3618 = vlaneseq
          %v3619 = vshrl.u32 %v3618, 7
          %v3620 = vsub.s32 %v3617, %v3619
          %v3621 = vrot.slane %v3445, %v3620
          %v3622 = vcombine.low %v3446, %v3447
          %v3623 = vcombine.low %v3448, %v3449
          %v3625 = vunpack.c.l.s4 1983009808
          %v3626 = vunpack.c.0.s8 %v3625
          %v3627 = vlaneseq
          %v3628 = vshrl.u32 %v3627, 7
          %v3629 = vsub.s32 %v3626, %v3628
          %v3630 = vrot.slane %v3622, %v3629
          %v3632 = vunpack.c.l.s4 1983009808
          %v3633 = vunpack.c.0.s8 %v3632
          %v3634 = vlaneseq
          %v3635 = vshrl.u32 %v3634, 7
          %v3636 = vsub.s32 %v3633, %v3635
          %v3637 = vrot.slane %v3623, %v3636
          %v3638 = vcombine.low %v3630, %v3637
          %v3640 = vunpack.c.l.s4 1983009808
          %v3641 = vunpack.c.0.s8 %v3640
          %v3642 = vlaneseq
          %v3643 = vshrl.u32 %v3642, 7
          %v3644 = vsub.s32 %v3641, %v3643
          %v3645 = vrot.slane %v3450, %v3644
          %v3646 = vcombine.low %v3451, %v3452
          %v3647 = vcombine.low %v3453, %v3454
          %v3649 = vunpack.c.l.s4 1983009808
          %v3650 = vunpack.c.0.s8 %v3649
          %v3651 = vlaneseq
          %v3652 = vshrl.u32 %v3651, 7
          %v3653 = vsub.s32 %v3650, %v3652
          %v3654 = vrot.slane %v3646, %v3653
          %v3656 = vunpack.c.l.s4 1983009808
          %v3657 = vunpack.c.0.s8 %v3656
          %v3658 = vlaneseq
          %v3659 = vshrl.u32 %v3658, 7
          %v3660 = vsub.s32 %v3657, %v3659
          %v3661 = vrot.slane %v3647, %v3660
          %v3662 = vcombine.low %v3654, %v3661
          %v3664 = vunpack.c.l.s4 1983009808
          %v3665 = vunpack.c.0.s8 %v3664
          %v3666 = vlaneseq
          %v3667 = vshrl.u32 %v3666, 7
          %v3668 = vsub.s32 %v3665, %v3667
          %v3669 = vrot.slane %v3455, %v3668
          %v3670 = vcombine.low %v3456, %v3457
          %v3671 = vcombine.low %v3458, %v3459
          %v3673 = vunpack.c.l.s4 1983009808
          %v3674 = vunpack.c.0.s8 %v3673
          %v3675 = vlaneseq
          %v3676 = vshrl.u32 %v3675, 7
          %v3677 = vsub.s32 %v3674, %v3676
          %v3678 = vrot.slane %v3670, %v3677
          %v3680 = vunpack.c.l.s4 1983009808
          %v3681 = vunpack.c.0.s8 %v3680
          %v3682 = vlaneseq
          %v3683 = vshrl.u32 %v3682, 7
          %v3684 = vsub.s32 %v3681, %v3683
          %v3685 = vrot.slane %v3671, %v3684
          %v3686 = vcombine.low %v3678, %v3685
          %v3688 = vunpack.c.l.s4 1983009808
          %v3689 = vunpack.c.0.s8 %v3688
          %v3690 = vlaneseq
          %v3691 = vshrl.u32 %v3690, 7
          %v3692 = vsub.s32 %v3689, %v3691
          %v3693 = vrot.slane %v3460, %v3692
          %v3694 = vcombine.low %v3461, %v3462
          %v3695 = vcombine.low %v3463, %v3464
          %v3697 = vunpack.c.l.s4 1983009808
          %v3698 = vunpack.c.0.s8 %v3697
          %v3699 = vlaneseq
          %v3700 = vshrl.u32 %v3699, 7
          %v3701 = vsub.s32 %v3698, %v3700
          %v3702 = vrot.slane %v3694, %v3701
          %v3704 = vunpack.c.l.s4 1983009808
          %v3705 = vunpack.c.0.s8 %v3704
          %v3706 = vlaneseq
          %v3707 = vshrl.u32 %v3706, 7
          %v3708 = vsub.s32 %v3705, %v3707
          %v3709 = vrot.slane %v3695, %v3708
          %v3710 = vcombine.low %v3702, %v3709
          %v3712 = vunpack.c.l.s4 1983009808
          %v3713 = vunpack.c.0.s8 %v3712
          %v3714 = vlaneseq
          %v3715 = vshrl.u32 %v3714, 7
          %v3716 = vsub.s32 %v3713, %v3715
          %v3717 = vrot.slane %v3465, %v3716
          %v3718 = vcombine.low %v3466, %v3467
          %v3719 = vcombine.low %v3468, %v3469
          %v3721 = vunpack.c.l.s4 1983009808
          %v3722 = vunpack.c.0.s8 %v3721
          %v3723 = vlaneseq
          %v3724 = vshrl.u32 %v3723, 7
          %v3725 = vsub.s32 %v3722, %v3724
          %v3726 = vrot.slane %v3718, %v3725
          %v3728 = vunpack.c.l.s4 1983009808
          %v3729 = vunpack.c.0.s8 %v3728
          %v3730 = vlaneseq
          %v3731 = vshrl.u32 %v3730, 7
          %v3732 = vsub.s32 %v3729, %v3731
          %v3733 = vrot.slane %v3719, %v3732
          %v3734 = vcombine.low %v3726, %v3733
          %v3736 = vunpack.c.l.s4 1983009808
          %v3737 = vunpack.c.0.s8 %v3736
          %v3738 = vlaneseq
          %v3739 = vshrl.u32 %v3738, 7
          %v3740 = vsub.s32 %v3737, %v3739
          %v3741 = vrot.slane %v3470, %v3740
          %v3742 = vcombine.low %v3471, %v3472
          %v3743 = vcombine.low %v3473, %v3474
          %v3745 = vunpack.c.l.s4 1983009808
          %v3746 = vunpack.c.0.s8 %v3745
          %v3747 = vlaneseq
          %v3748 = vshrl.u32 %v3747, 7
          %v3749 = vsub.s32 %v3746, %v3748
          %v3750 = vrot.slane %v3742, %v3749
          %v3752 = vunpack.c.l.s4 1983009808
          %v3753 = vunpack.c.0.s8 %v3752
          %v3754 = vlaneseq
          %v3755 = vshrl.u32 %v3754, 7
          %v3756 = vsub.s32 %v3753, %v3755
          %v3757 = vrot.slane %v3743, %v3756
          %v3758 = vcombine.low %v3750, %v3757
          %v3760 = vunpack.c.l.s4 1983009808
          %v3761 = vunpack.c.0.s8 %v3760
          %v3762 = vlaneseq
          %v3763 = vshrl.u32 %v3762, 7
          %v3764 = vsub.s32 %v3761, %v3763
          %v3765 = vrot.slane %v3475, %v3764
          %v3786 = vpack.c.bf16 %v3549, %v3542
          %v3787 = vpack.c.bf16 %v3573, %v3566
          %v3788 = vpack.c.bf16 %v3597, %v3590
          %v3789 = vpack.c.bf16 %v3621, %v3614
          %v3790 = vpack.c.bf16 %v3645, %v3638
          %v3791 = vpack.c.bf16 %v3669, %v3662
          %v3792 = vpack.c.bf16 %v3693, %v3686
          %v3793 = vpack.c.bf16 %v3717, %v3710
          %v3794 = vpack.c.bf16 %v3741, %v3734
          %v3795 = vpack.c.bf16 %v3765, %v3758
          %p3796 = scmp.lt.s32.totalorder %s2155, 0
          %s3797 = ssub.s32 0, %s2155
          %s3798 = scalar_select %p3796, %s3797, %s2155
          %s3799 = sdiv.u32.pop %s3798, 3
          %s3800 = srem.u32.pop %s3798, 3
          %s3801 = ssub.s32 0, %s3800
          %s3802 = scalar_select %p3796, %s3801, %s3800
          %p3803 = scmp.ne.s32.totalorder %s3802, 0
          %p3804 = scmp.lt.s32.totalorder %s3802, 0
          %p3805 = pnand %p3804, %p3803
          %p3806 = pneg %p3805
          %s3807 = sadd.s32 %s3802, 3
          %s3808 = scalar_select %p3806, %s3807, %s3802
          %v3819 = vunpack.c.l.b16 %v3786
          %v3820 = vunpack.c.h.b16 %v3786
          %v3821 = vunpack.c.l.b16 %v3787
          %v3822 = vunpack.c.h.b16 %v3787
          %v3823 = vunpack.c.l.b16 %v3788
          %v3824 = vunpack.c.h.b16 %v3788
          %v3825 = vunpack.c.l.b16 %v3789
          %v3826 = vunpack.c.h.b16 %v3789
          %v3827 = vunpack.c.l.b16 %v3790
          %v3828 = vunpack.c.h.b16 %v3790
          %v3829 = vunpack.c.l.b16 %v3791
          %v3830 = vunpack.c.h.b16 %v3791
          %v3831 = vunpack.c.l.b16 %v3792
          %v3832 = vunpack.c.h.b16 %v3792
          %v3833 = vunpack.c.l.b16 %v3793
          %v3834 = vunpack.c.h.b16 %v3793
          %v3835 = vunpack.c.l.b16 %v3794
          %v3836 = vunpack.c.h.b16 %v3794
          %v3837 = vunpack.c.l.b16 %v3795
          %v3838 = vunpack.c.h.b16 %v3795
          %v3839 = vpack.c.b16 %v3819, %v3819
          %v3840 = vpack.c.b16 %v3820, %v3820
          %v3841 = vpack.c.b16 %v3821, %v3821
          %v3842 = vpack.c.b16 %v3822, %v3822
          %v3843 = vpack.c.b16 %v3823, %v3823
          %v3844 = vpack.c.b16 %v3824, %v3824
          %v3845 = vpack.c.b16 %v3825, %v3825
          %v3846 = vpack.c.b16 %v3826, %v3826
          %v3847 = vpack.c.b16 %v3827, %v3827
          %v3848 = vpack.c.b16 %v3828, %v3828
          %v3849 = vpack.c.b16 %v3829, %v3829
          %v3850 = vpack.c.b16 %v3830, %v3830
          %v3851 = vpack.c.b16 %v3831, %v3831
          %v3852 = vpack.c.b16 %v3832, %v3832
          %v3853 = vpack.c.b16 %v3833, %v3833
          %v3854 = vpack.c.b16 %v3834, %v3834
          %v3855 = vpack.c.b16 %v3835, %v3835
          %v3856 = vpack.c.b16 %v3836, %v3836
          %v3857 = vpack.c.b16 %v3837, %v3837
          %v3858 = vpack.c.b16 %v3838, %v3838
          %s3879 = smul.u32 %s3808, 20
          %s3880 = smul.addr %s3879, 4
          %s3881 = scalar_lea.vmem [#allocation2], %s3880
          %vm3882 = vcmask 125952
          %3883 = vst.msk [vmem:[%s3881] sm:$0xf] %vm3882, %v3839
          %vm3884 = vcmask 122880
          %3885 = vst.msk [vmem:[%s3881 + $0x4] sm:$0x1] %vm3884, %v3840
          %3886 = vst.msk [vmem:[%s3881 + $0x8] sm:$0xf] %vm3882, %v3841
          %3887 = vst.msk [vmem:[%s3881 + $0xc] sm:$0x1] %vm3884, %v3842
          %3888 = vst.msk [vmem:[%s3881 + $0x10] sm:$0xf] %vm3882, %v3843
          %3889 = vst.msk [vmem:[%s3881 + $0x14] sm:$0x1] %vm3884, %v3844
          %3890 = vst.msk [vmem:[%s3881 + $0x18] sm:$0xf] %vm3882, %v3845
          %3891 = vst.msk [vmem:[%s3881 + $0x1c] sm:$0x1] %vm3884, %v3846
          %3892 = vst.msk [vmem:[%s3881 + $0x20] sm:$0xf] %vm3882, %v3847
          %3893 = vst.msk [vmem:[%s3881 + $0x24] sm:$0x1] %vm3884, %v3848
          %3894 = vst.msk [vmem:[%s3881 + $0x28] sm:$0xf] %vm3882, %v3849
          %3895 = vst.msk [vmem:[%s3881 + $0x2c] sm:$0x1] %vm3884, %v3850
          %3896 = vst.msk [vmem:[%s3881 + $0x30] sm:$0xf] %vm3882, %v3851
          %3897 = vst.msk [vmem:[%s3881 + $0x34] sm:$0x1] %vm3884, %v3852
          %3898 = vst.msk [vmem:[%s3881 + $0x38] sm:$0xf] %vm3882, %v3853
          %3899 = vst.msk [vmem:[%s3881 + $0x3c] sm:$0x1] %vm3884, %v3854
          %3900 = vst.msk [vmem:[%s3881 + $0x40] sm:$0xf] %vm3882, %v3855
          %3901 = vst.msk [vmem:[%s3881 + $0x44] sm:$0x1] %vm3884, %v3856
          %3902 = vst.msk [vmem:[%s3881 + $0x48] sm:$0xf] %vm3882, %v3857
          %3903 = vst.msk [vmem:[%s3881 + $0x4c] sm:$0x1] %vm3884, %v3858
        $region68: #{resblock3d_forward.1} parent=59 // pred_fallthru
          _
        %p3904 = scmp.eq.s32.totalorder %s29, 7
        // Predicated region
        $region69: #{resblock3d_forward.1} parent=59 // pred_check
          %p3905 = pneg %p3904
        $region70: #{resblock3d_forward.1} parent=59 // pred_check_branch
          %3907 = sbr.rel (%p3905) target = $region72
        $region71: #{resblock3d_forward.1} parent=59 // pred_region
          %s3908 = sadd.s32 %s29, 2
          %p3909 = scmp.lt.s32.totalorder %s3908, 0
          %s3910 = ssub.s32 0, %s3908
          %s3911 = scalar_select %p3909, %s3910, %s3908
          %s3912 = sdiv.u32.pop %s3911, 3
          %s3913 = srem.u32.pop %s3911, 3
          %s3914 = ssub.s32 0, %s3913
          %s3915 = scalar_select %p3909, %s3914, %s3913
          %p3916 = scmp.ne.s32.totalorder %s3915, 0
          %p3917 = scmp.lt.s32.totalorder %s3915, 0
          %p3918 = pnand %p3917, %p3916
          %p3919 = pneg %p3918
          %s3920 = sadd.s32 %s3915, 3
          %s3921 = scalar_select %p3919, %s3920, %s3915
          %s3922 = smul.u32 %s3921, 20
          %s3923 = smul.addr %s3922, 4
          %s3924 = scalar_lea.vmem [#allocation2], %s3923
          %vm3925 = vcmask 125952
          %3926 = vst.msk [vmem:[%s3924] sm:$0xf] %vm3925, 0
          %vm3927 = vcmask 122880
          %3928 = vst.msk [vmem:[%s3924 + $0x4] sm:$0x1] %vm3927, 0
          %3929 = vst.msk [vmem:[%s3924 + $0x8] sm:$0xf] %vm3925, 0
          %3930 = vst.msk [vmem:[%s3924 + $0xc] sm:$0x1] %vm3927, 0
          %3931 = vst.msk [vmem:[%s3924 + $0x10] sm:$0xf] %vm3925, 0
          %3932 = vst.msk [vmem:[%s3924 + $0x14] sm:$0x1] %vm3927, 0
          %3933 = vst.msk [vmem:[%s3924 + $0x18] sm:$0xf] %vm3925, 0
          %3934 = vst.msk [vmem:[%s3924 + $0x1c] sm:$0x1] %vm3927, 0
          %3935 = vst.msk [vmem:[%s3924 + $0x20] sm:$0xf] %vm3925, 0
          %3936 = vst.msk [vmem:[%s3924 + $0x24] sm:$0x1] %vm3927, 0
          %3937 = vst.msk [vmem:[%s3924 + $0x28] sm:$0xf] %vm3925, 0
          %3938 = vst.msk [vmem:[%s3924 + $0x2c] sm:$0x1] %vm3927, 0
          %3939 = vst.msk [vmem:[%s3924 + $0x30] sm:$0xf] %vm3925, 0
          %3940 = vst.msk [vmem:[%s3924 + $0x34] sm:$0x1] %vm3927, 0
          %3941 = vst.msk [vmem:[%s3924 + $0x38] sm:$0xf] %vm3925, 0
          %3942 = vst.msk [vmem:[%s3924 + $0x3c] sm:$0x1] %vm3927, 0
          %3943 = vst.msk [vmem:[%s3924 + $0x40] sm:$0xf] %vm3925, 0
          %3944 = vst.msk [vmem:[%s3924 + $0x44] sm:$0x1] %vm3927, 0
          %3945 = vst.msk [vmem:[%s3924 + $0x48] sm:$0xf] %vm3925, 0
          %3946 = vst.msk [vmem:[%s3924 + $0x4c] sm:$0x1] %vm3927, 0
        $region72: #{resblock3d_forward.1} parent=59 // pred_fallthru
          _
        %vm3947 = vcmask 130048
        %3948 = vst.msk [vmem:[#allocation3] sm:$0xff] %vm3947, 0.0
        %3949 = vst.msk [vmem:[#allocation3 + $0x8] sm:$0xff] %vm3947, 0.0
        %3950 = vst.msk [vmem:[#allocation3 + $0x10] sm:$0xff] %vm3947, 0.0
        %3951 = vst.msk [vmem:[#allocation3 + $0x18] sm:$0xff] %vm3947, 0.0
        %3952 = vst.msk [vmem:[#allocation3 + $0x20] sm:$0xff] %vm3947, 0.0
        %3953 = vst.msk [vmem:[#allocation3 + $0x28] sm:$0xff] %vm3947, 0.0
        %3954 = vst.msk [vmem:[#allocation3 + $0x30] sm:$0xff] %vm3947, 0.0
        %3955 = vst.msk [vmem:[#allocation3 + $0x38] sm:$0xff] %vm3947, 0.0
        %p3956 = scmp.gt.s32.totalorder %s29, 0
        // Predicated region
        $region73: #{resblock3d_forward.1} parent=59 // pred_check
          %p3957 = pneg %p3956
        $region74: #{resblock3d_forward.1} parent=59 // pred_check_branch
          %3959 = sbr.rel (%p3957) target = $region76
        $region75: #{resblock3d_forward.1} parent=59 // pred_region
          %p3960 = scmp.lt.s32.totalorder %s29, 0
          %s3961 = ssub.s32 0, %s29
          %s3962 = scalar_select %p3960, %s3961, %s29
          %s3963 = sdiv.u32.pop %s3962, 3
          %s3964 = srem.u32.pop %s3962, 3
          %s3965 = ssub.s32 0, %s3964
          %s3966 = scalar_select %p3960, %s3965, %s3964
          %p3967 = scmp.ne.s32.totalorder %s3966, 0
          %p3968 = scmp.lt.s32.totalorder %s3966, 0
          %p3969 = pnand %p3968, %p3967
          %p3970 = pneg %p3969
          %s3971 = sadd.s32 %s3966, 3
          %s3972 = scalar_select %p3970, %s3971, %s3966
          %s3973 = smul.u32 %s3972, 20
          %s3974 = smul.addr %s3973, 4
          %s3975 = scalar_lea.vmem [#allocation2], %s3974
          %v3976 = vld [vmem:[%s3975] sm:$0xf]
          %v3977 = vld [vmem:[%s3975 + $0x4] sm:$0x1]
          %v3978 = vld [vmem:[%s3975 + $0x8] sm:$0xf]
          %v3979 = vld [vmem:[%s3975 + $0xc] sm:$0x1]
          %v3980 = vld [vmem:[%s3975 + $0x10] sm:$0xf]
          %v3981 = vld [vmem:[%s3975 + $0x14] sm:$0x1]
          %v3982 = vld [vmem:[%s3975 + $0x18] sm:$0xf]
          %v3983 = vld [vmem:[%s3975 + $0x1c] sm:$0x1]
          %v3984 = vld [vmem:[%s3975 + $0x20] sm:$0xf]
          %v3985 = vld [vmem:[%s3975 + $0x24] sm:$0x1]
          %v3986 = vld [vmem:[%s3975 + $0x28] sm:$0xf]
          %v3987 = vld [vmem:[%s3975 + $0x2c] sm:$0x1]
          %v3988 = vld [vmem:[%s3975 + $0x30] sm:$0xf]
          %v3989 = vld [vmem:[%s3975 + $0x34] sm:$0x1]
          %v3990 = vld [vmem:[%s3975 + $0x38] sm:$0xf]
          %v3991 = vld [vmem:[%s3975 + $0x3c] sm:$0x1]
          %v3992 = vld [vmem:[%s3975 + $0x40] sm:$0xf]
          %v3993 = vld [vmem:[%s3975 + $0x44] sm:$0x1]
          %v3994 = vld [vmem:[%s3975 + $0x48] sm:$0xf]
          %v3995 = vld [vmem:[%s3975 + $0x4c] sm:$0x1]
          %v3996 = vld [vmem:[%s4] sm:$0xf]
          %v3997 = vld [vmem:[%s4 + $0x4] sm:$0xf]
          %vm3998 = vsmask.f32 3328
          %vm3999 = vsmask.f32 7440
          %vm4000 = vmor %vm3998, %vm3999
          %v4002 = vshrl.u32 %v3976, 16
          %v4004 = vrot.slane %v4002, 4
          %v4005 = vshll.u32 %v3976, 16
          %v4007 = vrot.slane %v4005, 5
          %v4008 = vor.u32 %v4004, %v4007
          %v4009 = vrot.slane %v4008, 4
          %v4011 = vshll.u32 %v3977, 16
          %v4013 = vrot.slane %v4011, 5
          %v4014 = vsel %vm4000, %v4009, %v4013
          %v4016 = vshrl.u32 %v3978, 16
          %v4018 = vrot.slane %v4016, 4
          %v4019 = vshll.u32 %v3978, 16
          %v4021 = vrot.slane %v4019, 5
          %v4022 = vor.u32 %v4018, %v4021
          %v4023 = vrot.slane %v4022, 4
          %v4025 = vshll.u32 %v3979, 16
          %v4027 = vrot.slane %v4025, 5
          %v4028 = vsel %vm4000, %v4023, %v4027
          %v4030 = vshrl.u32 %v3980, 16
          %v4032 = vrot.slane %v4030, 4
          %v4033 = vshll.u32 %v3980, 16
          %v4035 = vrot.slane %v4033, 5
          %v4036 = vor.u32 %v4032, %v4035
          %v4037 = vrot.slane %v4036, 4
          %v4039 = vshll.u32 %v3981, 16
          %v4041 = vrot.slane %v4039, 5
          %v4042 = vsel %vm4000, %v4037, %v4041
          %v4044 = vshrl.u32 %v3982, 16
          %v4046 = vrot.slane %v4044, 4
          %v4047 = vshll.u32 %v3982, 16
          %v4049 = vrot.slane %v4047, 5
          %v4050 = vor.u32 %v4046, %v4049
          %v4051 = vrot.slane %v4050, 4
          %v4053 = vshll.u32 %v3983, 16
          %v4055 = vrot.slane %v4053, 5
          %v4056 = vsel %vm4000, %v4051, %v4055
          %v4058 = vshrl.u32 %v3984, 16
          %v4060 = vrot.slane %v4058, 4
          %v4061 = vshll.u32 %v3984, 16
          %v4063 = vrot.slane %v4061, 5
          %v4064 = vor.u32 %v4060, %v4063
          %v4065 = vrot.slane %v4064, 4
          %v4067 = vshll.u32 %v3985, 16
          %v4069 = vrot.slane %v4067, 5
          %v4070 = vsel %vm4000, %v4065, %v4069
          %v4072 = vshrl.u32 %v3986, 16
          %v4074 = vrot.slane %v4072, 4
          %v4075 = vshll.u32 %v3986, 16
          %v4077 = vrot.slane %v4075, 5
          %v4078 = vor.u32 %v4074, %v4077
          %v4079 = vrot.slane %v4078, 4
          %v4081 = vshll.u32 %v3987, 16
          %v4083 = vrot.slane %v4081, 5
          %v4084 = vsel %vm4000, %v4079, %v4083
          %v4086 = vshrl.u32 %v3988, 16
          %v4088 = vrot.slane %v4086, 4
          %v4089 = vshll.u32 %v3988, 16
          %v4091 = vrot.slane %v4089, 5
          %v4092 = vor.u32 %v4088, %v4091
          %v4093 = vrot.slane %v4092, 4
          %v4095 = vshll.u32 %v3989, 16
          %v4097 = vrot.slane %v4095, 5
          %v4098 = vsel %vm4000, %v4093, %v4097
          %v4100 = vshrl.u32 %v3990, 16
          %v4102 = vrot.slane %v4100, 4
          %v4103 = vshll.u32 %v3990, 16
          %v4105 = vrot.slane %v4103, 5
          %v4106 = vor.u32 %v4102, %v4105
          %v4107 = vrot.slane %v4106, 4
          %v4109 = vshll.u32 %v3991, 16
          %v4111 = vrot.slane %v4109, 5
          %v4112 = vsel %vm4000, %v4107, %v4111
          %s4113 = scalar_lea.vmem %s4, 8
          %v4114 = vld [vmem:[%s4113] sm:$0xf]
          %v4115 = vld [vmem:[%s4113 + $0x4] sm:$0xf]
          %v4116 = vunpack.c.l.b16 %v4014
          %v4117 = vunpack.c.l.b16 %v4028
          %v4118 = vunpack.c.l.b16 %v4042
          %v4119 = vunpack.c.l.b16 %v4056
          %v4120 = vunpack.c.l.b16 %v4070
          %v4121 = vunpack.c.l.b16 %v4084
          %v4122 = vunpack.c.l.b16 %v4098
          %v4123 = vunpack.c.l.b16 %v4112
          %v4124 = vpack.c.b16 %v4117, %v4116
          %v4125 = vpack.c.b16 %v4119, %v4118
          %v4126 = vpack.c.b16 %v4121, %v4120
          %v4127 = vpack.c.b16 %v4123, %v4122
          %v4130 = vunpack.c.l.b16 %v4114
          %v4131 = vunpack.c.l.b16 %v4115
          %v4132 = vpack.c.b16 %v4131, %v4130
          %v4135 = vsel %vm3947, %v4124, 0
          %v4138 = vsel %vm3947, %v4125, 0
          %v4141 = vsel %vm3947, %v4126, 0
          %v4144 = vsel %vm3947, %v4127, 0
          %4146 = vmatprep.subr.bf16.mxu0 0
          %4147 = vmatpush1.bf16.msra.mxu0 %v4132
          %4148 = vmatprep.subr.bf16.mxu0 0
          %4149 = vmatpush1.bf16.msra.mxu0 0
          %4150 = vmatprep.subr.bf16.mxu0 0
          %4151 = vmatpush1.bf16.msra.mxu0 0
          %4152 = vmatprep.subr.bf16.mxu0 0
          %4153 = vmatpush1.bf16.msra.mxu0 0
          %4154 = vmatprep.subr.bf16.mxu0 0
          %4155 = vmatpush1.bf16.msra.mxu0 0
          %4156 = vmatprep.subr.bf16.mxu0 0
          %4157 = vmatpush1.bf16.msra.mxu0 0
          %4158 = vmatprep.subr.bf16.mxu0 0
          %4159 = vmatpush1.bf16.msra.mxu0 0
          %4160 = vmatprep.subr.bf16.mxu0 0
          %4161 = vmatpush1.bf16.msra.mxu0 0
          %4162 = vmatprep.subr.bf16.mxu0 0
          %4163 = vmatpush1.bf16.msra.mxu0 0
          %4164 = vmatprep.subr.bf16.mxu0 0
          %4165 = vmatpush1.bf16.msra.mxu0 0
          %4166 = vmatprep.subr.bf16.mxu0 0
          %4167 = vmatpush1.bf16.msra.mxu0 0
          %4168 = vmatprep.subr.bf16.mxu0 0
          %4169 = vmatpush1.bf16.msra.mxu0 0
          %4170 = vmatprep.subr.bf16.mxu0 0
          %4171 = vmatpush1.bf16.msra.mxu0 0
          %4172 = vmatprep.subr.bf16.mxu0 0
          %4173 = vmatpush1.bf16.msra.mxu0 0
          %4174 = vmatprep.subr.bf16.mxu0 0
          %4175 = vmatpush1.bf16.msra.mxu0 0
          %4176 = vmatprep.subr.bf16.mxu0 0
          %4177 = vmatpush1.bf16.msra.mxu0 0
          %4178 = vmatprep.mubr.bf16.mxu0 0
          %4179 = vmatmul.mubr.bf16.gmra.mrb[0].mxu0 %v4135
          %v4180 = vpop.f32.mrb[0].mxu0
          %v4181 = vadd.f32 0.0, %v4180
          %v4182 = vpop.f32.mrb[0].mxu0
          %v4183 = vpop.f32.mrb[0].mxu0
          %v4184 = vadd.f32 0.0, %v4183
          %v4185 = vpop.f32.mrb[0].mxu0
          %4186 = vmatprep.mubr.bf16.mxu0 0
          %4187 = vmatmul.mubr.bf16.gmra.mrb[0].mxu0 %v4138
          %v4188 = vpop.f32.mrb[0].mxu0
          %v4189 = vadd.f32 0.0, %v4188
          %v4190 = vpop.f32.mrb[0].mxu0
          %v4191 = vpop.f32.mrb[0].mxu0
          %v4192 = vadd.f32 0.0, %v4191
          %v4193 = vpop.f32.mrb[0].mxu0
          %4194 = vmatprep.mubr.bf16.mxu0 0
          %4195 = vmatmul.mubr.bf16.gmra.mrb[0].mxu0 %v4141
          %v4196 = vpop.f32.mrb[0].mxu0
          %v4197 = vadd.f32 0.0, %v4196
          %v4198 = vpop.f32.mrb[0].mxu0
          %v4199 = vpop.f32.mrb[0].mxu0
          %v4200 = vadd.f32 0.0, %v4199
          %v4201 = vpop.f32.mrb[0].mxu0
          %4202 = vmatprep.mubr.bf16.mxu0 0
          %4203 = vmatmul.mubr.bf16.gmra.mrb[0].mxu0 %v4144
          %v4204 = vpop.f32.mrb[0].mxu0
          %v4205 = vadd.f32 0.0, %v4204
          %v4206 = vpop.f32.mrb[0].mxu0
          %v4207 = vpop.f32.mrb[0].mxu0
          %v4208 = vadd.f32 0.0, %v4207
          %v4209 = vpop.f32.mrb[0].mxu0
          %4210 = vdwg.mxu0
          %v4219 = vunpack.c.l.b16 %v3976
          %v4220 = vunpack.c.l.b16 %v3978
          %v4221 = vunpack.c.l.b16 %v3980
          %v4222 = vunpack.c.l.b16 %v3982
          %v4223 = vunpack.c.l.b16 %v3984
          %v4224 = vunpack.c.l.b16 %v3986
          %v4225 = vunpack.c.l.b16 %v3988
          %v4226 = vunpack.c.l.b16 %v3990
          %v4227 = vpack.c.b16 %v4220, %v4219
          %v4228 = vpack.c.b16 %v4222, %v4221
          %v4229 = vpack.c.b16 %v4224, %v4223
          %v4230 = vpack.c.b16 %v4226, %v4225
          %v4233 = vunpack.c.l.b16 %v3996
          %v4234 = vunpack.c.l.b16 %v3997
          %v4235 = vpack.c.b16 %v4234, %v4233
          %v4238 = vsel %vm3947, %v4227, 0
          %v4241 = vsel %vm3947, %v4228, 0
          %v4244 = vsel %vm3947, %v4229, 0
          %v4247 = vsel %vm3947, %v4230, 0
          %4249 = vmatprep.subr.bf16.mxu0 0
          %4250 = vmatpush1.bf16.msra.mxu0 %v4235
          %4251 = vmatprep.subr.bf16.mxu0 0
          %4252 = vmatpush1.bf16.msra.mxu0 0
          %4253 = vmatprep.subr.bf16.mxu0 0
          %4254 = vmatpush1.bf16.msra.mxu0 0
          %4255 = vmatprep.subr.bf16.mxu0 0
          %4256 = vmatpush1.bf16.msra.mxu0 0
          %4257 = vmatprep.subr.bf16.mxu0 0
          %4258 = vmatpush1.bf16.msra.mxu0 0
          %4259 = vmatprep.subr.bf16.mxu0 0
          %4260 = vmatpush1.bf16.msra.mxu0 0
          %4261 = vmatprep.subr.bf16.mxu0 0
          %4262 = vmatpush1.bf16.msra.mxu0 0
          %4263 = vmatprep.subr.bf16.mxu0 0
          %4264 = vmatpush1.bf16.msra.mxu0 0
          %4265 = vmatprep.subr.bf16.mxu0 0
          %4266 = vmatpush1.bf16.msra.mxu0 0
          %4267 = vmatprep.subr.bf16.mxu0 0
          %4268 = vmatpush1.bf16.msra.mxu0 0
          %4269 = vmatprep.subr.bf16.mxu0 0
          %4270 = vmatpush1.bf16.msra.mxu0 0
          %4271 = vmatprep.subr.bf16.mxu0 0
          %4272 = vmatpush1.bf16.msra.mxu0 0
          %4273 = vmatprep.subr.bf16.mxu0 0
          %4274 = vmatpush1.bf16.msra.mxu0 0
          %4275 = vmatprep.subr.bf16.mxu0 0
          %4276 = vmatpush1.bf16.msra.mxu0 0
          %4277 = vmatprep.subr.bf16.mxu0 0
          %4278 = vmatpush1.bf16.msra.mxu0 0
          %4279 = vmatprep.subr.bf16.mxu0 0
          %4280 = vmatpush1.bf16.msra.mxu0 0
          %4281 = vmatprep.mubr.bf16.mxu0 0
          %4282 = vmatmul.mubr.bf16.gmra.mrb[0].mxu0 %v4238
          %v4283 = vpop.f32.mrb[0].mxu0
          %v4284 = vadd.f32 %v4181, %v4283
          %v4285 = vpop.f32.mrb[0].mxu0
          %v4286 = vpop.f32.mrb[0].mxu0
          %v4287 = vadd.f32 %v4184, %v4286
          %v4288 = vpop.f32.mrb[0].mxu0
          %4289 = vmatprep.mubr.bf16.mxu0 0
          %4290 = vmatmul.mubr.bf16.gmra.mrb[0].mxu0 %v4241
          %v4291 = vpop.f32.mrb[0].mxu0
          %v4292 = vadd.f32 %v4189, %v4291
          %v4293 = vpop.f32.mrb[0].mxu0
          %v4294 = vpop.f32.mrb[0].mxu0
          %v4295 = vadd.f32 %v4192, %v4294
          %v4296 = vpop.f32.mrb[0].mxu0
          %4297 = vmatprep.mubr.bf16.mxu0 0
          %4298 = vmatmul.mubr.bf16.gmra.mrb[0].mxu0 %v4244
          %v4299 = vpop.f32.mrb[0].mxu0
          %v4300 = vadd.f32 %v4197, %v4299
          %v4301 = vpop.f32.mrb[0].mxu0
          %v4302 = vpop.f32.mrb[0].mxu0
          %v4303 = vadd.f32 %v4200, %v4302
          %v4304 = vpop.f32.mrb[0].mxu0
          %4305 = vmatprep.mubr.bf16.mxu0 0
          %4306 = vmatmul.mubr.bf16.gmra.mrb[0].mxu0 %v4247
          %v4307 = vpop.f32.mrb[0].mxu0
          %v4308 = vadd.f32 %v4205, %v4307
          %v4309 = vpop.f32.mrb[0].mxu0
          %v4310 = vpop.f32.mrb[0].mxu0
          %v4311 = vadd.f32 %v4208, %v4310
          %v4312 = vpop.f32.mrb[0].mxu0
          %4313 = vdwg.mxu0
          %vm4322 = vcmask 1042432
          %vm4323 = vcmask 1046532
          %vm4324 = vmor %vm4322, %vm4323
          %v4325 = vrot.slane %v3976, 5
          %v4326 = vrot.slane %v4325, 4
          %v4327 = vrot.slane %v3977, 5
          %v4328 = vsel %vm4324, %v4326, %v4327
          %v4329 = vrot.slane %v3978, 5
          %v4330 = vrot.slane %v4329, 4
          %v4331 = vrot.slane %v3979, 5
          %v4332 = vsel %vm4324, %v4330, %v4331
          %v4333 = vrot.slane %v3980, 5
          %v4334 = vrot.slane %v4333, 4
          %v4335 = vrot.slane %v3981, 5
          %v4336 = vsel %vm4324, %v4334, %v4335
          %v4337 = vrot.slane %v3982, 5
          %v4338 = vrot.slane %v4337, 4
          %v4339 = vrot.slane %v3983, 5
          %v4340 = vsel %vm4324, %v4338, %v4339
          %v4341 = vrot.slane %v3984, 5
          %v4342 = vrot.slane %v4341, 4
          %v4343 = vrot.slane %v3985, 5
          %v4344 = vsel %vm4324, %v4342, %v4343
          %v4345 = vrot.slane %v3986, 5
          %v4346 = vrot.slane %v4345, 4
          %v4347 = vrot.slane %v3987, 5
          %v4348 = vsel %vm4324, %v4346, %v4347
          %v4349 = vrot.slane %v3988, 5
          %v4350 = vrot.slane %v4349, 4
          %v4351 = vrot.slane %v3989, 5
          %v4352 = vsel %vm4324, %v4350, %v4351
          %v4353 = vrot.slane %v3990, 5
          %v4354 = vrot.slane %v4353, 4
          %v4355 = vrot.slane %v3991, 5
          %v4356 = vsel %vm4324, %v4354, %v4355
          %s4357 = scalar_lea.vmem %s4, 16
          %v4358 = vld [vmem:[%s4357] sm:$0xf]
          %v4359 = vld [vmem:[%s4357 + $0x4] sm:$0xf]
          %v4360 = vunpack.c.l.b16 %v4328
          %v4361 = vunpack.c.l.b16 %v4332
          %v4362 = vunpack.c.l.b16 %v4336
          %v4363 = vunpack.c.l.b16 %v4340
          %v4364 = vunpack.c.l.b16 %v4344
          %v4365 = vunpack.c.l.b16 %v4348
          %v4366 = vunpack.c.l.b16 %v4352
          %v4367 = vunpack.c.l.b16 %v4356
          %v4368 = vpack.c.b16 %v4361, %v4360
          %v4369 = vpack.c.b16 %v4363, %v4362
          %v4370 = vpack.c.b16 %v4365, %v4364
          %v4371 = vpack.c.b16 %v4367, %v4366
          %v4374 = vunpack.c.l.b16 %v4358
          %v4375 = vunpack.c.l.b16 %v4359
          %v4376 = vpack.c.b16 %v4375, %v4374
          %v4379 = vsel %vm3947, %v4368, 0
          %v4382 = vsel %vm3947, %v4369, 0
          %v4385 = vsel %vm3947, %v4370, 0
          %v4388 = vsel %vm3947, %v4371, 0
          %4390 = vmatprep.subr.bf16.mxu0 0
          %4391 = vmatpush1.bf16.msra.mxu0 %v4376
          %4392 = vmatprep.subr.bf16.mxu0 0
          %4393 = vmatpush1.bf16.msra.mxu0 0
          %4394 = vmatprep.subr.bf16.mxu0 0
          %4395 = vmatpush1.bf16.msra.mxu0 0
          %4396 = vmatprep.subr.bf16.mxu0 0
          %4397 = vmatpush1.bf16.msra.mxu0 0
          %4398 = vmatprep.subr.bf16.mxu0 0
          %4399 = vmatpush1.bf16.msra.mxu0 0
          %4400 = vmatprep.subr.bf16.mxu0 0
          %4401 = vmatpush1.bf16.msra.mxu0 0
          %4402 = vmatprep.subr.bf16.mxu0 0
          %4403 = vmatpush1.bf16.msra.mxu0 0
          %4404 = vmatprep.subr.bf16.mxu0 0
          %4405 = vmatpush1.bf16.msra.mxu0 0
          %4406 = vmatprep.subr.bf16.mxu0 0
          %4407 = vmatpush1.bf16.msra.mxu0 0
          %4408 = vmatprep.subr.bf16.mxu0 0
          %4409 = vmatpush1.bf16.msra.mxu0 0
          %4410 = vmatprep.subr.bf16.mxu0 0
          %4411 = vmatpush1.bf16.msra.mxu0 0
          %4412 = vmatprep.subr.bf16.mxu0 0
          %4413 = vmatpush1.bf16.msra.mxu0 0
          %4414 = vmatprep.subr.bf16.mxu0 0
          %4415 = vmatpush1.bf16.msra.mxu0 0
          %4416 = vmatprep.subr.bf16.mxu0 0
          %4417 = vmatpush1.bf16.msra.mxu0 0
          %4418 = vmatprep.subr.bf16.mxu0 0
          %4419 = vmatpush1.bf16.msra.mxu0 0
          %4420 = vmatprep.subr.bf16.mxu0 0
          %4421 = vmatpush1.bf16.msra.mxu0 0
          %4422 = vmatprep.mubr.bf16.mxu0 0
          %4423 = vmatmul.mubr.bf16.gmra.mrb[0].mxu0 %v4379
          %v4424 = vpop.f32.mrb[0].mxu0
          %v4425 = vadd.f32 0.0, %v4424
          %v4426 = vpop.f32.mrb[0].mxu0
          %v4427 = vpop.f32.mrb[0].mxu0
          %v4428 = vadd.f32 0.0, %v4427
          %v4429 = vpop.f32.mrb[0].mxu0
          %4430 = vmatprep.mubr.bf16.mxu0 0
          %4431 = vmatmul.mubr.bf16.gmra.mrb[0].mxu0 %v4382
          %v4432 = vpop.f32.mrb[0].mxu0
          %v4433 = vadd.f32 0.0, %v4432
          %v4434 = vpop.f32.mrb[0].mxu0
          %v4435 = vpop.f32.mrb[0].mxu0
          %v4436 = vadd.f32 0.0, %v4435
          %v4437 = vpop.f32.mrb[0].mxu0
          %4438 = vmatprep.mubr.bf16.mxu0 0
          %4439 = vmatmul.mubr.bf16.gmra.mrb[0].mxu0 %v4385
          %v4440 = vpop.f32.mrb[0].mxu0
          %v4441 = vadd.f32 0.0, %v4440
          %v4442 = vpop.f32.mrb[0].mxu0
          %v4443 = vpop.f32.mrb[0].mxu0
          %v4444 = vadd.f32 0.0, %v4443
          %v4445 = vpop.f32.mrb[0].mxu0
          %4446 = vmatprep.mubr.bf16.mxu0 0
          %4447 = vmatmul.mubr.bf16.gmra.mrb[0].mxu0 %v4388
          %v4448 = vpop.f32.mrb[0].mxu0
          %v4449 = vadd.f32 0.0, %v4448
          %v4450 = vpop.f32.mrb[0].mxu0
          %v4451 = vpop.f32.mrb[0].mxu0
          %v4452 = vadd.f32 0.0, %v4451
          %v4453 = vpop.f32.mrb[0].mxu0
          %4454 = vdwg.mxu0
          %v4455 = vadd.f32 %v4284, %v4425
          %v4456 = vadd.f32 %v4287, %v4428
          %v4457 = vadd.f32 %v4292, %v4433
          %v4458 = vadd.f32 %v4295, %v4436
          %v4459 = vadd.f32 %v4300, %v4441
          %v4460 = vadd.f32 %v4303, %v4444
          %v4461 = vadd.f32 %v4308, %v4449
          %v4462 = vadd.f32 %v4311, %v4452
          %s4463 = scalar_lea.vmem %s4, 24
          %v4464 = vld [vmem:[%s4463] sm:$0xf]
          %v4465 = vld [vmem:[%s4463 + $0x4] sm:$0xf]
          %v4467 = vunpack.c.l.b16 %v3992
          %v4468 = vpack.c.b16 %v4221, %v4220
          %v4469 = vpack.c.b16 %v4223, %v4222
          %v4470 = vpack.c.b16 %v4225, %v4224
          %v4471 = vpack.c.b16 %v4467, %v4226
          %v4474 = vunpack.c.l.b16 %v4464
          %v4475 = vunpack.c.l.b16 %v4465
          %v4476 = vpack.c.b16 %v4475, %v4474
          %v4479 = vsel %vm3947, %v4468, 0
          %v4482 = vsel %vm3947, %v4469, 0
          %v4485 = vsel %vm3947, %v4470, 0
          %v4488 = vsel %vm3947, %v4471, 0
          %4490 = vmatprep.subr.bf16.mxu0 0
          %4491 = vmatpush1.bf16.msra.mxu0 %v4476
          %4492 = vmatprep.subr.bf16.mxu0 0
          %4493 = vmatpush1.bf16.msra.mxu0 0
          %4494 = vmatprep.subr.bf16.mxu0 0
          %4495 = vmatpush1.bf16.msra.mxu0 0
          %4496 = vmatprep.subr.bf16.mxu0 0
          %4497 = vmatpush1.bf16.msra.mxu0 0
          %4498 = vmatprep.subr.bf16.mxu0 0
          %4499 = vmatpush1.bf16.msra.mxu0 0
          %4500 = vmatprep.subr.bf16.mxu0 0
          %4501 = vmatpush1.bf16.msra.mxu0 0
          %4502 = vmatprep.subr.bf16.mxu0 0
          %4503 = vmatpush1.bf16.msra.mxu0 0
          %4504 = vmatprep.subr.bf16.mxu0 0
          %4505 = vmatpush1.bf16.msra.mxu0 0
          %4506 = vmatprep.subr.bf16.mxu0 0
          %4507 = vmatpush1.bf16.msra.mxu0 0
          %4508 = vmatprep.subr.bf16.mxu0 0
          %4509 = vmatpush1.bf16.msra.mxu0 0
          %4510 = vmatprep.subr.bf16.mxu0 0
          %4511 = vmatpush1.bf16.msra.mxu0 0
          %4512 = vmatprep.subr.bf16.mxu0 0
          %4513 = vmatpush1.bf16.msra.mxu0 0
          %4514 = vmatprep.subr.bf16.mxu0 0
          %4515 = vmatpush1.bf16.msra.mxu0 0
          %4516 = vmatprep.subr.bf16.mxu0 0
          %4517 = vmatpush1.bf16.msra.mxu0 0
          %4518 = vmatprep.subr.bf16.mxu0 0
          %4519 = vmatpush1.bf16.msra.mxu0 0
          %4520 = vmatprep.subr.bf16.mxu0 0
          %4521 = vmatpush1.bf16.msra.mxu0 0
          %4522 = vmatprep.mubr.bf16.mxu0 0
          %4523 = vmatmul.mubr.bf16.gmra.mrb[0].mxu0 %v4479
          %v4524 = vpop.f32.mrb[0].mxu0
          %v4525 = vadd.f32 0.0, %v4524
          %v4526 = vpop.f32.mrb[0].mxu0
          %v4527 = vpop.f32.mrb[0].mxu0
          %v4528 = vadd.f32 0.0, %v4527
          %v4529 = vpop.f32.mrb[0].mxu0
          %4530 = vmatprep.mubr.bf16.mxu0 0
          %4531 = vmatmul.mubr.bf16.gmra.mrb[0].mxu0 %v4482
          %v4532 = vpop.f32.mrb[0].mxu0
          %v4533 = vadd.f32 0.0, %v4532
          %v4534 = vpop.f32.mrb[0].mxu0
          %v4535 = vpop.f32.mrb[0].mxu0
          %v4536 = vadd.f32 0.0, %v4535
          %v4537 = vpop.f32.mrb[0].mxu0
          %4538 = vmatprep.mubr.bf16.mxu0 0
          %4539 = vmatmul.mubr.bf16.gmra.mrb[0].mxu0 %v4485
          %v4540 = vpop.f32.mrb[0].mxu0
          %v4541 = vadd.f32 0.0, %v4540
          %v4542 = vpop.f32.mrb[0].mxu0
          %v4543 = vpop.f32.mrb[0].mxu0
          %v4544 = vadd.f32 0.0, %v4543
          %v4545 = vpop.f32.mrb[0].mxu0
          %4546 = vmatprep.mubr.bf16.mxu0 0
          %4547 = vmatmul.mubr.bf16.gmra.mrb[0].mxu0 %v4488
          %v4548 = vpop.f32.mrb[0].mxu0
          %v4549 = vadd.f32 0.0, %v4548
          %v4550 = vpop.f32.mrb[0].mxu0
          %v4551 = vpop.f32.mrb[0].mxu0
          %v4552 = vadd.f32 0.0, %v4551
          %v4553 = vpop.f32.mrb[0].mxu0
          %4554 = vdwg.mxu0
          %v4555 = vadd.f32 %v4455, %v4525
          %v4556 = vadd.f32 %v4456, %v4528
          %v4557 = vadd.f32 %v4457, %v4533
          %v4558 = vadd.f32 %v4458, %v4536
          %v4559 = vadd.f32 %v4459, %v4541
          %v4560 = vadd.f32 %v4460, %v4544
          %v4561 = vadd.f32 %v4461, %v4549
          %v4562 = vadd.f32 %v4462, %v4552
          %v4564 = vshrl.u32 %v3992, 16
          %v4566 = vrot.slane %v4564, 4
          %v4567 = vshll.u32 %v3992, 16
          %v4569 = vrot.slane %v4567, 5
          %v4570 = vor.u32 %v4566, %v4569
          %v4571 = vrot.slane %v4570, 4
          %v4573 = vshll.u32 %v3993, 16
          %v4575 = vrot.slane %v4573, 5
          %v4576 = vsel %vm4000, %v4571, %v4575
          %s4577 = scalar_lea.vmem %s4, 32
          %v4578 = vld [vmem:[%s4577] sm:$0xf]
          %v4579 = vld [vmem:[%s4577 + $0x4] sm:$0xf]
          %v4580 = vunpack.c.l.b16 %v4576
          %v4581 = vpack.c.b16 %v4118, %v4117
          %v4582 = vpack.c.b16 %v4120, %v4119
          %v4583 = vpack.c.b16 %v4122, %v4121
          %v4584 = vpack.c.b16 %v4580, %v4123
          %v4587 = vunpack.c.l.b16 %v4578
          %v4588 = vunpack.c.l.b16 %v4579
          %v4589 = vpack.c.b16 %v4588, %v4587
          %v4592 = vsel %vm3947, %v4581, 0
          %v4595 = vsel %vm3947, %v4582, 0
          %v4598 = vsel %vm3947, %v4583, 0
          %v4601 = vsel %vm3947, %v4584, 0
          %4603 = vmatprep.subr.bf16.mxu0 0
          %4604 = vmatpush1.bf16.msra.mxu0 %v4589
          %4605 = vmatprep.subr.bf16.mxu0 0
          %4606 = vmatpush1.bf16.msra.mxu0 0
          %4607 = vmatprep.subr.bf16.mxu0 0
          %4608 = vmatpush1.bf16.msra.mxu0 0
          %4609 = vmatprep.subr.bf16.mxu0 0
          %4610 = vmatpush1.bf16.msra.mxu0 0
          %4611 = vmatprep.subr.bf16.mxu0 0
          %4612 = vmatpush1.bf16.msra.mxu0 0
          %4613 = vmatprep.subr.bf16.mxu0 0
          %4614 = vmatpush1.bf16.msra.mxu0 0
          %4615 = vmatprep.subr.bf16.mxu0 0
          %4616 = vmatpush1.bf16.msra.mxu0 0
          %4617 = vmatprep.subr.bf16.mxu0 0
          %4618 = vmatpush1.bf16.msra.mxu0 0
          %4619 = vmatprep.subr.bf16.mxu0 0
          %4620 = vmatpush1.bf16.msra.mxu0 0
          %4621 = vmatprep.subr.bf16.mxu0 0
          %4622 = vmatpush1.bf16.msra.mxu0 0
          %4623 = vmatprep.subr.bf16.mxu0 0
          %4624 = vmatpush1.bf16.msra.mxu0 0
          %4625 = vmatprep.subr.bf16.mxu0 0
          %4626 = vmatpush1.bf16.msra.mxu0 0
          %4627 = vmatprep.subr.bf16.mxu0 0
          %4628 = vmatpush1.bf16.msra.mxu0 0
          %4629 = vmatprep.subr.bf16.mxu0 0
          %4630 = vmatpush1.bf16.msra.mxu0 0
          %4631 = vmatprep.subr.bf16.mxu0 0
          %4632 = vmatpush1.bf16.msra.mxu0 0
          %4633 = vmatprep.subr.bf16.mxu0 0
          %4634 = vmatpush1.bf16.msra.mxu0 0
          %4635 = vmatprep.mubr.bf16.mxu0 0
          %4636 = vmatmul.mubr.bf16.gmra.mrb[0].mxu0 %v4592
          %v4637 = vpop.f32.mrb[0].mxu0
          %v4638 = vadd.f32 0.0, %v4637
          %v4639 = vpop.f32.mrb[0].mxu0
          %v4640 = vpop.f32.mrb[0].mxu0
          %v4641 = vadd.f32 0.0, %v4640
          %v4642 = vpop.f32.mrb[0].mxu0
          %4643 = vmatprep.mubr.bf16.mxu0 0
          %4644 = vmatmul.mubr.bf16.gmra.mrb[0].mxu0 %v4595
          %v4645 = vpop.f32.mrb[0].mxu0
          %v4646 = vadd.f32 0.0, %v4645
          %v4647 = vpop.f32.mrb[0].mxu0
          %v4648 = vpop.f32.mrb[0].mxu0
          %v4649 = vadd.f32 0.0, %v4648
          %v4650 = vpop.f32.mrb[0].mxu0
          %4651 = vmatprep.mubr.bf16.mxu0 0
          %4652 = vmatmul.mubr.bf16.gmra.mrb[0].mxu0 %v4598
          %v4653 = vpop.f32.mrb[0].mxu0
          %v4654 = vadd.f32 0.0, %v4653
          %v4655 = vpop.f32.mrb[0].mxu0
          %v4656 = vpop.f32.mrb[0].mxu0
          %v4657 = vadd.f32 0.0, %v4656
          %v4658 = vpop.f32.mrb[0].mxu0
          %4659 = vmatprep.mubr.bf16.mxu0 0
          %4660 = vmatmul.mubr.bf16.gmra.mrb[0].mxu0 %v4601
          %v4661 = vpop.f32.mrb[0].mxu0
          %v4662 = vadd.f32 0.0, %v4661
          %v4663 = vpop.f32.mrb[0].mxu0
          %v4664 = vpop.f32.mrb[0].mxu0
          %v4665 = vadd.f32 0.0, %v4664
          %v4666 = vpop.f32.mrb[0].mxu0
          %4667 = vdwg.mxu0
          %v4668 = vadd.f32 %v4555, %v4638
          %v4669 = vadd.f32 %v4556, %v4641
          %v4670 = vadd.f32 %v4557, %v4646
          %v4671 = vadd.f32 %v4558, %v4649
          %v4672 = vadd.f32 %v4559, %v4654
          %v4673 = vadd.f32 %v4560, %v4657
          %v4674 = vadd.f32 %v4561, %v4662
          %v4675 = vadd.f32 %v4562, %v4665
          %v4677 = vrot.slane %v3992, 5
          %v4678 = vrot.slane %v4677, 4
          %v4679 = vrot.slane %v3993, 5
          %v4680 = vsel %vm4324, %v4678, %v4679
          %s4681 = scalar_lea.vmem %s4, 40
          %v4682 = vld [vmem:[%s4681] sm:$0xf]
          %v4683 = vld [vmem:[%s4681 + $0x4] sm:$0xf]
          %v4684 = vunpack.c.l.b16 %v4680
          %v4685 = vpack.c.b16 %v4362, %v4361
          %v4686 = vpack.c.b16 %v4364, %v4363
          %v4687 = vpack.c.b16 %v4366, %v4365
          %v4688 = vpack.c.b16 %v4684, %v4367
          %v4691 = vunpack.c.l.b16 %v4682
          %v4692 = vunpack.c.l.b16 %v4683
          %v4693 = vpack.c.b16 %v4692, %v4691
          %v4696 = vsel %vm3947, %v4685, 0
          %v4699 = vsel %vm3947, %v4686, 0
          %v4702 = vsel %vm3947, %v4687, 0
          %v4705 = vsel %vm3947, %v4688, 0
          %4707 = vmatprep.subr.bf16.mxu0 0
          %4708 = vmatpush1.bf16.msra.mxu0 %v4693
          %4709 = vmatprep.subr.bf16.mxu0 0
          %4710 = vmatpush1.bf16.msra.mxu0 0
          %4711 = vmatprep.subr.bf16.mxu0 0
          %4712 = vmatpush1.bf16.msra.mxu0 0
          %4713 = vmatprep.subr.bf16.mxu0 0
          %4714 = vmatpush1.bf16.msra.mxu0 0
          %4715 = vmatprep.subr.bf16.mxu0 0
          %4716 = vmatpush1.bf16.msra.mxu0 0
          %4717 = vmatprep.subr.bf16.mxu0 0
          %4718 = vmatpush1.bf16.msra.mxu0 0
          %4719 = vmatprep.subr.bf16.mxu0 0
          %4720 = vmatpush1.bf16.msra.mxu0 0
          %4721 = vmatprep.subr.bf16.mxu0 0
          %4722 = vmatpush1.bf16.msra.mxu0 0
          %4723 = vmatprep.subr.bf16.mxu0 0
          %4724 = vmatpush1.bf16.msra.mxu0 0
          %4725 = vmatprep.subr.bf16.mxu0 0
          %4726 = vmatpush1.bf16.msra.mxu0 0
          %4727 = vmatprep.subr.bf16.mxu0 0
          %4728 = vmatpush1.bf16.msra.mxu0 0
          %4729 = vmatprep.subr.bf16.mxu0 0
          %4730 = vmatpush1.bf16.msra.mxu0 0
          %4731 = vmatprep.subr.bf16.mxu0 0
          %4732 = vmatpush1.bf16.msra.mxu0 0
          %4733 = vmatprep.subr.bf16.mxu0 0
          %4734 = vmatpush1.bf16.msra.mxu0 0
          %4735 = vmatprep.subr.bf16.mxu0 0
          %4736 = vmatpush1.bf16.msra.mxu0 0
          %4737 = vmatprep.subr.bf16.mxu0 0
          %4738 = vmatpush1.bf16.msra.mxu0 0
          %4739 = vmatprep.mubr.bf16.mxu0 0
          %4740 = vmatmul.mubr.bf16.gmra.mrb[0].mxu0 %v4696
          %v4741 = vpop.f32.mrb[0].mxu0
          %v4742 = vadd.f32 0.0, %v4741
          %v4743 = vpop.f32.mrb[0].mxu0
          %v4744 = vpop.f32.mrb[0].mxu0
          %v4745 = vadd.f32 0.0, %v4744
          %v4746 = vpop.f32.mrb[0].mxu0
          %4747 = vmatprep.mubr.bf16.mxu0 0
          %4748 = vmatmul.mubr.bf16.gmra.mrb[0].mxu0 %v4699
          %v4749 = vpop.f32.mrb[0].mxu0
          %v4750 = vadd.f32 0.0, %v4749
          %v4751 = vpop.f32.mrb[0].mxu0
          %v4752 = vpop.f32.mrb[0].mxu0
          %v4753 = vadd.f32 0.0, %v4752
          %v4754 = vpop.f32.mrb[0].mxu0
          %4755 = vmatprep.mubr.bf16.mxu0 0
          %4756 = vmatmul.mubr.bf16.gmra.mrb[0].mxu0 %v4702
          %v4757 = vpop.f32.mrb[0].mxu0
          %v4758 = vadd.f32 0.0, %v4757
          %v4759 = vpop.f32.mrb[0].mxu0
          %v4760 = vpop.f32.mrb[0].mxu0
          %v4761 = vadd.f32 0.0, %v4760
          %v4762 = vpop.f32.mrb[0].mxu0
          %4763 = vmatprep.mubr.bf16.mxu0 0
          %4764 = vmatmul.mubr.bf16.gmra.mrb[0].mxu0 %v4705
          %v4765 = vpop.f32.mrb[0].mxu0
          %v4766 = vadd.f32 0.0, %v4765
          %v4767 = vpop.f32.mrb[0].mxu0
          %v4768 = vpop.f32.mrb[0].mxu0
          %v4769 = vadd.f32 0.0, %v4768
          %v4770 = vpop.f32.mrb[0].mxu0
          %4771 = vdwg.mxu0
          %v4772 = vadd.f32 %v4668, %v4742
          %v4773 = vadd.f32 %v4669, %v4745
          %v4774 = vadd.f32 %v4670, %v4750
          %v4775 = vadd.f32 %v4671, %v4753
          %v4776 = vadd.f32 %v4672, %v4758
          %v4777 = vadd.f32 %v4673, %v4761
          %v4778 = vadd.f32 %v4674, %v4766
          %v4779 = vadd.f32 %v4675, %v4769
          %s4780 = scalar_lea.vmem %s4, 48
          %v4781 = vld [vmem:[%s4780] sm:$0xf]
          %v4782 = vld [vmem:[%s4780 + $0x4] sm:$0xf]
          %v4784 = vunpack.c.l.b16 %v3994
          %v4785 = vpack.c.b16 %v4784, %v4467
          %v4788 = vunpack.c.l.b16 %v4781
          %v4789 = vunpack.c.l.b16 %v4782
          %v4790 = vpack.c.b16 %v4789, %v4788
          %v4793 = vsel %vm3947, %v4785, 0
          %4795 = vmatprep.subr.bf16.mxu0 0
          %4796 = vmatpush1.bf16.msra.mxu0 %v4790
          %4797 = vmatprep.subr.bf16.mxu0 0
          %4798 = vmatpush1.bf16.msra.mxu0 0
          %4799 = vmatprep.subr.bf16.mxu0 0
          %4800 = vmatpush1.bf16.msra.mxu0 0
          %4801 = vmatprep.subr.bf16.mxu0 0
          %4802 = vmatpush1.bf16.msra.mxu0 0
          %4803 = vmatprep.subr.bf16.mxu0 0
          %4804 = vmatpush1.bf16.msra.mxu0 0
          %4805 = vmatprep.subr.bf16.mxu0 0
          %4806 = vmatpush1.bf16.msra.mxu0 0
          %4807 = vmatprep.subr.bf16.mxu0 0
          %4808 = vmatpush1.bf16.msra.mxu0 0
          %4809 = vmatprep.subr.bf16.mxu0 0
          %4810 = vmatpush1.bf16.msra.mxu0 0
          %4811 = vmatprep.subr.bf16.mxu0 0
          %4812 = vmatpush1.bf16.msra.mxu0 0
          %4813 = vmatprep.subr.bf16.mxu0 0
          %4814 = vmatpush1.bf16.msra.mxu0 0
          %4815 = vmatprep.subr.bf16.mxu0 0
          %4816 = vmatpush1.bf16.msra.mxu0 0
          %4817 = vmatprep.subr.bf16.mxu0 0
          %4818 = vmatpush1.bf16.msra.mxu0 0
          %4819 = vmatprep.subr.bf16.mxu0 0
          %4820 = vmatpush1.bf16.msra.mxu0 0
          %4821 = vmatprep.subr.bf16.mxu0 0
          %4822 = vmatpush1.bf16.msra.mxu0 0
          %4823 = vmatprep.subr.bf16.mxu0 0
          %4824 = vmatpush1.bf16.msra.mxu0 0
          %4825 = vmatprep.subr.bf16.mxu0 0
          %4826 = vmatpush1.bf16.msra.mxu0 0
          %4827 = vmatprep.mubr.bf16.mxu0 0
          %4828 = vmatmul.mubr.bf16.gmra.mrb[0].mxu0 %v4241
          %v4829 = vpop.f32.mrb[0].mxu0
          %v4830 = vadd.f32 0.0, %v4829
          %v4831 = vpop.f32.mrb[0].mxu0
          %v4832 = vpop.f32.mrb[0].mxu0
          %v4833 = vadd.f32 0.0, %v4832
          %v4834 = vpop.f32.mrb[0].mxu0
          %4835 = vmatprep.mubr.bf16.mxu0 0
          %4836 = vmatmul.mubr.bf16.gmra.mrb[0].mxu0 %v4244
          %v4837 = vpop.f32.mrb[0].mxu0
          %v4838 = vadd.f32 0.0, %v4837
          %v4839 = vpop.f32.mrb[0].mxu0
          %v4840 = vpop.f32.mrb[0].mxu0
          %v4841 = vadd.f32 0.0, %v4840
          %v4842 = vpop.f32.mrb[0].mxu0
          %4843 = vmatprep.mubr.bf16.mxu0 0
          %4844 = vmatmul.mubr.bf16.gmra.mrb[0].mxu0 %v4247
          %v4845 = vpop.f32.mrb[0].mxu0
          %v4846 = vadd.f32 0.0, %v4845
          %v4847 = vpop.f32.mrb[0].mxu0
          %v4848 = vpop.f32.mrb[0].mxu0
          %v4849 = vadd.f32 0.0, %v4848
          %v4850 = vpop.f32.mrb[0].mxu0
          %4851 = vmatprep.mubr.bf16.mxu0 0
          %4852 = vmatmul.mubr.bf16.gmra.mrb[0].mxu0 %v4793
          %v4853 = vpop.f32.mrb[0].mxu0
          %v4854 = vadd.f32 0.0, %v4853
          %v4855 = vpop.f32.mrb[0].mxu0
          %v4856 = vpop.f32.mrb[0].mxu0
          %v4857 = vadd.f32 0.0, %v4856
          %v4858 = vpop.f32.mrb[0].mxu0
          %4859 = vdwg.mxu0
          %v4860 = vadd.f32 %v4772, %v4830
          %v4861 = vadd.f32 %v4773, %v4833
          %v4862 = vadd.f32 %v4774, %v4838
          %v4863 = vadd.f32 %v4775, %v4841
          %v4864 = vadd.f32 %v4776, %v4846
          %v4865 = vadd.f32 %v4777, %v4849
          %v4866 = vadd.f32 %v4778, %v4854
          %v4867 = vadd.f32 %v4779, %v4857
          %v4869 = vshrl.u32 %v3994, 16
          %v4871 = vrot.slane %v4869, 4
          %v4872 = vshll.u32 %v3994, 16
          %v4874 = vrot.slane %v4872, 5
          %v4875 = vor.u32 %v4871, %v4874
          %v4876 = vrot.slane %v4875, 4
          %v4878 = vshll.u32 %v3995, 16
          %v4880 = vrot.slane %v4878, 5
          %v4881 = vsel %vm4000, %v4876, %v4880
          %s4882 = scalar_lea.vmem %s4, 56
          %v4883 = vld [vmem:[%s4882] sm:$0xf]
          %v4884 = vld [vmem:[%s4882 + $0x4] sm:$0xf]
          %v4885 = vunpack.c.l.b16 %v4881
          %v4886 = vpack.c.b16 %v4885, %v4580
          %v4889 = vunpack.c.l.b16 %v4883
          %v4890 = vunpack.c.l.b16 %v4884
          %v4891 = vpack.c.b16 %v4890, %v4889
          %v4894 = vsel %vm3947, %v4886, 0
          %4896 = vmatprep.subr.bf16.mxu0 0
          %4897 = vmatpush1.bf16.msra.mxu0 %v4891
          %4898 = vmatprep.subr.bf16.mxu0 0
          %4899 = vmatpush1.bf16.msra.mxu0 0
          %4900 = vmatprep.subr.bf16.mxu0 0
          %4901 = vmatpush1.bf16.msra.mxu0 0
          %4902 = vmatprep.subr.bf16.mxu0 0
          %4903 = vmatpush1.bf16.msra.mxu0 0
          %4904 = vmatprep.subr.bf16.mxu0 0
          %4905 = vmatpush1.bf16.msra.mxu0 0
          %4906 = vmatprep.subr.bf16.mxu0 0
          %4907 = vmatpush1.bf16.msra.mxu0 0
          %4908 = vmatprep.subr.bf16.mxu0 0
          %4909 = vmatpush1.bf16.msra.mxu0 0
          %4910 = vmatprep.subr.bf16.mxu0 0
          %4911 = vmatpush1.bf16.msra.mxu0 0
          %4912 = vmatprep.subr.bf16.mxu0 0
          %4913 = vmatpush1.bf16.msra.mxu0 0
          %4914 = vmatprep.subr.bf16.mxu0 0
          %4915 = vmatpush1.bf16.msra.mxu0 0
          %4916 = vmatprep.subr.bf16.mxu0 0
          %4917 = vmatpush1.bf16.msra.mxu0 0
          %4918 = vmatprep.subr.bf16.mxu0 0
          %4919 = vmatpush1.bf16.msra.mxu0 0
          %4920 = vmatprep.subr.bf16.mxu0 0
          %4921 = vmatpush1.bf16.msra.mxu0 0
          %4922 = vmatprep.subr.bf16.mxu0 0
          %4923 = vmatpush1.bf16.msra.mxu0 0
          %4924 = vmatprep.subr.bf16.mxu0 0
          %4925 = vmatpush1.bf16.msra.mxu0 0
          %4926 = vmatprep.subr.bf16.mxu0 0
          %4927 = vmatpush1.bf16.msra.mxu0 0
          %4928 = vmatprep.mubr.bf16.mxu0 0
          %4929 = vmatmul.mubr.bf16.gmra.mrb[0].mxu0 %v4138
          %v4930 = vpop.f32.mrb[0].mxu0
          %v4931 = vadd.f32 0.0, %v4930
          %v4932 = vpop.f32.mrb[0].mxu0
          %v4933 = vpop.f32.mrb[0].mxu0
          %v4934 = vadd.f32 0.0, %v4933
          %v4935 = vpop.f32.mrb[0].mxu0
          %4936 = vmatprep.mubr.bf16.mxu0 0
          %4937 = vmatmul.mubr.bf16.gmra.mrb[0].mxu0 %v4141
          %v4938 = vpop.f32.mrb[0].mxu0
          %v4939 = vadd.f32 0.0, %v4938
          %v4940 = vpop.f32.mrb[0].mxu0
          %v4941 = vpop.f32.mrb[0].mxu0
          %v4942 = vadd.f32 0.0, %v4941
          %v4943 = vpop.f32.mrb[0].mxu0
          %4944 = vmatprep.mubr.bf16.mxu0 0
          %4945 = vmatmul.mubr.bf16.gmra.mrb[0].mxu0 %v4144
          %v4946 = vpop.f32.mrb[0].mxu0
          %v4947 = vadd.f32 0.0, %v4946
          %v4948 = vpop.f32.mrb[0].mxu0
          %v4949 = vpop.f32.mrb[0].mxu0
          %v4950 = vadd.f32 0.0, %v4949
          %v4951 = vpop.f32.mrb[0].mxu0
          %4952 = vmatprep.mubr.bf16.mxu0 0
          %4953 = vmatmul.mubr.bf16.gmra.mrb[0].mxu0 %v4894
          %v4954 = vpop.f32.mrb[0].mxu0
          %v4955 = vadd.f32 0.0, %v4954
          %v4956 = vpop.f32.mrb[0].mxu0
          %v4957 = vpop.f32.mrb[0].mxu0
          %v4958 = vadd.f32 0.0, %v4957
          %v4959 = vpop.f32.mrb[0].mxu0
          %4960 = vdwg.mxu0
          %v4961 = vadd.f32 %v4860, %v4931
          %v4962 = vadd.f32 %v4861, %v4934
          %v4963 = vadd.f32 %v4862, %v4939
          %v4964 = vadd.f32 %v4863, %v4942
          %v4965 = vadd.f32 %v4864, %v4947
          %v4966 = vadd.f32 %v4865, %v4950
          %v4967 = vadd.f32 %v4866, %v4955
          %v4968 = vadd.f32 %v4867, %v4958
          %v4970 = vrot.slane %v3994, 5
          %v4971 = vrot.slane %v4970, 4
          %v4972 = vrot.slane %v3995, 5
          %v4973 = vsel %vm4324, %v4971, %v4972
          %s4974 = scalar_lea.vmem %s4, 64
          %v4975 = vld [vmem:[%s4974] sm:$0xf]
          %v4976 = vld [vmem:[%s4974 + $0x4] sm:$0xf]
          %v4977 = vunpack.c.l.b16 %v4973
          %v4978 = vpack.c.b16 %v4977, %v4684
          %v4981 = vunpack.c.l.b16 %v4975
          %v4982 = vunpack.c.l.b16 %v4976
          %v4983 = vpack.c.b16 %v4982, %v4981
          %v4986 = vsel %vm3947, %v4978, 0
          %4988 = vmatprep.subr.bf16.mxu0 0
          %4989 = vmatpush1.bf16.msra.mxu0 %v4983
          %4990 = vmatprep.subr.bf16.mxu0 0
          %4991 = vmatpush1.bf16.msra.mxu0 0
          %4992 = vmatprep.subr.bf16.mxu0 0
          %4993 = vmatpush1.bf16.msra.mxu0 0
          %4994 = vmatprep.subr.bf16.mxu0 0
          %4995 = vmatpush1.bf16.msra.mxu0 0
          %4996 = vmatprep.subr.bf16.mxu0 0
          %4997 = vmatpush1.bf16.msra.mxu0 0
          %4998 = vmatprep.subr.bf16.mxu0 0
          %4999 = vmatpush1.bf16.msra.mxu0 0
          %5000 = vmatprep.subr.bf16.mxu0 0
          %5001 = vmatpush1.bf16.msra.mxu0 0
          %5002 = vmatprep.subr.bf16.mxu0 0
          %5003 = vmatpush1.bf16.msra.mxu0 0
          %5004 = vmatprep.subr.bf16.mxu0 0
          %5005 = vmatpush1.bf16.msra.mxu0 0
          %5006 = vmatprep.subr.bf16.mxu0 0
          %5007 = vmatpush1.bf16.msra.mxu0 0
          %5008 = vmatprep.subr.bf16.mxu0 0
          %5009 = vmatpush1.bf16.msra.mxu0 0
          %5010 = vmatprep.subr.bf16.mxu0 0
          %5011 = vmatpush1.bf16.msra.mxu0 0
          %5012 = vmatprep.subr.bf16.mxu0 0
          %5013 = vmatpush1.bf16.msra.mxu0 0
          %5014 = vmatprep.subr.bf16.mxu0 0
          %5015 = vmatpush1.bf16.msra.mxu0 0
          %5016 = vmatprep.subr.bf16.mxu0 0
          %5017 = vmatpush1.bf16.msra.mxu0 0
          %5018 = vmatprep.subr.bf16.mxu0 0
          %5019 = vmatpush1.bf16.msra.mxu0 0
          %5020 = vmatprep.mubr.bf16.mxu0 0
          %5021 = vmatmul.mubr.bf16.gmra.mrb[0].mxu0 %v4382
          %v5022 = vpop.f32.mrb[0].mxu0
          %v5023 = vadd.f32 0.0, %v5022
          %v5024 = vpop.f32.mrb[0].mxu0
          %v5025 = vpop.f32.mrb[0].mxu0
          %v5026 = vadd.f32 0.0, %v5025
          %v5027 = vpop.f32.mrb[0].mxu0
          %5028 = vmatprep.mubr.bf16.mxu0 0
          %5029 = vmatmul.mubr.bf16.gmra.mrb[0].mxu0 %v4385
          %v5030 = vpop.f32.mrb[0].mxu0
          %v5031 = vadd.f32 0.0, %v5030
          %v5032 = vpop.f32.mrb[0].mxu0
          %v5033 = vpop.f32.mrb[0].mxu0
          %v5034 = vadd.f32 0.0, %v5033
          %v5035 = vpop.f32.mrb[0].mxu0
          %5036 = vmatprep.mubr.bf16.mxu0 0
          %5037 = vmatmul.mubr.bf16.gmra.mrb[0].mxu0 %v4388
          %v5038 = vpop.f32.mrb[0].mxu0
          %v5039 = vadd.f32 0.0, %v5038
          %v5040 = vpop.f32.mrb[0].mxu0
          %v5041 = vpop.f32.mrb[0].mxu0
          %v5042 = vadd.f32 0.0, %v5041
          %v5043 = vpop.f32.mrb[0].mxu0
          %5044 = vmatprep.mubr.bf16.mxu0 0
          %5045 = vmatmul.mubr.bf16.gmra.mrb[0].mxu0 %v4986
          %v5046 = vpop.f32.mrb[0].mxu0
          %v5047 = vadd.f32 0.0, %v5046
          %v5048 = vpop.f32.mrb[0].mxu0
          %v5049 = vpop.f32.mrb[0].mxu0
          %v5050 = vadd.f32 0.0, %v5049
          %v5051 = vpop.f32.mrb[0].mxu0
          %5052 = vdwg.mxu0
          %v5053 = vadd.f32 %v4961, %v5023
          %v5054 = vadd.f32 %v4962, %v5026
          %v5055 = vadd.f32 %v4963, %v5031
          %v5056 = vadd.f32 %v4964, %v5034
          %v5057 = vadd.f32 %v4965, %v5039
          %v5058 = vadd.f32 %v4966, %v5042
          %v5059 = vadd.f32 %v4967, %v5047
          %v5060 = vadd.f32 %v4968, %v5050
          %v5061 = vld [vmem:[#allocation3] sm:$0xff]
          %v5062 = vld [vmem:[#allocation3 + $0x8] sm:$0xff]
          %v5063 = vld [vmem:[#allocation3 + $0x10] sm:$0xff]
          %v5064 = vld [vmem:[#allocation3 + $0x18] sm:$0xff]
          %v5065 = vld [vmem:[#allocation3 + $0x20] sm:$0xff]
          %v5066 = vld [vmem:[#allocation3 + $0x28] sm:$0xff]
          %v5067 = vld [vmem:[#allocation3 + $0x30] sm:$0xff]
          %v5068 = vld [vmem:[#allocation3 + $0x38] sm:$0xff]
          %v5069 = vadd.f32 %v5061, %v5053
          %v5070 = vadd.f32 %v5062, %v5054
          %v5071 = vadd.f32 %v5063, %v5055
          %v5072 = vadd.f32 %v5064, %v5056
          %v5073 = vadd.f32 %v5065, %v5057
          %v5074 = vadd.f32 %v5066, %v5058
          %v5075 = vadd.f32 %v5067, %v5059
          %v5076 = vadd.f32 %v5068, %v5060
          %5077 = vst.msk [vmem:[#allocation3] sm:$0xff] %vm3947, %v5069
          %5078 = vst.msk [vmem:[#allocation3 + $0x8] sm:$0xff] %vm3947, %v5070
          %5079 = vst.msk [vmem:[#allocation3 + $0x10] sm:$0xff] %vm3947, %v5071
          %5080 = vst.msk [vmem:[#allocation3 + $0x18] sm:$0xff] %vm3947, %v5072
          %5081 = vst.msk [vmem:[#allocation3 + $0x20] sm:$0xff] %vm3947, %v5073
          %5082 = vst.msk [vmem:[#allocation3 + $0x28] sm:$0xff] %vm3947, %v5074
          %5083 = vst.msk [vmem:[#allocation3 + $0x30] sm:$0xff] %vm3947, %v5075
          %5084 = vst.msk [vmem:[#allocation3 + $0x38] sm:$0xff] %vm3947, %v5076
        $region76: #{resblock3d_forward.1} parent=59 // pred_fallthru
          _
        %s5085 = sadd.s32 %s29, 1
        %p5086 = scmp.lt.s32.totalorder %s5085, 0
        %s5087 = ssub.s32 0, %s5085
        %s5088 = scalar_select %p5086, %s5087, %s5085
        %s5089 = sdiv.u32.pop %s5088, 3
        %s5090 = srem.u32.pop %s5088, 3
        %s5091 = ssub.s32 0, %s5090
        %s5092 = scalar_select %p5086, %s5091, %s5090
        %p5093 = scmp.ne.s32.totalorder %s5092, 0
        %p5094 = scmp.lt.s32.totalorder %s5092, 0
        %p5095 = pnand %p5094, %p5093
        %p5096 = pneg %p5095
        %s5097 = sadd.s32 %s5092, 3
        %s5098 = scalar_select %p5096, %s5097, %s5092
        %s5099 = smul.u32 %s5098, 20
        %s5100 = smul.addr %s5099, 4
        %s5101 = scalar_lea.vmem [#allocation2], %s5100
        %v5102 = vld [vmem:[%s5101] sm:$0xf]
        %v5103 = vld [vmem:[%s5101 + $0x4] sm:$0x1]
        %v5104 = vld [vmem:[%s5101 + $0x8] sm:$0xf]
        %v5105 = vld [vmem:[%s5101 + $0xc] sm:$0x1]
        %v5106 = vld [vmem:[%s5101 + $0x10] sm:$0xf]
        %v5107 = vld [vmem:[%s5101 + $0x14] sm:$0x1]
        %v5108 = vld [vmem:[%s5101 + $0x18] sm:$0xf]
        %v5109 = vld [vmem:[%s5101 + $0x1c] sm:$0x1]
        %v5110 = vld [vmem:[%s5101 + $0x20] sm:$0xf]
        %v5111 = vld [vmem:[%s5101 + $0x24] sm:$0x1]
        %v5112 = vld [vmem:[%s5101 + $0x28] sm:$0xf]
        %v5113 = vld [vmem:[%s5101 + $0x2c] sm:$0x1]
        %v5114 = vld [vmem:[%s5101 + $0x30] sm:$0xf]
        %v5115 = vld [vmem:[%s5101 + $0x34] sm:$0x1]
        %v5116 = vld [vmem:[%s5101 + $0x38] sm:$0xf]
        %v5117 = vld [vmem:[%s5101 + $0x3c] sm:$0x1]
        %v5118 = vld [vmem:[%s5101 + $0x40] sm:$0xf]
        %v5119 = vld [vmem:[%s5101 + $0x44] sm:$0x1]
        %v5120 = vld [vmem:[%s5101 + $0x48] sm:$0xf]
        %v5121 = vld [vmem:[%s5101 + $0x4c] sm:$0x1]
        %s5122 = scalar_lea.vmem %s4, 72
        %v5123 = vld [vmem:[%s5122] sm:$0xf]
        %v5124 = vld [vmem:[%s5122 + $0x4] sm:$0xf]
        %vm5125 = vsmask.f32 3328
        %vm5126 = vsmask.f32 7440
        %vm5127 = vmor %vm5125, %vm5126
        %v5129 = vshrl.u32 %v5102, 16
        %v5131 = vrot.slane %v5129, 4
        %v5132 = vshll.u32 %v5102, 16
        %v5134 = vrot.slane %v5132, 5
        %v5135 = vor.u32 %v5131, %v5134
        %v5136 = vrot.slane %v5135, 4
        %v5138 = vshll.u32 %v5103, 16
        %v5140 = vrot.slane %v5138, 5
        %v5141 = vsel %vm5127, %v5136, %v5140
        %v5143 = vshrl.u32 %v5104, 16
        %v5145 = vrot.slane %v5143, 4
        %v5146 = vshll.u32 %v5104, 16
        %v5148 = vrot.slane %v5146, 5
        %v5149 = vor.u32 %v5145, %v5148
        %v5150 = vrot.slane %v5149, 4
        %v5152 = vshll.u32 %v5105, 16
        %v5154 = vrot.slane %v5152, 5
        %v5155 = vsel %vm5127, %v5150, %v5154
        %v5157 = vshrl.u32 %v5106, 16
        %v5159 = vrot.slane %v5157, 4
        %v5160 = vshll.u32 %v5106, 16
        %v5162 = vrot.slane %v5160, 5
        %v5163 = vor.u32 %v5159, %v5162
        %v5164 = vrot.slane %v5163, 4
        %v5166 = vshll.u32 %v5107, 16
        %v5168 = vrot.slane %v5166, 5
        %v5169 = vsel %vm5127, %v5164, %v5168
        %v5171 = vshrl.u32 %v5108, 16
        %v5173 = vrot.slane %v5171, 4
        %v5174 = vshll.u32 %v5108, 16
        %v5176 = vrot.slane %v5174, 5
        %v5177 = vor.u32 %v5173, %v5176
        %v5178 = vrot.slane %v5177, 4
        %v5180 = vshll.u32 %v5109, 16
        %v5182 = vrot.slane %v5180, 5
        %v5183 = vsel %vm5127, %v5178, %v5182
        %v5185 = vshrl.u32 %v5110, 16
        %v5187 = vrot.slane %v5185, 4
        %v5188 = vshll.u32 %v5110, 16
        %v5190 = vrot.slane %v5188, 5
        %v5191 = vor.u32 %v5187, %v5190
        %v5192 = vrot.slane %v5191, 4
        %v5194 = vshll.u32 %v5111, 16
        %v5196 = vrot.slane %v5194, 5
        %v5197 = vsel %vm5127, %v5192, %v5196
        %v5199 = vshrl.u32 %v5112, 16
        %v5201 = vrot.slane %v5199, 4
        %v5202 = vshll.u32 %v5112, 16
        %v5204 = vrot.slane %v5202, 5
        %v5205 = vor.u32 %v5201, %v5204
        %v5206 = vrot.slane %v5205, 4
        %v5208 = vshll.u32 %v5113, 16
        %v5210 = vrot.slane %v5208, 5
        %v5211 = vsel %vm5127, %v5206, %v5210
        %v5213 = vshrl.u32 %v5114, 16
        %v5215 = vrot.slane %v5213, 4
        %v5216 = vshll.u32 %v5114, 16
        %v5218 = vrot.slane %v5216, 5
        %v5219 = vor.u32 %v5215, %v5218
        %v5220 = vrot.slane %v5219, 4
        %v5222 = vshll.u32 %v5115, 16
        %v5224 = vrot.slane %v5222, 5
        %v5225 = vsel %vm5127, %v5220, %v5224
        %v5227 = vshrl.u32 %v5116, 16
        %v5229 = vrot.slane %v5227, 4
        %v5230 = vshll.u32 %v5116, 16
        %v5232 = vrot.slane %v5230, 5
        %v5233 = vor.u32 %v5229, %v5232
        %v5234 = vrot.slane %v5233, 4
        %v5236 = vshll.u32 %v5117, 16
        %v5238 = vrot.slane %v5236, 5
        %v5239 = vsel %vm5127, %v5234, %v5238
        %s5240 = scalar_lea.vmem %s4, 80
        %v5241 = vld [vmem:[%s5240] sm:$0xf]
        %v5242 = vld [vmem:[%s5240 + $0x4] sm:$0xf]
        %v5243 = vunpack.c.l.b16 %v5141
        %v5244 = vunpack.c.l.b16 %v5155
        %v5245 = vunpack.c.l.b16 %v5169
        %v5246 = vunpack.c.l.b16 %v5183
        %v5247 = vunpack.c.l.b16 %v5197
        %v5248 = vunpack.c.l.b16 %v5211
        %v5249 = vunpack.c.l.b16 %v5225
        %v5250 = vunpack.c.l.b16 %v5239
        %v5251 = vpack.c.b16 %v5244, %v5243
        %v5252 = vpack.c.b16 %v5246, %v5245
        %v5253 = vpack.c.b16 %v5248, %v5247
        %v5254 = vpack.c.b16 %v5250, %v5249
        %v5257 = vunpack.c.l.b16 %v5241
        %v5258 = vunpack.c.l.b16 %v5242
        %v5259 = vpack.c.b16 %v5258, %v5257
        %v5262 = vsel %vm3947, %v5251, 0
        %v5265 = vsel %vm3947, %v5252, 0
        %v5268 = vsel %vm3947, %v5253, 0
        %v5271 = vsel %vm3947, %v5254, 0
        %5273 = vmatprep.subr.bf16.mxu0 0
        %5274 = vmatpush1.bf16.msra.mxu0 %v5259
        %5275 = vmatprep.subr.bf16.mxu0 0
        %5276 = vmatpush1.bf16.msra.mxu0 0
        %5277 = vmatprep.subr.bf16.mxu0 0
        %5278 = vmatpush1.bf16.msra.mxu0 0
        %5279 = vmatprep.subr.bf16.mxu0 0
        %5280 = vmatpush1.bf16.msra.mxu0 0
        %5281 = vmatprep.subr.bf16.mxu0 0
        %5282 = vmatpush1.bf16.msra.mxu0 0
        %5283 = vmatprep.subr.bf16.mxu0 0
        %5284 = vmatpush1.bf16.msra.mxu0 0
        %5285 = vmatprep.subr.bf16.mxu0 0
        %5286 = vmatpush1.bf16.msra.mxu0 0
        %5287 = vmatprep.subr.bf16.mxu0 0
        %5288 = vmatpush1.bf16.msra.mxu0 0
        %5289 = vmatprep.subr.bf16.mxu0 0
        %5290 = vmatpush1.bf16.msra.mxu0 0
        %5291 = vmatprep.subr.bf16.mxu0 0
        %5292 = vmatpush1.bf16.msra.mxu0 0
        %5293 = vmatprep.subr.bf16.mxu0 0
        %5294 = vmatpush1.bf16.msra.mxu0 0
        %5295 = vmatprep.subr.bf16.mxu0 0
        %5296 = vmatpush1.bf16.msra.mxu0 0
        %5297 = vmatprep.subr.bf16.mxu0 0
        %5298 = vmatpush1.bf16.msra.mxu0 0
        %5299 = vmatprep.subr.bf16.mxu0 0
        %5300 = vmatpush1.bf16.msra.mxu0 0
        %5301 = vmatprep.subr.bf16.mxu0 0
        %5302 = vmatpush1.bf16.msra.mxu0 0
        %5303 = vmatprep.subr.bf16.mxu0 0
        %5304 = vmatpush1.bf16.msra.mxu0 0
        %5305 = vmatprep.mubr.bf16.mxu0 0
        %5306 = vmatmul.mubr.bf16.gmra.mrb[0].mxu0 %v5262
        %v5307 = vpop.f32.mrb[0].mxu0
        %v5308 = vadd.f32 0.0, %v5307
        %v5309 = vpop.f32.mrb[0].mxu0
        %v5310 = vpop.f32.mrb[0].mxu0
        %v5311 = vadd.f32 0.0, %v5310
        %v5312 = vpop.f32.mrb[0].mxu0
        %5313 = vmatprep.mubr.bf16.mxu0 0
        %5314 = vmatmul.mubr.bf16.gmra.mrb[0].mxu0 %v5265
        %v5315 = vpop.f32.mrb[0].mxu0
        %v5316 = vadd.f32 0.0, %v5315
        %v5317 = vpop.f32.mrb[0].mxu0
        %v5318 = vpop.f32.mrb[0].mxu0
        %v5319 = vadd.f32 0.0, %v5318
        %v5320 = vpop.f32.mrb[0].mxu0
        %5321 = vmatprep.mubr.bf16.mxu0 0
        %5322 = vmatmul.mubr.bf16.gmra.mrb[0].mxu0 %v5268
        %v5323 = vpop.f32.mrb[0].mxu0
        %v5324 = vadd.f32 0.0, %v5323
        %v5325 = vpop.f32.mrb[0].mxu0
        %v5326 = vpop.f32.mrb[0].mxu0
        %v5327 = vadd.f32 0.0, %v5326
        %v5328 = vpop.f32.mrb[0].mxu0
        %5329 = vmatprep.mubr.bf16.mxu0 0
        %5330 = vmatmul.mubr.bf16.gmra.mrb[0].mxu0 %v5271
        %v5331 = vpop.f32.mrb[0].mxu0
        %v5332 = vadd.f32 0.0, %v5331
        %v5333 = vpop.f32.mrb[0].mxu0
        %v5334 = vpop.f32.mrb[0].mxu0
        %v5335 = vadd.f32 0.0, %v5334
        %v5336 = vpop.f32.mrb[0].mxu0
        %5337 = vdwg.mxu0
        %v5346 = vunpack.c.l.b16 %v5102
        %v5347 = vunpack.c.l.b16 %v5104
        %v5348 = vunpack.c.l.b16 %v5106
        %v5349 = vunpack.c.l.b16 %v5108
        %v5350 = vunpack.c.l.b16 %v5110
        %v5351 = vunpack.c.l.b16 %v5112
        %v5352 = vunpack.c.l.b16 %v5114
        %v5353 = vunpack.c.l.b16 %v5116
        %v5354 = vpack.c.b16 %v5347, %v5346
        %v5355 = vpack.c.b16 %v5349, %v5348
        %v5356 = vpack.c.b16 %v5351, %v5350
        %v5357 = vpack.c.b16 %v5353, %v5352
        %v5360 = vunpack.c.l.b16 %v5123
        %v5361 = vunpack.c.l.b16 %v5124
        %v5362 = vpack.c.b16 %v5361, %v5360
        %v5365 = vsel %vm3947, %v5354, 0
        %v5368 = vsel %vm3947, %v5355, 0
        %v5371 = vsel %vm3947, %v5356, 0
        %v5374 = vsel %vm3947, %v5357, 0
        %5376 = vmatprep.subr.bf16.mxu0 0
        %5377 = vmatpush1.bf16.msra.mxu0 %v5362
        %5378 = vmatprep.subr.bf16.mxu0 0
        %5379 = vmatpush1.bf16.msra.mxu0 0
        %5380 = vmatprep.subr.bf16.mxu0 0
        %5381 = vmatpush1.bf16.msra.mxu0 0
        %5382 = vmatprep.subr.bf16.mxu0 0
        %5383 = vmatpush1.bf16.msra.mxu0 0
        %5384 = vmatprep.subr.bf16.mxu0 0
        %5385 = vmatpush1.bf16.msra.mxu0 0
        %5386 = vmatprep.subr.bf16.mxu0 0
        %5387 = vmatpush1.bf16.msra.mxu0 0
        %5388 = vmatprep.subr.bf16.mxu0 0
        %5389 = vmatpush1.bf16.msra.mxu0 0
        %5390 = vmatprep.subr.bf16.mxu0 0
        %5391 = vmatpush1.bf16.msra.mxu0 0
        %5392 = vmatprep.subr.bf16.mxu0 0
        %5393 = vmatpush1.bf16.msra.mxu0 0
        %5394 = vmatprep.subr.bf16.mxu0 0
        %5395 = vmatpush1.bf16.msra.mxu0 0
        %5396 = vmatprep.subr.bf16.mxu0 0
        %5397 = vmatpush1.bf16.msra.mxu0 0
        %5398 = vmatprep.subr.bf16.mxu0 0
        %5399 = vmatpush1.bf16.msra.mxu0 0
        %5400 = vmatprep.subr.bf16.mxu0 0
        %5401 = vmatpush1.bf16.msra.mxu0 0
        %5402 = vmatprep.subr.bf16.mxu0 0
        %5403 = vmatpush1.bf16.msra.mxu0 0
        %5404 = vmatprep.subr.bf16.mxu0 0
        %5405 = vmatpush1.bf16.msra.mxu0 0
        %5406 = vmatprep.subr.bf16.mxu0 0
        %5407 = vmatpush1.bf16.msra.mxu0 0
        %5408 = vmatprep.mubr.bf16.mxu0 0
        %5409 = vmatmul.mubr.bf16.gmra.mrb[0].mxu0 %v5365
        %v5410 = vpop.f32.mrb[0].mxu0
        %v5411 = vadd.f32 %v5308, %v5410
        %v5412 = vpop.f32.mrb[0].mxu0
        %v5413 = vpop.f32.mrb[0].mxu0
        %v5414 = vadd.f32 %v5311, %v5413
        %v5415 = vpop.f32.mrb[0].mxu0
        %5416 = vmatprep.mubr.bf16.mxu0 0
        %5417 = vmatmul.mubr.bf16.gmra.mrb[0].mxu0 %v5368
        %v5418 = vpop.f32.mrb[0].mxu0
        %v5419 = vadd.f32 %v5316, %v5418
        %v5420 = vpop.f32.mrb[0].mxu0
        %v5421 = vpop.f32.mrb[0].mxu0
        %v5422 = vadd.f32 %v5319, %v5421
        %v5423 = vpop.f32.mrb[0].mxu0
        %5424 = vmatprep.mubr.bf16.mxu0 0
        %5425 = vmatmul.mubr.bf16.gmra.mrb[0].mxu0 %v5371
        %v5426 = vpop.f32.mrb[0].mxu0
        %v5427 = vadd.f32 %v5324, %v5426
        %v5428 = vpop.f32.mrb[0].mxu0
        %v5429 = vpop.f32.mrb[0].mxu0
        %v5430 = vadd.f32 %v5327, %v5429
        %v5431 = vpop.f32.mrb[0].mxu0
        %5432 = vmatprep.mubr.bf16.mxu0 0
        %5433 = vmatmul.mubr.bf16.gmra.mrb[0].mxu0 %v5374
        %v5434 = vpop.f32.mrb[0].mxu0
        %v5435 = vadd.f32 %v5332, %v5434
        %v5436 = vpop.f32.mrb[0].mxu0
        %v5437 = vpop.f32.mrb[0].mxu0
        %v5438 = vadd.f32 %v5335, %v5437
        %v5439 = vpop.f32.mrb[0].mxu0
        %5440 = vdwg.mxu0
        %vm5449 = vcmask 1042432
        %vm5450 = vcmask 1046532
        %vm5451 = vmor %vm5449, %vm5450
        %v5452 = vrot.slane %v5102, 5
        %v5453 = vrot.slane %v5452, 4
        %v5454 = vrot.slane %v5103, 5
        %v5455 = vsel %vm5451, %v5453, %v5454
        %v5456 = vrot.slane %v5104, 5
        %v5457 = vrot.slane %v5456, 4
        %v5458 = vrot.slane %v5105, 5
        %v5459 = vsel %vm5451, %v5457, %v5458
        %v5460 = vrot.slane %v5106, 5
        %v5461 = vrot.slane %v5460, 4
        %v5462 = vrot.slane %v5107, 5
        %v5463 = vsel %vm5451, %v5461, %v5462
        %v5464 = vrot.slane %v5108, 5
        %v5465 = vrot.slane %v5464, 4
        %v5466 = vrot.slane %v5109, 5
        %v5467 = vsel %vm5451, %v5465, %v5466
        %v5468 = vrot.slane %v5110, 5
        %v5469 = vrot.slane %v5468, 4
        %v5470 = vrot.slane %v5111, 5
        %v5471 = vsel %vm5451, %v5469, %v5470
        %v5472 = vrot.slane %v5112, 5
        %v5473 = vrot.slane %v5472, 4
        %v5474 = vrot.slane %v5113, 5
        %v5475 = vsel %vm5451, %v5473, %v5474
        %v5476 = vrot.slane %v5114, 5
        %v5477 = vrot.slane %v5476, 4
        %v5478 = vrot.slane %v5115, 5
        %v5479 = vsel %vm5451, %v5477, %v5478
        %v5480 = vrot.slane %v5116, 5
        %v5481 = vrot.slane %v5480, 4
        %v5482 = vrot.slane %v5117, 5
        %v5483 = vsel %vm5451, %v5481, %v5482
        %s5484 = scalar_lea.vmem %s4, 88
        %v5485 = vld [vmem:[%s5484] sm:$0xf]
        %v5486 = vld [vmem:[%s5484 + $0x4] sm:$0xf]
        %v5487 = vunpack.c.l.b16 %v5455
        %v5488 = vunpack.c.l.b16 %v5459
        %v5489 = vunpack.c.l.b16 %v5463
        %v5490 = vunpack.c.l.b16 %v5467
        %v5491 = vunpack.c.l.b16 %v5471
        %v5492 = vunpack.c.l.b16 %v5475
        %v5493 = vunpack.c.l.b16 %v5479
        %v5494 = vunpack.c.l.b16 %v5483
        %v5495 = vpack.c.b16 %v5488, %v5487
        %v5496 = vpack.c.b16 %v5490, %v5489
        %v5497 = vpack.c.b16 %v5492, %v5491
        %v5498 = vpack.c.b16 %v5494, %v5493
        %v5501 = vunpack.c.l.b16 %v5485
        %v5502 = vunpack.c.l.b16 %v5486
        %v5503 = vpack.c.b16 %v5502, %v5501
        %v5506 = vsel %vm3947, %v5495, 0
        %v5509 = vsel %vm3947, %v5496, 0
        %v5512 = vsel %vm3947, %v5497, 0
        %v5515 = vsel %vm3947, %v5498, 0
        %5517 = vmatprep.subr.bf16.mxu0 0
        %5518 = vmatpush1.bf16.msra.mxu0 %v5503
        %5519 = vmatprep.subr.bf16.mxu0 0
        %5520 = vmatpush1.bf16.msra.mxu0 0
        %5521 = vmatprep.subr.bf16.mxu0 0
        %5522 = vmatpush1.bf16.msra.mxu0 0
        %5523 = vmatprep.subr.bf16.mxu0 0
        %5524 = vmatpush1.bf16.msra.mxu0 0
        %5525 = vmatprep.subr.bf16.mxu0 0
        %5526 = vmatpush1.bf16.msra.mxu0 0
        %5527 = vmatprep.subr.bf16.mxu0 0
        %5528 = vmatpush1.bf16.msra.mxu0 0
        %5529 = vmatprep.subr.bf16.mxu0 0
        %5530 = vmatpush1.bf16.msra.mxu0 0
        %5531 = vmatprep.subr.bf16.mxu0 0
        %5532 = vmatpush1.bf16.msra.mxu0 0
        %5533 = vmatprep.subr.bf16.mxu0 0
        %5534 = vmatpush1.bf16.msra.mxu0 0
        %5535 = vmatprep.subr.bf16.mxu0 0
        %5536 = vmatpush1.bf16.msra.mxu0 0
        %5537 = vmatprep.subr.bf16.mxu0 0
        %5538 = vmatpush1.bf16.msra.mxu0 0
        %5539 = vmatprep.subr.bf16.mxu0 0
        %5540 = vmatpush1.bf16.msra.mxu0 0
        %5541 = vmatprep.subr.bf16.mxu0 0
        %5542 = vmatpush1.bf16.msra.mxu0 0
        %5543 = vmatprep.subr.bf16.mxu0 0
        %5544 = vmatpush1.bf16.msra.mxu0 0
        %5545 = vmatprep.subr.bf16.mxu0 0
        %5546 = vmatpush1.bf16.msra.mxu0 0
        %5547 = vmatprep.subr.bf16.mxu0 0
        %5548 = vmatpush1.bf16.msra.mxu0 0
        %5549 = vmatprep.mubr.bf16.mxu0 0
        %5550 = vmatmul.mubr.bf16.gmra.mrb[0].mxu0 %v5506
        %v5551 = vpop.f32.mrb[0].mxu0
        %v5552 = vadd.f32 0.0, %v5551
        %v5553 = vpop.f32.mrb[0].mxu0
        %v5554 = vpop.f32.mrb[0].mxu0
        %v5555 = vadd.f32 0.0, %v5554
        %v5556 = vpop.f32.mrb[0].mxu0
        %5557 = vmatprep.mubr.bf16.mxu0 0
        %5558 = vmatmul.mubr.bf16.gmra.mrb[0].mxu0 %v5509
        %v5559 = vpop.f32.mrb[0].mxu0
        %v5560 = vadd.f32 0.0, %v5559
        %v5561 = vpop.f32.mrb[0].mxu0
        %v5562 = vpop.f32.mrb[0].mxu0
        %v5563 = vadd.f32 0.0, %v5562
        %v5564 = vpop.f32.mrb[0].mxu0
        %5565 = vmatprep.mubr.bf16.mxu0 0
        %5566 = vmatmul.mubr.bf16.gmra.mrb[0].mxu0 %v5512
        %v5567 = vpop.f32.mrb[0].mxu0
        %v5568 = vadd.f32 0.0, %v5567
        %v5569 = vpop.f32.mrb[0].mxu0
        %v5570 = vpop.f32.mrb[0].mxu0
        %v5571 = vadd.f32 0.0, %v5570
        %v5572 = vpop.f32.mrb[0].mxu0
        %5573 = vmatprep.mubr.bf16.mxu0 0
        %5574 = vmatmul.mubr.bf16.gmra.mrb[0].mxu0 %v5515
        %v5575 = vpop.f32.mrb[0].mxu0
        %v5576 = vadd.f32 0.0, %v5575
        %v5577 = vpop.f32.mrb[0].mxu0
        %v5578 = vpop.f32.mrb[0].mxu0
        %v5579 = vadd.f32 0.0, %v5578
        %v5580 = vpop.f32.mrb[0].mxu0
        %5581 = vdwg.mxu0
        %v5582 = vadd.f32 %v5411, %v5552
        %v5583 = vadd.f32 %v5414, %v5555
        %v5584 = vadd.f32 %v5419, %v5560
        %v5585 = vadd.f32 %v5422, %v5563
        %v5586 = vadd.f32 %v5427, %v5568
        %v5587 = vadd.f32 %v5430, %v5571
        %v5588 = vadd.f32 %v5435, %v5576
        %v5589 = vadd.f32 %v5438, %v5579
        %s5590 = scalar_lea.vmem %s4, 96
        %v5591 = vld [vmem:[%s5590] sm:$0xf]
        %v5592 = vld [vmem:[%s5590 + $0x4] sm:$0xf]
        %v5594 = vunpack.c.l.b16 %v5118
        %v5595 = vpack.c.b16 %v5348, %v5347
        %v5596 = vpack.c.b16 %v5350, %v5349
        %v5597 = vpack.c.b16 %v5352, %v5351
        %v5598 = vpack.c.b16 %v5594, %v5353
        %v5601 = vunpack.c.l.b16 %v5591
        %v5602 = vunpack.c.l.b16 %v5592
        %v5603 = vpack.c.b16 %v5602, %v5601
        %v5606 = vsel %vm3947, %v5595, 0
        %v5609 = vsel %vm3947, %v5596, 0
        %v5612 = vsel %vm3947, %v5597, 0
        %v5615 = vsel %vm3947, %v5598, 0
        %5617 = vmatprep.subr.bf16.mxu0 0
        %5618 = vmatpush1.bf16.msra.mxu0 %v5603
        %5619 = vmatprep.subr.bf16.mxu0 0
        %5620 = vmatpush1.bf16.msra.mxu0 0
        %5621 = vmatprep.subr.bf16.mxu0 0
        %5622 = vmatpush1.bf16.msra.mxu0 0
        %5623 = vmatprep.subr.bf16.mxu0 0
        %5624 = vmatpush1.bf16.msra.mxu0 0
        %5625 = vmatprep.subr.bf16.mxu0 0
        %5626 = vmatpush1.bf16.msra.mxu0 0
        %5627 = vmatprep.subr.bf16.mxu0 0
        %5628 = vmatpush1.bf16.msra.mxu0 0
        %5629 = vmatprep.subr.bf16.mxu0 0
        %5630 = vmatpush1.bf16.msra.mxu0 0
        %5631 = vmatprep.subr.bf16.mxu0 0
        %5632 = vmatpush1.bf16.msra.mxu0 0
        %5633 = vmatprep.subr.bf16.mxu0 0
        %5634 = vmatpush1.bf16.msra.mxu0 0
        %5635 = vmatprep.subr.bf16.mxu0 0
        %5636 = vmatpush1.bf16.msra.mxu0 0
        %5637 = vmatprep.subr.bf16.mxu0 0
        %5638 = vmatpush1.bf16.msra.mxu0 0
        %5639 = vmatprep.subr.bf16.mxu0 0
        %5640 = vmatpush1.bf16.msra.mxu0 0
        %5641 = vmatprep.subr.bf16.mxu0 0
        %5642 = vmatpush1.bf16.msra.mxu0 0
        %5643 = vmatprep.subr.bf16.mxu0 0
        %5644 = vmatpush1.bf16.msra.mxu0 0
        %5645 = vmatprep.subr.bf16.mxu0 0
        %5646 = vmatpush1.bf16.msra.mxu0 0
        %5647 = vmatprep.subr.bf16.mxu0 0
        %5648 = vmatpush1.bf16.msra.mxu0 0
        %5649 = vmatprep.mubr.bf16.mxu0 0
        %5650 = vmatmul.mubr.bf16.gmra.mrb[0].mxu0 %v5606
        %v5651 = vpop.f32.mrb[0].mxu0
        %v5652 = vadd.f32 0.0, %v5651
        %v5653 = vpop.f32.mrb[0].mxu0
        %v5654 = vpop.f32.mrb[0].mxu0
        %v5655 = vadd.f32 0.0, %v5654
        %v5656 = vpop.f32.mrb[0].mxu0
        %5657 = vmatprep.mubr.bf16.mxu0 0
        %5658 = vmatmul.mubr.bf16.gmra.mrb[0].mxu0 %v5609
        %v5659 = vpop.f32.mrb[0].mxu0
        %v5660 = vadd.f32 0.0, %v5659
        %v5661 = vpop.f32.mrb[0].mxu0
        %v5662 = vpop.f32.mrb[0].mxu0
        %v5663 = vadd.f32 0.0, %v5662
        %v5664 = vpop.f32.mrb[0].mxu0
        %5665 = vmatprep.mubr.bf16.mxu0 0
        %5666 = vmatmul.mubr.bf16.gmra.mrb[0].mxu0 %v5612
        %v5667 = vpop.f32.mrb[0].mxu0
        %v5668 = vadd.f32 0.0, %v5667
        %v5669 = vpop.f32.mrb[0].mxu0
        %v5670 = vpop.f32.mrb[0].mxu0
        %v5671 = vadd.f32 0.0, %v5670
        %v5672 = vpop.f32.mrb[0].mxu0
        %5673 = vmatprep.mubr.bf16.mxu0 0
        %5674 = vmatmul.mubr.bf16.gmra.mrb[0].mxu0 %v5615
        %v5675 = vpop.f32.mrb[0].mxu0
        %v5676 = vadd.f32 0.0, %v5675
        %v5677 = vpop.f32.mrb[0].mxu0
        %v5678 = vpop.f32.mrb[0].mxu0
        %v5679 = vadd.f32 0.0, %v5678
        %v5680 = vpop.f32.mrb[0].mxu0
        %5681 = vdwg.mxu0
        %v5682 = vadd.f32 %v5582, %v5652
        %v5683 = vadd.f32 %v5583, %v5655
        %v5684 = vadd.f32 %v5584, %v5660
        %v5685 = vadd.f32 %v5585, %v5663
        %v5686 = vadd.f32 %v5586, %v5668
        %v5687 = vadd.f32 %v5587, %v5671
        %v5688 = vadd.f32 %v5588, %v5676
        %v5689 = vadd.f32 %v5589, %v5679
        %v5691 = vshrl.u32 %v5118, 16
        %v5693 = vrot.slane %v5691, 4
        %v5694 = vshll.u32 %v5118, 16
        %v5696 = vrot.slane %v5694, 5
        %v5697 = vor.u32 %v5693, %v5696
        %v5698 = vrot.slane %v5697, 4
        %v5700 = vshll.u32 %v5119, 16
        %v5702 = vrot.slane %v5700, 5
        %v5703 = vsel %vm5127, %v5698, %v5702
        %s5704 = scalar_lea.vmem %s4, 104
        %v5705 = vld [vmem:[%s5704] sm:$0xf]
        %v5706 = vld [vmem:[%s5704 + $0x4] sm:$0xf]
        %v5707 = vunpack.c.l.b16 %v5703
        %v5708 = vpack.c.b16 %v5245, %v5244
        %v5709 = vpack.c.b16 %v5247, %v5246
        %v5710 = vpack.c.b16 %v5249, %v5248
        %v5711 = vpack.c.b16 %v5707, %v5250
        %v5714 = vunpack.c.l.b16 %v5705
        %v5715 = vunpack.c.l.b16 %v5706
        %v5716 = vpack.c.b16 %v5715, %v5714
        %v5719 = vsel %vm3947, %v5708, 0
        %v5722 = vsel %vm3947, %v5709, 0
        %v5725 = vsel %vm3947, %v5710, 0
        %v5728 = vsel %vm3947, %v5711, 0
        %5730 = vmatprep.subr.bf16.mxu0 0
        %5731 = vmatpush1.bf16.msra.mxu0 %v5716
        %5732 = vmatprep.subr.bf16.mxu0 0
        %5733 = vmatpush1.bf16.msra.mxu0 0
        %5734 = vmatprep.subr.bf16.mxu0 0
        %5735 = vmatpush1.bf16.msra.mxu0 0
        %5736 = vmatprep.subr.bf16.mxu0 0
        %5737 = vmatpush1.bf16.msra.mxu0 0
        %5738 = vmatprep.subr.bf16.mxu0 0
        %5739 = vmatpush1.bf16.msra.mxu0 0
        %5740 = vmatprep.subr.bf16.mxu0 0
        %5741 = vmatpush1.bf16.msra.mxu0 0
        %5742 = vmatprep.subr.bf16.mxu0 0
        %5743 = vmatpush1.bf16.msra.mxu0 0
        %5744 = vmatprep.subr.bf16.mxu0 0
        %5745 = vmatpush1.bf16.msra.mxu0 0
        %5746 = vmatprep.subr.bf16.mxu0 0
        %5747 = vmatpush1.bf16.msra.mxu0 0
        %5748 = vmatprep.subr.bf16.mxu0 0
        %5749 = vmatpush1.bf16.msra.mxu0 0
        %5750 = vmatprep.subr.bf16.mxu0 0
        %5751 = vmatpush1.bf16.msra.mxu0 0
        %5752 = vmatprep.subr.bf16.mxu0 0
        %5753 = vmatpush1.bf16.msra.mxu0 0
        %5754 = vmatprep.subr.bf16.mxu0 0
        %5755 = vmatpush1.bf16.msra.mxu0 0
        %5756 = vmatprep.subr.bf16.mxu0 0
        %5757 = vmatpush1.bf16.msra.mxu0 0
        %5758 = vmatprep.subr.bf16.mxu0 0
        %5759 = vmatpush1.bf16.msra.mxu0 0
        %5760 = vmatprep.subr.bf16.mxu0 0
        %5761 = vmatpush1.bf16.msra.mxu0 0
        %5762 = vmatprep.mubr.bf16.mxu0 0
        %5763 = vmatmul.mubr.bf16.gmra.mrb[0].mxu0 %v5719
        %v5764 = vpop.f32.mrb[0].mxu0
        %v5765 = vadd.f32 0.0, %v5764
        %v5766 = vpop.f32.mrb[0].mxu0
        %v5767 = vpop.f32.mrb[0].mxu0
        %v5768 = vadd.f32 0.0, %v5767
        %v5769 = vpop.f32.mrb[0].mxu0
        %5770 = vmatprep.mubr.bf16.mxu0 0
        %5771 = vmatmul.mubr.bf16.gmra.mrb[0].mxu0 %v5722
        %v5772 = vpop.f32.mrb[0].mxu0
        %v5773 = vadd.f32 0.0, %v5772
        %v5774 = vpop.f32.mrb[0].mxu0
        %v5775 = vpop.f32.mrb[0].mxu0
        %v5776 = vadd.f32 0.0, %v5775
        %v5777 = vpop.f32.mrb[0].mxu0
        %5778 = vmatprep.mubr.bf16.mxu0 0
        %5779 = vmatmul.mubr.bf16.gmra.mrb[0].mxu0 %v5725
        %v5780 = vpop.f32.mrb[0].mxu0
        %v5781 = vadd.f32 0.0, %v5780
        %v5782 = vpop.f32.mrb[0].mxu0
        %v5783 = vpop.f32.mrb[0].mxu0
        %v5784 = vadd.f32 0.0, %v5783
        %v5785 = vpop.f32.mrb[0].mxu0
        %5786 = vmatprep.mubr.bf16.mxu0 0
        %5787 = vmatmul.mubr.bf16.gmra.mrb[0].mxu0 %v5728
        %v5788 = vpop.f32.mrb[0].mxu0
        %v5789 = vadd.f32 0.0, %v5788
        %v5790 = vpop.f32.mrb[0].mxu0
        %v5791 = vpop.f32.mrb[0].mxu0
        %v5792 = vadd.f32 0.0, %v5791
        %v5793 = vpop.f32.mrb[0].mxu0
        %5794 = vdwg.mxu0
        %v5795 = vadd.f32 %v5682, %v5765
        %v5796 = vadd.f32 %v5683, %v5768
        %v5797 = vadd.f32 %v5684, %v5773
        %v5798 = vadd.f32 %v5685, %v5776
        %v5799 = vadd.f32 %v5686, %v5781
        %v5800 = vadd.f32 %v5687, %v5784
        %v5801 = vadd.f32 %v5688, %v5789
        %v5802 = vadd.f32 %v5689, %v5792
        %v5804 = vrot.slane %v5118, 5
        %v5805 = vrot.slane %v5804, 4
        %v5806 = vrot.slane %v5119, 5
        %v5807 = vsel %vm5451, %v5805, %v5806
        %s5808 = scalar_lea.vmem %s4, 112
        %v5809 = vld [vmem:[%s5808] sm:$0xf]
        %v5810 = vld [vmem:[%s5808 + $0x4] sm:$0xf]
        %v5811 = vunpack.c.l.b16 %v5807
        %v5812 = vpack.c.b16 %v5489, %v5488
        %v5813 = vpack.c.b16 %v5491, %v5490
        %v5814 = vpack.c.b16 %v5493, %v5492
        %v5815 = vpack.c.b16 %v5811, %v5494
        %v5818 = vunpack.c.l.b16 %v5809
        %v5819 = vunpack.c.l.b16 %v5810
        %v5820 = vpack.c.b16 %v5819, %v5818
        %v5823 = vsel %vm3947, %v5812, 0
        %v5826 = vsel %vm3947, %v5813, 0
        %v5829 = vsel %vm3947, %v5814, 0
        %v5832 = vsel %vm3947, %v5815, 0
        %5834 = vmatprep.subr.bf16.mxu0 0
        %5835 = vmatpush1.bf16.msra.mxu0 %v5820
        %5836 = vmatprep.subr.bf16.mxu0 0
        %5837 = vmatpush1.bf16.msra.mxu0 0
        %5838 = vmatprep.subr.bf16.mxu0 0
        %5839 = vmatpush1.bf16.msra.mxu0 0
        %5840 = vmatprep.subr.bf16.mxu0 0
        %5841 = vmatpush1.bf16.msra.mxu0 0
        %5842 = vmatprep.subr.bf16.mxu0 0
        %5843 = vmatpush1.bf16.msra.mxu0 0
        %5844 = vmatprep.subr.bf16.mxu0 0
        %5845 = vmatpush1.bf16.msra.mxu0 0
        %5846 = vmatprep.subr.bf16.mxu0 0
        %5847 = vmatpush1.bf16.msra.mxu0 0
        %5848 = vmatprep.subr.bf16.mxu0 0
        %5849 = vmatpush1.bf16.msra.mxu0 0
        %5850 = vmatprep.subr.bf16.mxu0 0
        %5851 = vmatpush1.bf16.msra.mxu0 0
        %5852 = vmatprep.subr.bf16.mxu0 0
        %5853 = vmatpush1.bf16.msra.mxu0 0
        %5854 = vmatprep.subr.bf16.mxu0 0
        %5855 = vmatpush1.bf16.msra.mxu0 0
        %5856 = vmatprep.subr.bf16.mxu0 0
        %5857 = vmatpush1.bf16.msra.mxu0 0
        %5858 = vmatprep.subr.bf16.mxu0 0
        %5859 = vmatpush1.bf16.msra.mxu0 0
        %5860 = vmatprep.subr.bf16.mxu0 0
        %5861 = vmatpush1.bf16.msra.mxu0 0
        %5862 = vmatprep.subr.bf16.mxu0 0
        %5863 = vmatpush1.bf16.msra.mxu0 0
        %5864 = vmatprep.subr.bf16.mxu0 0
        %5865 = vmatpush1.bf16.msra.mxu0 0
        %5866 = vmatprep.mubr.bf16.mxu0 0
        %5867 = vmatmul.mubr.bf16.gmra.mrb[0].mxu0 %v5823
        %v5868 = vpop.f32.mrb[0].mxu0
        %v5869 = vadd.f32 0.0, %v5868
        %v5870 = vpop.f32.mrb[0].mxu0
        %v5871 = vpop.f32.mrb[0].mxu0
        %v5872 = vadd.f32 0.0, %v5871
        %v5873 = vpop.f32.mrb[0].mxu0
        %5874 = vmatprep.mubr.bf16.mxu0 0
        %5875 = vmatmul.mubr.bf16.gmra.mrb[0].mxu0 %v5826
        %v5876 = vpop.f32.mrb[0].mxu0
        %v5877 = vadd.f32 0.0, %v5876
        %v5878 = vpop.f32.mrb[0].mxu0
        %v5879 = vpop.f32.mrb[0].mxu0
        %v5880 = vadd.f32 0.0, %v5879
        %v5881 = vpop.f32.mrb[0].mxu0
        %5882 = vmatprep.mubr.bf16.mxu0 0
        %5883 = vmatmul.mubr.bf16.gmra.mrb[0].mxu0 %v5829
        %v5884 = vpop.f32.mrb[0].mxu0
        %v5885 = vadd.f32 0.0, %v5884
        %v5886 = vpop.f32.mrb[0].mxu0
        %v5887 = vpop.f32.mrb[0].mxu0
        %v5888 = vadd.f32 0.0, %v5887
        %v5889 = vpop.f32.mrb[0].mxu0
        %5890 = vmatprep.mubr.bf16.mxu0 0
        %5891 = vmatmul.mubr.bf16.gmra.mrb[0].mxu0 %v5832
        %v5892 = vpop.f32.mrb[0].mxu0
        %v5893 = vadd.f32 0.0, %v5892
        %v5894 = vpop.f32.mrb[0].mxu0
        %v5895 = vpop.f32.mrb[0].mxu0
        %v5896 = vadd.f32 0.0, %v5895
        %v5897 = vpop.f32.mrb[0].mxu0
        %5898 = vdwg.mxu0
        %v5899 = vadd.f32 %v5795, %v5869
        %v5900 = vadd.f32 %v5796, %v5872
        %v5901 = vadd.f32 %v5797, %v5877
        %v5902 = vadd.f32 %v5798, %v5880
        %v5903 = vadd.f32 %v5799, %v5885
        %v5904 = vadd.f32 %v5800, %v5888
        %v5905 = vadd.f32 %v5801, %v5893
        %v5906 = vadd.f32 %v5802, %v5896
        %s5907 = scalar_lea.vmem %s4, 120
        %v5908 = vld [vmem:[%s5907] sm:$0xf]
        %v5909 = vld [vmem:[%s5907 + $0x4] sm:$0xf]
        %v5911 = vunpack.c.l.b16 %v5120
        %v5912 = vpack.c.b16 %v5911, %v5594
        %v5915 = vunpack.c.l.b16 %v5908
        %v5916 = vunpack.c.l.b16 %v5909
        %v5917 = vpack.c.b16 %v5916, %v5915
        %v5920 = vsel %vm3947, %v5912, 0
        %5922 = vmatprep.subr.bf16.mxu0 0
        %5923 = vmatpush1.bf16.msra.mxu0 %v5917
        %5924 = vmatprep.subr.bf16.mxu0 0
        %5925 = vmatpush1.bf16.msra.mxu0 0
        %5926 = vmatprep.subr.bf16.mxu0 0
        %5927 = vmatpush1.bf16.msra.mxu0 0
        %5928 = vmatprep.subr.bf16.mxu0 0
        %5929 = vmatpush1.bf16.msra.mxu0 0
        %5930 = vmatprep.subr.bf16.mxu0 0
        %5931 = vmatpush1.bf16.msra.mxu0 0
        %5932 = vmatprep.subr.bf16.mxu0 0
        %5933 = vmatpush1.bf16.msra.mxu0 0
        %5934 = vmatprep.subr.bf16.mxu0 0
        %5935 = vmatpush1.bf16.msra.mxu0 0
        %5936 = vmatprep.subr.bf16.mxu0 0
        %5937 = vmatpush1.bf16.msra.mxu0 0
        %5938 = vmatprep.subr.bf16.mxu0 0
        %5939 = vmatpush1.bf16.msra.mxu0 0
        %5940 = vmatprep.subr.bf16.mxu0 0
        %5941 = vmatpush1.bf16.msra.mxu0 0
        %5942 = vmatprep.subr.bf16.mxu0 0
        %5943 = vmatpush1.bf16.msra.mxu0 0
        %5944 = vmatprep.subr.bf16.mxu0 0
        %5945 = vmatpush1.bf16.msra.mxu0 0
        %5946 = vmatprep.subr.bf16.mxu0 0
        %5947 = vmatpush1.bf16.msra.mxu0 0
        %5948 = vmatprep.subr.bf16.mxu0 0
        %5949 = vmatpush1.bf16.msra.mxu0 0
        %5950 = vmatprep.subr.bf16.mxu0 0
        %5951 = vmatpush1.bf16.msra.mxu0 0
        %5952 = vmatprep.subr.bf16.mxu0 0
        %5953 = vmatpush1.bf16.msra.mxu0 0
        %5954 = vmatprep.mubr.bf16.mxu0 0
        %5955 = vmatmul.mubr.bf16.gmra.mrb[0].mxu0 %v5368
        %v5956 = vpop.f32.mrb[0].mxu0
        %v5957 = vadd.f32 0.0, %v5956
        %v5958 = vpop.f32.mrb[0].mxu0
        %v5959 = vpop.f32.mrb[0].mxu0
        %v5960 = vadd.f32 0.0, %v5959
        %v5961 = vpop.f32.mrb[0].mxu0
        %5962 = vmatprep.mubr.bf16.mxu0 0
        %5963 = vmatmul.mubr.bf16.gmra.mrb[0].mxu0 %v5371
        %v5964 = vpop.f32.mrb[0].mxu0
        %v5965 = vadd.f32 0.0, %v5964
        %v5966 = vpop.f32.mrb[0].mxu0
        %v5967 = vpop.f32.mrb[0].mxu0
        %v5968 = vadd.f32 0.0, %v5967
        %v5969 = vpop.f32.mrb[0].mxu0
        %5970 = vmatprep.mubr.bf16.mxu0 0
        %5971 = vmatmul.mubr.bf16.gmra.mrb[0].mxu0 %v5374
        %v5972 = vpop.f32.mrb[0].mxu0
        %v5973 = vadd.f32 0.0, %v5972
        %v5974 = vpop.f32.mrb[0].mxu0
        %v5975 = vpop.f32.mrb[0].mxu0
        %v5976 = vadd.f32 0.0, %v5975
        %v5977 = vpop.f32.mrb[0].mxu0
        %5978 = vmatprep.mubr.bf16.mxu0 0
        %5979 = vmatmul.mubr.bf16.gmra.mrb[0].mxu0 %v5920
        %v5980 = vpop.f32.mrb[0].mxu0
        %v5981 = vadd.f32 0.0, %v5980
        %v5982 = vpop.f32.mrb[0].mxu0
        %v5983 = vpop.f32.mrb[0].mxu0
        %v5984 = vadd.f32 0.0, %v5983
        %v5985 = vpop.f32.mrb[0].mxu0
        %5986 = vdwg.mxu0
        %v5987 = vadd.f32 %v5899, %v5957
        %v5988 = vadd.f32 %v5900, %v5960
        %v5989 = vadd.f32 %v5901, %v5965
        %v5990 = vadd.f32 %v5902, %v5968
        %v5991 = vadd.f32 %v5903, %v5973
        %v5992 = vadd.f32 %v5904, %v5976
        %v5993 = vadd.f32 %v5905, %v5981
        %v5994 = vadd.f32 %v5906, %v5984
        %v5996 = vshrl.u32 %v5120, 16
        %v5998 = vrot.slane %v5996, 4
        %v5999 = vshll.u32 %v5120, 16
        %v6001 = vrot.slane %v5999, 5
        %v6002 = vor.u32 %v5998, %v6001
        %v6003 = vrot.slane %v6002, 4
        %v6005 = vshll.u32 %v5121, 16
        %v6007 = vrot.slane %v6005, 5
        %v6008 = vsel %vm5127, %v6003, %v6007
        %s6009 = scalar_lea.vmem %s4, 128
        %v6010 = vld [vmem:[%s6009] sm:$0xf]
        %v6011 = vld [vmem:[%s6009 + $0x4] sm:$0xf]
        %v6012 = vunpack.c.l.b16 %v6008
        %v6013 = vpack.c.b16 %v6012, %v5707
        %v6016 = vunpack.c.l.b16 %v6010
        %v6017 = vunpack.c.l.b16 %v6011
        %v6018 = vpack.c.b16 %v6017, %v6016
        %v6021 = vsel %vm3947, %v6013, 0
        %6023 = vmatprep.subr.bf16.mxu0 0
        %6024 = vmatpush1.bf16.msra.mxu0 %v6018
        %6025 = vmatprep.subr.bf16.mxu0 0
        %6026 = vmatpush1.bf16.msra.mxu0 0
        %6027 = vmatprep.subr.bf16.mxu0 0
        %6028 = vmatpush1.bf16.msra.mxu0 0
        %6029 = vmatprep.subr.bf16.mxu0 0
        %6030 = vmatpush1.bf16.msra.mxu0 0
        %6031 = vmatprep.subr.bf16.mxu0 0
        %6032 = vmatpush1.bf16.msra.mxu0 0
        %6033 = vmatprep.subr.bf16.mxu0 0
        %6034 = vmatpush1.bf16.msra.mxu0 0
        %6035 = vmatprep.subr.bf16.mxu0 0
        %6036 = vmatpush1.bf16.msra.mxu0 0
        %6037 = vmatprep.subr.bf16.mxu0 0
        %6038 = vmatpush1.bf16.msra.mxu0 0
        %6039 = vmatprep.subr.bf16.mxu0 0
        %6040 = vmatpush1.bf16.msra.mxu0 0
        %6041 = vmatprep.subr.bf16.mxu0 0
        %6042 = vmatpush1.bf16.msra.mxu0 0
        %6043 = vmatprep.subr.bf16.mxu0 0
        %6044 = vmatpush1.bf16.msra.mxu0 0
        %6045 = vmatprep.subr.bf16.mxu0 0
        %6046 = vmatpush1.bf16.msra.mxu0 0
        %6047 = vmatprep.subr.bf16.mxu0 0
        %6048 = vmatpush1.bf16.msra.mxu0 0
        %6049 = vmatprep.subr.bf16.mxu0 0
        %6050 = vmatpush1.bf16.msra.mxu0 0
        %6051 = vmatprep.subr.bf16.mxu0 0
        %6052 = vmatpush1.bf16.msra.mxu0 0
        %6053 = vmatprep.subr.bf16.mxu0 0
        %6054 = vmatpush1.bf16.msra.mxu0 0
        %6055 = vmatprep.mubr.bf16.mxu0 0
        %6056 = vmatmul.mubr.bf16.gmra.mrb[0].mxu0 %v5265
        %v6057 = vpop.f32.mrb[0].mxu0
        %v6058 = vadd.f32 0.0, %v6057
        %v6059 = vpop.f32.mrb[0].mxu0
        %v6060 = vpop.f32.mrb[0].mxu0
        %v6061 = vadd.f32 0.0, %v6060
        %v6062 = vpop.f32.mrb[0].mxu0
        %6063 = vmatprep.mubr.bf16.mxu0 0
        %6064 = vmatmul.mubr.bf16.gmra.mrb[0].mxu0 %v5268
        %v6065 = vpop.f32.mrb[0].mxu0
        %v6066 = vadd.f32 0.0, %v6065
        %v6067 = vpop.f32.mrb[0].mxu0
        %v6068 = vpop.f32.mrb[0].mxu0
        %v6069 = vadd.f32 0.0, %v6068
        %v6070 = vpop.f32.mrb[0].mxu0
        %6071 = vmatprep.mubr.bf16.mxu0 0
        %6072 = vmatmul.mubr.bf16.gmra.mrb[0].mxu0 %v5271
        %v6073 = vpop.f32.mrb[0].mxu0
        %v6074 = vadd.f32 0.0, %v6073
        %v6075 = vpop.f32.mrb[0].mxu0
        %v6076 = vpop.f32.mrb[0].mxu0
        %v6077 = vadd.f32 0.0, %v6076
        %v6078 = vpop.f32.mrb[0].mxu0
        %6079 = vmatprep.mubr.bf16.mxu0 0
        %6080 = vmatmul.mubr.bf16.gmra.mrb[0].mxu0 %v6021
        %v6081 = vpop.f32.mrb[0].mxu0
        %v6082 = vadd.f32 0.0, %v6081
        %v6083 = vpop.f32.mrb[0].mxu0
        %v6084 = vpop.f32.mrb[0].mxu0
        %v6085 = vadd.f32 0.0, %v6084
        %v6086 = vpop.f32.mrb[0].mxu0
        %6087 = vdwg.mxu0
        %v6088 = vadd.f32 %v5987, %v6058
        %v6089 = vadd.f32 %v5988, %v6061
        %v6090 = vadd.f32 %v5989, %v6066
        %v6091 = vadd.f32 %v5990, %v6069
        %v6092 = vadd.f32 %v5991, %v6074
        %v6093 = vadd.f32 %v5992, %v6077
        %v6094 = vadd.f32 %v5993, %v6082
        %v6095 = vadd.f32 %v5994, %v6085
        %v6097 = vrot.slane %v5120, 5
        %v6098 = vrot.slane %v6097, 4
        %v6099 = vrot.slane %v5121, 5
        %v6100 = vsel %vm5451, %v6098, %v6099
        %s6101 = scalar_lea.vmem %s4, 136
        %v6102 = vld [vmem:[%s6101] sm:$0xf]
        %v6103 = vld [vmem:[%s6101 + $0x4] sm:$0xf]
        %v6104 = vunpack.c.l.b16 %v6100
        %v6105 = vpack.c.b16 %v6104, %v5811
        %v6108 = vunpack.c.l.b16 %v6102
        %v6109 = vunpack.c.l.b16 %v6103
        %v6110 = vpack.c.b16 %v6109, %v6108
        %v6113 = vsel %vm3947, %v6105, 0
        %6115 = vmatprep.subr.bf16.mxu0 0
        %6116 = vmatpush1.bf16.msra.mxu0 %v6110
        %6117 = vmatprep.subr.bf16.mxu0 0
        %6118 = vmatpush1.bf16.msra.mxu0 0
        %6119 = vmatprep.subr.bf16.mxu0 0
        %6120 = vmatpush1.bf16.msra.mxu0 0
        %6121 = vmatprep.subr.bf16.mxu0 0
        %6122 = vmatpush1.bf16.msra.mxu0 0
        %6123 = vmatprep.subr.bf16.mxu0 0
        %6124 = vmatpush1.bf16.msra.mxu0 0
        %6125 = vmatprep.subr.bf16.mxu0 0
        %6126 = vmatpush1.bf16.msra.mxu0 0
        %6127 = vmatprep.subr.bf16.mxu0 0
        %6128 = vmatpush1.bf16.msra.mxu0 0
        %6129 = vmatprep.subr.bf16.mxu0 0
        %6130 = vmatpush1.bf16.msra.mxu0 0
        %6131 = vmatprep.subr.bf16.mxu0 0
        %6132 = vmatpush1.bf16.msra.mxu0 0
        %6133 = vmatprep.subr.bf16.mxu0 0
        %6134 = vmatpush1.bf16.msra.mxu0 0
        %6135 = vmatprep.subr.bf16.mxu0 0
        %6136 = vmatpush1.bf16.msra.mxu0 0
        %6137 = vmatprep.subr.bf16.mxu0 0
        %6138 = vmatpush1.bf16.msra.mxu0 0
        %6139 = vmatprep.subr.bf16.mxu0 0
        %6140 = vmatpush1.bf16.msra.mxu0 0
        %6141 = vmatprep.subr.bf16.mxu0 0
        %6142 = vmatpush1.bf16.msra.mxu0 0
        %6143 = vmatprep.subr.bf16.mxu0 0
        %6144 = vmatpush1.bf16.msra.mxu0 0
        %6145 = vmatprep.subr.bf16.mxu0 0
        %6146 = vmatpush1.bf16.msra.mxu0 0
        %6147 = vmatprep.mubr.bf16.mxu0 0
        %6148 = vmatmul.mubr.bf16.gmra.mrb[0].mxu0 %v5509
        %v6149 = vpop.f32.mrb[0].mxu0
        %v6150 = vadd.f32 0.0, %v6149
        %v6151 = vpop.f32.mrb[0].mxu0
        %v6152 = vpop.f32.mrb[0].mxu0
        %v6153 = vadd.f32 0.0, %v6152
        %v6154 = vpop.f32.mrb[0].mxu0
        %6155 = vmatprep.mubr.bf16.mxu0 0
        %6156 = vmatmul.mubr.bf16.gmra.mrb[0].mxu0 %v5512
        %v6157 = vpop.f32.mrb[0].mxu0
        %v6158 = vadd.f32 0.0, %v6157
        %v6159 = vpop.f32.mrb[0].mxu0
        %v6160 = vpop.f32.mrb[0].mxu0
        %v6161 = vadd.f32 0.0, %v6160
        %v6162 = vpop.f32.mrb[0].mxu0
        %6163 = vmatprep.mubr.bf16.mxu0 0
        %6164 = vmatmul.mubr.bf16.gmra.mrb[0].mxu0 %v5515
        %v6165 = vpop.f32.mrb[0].mxu0
        %v6166 = vadd.f32 0.0, %v6165
        %v6167 = vpop.f32.mrb[0].mxu0
        %v6168 = vpop.f32.mrb[0].mxu0
        %v6169 = vadd.f32 0.0, %v6168
        %v6170 = vpop.f32.mrb[0].mxu0
        %6171 = vmatprep.mubr.bf16.mxu0 0
        %6172 = vmatmul.mubr.bf16.gmra.mrb[0].mxu0 %v6113
        %v6173 = vpop.f32.mrb[0].mxu0
        %v6174 = vadd.f32 0.0, %v6173
        %v6175 = vpop.f32.mrb[0].mxu0
        %v6176 = vpop.f32.mrb[0].mxu0
        %v6177 = vadd.f32 0.0, %v6176
        %v6178 = vpop.f32.mrb[0].mxu0
        %6179 = vdwg.mxu0
        %v6180 = vadd.f32 %v6088, %v6150
        %v6181 = vadd.f32 %v6089, %v6153
        %v6182 = vadd.f32 %v6090, %v6158
        %v6183 = vadd.f32 %v6091, %v6161
        %v6184 = vadd.f32 %v6092, %v6166
        %v6185 = vadd.f32 %v6093, %v6169
        %v6186 = vadd.f32 %v6094, %v6174
        %v6187 = vadd.f32 %v6095, %v6177
        %v6188 = vld [vmem:[#allocation3] sm:$0xff]
        %v6189 = vld [vmem:[#allocation3 + $0x8] sm:$0xff]
        %v6190 = vld [vmem:[#allocation3 + $0x10] sm:$0xff]
        %v6191 = vld [vmem:[#allocation3 + $0x18] sm:$0xff]
        %v6192 = vld [vmem:[#allocation3 + $0x20] sm:$0xff]
        %v6193 = vld [vmem:[#allocation3 + $0x28] sm:$0xff]
        %v6194 = vld [vmem:[#allocation3 + $0x30] sm:$0xff]
        %v6195 = vld [vmem:[#allocation3 + $0x38] sm:$0xff]
        %v6196 = vadd.f32 %v6188, %v6180
        %v6197 = vadd.f32 %v6189, %v6181
        %v6198 = vadd.f32 %v6190, %v6182
        %v6199 = vadd.f32 %v6191, %v6183
        %v6200 = vadd.f32 %v6192, %v6184
        %v6201 = vadd.f32 %v6193, %v6185
        %v6202 = vadd.f32 %v6194, %v6186
        %v6203 = vadd.f32 %v6195, %v6187
        %6204 = vst.msk [vmem:[#allocation3] sm:$0xff] %vm3947, %v6196
        %6205 = vst.msk [vmem:[#allocation3 + $0x8] sm:$0xff] %vm3947, %v6197
        %6206 = vst.msk [vmem:[#allocation3 + $0x10] sm:$0xff] %vm3947, %v6198
        %6207 = vst.msk [vmem:[#allocation3 + $0x18] sm:$0xff] %vm3947, %v6199
        %6208 = vst.msk [vmem:[#allocation3 + $0x20] sm:$0xff] %vm3947, %v6200
        %6209 = vst.msk [vmem:[#allocation3 + $0x28] sm:$0xff] %vm3947, %v6201
        %6210 = vst.msk [vmem:[#allocation3 + $0x30] sm:$0xff] %vm3947, %v6202
        %6211 = vst.msk [vmem:[#allocation3 + $0x38] sm:$0xff] %vm3947, %v6203
        // Predicated region
        $region77: #{resblock3d_forward.1} parent=59 // pred_check
          %p6212 = pneg %p2151
        $region78: #{resblock3d_forward.1} parent=59 // pred_check_branch
          %6214 = sbr.rel (%p6212) target = $region80
        $region79: #{resblock3d_forward.1} parent=59 // pred_region
          %s6215 = sadd.s32 %s29, 2
          %p6216 = scmp.lt.s32.totalorder %s6215, 0
          %s6217 = ssub.s32 0, %s6215
          %s6218 = scalar_select %p6216, %s6217, %s6215
          %s6219 = sdiv.u32.pop %s6218, 3
          %s6220 = srem.u32.pop %s6218, 3
          %s6221 = ssub.s32 0, %s6220
          %s6222 = scalar_select %p6216, %s6221, %s6220
          %p6223 = scmp.ne.s32.totalorder %s6222, 0
          %p6224 = scmp.lt.s32.totalorder %s6222, 0
          %p6225 = pnand %p6224, %p6223
          %p6226 = pneg %p6225
          %s6227 = sadd.s32 %s6222, 3
          %s6228 = scalar_select %p6226, %s6227, %s6222
          %s6229 = smul.u32 %s6228, 20
          %s6230 = smul.addr %s6229, 4
          %s6231 = scalar_lea.vmem [#allocation2], %s6230
          %v6232 = vld [vmem:[%s6231] sm:$0xf]
          %v6233 = vld [vmem:[%s6231 + $0x4] sm:$0x1]
          %v6234 = vld [vmem:[%s6231 + $0x8] sm:$0xf]
          %v6235 = vld [vmem:[%s6231 + $0xc] sm:$0x1]
          %v6236 = vld [vmem:[%s6231 + $0x10] sm:$0xf]
          %v6237 = vld [vmem:[%s6231 + $0x14] sm:$0x1]
          %v6238 = vld [vmem:[%s6231 + $0x18] sm:$0xf]
          %v6239 = vld [vmem:[%s6231 + $0x1c] sm:$0x1]
          %v6240 = vld [vmem:[%s6231 + $0x20] sm:$0xf]
          %v6241 = vld [vmem:[%s6231 + $0x24] sm:$0x1]
          %v6242 = vld [vmem:[%s6231 + $0x28] sm:$0xf]
          %v6243 = vld [vmem:[%s6231 + $0x2c] sm:$0x1]
          %v6244 = vld [vmem:[%s6231 + $0x30] sm:$0xf]
          %v6245 = vld [vmem:[%s6231 + $0x34] sm:$0x1]
          %v6246 = vld [vmem:[%s6231 + $0x38] sm:$0xf]
          %v6247 = vld [vmem:[%s6231 + $0x3c] sm:$0x1]
          %v6248 = vld [vmem:[%s6231 + $0x40] sm:$0xf]
          %v6249 = vld [vmem:[%s6231 + $0x44] sm:$0x1]
          %v6250 = vld [vmem:[%s6231 + $0x48] sm:$0xf]
          %v6251 = vld [vmem:[%s6231 + $0x4c] sm:$0x1]
          %s6252 = scalar_lea.vmem %s4, 144
          %v6253 = vld [vmem:[%s6252] sm:$0xf]
          %v6254 = vld [vmem:[%s6252 + $0x4] sm:$0xf]
          %v6256 = vshrl.u32 %v6232, 16
          %v6258 = vrot.slane %v6256, 4
          %v6259 = vshll.u32 %v6232, 16
          %v6261 = vrot.slane %v6259, 5
          %v6262 = vor.u32 %v6258, %v6261
          %v6263 = vrot.slane %v6262, 4
          %v6265 = vshll.u32 %v6233, 16
          %v6267 = vrot.slane %v6265, 5
          %v6268 = vsel %vm5127, %v6263, %v6267
          %v6270 = vshrl.u32 %v6234, 16
          %v6272 = vrot.slane %v6270, 4
          %v6273 = vshll.u32 %v6234, 16
          %v6275 = vrot.slane %v6273, 5
          %v6276 = vor.u32 %v6272, %v6275
          %v6277 = vrot.slane %v6276, 4
          %v6279 = vshll.u32 %v6235, 16
          %v6281 = vrot.slane %v6279, 5
          %v6282 = vsel %vm5127, %v6277, %v6281
          %v6284 = vshrl.u32 %v6236, 16
          %v6286 = vrot.slane %v6284, 4
          %v6287 = vshll.u32 %v6236, 16
          %v6289 = vrot.slane %v6287, 5
          %v6290 = vor.u32 %v6286, %v6289
          %v6291 = vrot.slane %v6290, 4
          %v6293 = vshll.u32 %v6237, 16
          %v6295 = vrot.slane %v6293, 5
          %v6296 = vsel %vm5127, %v6291, %v6295
          %v6298 = vshrl.u32 %v6238, 16
          %v6300 = vrot.slane %v6298, 4
          %v6301 = vshll.u32 %v6238, 16
          %v6303 = vrot.slane %v6301, 5
          %v6304 = vor.u32 %v6300, %v6303
          %v6305 = vrot.slane %v6304, 4
          %v6307 = vshll.u32 %v6239, 16
          %v6309 = vrot.slane %v6307, 5
          %v6310 = vsel %vm5127, %v6305, %v6309
          %v6312 = vshrl.u32 %v6240, 16
          %v6314 = vrot.slane %v6312, 4
          %v6315 = vshll.u32 %v6240, 16
          %v6317 = vrot.slane %v6315, 5
          %v6318 = vor.u32 %v6314, %v6317
          %v6319 = vrot.slane %v6318, 4
          %v6321 = vshll.u32 %v6241, 16
          %v6323 = vrot.slane %v6321, 5
          %v6324 = vsel %vm5127, %v6319, %v6323
          %v6326 = vshrl.u32 %v6242, 16
          %v6328 = vrot.slane %v6326, 4
          %v6329 = vshll.u32 %v6242, 16
          %v6331 = vrot.slane %v6329, 5
          %v6332 = vor.u32 %v6328, %v6331
          %v6333 = vrot.slane %v6332, 4
          %v6335 = vshll.u32 %v6243, 16
          %v6337 = vrot.slane %v6335, 5
          %v6338 = vsel %vm5127, %v6333, %v6337
          %v6340 = vshrl.u32 %v6244, 16
          %v6342 = vrot.slane %v6340, 4
          %v6343 = vshll.u32 %v6244, 16
          %v6345 = vrot.slane %v6343, 5
          %v6346 = vor.u32 %v6342, %v6345
          %v6347 = vrot.slane %v6346, 4
          %v6349 = vshll.u32 %v6245, 16
          %v6351 = vrot.slane %v6349, 5
          %v6352 = vsel %vm5127, %v6347, %v6351
          %v6354 = vshrl.u32 %v6246, 16
          %v6356 = vrot.slane %v6354, 4
          %v6357 = vshll.u32 %v6246, 16
          %v6359 = vrot.slane %v6357, 5
          %v6360 = vor.u32 %v6356, %v6359
          %v6361 = vrot.slane %v6360, 4
          %v6363 = vshll.u32 %v6247, 16
          %v6365 = vrot.slane %v6363, 5
          %v6366 = vsel %vm5127, %v6361, %v6365
          %s6367 = scalar_lea.vmem %s4, 152
          %v6368 = vld [vmem:[%s6367] sm:$0xf]
          %v6369 = vld [vmem:[%s6367 + $0x4] sm:$0xf]
          %v6370 = vunpack.c.l.b16 %v6268
          %v6371 = vunpack.c.l.b16 %v6282
          %v6372 = vunpack.c.l.b16 %v6296
          %v6373 = vunpack.c.l.b16 %v6310
          %v6374 = vunpack.c.l.b16 %v6324
          %v6375 = vunpack.c.l.b16 %v6338
          %v6376 = vunpack.c.l.b16 %v6352
          %v6377 = vunpack.c.l.b16 %v6366
          %v6378 = vpack.c.b16 %v6371, %v6370
          %v6379 = vpack.c.b16 %v6373, %v6372
          %v6380 = vpack.c.b16 %v6375, %v6374
          %v6381 = vpack.c.b16 %v6377, %v6376
          %v6384 = vunpack.c.l.b16 %v6368
          %v6385 = vunpack.c.l.b16 %v6369
          %v6386 = vpack.c.b16 %v6385, %v6384
          %v6389 = vsel %vm3947, %v6378, 0
          %v6392 = vsel %vm3947, %v6379, 0
          %v6395 = vsel %vm3947, %v6380, 0
          %v6398 = vsel %vm3947, %v6381, 0
          %6400 = vmatprep.subr.bf16.mxu0 0
          %6401 = vmatpush1.bf16.msra.mxu0 %v6386
          %6402 = vmatprep.subr.bf16.mxu0 0
          %6403 = vmatpush1.bf16.msra.mxu0 0
          %6404 = vmatprep.subr.bf16.mxu0 0
          %6405 = vmatpush1.bf16.msra.mxu0 0
          %6406 = vmatprep.subr.bf16.mxu0 0
          %6407 = vmatpush1.bf16.msra.mxu0 0
          %6408 = vmatprep.subr.bf16.mxu0 0
          %6409 = vmatpush1.bf16.msra.mxu0 0
          %6410 = vmatprep.subr.bf16.mxu0 0
          %6411 = vmatpush1.bf16.msra.mxu0 0
          %6412 = vmatprep.subr.bf16.mxu0 0
          %6413 = vmatpush1.bf16.msra.mxu0 0
          %6414 = vmatprep.subr.bf16.mxu0 0
          %6415 = vmatpush1.bf16.msra.mxu0 0
          %6416 = vmatprep.subr.bf16.mxu0 0
          %6417 = vmatpush1.bf16.msra.mxu0 0
          %6418 = vmatprep.subr.bf16.mxu0 0
          %6419 = vmatpush1.bf16.msra.mxu0 0
          %6420 = vmatprep.subr.bf16.mxu0 0
          %6421 = vmatpush1.bf16.msra.mxu0 0
          %6422 = vmatprep.subr.bf16.mxu0 0
          %6423 = vmatpush1.bf16.msra.mxu0 0
          %6424 = vmatprep.subr.bf16.mxu0 0
          %6425 = vmatpush1.bf16.msra.mxu0 0
          %6426 = vmatprep.subr.bf16.mxu0 0
          %6427 = vmatpush1.bf16.msra.mxu0 0
          %6428 = vmatprep.subr.bf16.mxu0 0
          %6429 = vmatpush1.bf16.msra.mxu0 0
          %6430 = vmatprep.subr.bf16.mxu0 0
          %6431 = vmatpush1.bf16.msra.mxu0 0
          %6432 = vmatprep.mubr.bf16.mxu0 0
          %6433 = vmatmul.mubr.bf16.gmra.mrb[0].mxu0 %v6389
          %v6434 = vpop.f32.mrb[0].mxu0
          %v6435 = vadd.f32 0.0, %v6434
          %v6436 = vpop.f32.mrb[0].mxu0
          %v6437 = vpop.f32.mrb[0].mxu0
          %v6438 = vadd.f32 0.0, %v6437
          %v6439 = vpop.f32.mrb[0].mxu0
          %6440 = vmatprep.mubr.bf16.mxu0 0
          %6441 = vmatmul.mubr.bf16.gmra.mrb[0].mxu0 %v6392
          %v6442 = vpop.f32.mrb[0].mxu0
          %v6443 = vadd.f32 0.0, %v6442
          %v6444 = vpop.f32.mrb[0].mxu0
          %v6445 = vpop.f32.mrb[0].mxu0
          %v6446 = vadd.f32 0.0, %v6445
          %v6447 = vpop.f32.mrb[0].mxu0
          %6448 = vmatprep.mubr.bf16.mxu0 0
          %6449 = vmatmul.mubr.bf16.gmra.mrb[0].mxu0 %v6395
          %v6450 = vpop.f32.mrb[0].mxu0
          %v6451 = vadd.f32 0.0, %v6450
          %v6452 = vpop.f32.mrb[0].mxu0
          %v6453 = vpop.f32.mrb[0].mxu0
          %v6454 = vadd.f32 0.0, %v6453
          %v6455 = vpop.f32.mrb[0].mxu0
          %6456 = vmatprep.mubr.bf16.mxu0 0
          %6457 = vmatmul.mubr.bf16.gmra.mrb[0].mxu0 %v6398
          %v6458 = vpop.f32.mrb[0].mxu0
          %v6459 = vadd.f32 0.0, %v6458
          %v6460 = vpop.f32.mrb[0].mxu0
          %v6461 = vpop.f32.mrb[0].mxu0
          %v6462 = vadd.f32 0.0, %v6461
          %v6463 = vpop.f32.mrb[0].mxu0
          %6464 = vdwg.mxu0
          %v6473 = vunpack.c.l.b16 %v6232
          %v6474 = vunpack.c.l.b16 %v6234
          %v6475 = vunpack.c.l.b16 %v6236
          %v6476 = vunpack.c.l.b16 %v6238
          %v6477 = vunpack.c.l.b16 %v6240
          %v6478 = vunpack.c.l.b16 %v6242
          %v6479 = vunpack.c.l.b16 %v6244
          %v6480 = vunpack.c.l.b16 %v6246
          %v6481 = vpack.c.b16 %v6474, %v6473
          %v6482 = vpack.c.b16 %v6476, %v6475
          %v6483 = vpack.c.b16 %v6478, %v6477
          %v6484 = vpack.c.b16 %v6480, %v6479
          %v6487 = vunpack.c.l.b16 %v6253
          %v6488 = vunpack.c.l.b16 %v6254
          %v6489 = vpack.c.b16 %v6488, %v6487
          %v6492 = vsel %vm3947, %v6481, 0
          %v6495 = vsel %vm3947, %v6482, 0
          %v6498 = vsel %vm3947, %v6483, 0
          %v6501 = vsel %vm3947, %v6484, 0
          %6503 = vmatprep.subr.bf16.mxu0 0
          %6504 = vmatpush1.bf16.msra.mxu0 %v6489
          %6505 = vmatprep.subr.bf16.mxu0 0
          %6506 = vmatpush1.bf16.msra.mxu0 0
          %6507 = vmatprep.subr.bf16.mxu0 0
          %6508 = vmatpush1.bf16.msra.mxu0 0
          %6509 = vmatprep.subr.bf16.mxu0 0
          %6510 = vmatpush1.bf16.msra.mxu0 0
          %6511 = vmatprep.subr.bf16.mxu0 0
          %6512 = vmatpush1.bf16.msra.mxu0 0
          %6513 = vmatprep.subr.bf16.mxu0 0
          %6514 = vmatpush1.bf16.msra.mxu0 0
          %6515 = vmatprep.subr.bf16.mxu0 0
          %6516 = vmatpush1.bf16.msra.mxu0 0
          %6517 = vmatprep.subr.bf16.mxu0 0
          %6518 = vmatpush1.bf16.msra.mxu0 0
          %6519 = vmatprep.subr.bf16.mxu0 0
          %6520 = vmatpush1.bf16.msra.mxu0 0
          %6521 = vmatprep.subr.bf16.mxu0 0
          %6522 = vmatpush1.bf16.msra.mxu0 0
          %6523 = vmatprep.subr.bf16.mxu0 0
          %6524 = vmatpush1.bf16.msra.mxu0 0
          %6525 = vmatprep.subr.bf16.mxu0 0
          %6526 = vmatpush1.bf16.msra.mxu0 0
          %6527 = vmatprep.subr.bf16.mxu0 0
          %6528 = vmatpush1.bf16.msra.mxu0 0
          %6529 = vmatprep.subr.bf16.mxu0 0
          %6530 = vmatpush1.bf16.msra.mxu0 0
          %6531 = vmatprep.subr.bf16.mxu0 0
          %6532 = vmatpush1.bf16.msra.mxu0 0
          %6533 = vmatprep.subr.bf16.mxu0 0
          %6534 = vmatpush1.bf16.msra.mxu0 0
          %6535 = vmatprep.mubr.bf16.mxu0 0
          %6536 = vmatmul.mubr.bf16.gmra.mrb[0].mxu0 %v6492
          %v6537 = vpop.f32.mrb[0].mxu0
          %v6538 = vadd.f32 %v6435, %v6537
          %v6539 = vpop.f32.mrb[0].mxu0
          %v6540 = vpop.f32.mrb[0].mxu0
          %v6541 = vadd.f32 %v6438, %v6540
          %v6542 = vpop.f32.mrb[0].mxu0
          %6543 = vmatprep.mubr.bf16.mxu0 0
          %6544 = vmatmul.mubr.bf16.gmra.mrb[0].mxu0 %v6495
          %v6545 = vpop.f32.mrb[0].mxu0
          %v6546 = vadd.f32 %v6443, %v6545
          %v6547 = vpop.f32.mrb[0].mxu0
          %v6548 = vpop.f32.mrb[0].mxu0
          %v6549 = vadd.f32 %v6446, %v6548
          %v6550 = vpop.f32.mrb[0].mxu0
          %6551 = vmatprep.mubr.bf16.mxu0 0
          %6552 = vmatmul.mubr.bf16.gmra.mrb[0].mxu0 %v6498
          %v6553 = vpop.f32.mrb[0].mxu0
          %v6554 = vadd.f32 %v6451, %v6553
          %v6555 = vpop.f32.mrb[0].mxu0
          %v6556 = vpop.f32.mrb[0].mxu0
          %v6557 = vadd.f32 %v6454, %v6556
          %v6558 = vpop.f32.mrb[0].mxu0
          %6559 = vmatprep.mubr.bf16.mxu0 0
          %6560 = vmatmul.mubr.bf16.gmra.mrb[0].mxu0 %v6501
          %v6561 = vpop.f32.mrb[0].mxu0
          %v6562 = vadd.f32 %v6459, %v6561
          %v6563 = vpop.f32.mrb[0].mxu0
          %v6564 = vpop.f32.mrb[0].mxu0
          %v6565 = vadd.f32 %v6462, %v6564
          %v6566 = vpop.f32.mrb[0].mxu0
          %6567 = vdwg.mxu0
          %v6576 = vrot.slane %v6232, 5
          %v6577 = vrot.slane %v6576, 4
          %v6578 = vrot.slane %v6233, 5
          %v6579 = vsel %vm5451, %v6577, %v6578
          %v6580 = vrot.slane %v6234, 5
          %v6581 = vrot.slane %v6580, 4
          %v6582 = vrot.slane %v6235, 5
          %v6583 = vsel %vm5451, %v6581, %v6582
          %v6584 = vrot.slane %v6236, 5
          %v6585 = vrot.slane %v6584, 4
          %v6586 = vrot.slane %v6237, 5
          %v6587 = vsel %vm5451, %v6585, %v6586
          %v6588 = vrot.slane %v6238, 5
          %v6589 = vrot.slane %v6588, 4
          %v6590 = vrot.slane %v6239, 5
          %v6591 = vsel %vm5451, %v6589, %v6590
          %v6592 = vrot.slane %v6240, 5
          %v6593 = vrot.slane %v6592, 4
          %v6594 = vrot.slane %v6241, 5
          %v6595 = vsel %vm5451, %v6593, %v6594
          %v6596 = vrot.slane %v6242, 5
          %v6597 = vrot.slane %v6596, 4
          %v6598 = vrot.slane %v6243, 5
          %v6599 = vsel %vm5451, %v6597, %v6598
          %v6600 = vrot.slane %v6244, 5
          %v6601 = vrot.slane %v6600, 4
          %v6602 = vrot.slane %v6245, 5
          %v6603 = vsel %vm5451, %v6601, %v6602
          %v6604 = vrot.slane %v6246, 5
          %v6605 = vrot.slane %v6604, 4
          %v6606 = vrot.slane %v6247, 5
          %v6607 = vsel %vm5451, %v6605, %v6606
          %s6608 = scalar_lea.vmem %s4, 160
          %v6609 = vld [vmem:[%s6608] sm:$0xf]
          %v6610 = vld [vmem:[%s6608 + $0x4] sm:$0xf]
          %v6611 = vunpack.c.l.b16 %v6579
          %v6612 = vunpack.c.l.b16 %v6583
          %v6613 = vunpack.c.l.b16 %v6587
          %v6614 = vunpack.c.l.b16 %v6591
          %v6615 = vunpack.c.l.b16 %v6595
          %v6616 = vunpack.c.l.b16 %v6599
          %v6617 = vunpack.c.l.b16 %v6603
          %v6618 = vunpack.c.l.b16 %v6607
          %v6619 = vpack.c.b16 %v6612, %v6611
          %v6620 = vpack.c.b16 %v6614, %v6613
          %v6621 = vpack.c.b16 %v6616, %v6615
          %v6622 = vpack.c.b16 %v6618, %v6617
          %v6625 = vunpack.c.l.b16 %v6609
          %v6626 = vunpack.c.l.b16 %v6610
          %v6627 = vpack.c.b16 %v6626, %v6625
          %v6630 = vsel %vm3947, %v6619, 0
          %v6633 = vsel %vm3947, %v6620, 0
          %v6636 = vsel %vm3947, %v6621, 0
          %v6639 = vsel %vm3947, %v6622, 0
          %6641 = vmatprep.subr.bf16.mxu0 0
          %6642 = vmatpush1.bf16.msra.mxu0 %v6627
          %6643 = vmatprep.subr.bf16.mxu0 0
          %6644 = vmatpush1.bf16.msra.mxu0 0
          %6645 = vmatprep.subr.bf16.mxu0 0
          %6646 = vmatpush1.bf16.msra.mxu0 0
          %6647 = vmatprep.subr.bf16.mxu0 0
          %6648 = vmatpush1.bf16.msra.mxu0 0
          %6649 = vmatprep.subr.bf16.mxu0 0
          %6650 = vmatpush1.bf16.msra.mxu0 0
          %6651 = vmatprep.subr.bf16.mxu0 0
          %6652 = vmatpush1.bf16.msra.mxu0 0
          %6653 = vmatprep.subr.bf16.mxu0 0
          %6654 = vmatpush1.bf16.msra.mxu0 0
          %6655 = vmatprep.subr.bf16.mxu0 0
          %6656 = vmatpush1.bf16.msra.mxu0 0
          %6657 = vmatprep.subr.bf16.mxu0 0
          %6658 = vmatpush1.bf16.msra.mxu0 0
          %6659 = vmatprep.subr.bf16.mxu0 0
          %6660 = vmatpush1.bf16.msra.mxu0 0
          %6661 = vmatprep.subr.bf16.mxu0 0
          %6662 = vmatpush1.bf16.msra.mxu0 0
          %6663 = vmatprep.subr.bf16.mxu0 0
          %6664 = vmatpush1.bf16.msra.mxu0 0
          %6665 = vmatprep.subr.bf16.mxu0 0
          %6666 = vmatpush1.bf16.msra.mxu0 0
          %6667 = vmatprep.subr.bf16.mxu0 0
          %6668 = vmatpush1.bf16.msra.mxu0 0
          %6669 = vmatprep.subr.bf16.mxu0 0
          %6670 = vmatpush1.bf16.msra.mxu0 0
          %6671 = vmatprep.subr.bf16.mxu0 0
          %6672 = vmatpush1.bf16.msra.mxu0 0
          %6673 = vmatprep.mubr.bf16.mxu0 0
          %6674 = vmatmul.mubr.bf16.gmra.mrb[0].mxu0 %v6630
          %v6675 = vpop.f32.mrb[0].mxu0
          %v6676 = vadd.f32 0.0, %v6675
          %v6677 = vpop.f32.mrb[0].mxu0
          %v6678 = vpop.f32.mrb[0].mxu0
          %v6679 = vadd.f32 0.0, %v6678
          %v6680 = vpop.f32.mrb[0].mxu0
          %6681 = vmatprep.mubr.bf16.mxu0 0
          %6682 = vmatmul.mubr.bf16.gmra.mrb[0].mxu0 %v6633
          %v6683 = vpop.f32.mrb[0].mxu0
          %v6684 = vadd.f32 0.0, %v6683
          %v6685 = vpop.f32.mrb[0].mxu0
          %v6686 = vpop.f32.mrb[0].mxu0
          %v6687 = vadd.f32 0.0, %v6686
          %v6688 = vpop.f32.mrb[0].mxu0
          %6689 = vmatprep.mubr.bf16.mxu0 0
          %6690 = vmatmul.mubr.bf16.gmra.mrb[0].mxu0 %v6636
          %v6691 = vpop.f32.mrb[0].mxu0
          %v6692 = vadd.f32 0.0, %v6691
          %v6693 = vpop.f32.mrb[0].mxu0
          %v6694 = vpop.f32.mrb[0].mxu0
          %v6695 = vadd.f32 0.0, %v6694
          %v6696 = vpop.f32.mrb[0].mxu0
          %6697 = vmatprep.mubr.bf16.mxu0 0
          %6698 = vmatmul.mubr.bf16.gmra.mrb[0].mxu0 %v6639
          %v6699 = vpop.f32.mrb[0].mxu0
          %v6700 = vadd.f32 0.0, %v6699
          %v6701 = vpop.f32.mrb[0].mxu0
          %v6702 = vpop.f32.mrb[0].mxu0
          %v6703 = vadd.f32 0.0, %v6702
          %v6704 = vpop.f32.mrb[0].mxu0
          %6705 = vdwg.mxu0
          %v6706 = vadd.f32 %v6538, %v6676
          %v6707 = vadd.f32 %v6541, %v6679
          %v6708 = vadd.f32 %v6546, %v6684
          %v6709 = vadd.f32 %v6549, %v6687
          %v6710 = vadd.f32 %v6554, %v6692
          %v6711 = vadd.f32 %v6557, %v6695
          %v6712 = vadd.f32 %v6562, %v6700
          %v6713 = vadd.f32 %v6565, %v6703
          %s6714 = scalar_lea.vmem %s4, 168
          %v6715 = vld [vmem:[%s6714] sm:$0xf]
          %v6716 = vld [vmem:[%s6714 + $0x4] sm:$0xf]
          %v6718 = vunpack.c.l.b16 %v6248
          %v6719 = vpack.c.b16 %v6475, %v6474
          %v6720 = vpack.c.b16 %v6477, %v6476
          %v6721 = vpack.c.b16 %v6479, %v6478
          %v6722 = vpack.c.b16 %v6718, %v6480
          %v6725 = vunpack.c.l.b16 %v6715
          %v6726 = vunpack.c.l.b16 %v6716
          %v6727 = vpack.c.b16 %v6726, %v6725
          %v6730 = vsel %vm3947, %v6719, 0
          %v6733 = vsel %vm3947, %v6720, 0
          %v6736 = vsel %vm3947, %v6721, 0
          %v6739 = vsel %vm3947, %v6722, 0
          %6741 = vmatprep.subr.bf16.mxu0 0
          %6742 = vmatpush1.bf16.msra.mxu0 %v6727
          %6743 = vmatprep.subr.bf16.mxu0 0
          %6744 = vmatpush1.bf16.msra.mxu0 0
          %6745 = vmatprep.subr.bf16.mxu0 0
          %6746 = vmatpush1.bf16.msra.mxu0 0
          %6747 = vmatprep.subr.bf16.mxu0 0
          %6748 = vmatpush1.bf16.msra.mxu0 0
          %6749 = vmatprep.subr.bf16.mxu0 0
          %6750 = vmatpush1.bf16.msra.mxu0 0
          %6751 = vmatprep.subr.bf16.mxu0 0
          %6752 = vmatpush1.bf16.msra.mxu0 0
          %6753 = vmatprep.subr.bf16.mxu0 0
          %6754 = vmatpush1.bf16.msra.mxu0 0
          %6755 = vmatprep.subr.bf16.mxu0 0
          %6756 = vmatpush1.bf16.msra.mxu0 0
          %6757 = vmatprep.subr.bf16.mxu0 0
          %6758 = vmatpush1.bf16.msra.mxu0 0
          %6759 = vmatprep.subr.bf16.mxu0 0
          %6760 = vmatpush1.bf16.msra.mxu0 0
          %6761 = vmatprep.subr.bf16.mxu0 0
          %6762 = vmatpush1.bf16.msra.mxu0 0
          %6763 = vmatprep.subr.bf16.mxu0 0
          %6764 = vmatpush1.bf16.msra.mxu0 0
          %6765 = vmatprep.subr.bf16.mxu0 0
          %6766 = vmatpush1.bf16.msra.mxu0 0
          %6767 = vmatprep.subr.bf16.mxu0 0
          %6768 = vmatpush1.bf16.msra.mxu0 0
          %6769 = vmatprep.subr.bf16.mxu0 0
          %6770 = vmatpush1.bf16.msra.mxu0 0
          %6771 = vmatprep.subr.bf16.mxu0 0
          %6772 = vmatpush1.bf16.msra.mxu0 0
          %6773 = vmatprep.mubr.bf16.mxu0 0
          %6774 = vmatmul.mubr.bf16.gmra.mrb[0].mxu0 %v6730
          %v6775 = vpop.f32.mrb[0].mxu0
          %v6776 = vadd.f32 0.0, %v6775
          %v6777 = vpop.f32.mrb[0].mxu0
          %v6778 = vpop.f32.mrb[0].mxu0
          %v6779 = vadd.f32 0.0, %v6778
          %v6780 = vpop.f32.mrb[0].mxu0
          %6781 = vmatprep.mubr.bf16.mxu0 0
          %6782 = vmatmul.mubr.bf16.gmra.mrb[0].mxu0 %v6733
          %v6783 = vpop.f32.mrb[0].mxu0
          %v6784 = vadd.f32 0.0, %v6783
          %v6785 = vpop.f32.mrb[0].mxu0
          %v6786 = vpop.f32.mrb[0].mxu0
          %v6787 = vadd.f32 0.0, %v6786
          %v6788 = vpop.f32.mrb[0].mxu0
          %6789 = vmatprep.mubr.bf16.mxu0 0
          %6790 = vmatmul.mubr.bf16.gmra.mrb[0].mxu0 %v6736
          %v6791 = vpop.f32.mrb[0].mxu0
          %v6792 = vadd.f32 0.0, %v6791
          %v6793 = vpop.f32.mrb[0].mxu0
          %v6794 = vpop.f32.mrb[0].mxu0
          %v6795 = vadd.f32 0.0, %v6794
          %v6796 = vpop.f32.mrb[0].mxu0
          %6797 = vmatprep.mubr.bf16.mxu0 0
          %6798 = vmatmul.mubr.bf16.gmra.mrb[0].mxu0 %v6739
          %v6799 = vpop.f32.mrb[0].mxu0
          %v6800 = vadd.f32 0.0, %v6799
          %v6801 = vpop.f32.mrb[0].mxu0
          %v6802 = vpop.f32.mrb[0].mxu0
          %v6803 = vadd.f32 0.0, %v6802
          %v6804 = vpop.f32.mrb[0].mxu0
          %6805 = vdwg.mxu0
          %v6806 = vadd.f32 %v6706, %v6776
          %v6807 = vadd.f32 %v6707, %v6779
          %v6808 = vadd.f32 %v6708, %v6784
          %v6809 = vadd.f32 %v6709, %v6787
          %v6810 = vadd.f32 %v6710, %v6792
          %v6811 = vadd.f32 %v6711, %v6795
          %v6812 = vadd.f32 %v6712, %v6800
          %v6813 = vadd.f32 %v6713, %v6803
          %v6815 = vshrl.u32 %v6248, 16
          %v6817 = vrot.slane %v6815, 4
          %v6818 = vshll.u32 %v6248, 16
          %v6820 = vrot.slane %v6818, 5
          %v6821 = vor.u32 %v6817, %v6820
          %v6822 = vrot.slane %v6821, 4
          %v6824 = vshll.u32 %v6249, 16
          %v6826 = vrot.slane %v6824, 5
          %v6827 = vsel %vm5127, %v6822, %v6826
          %s6828 = scalar_lea.vmem %s4, 176
          %v6829 = vld [vmem:[%s6828] sm:$0xf]
          %v6830 = vld [vmem:[%s6828 + $0x4] sm:$0xf]
          %v6831 = vunpack.c.l.b16 %v6827
          %v6832 = vpack.c.b16 %v6372, %v6371
          %v6833 = vpack.c.b16 %v6374, %v6373
          %v6834 = vpack.c.b16 %v6376, %v6375
          %v6835 = vpack.c.b16 %v6831, %v6377
          %v6838 = vunpack.c.l.b16 %v6829
          %v6839 = vunpack.c.l.b16 %v6830
          %v6840 = vpack.c.b16 %v6839, %v6838
          %v6843 = vsel %vm3947, %v6832, 0
          %v6846 = vsel %vm3947, %v6833, 0
          %v6849 = vsel %vm3947, %v6834, 0
          %v6852 = vsel %vm3947, %v6835, 0
          %6854 = vmatprep.subr.bf16.mxu0 0
          %6855 = vmatpush1.bf16.msra.mxu0 %v6840
          %6856 = vmatprep.subr.bf16.mxu0 0
          %6857 = vmatpush1.bf16.msra.mxu0 0
          %6858 = vmatprep.subr.bf16.mxu0 0
          %6859 = vmatpush1.bf16.msra.mxu0 0
          %6860 = vmatprep.subr.bf16.mxu0 0
          %6861 = vmatpush1.bf16.msra.mxu0 0
          %6862 = vmatprep.subr.bf16.mxu0 0
          %6863 = vmatpush1.bf16.msra.mxu0 0
          %6864 = vmatprep.subr.bf16.mxu0 0
          %6865 = vmatpush1.bf16.msra.mxu0 0
          %6866 = vmatprep.subr.bf16.mxu0 0
          %6867 = vmatpush1.bf16.msra.mxu0 0
          %6868 = vmatprep.subr.bf16.mxu0 0
          %6869 = vmatpush1.bf16.msra.mxu0 0
          %6870 = vmatprep.subr.bf16.mxu0 0
          %6871 = vmatpush1.bf16.msra.mxu0 0
          %6872 = vmatprep.subr.bf16.mxu0 0
          %6873 = vmatpush1.bf16.msra.mxu0 0
          %6874 = vmatprep.subr.bf16.mxu0 0
          %6875 = vmatpush1.bf16.msra.mxu0 0
          %6876 = vmatprep.subr.bf16.mxu0 0
          %6877 = vmatpush1.bf16.msra.mxu0 0
          %6878 = vmatprep.subr.bf16.mxu0 0
          %6879 = vmatpush1.bf16.msra.mxu0 0
          %6880 = vmatprep.subr.bf16.mxu0 0
          %6881 = vmatpush1.bf16.msra.mxu0 0
          %6882 = vmatprep.subr.bf16.mxu0 0
          %6883 = vmatpush1.bf16.msra.mxu0 0
          %6884 = vmatprep.subr.bf16.mxu0 0
          %6885 = vmatpush1.bf16.msra.mxu0 0
          %6886 = vmatprep.mubr.bf16.mxu0 0
          %6887 = vmatmul.mubr.bf16.gmra.mrb[0].mxu0 %v6843
          %v6888 = vpop.f32.mrb[0].mxu0
          %v6889 = vadd.f32 0.0, %v6888
          %v6890 = vpop.f32.mrb[0].mxu0
          %v6891 = vpop.f32.mrb[0].mxu0
          %v6892 = vadd.f32 0.0, %v6891
          %v6893 = vpop.f32.mrb[0].mxu0
          %6894 = vmatprep.mubr.bf16.mxu0 0
          %6895 = vmatmul.mubr.bf16.gmra.mrb[0].mxu0 %v6846
          %v6896 = vpop.f32.mrb[0].mxu0
          %v6897 = vadd.f32 0.0, %v6896
          %v6898 = vpop.f32.mrb[0].mxu0
          %v6899 = vpop.f32.mrb[0].mxu0
          %v6900 = vadd.f32 0.0, %v6899
          %v6901 = vpop.f32.mrb[0].mxu0
          %6902 = vmatprep.mubr.bf16.mxu0 0
          %6903 = vmatmul.mubr.bf16.gmra.mrb[0].mxu0 %v6849
          %v6904 = vpop.f32.mrb[0].mxu0
          %v6905 = vadd.f32 0.0, %v6904
          %v6906 = vpop.f32.mrb[0].mxu0
          %v6907 = vpop.f32.mrb[0].mxu0
          %v6908 = vadd.f32 0.0, %v6907
          %v6909 = vpop.f32.mrb[0].mxu0
          %6910 = vmatprep.mubr.bf16.mxu0 0
          %6911 = vmatmul.mubr.bf16.gmra.mrb[0].mxu0 %v6852
          %v6912 = vpop.f32.mrb[0].mxu0
          %v6913 = vadd.f32 0.0, %v6912
          %v6914 = vpop.f32.mrb[0].mxu0
          %v6915 = vpop.f32.mrb[0].mxu0
          %v6916 = vadd.f32 0.0, %v6915
          %v6917 = vpop.f32.mrb[0].mxu0
          %6918 = vdwg.mxu0
          %v6919 = vadd.f32 %v6806, %v6889
          %v6920 = vadd.f32 %v6807, %v6892
          %v6921 = vadd.f32 %v6808, %v6897
          %v6922 = vadd.f32 %v6809, %v6900
          %v6923 = vadd.f32 %v6810, %v6905
          %v6924 = vadd.f32 %v6811, %v6908
          %v6925 = vadd.f32 %v6812, %v6913
          %v6926 = vadd.f32 %v6813, %v6916
          %v6928 = vrot.slane %v6248, 5
          %v6929 = vrot.slane %v6928, 4
          %v6930 = vrot.slane %v6249, 5
          %v6931 = vsel %vm5451, %v6929, %v6930
          %s6932 = scalar_lea.vmem %s4, 184
          %v6933 = vld [vmem:[%s6932] sm:$0xf]
          %v6934 = vld [vmem:[%s6932 + $0x4] sm:$0xf]
          %v6935 = vunpack.c.l.b16 %v6931
          %v6936 = vpack.c.b16 %v6613, %v6612
          %v6937 = vpack.c.b16 %v6615, %v6614
          %v6938 = vpack.c.b16 %v6617, %v6616
          %v6939 = vpack.c.b16 %v6935, %v6618
          %v6942 = vunpack.c.l.b16 %v6933
          %v6943 = vunpack.c.l.b16 %v6934
          %v6944 = vpack.c.b16 %v6943, %v6942
          %v6947 = vsel %vm3947, %v6936, 0
          %v6950 = vsel %vm3947, %v6937, 0
          %v6953 = vsel %vm3947, %v6938, 0
          %v6956 = vsel %vm3947, %v6939, 0
          %6958 = vmatprep.subr.bf16.mxu0 0
          %6959 = vmatpush1.bf16.msra.mxu0 %v6944
          %6960 = vmatprep.subr.bf16.mxu0 0
          %6961 = vmatpush1.bf16.msra.mxu0 0
          %6962 = vmatprep.subr.bf16.mxu0 0
          %6963 = vmatpush1.bf16.msra.mxu0 0
          %6964 = vmatprep.subr.bf16.mxu0 0
          %6965 = vmatpush1.bf16.msra.mxu0 0
          %6966 = vmatprep.subr.bf16.mxu0 0
          %6967 = vmatpush1.bf16.msra.mxu0 0
          %6968 = vmatprep.subr.bf16.mxu0 0
          %6969 = vmatpush1.bf16.msra.mxu0 0
          %6970 = vmatprep.subr.bf16.mxu0 0
          %6971 = vmatpush1.bf16.msra.mxu0 0
          %6972 = vmatprep.subr.bf16.mxu0 0
          %6973 = vmatpush1.bf16.msra.mxu0 0
          %6974 = vmatprep.subr.bf16.mxu0 0
          %6975 = vmatpush1.bf16.msra.mxu0 0
          %6976 = vmatprep.subr.bf16.mxu0 0
          %6977 = vmatpush1.bf16.msra.mxu0 0
          %6978 = vmatprep.subr.bf16.mxu0 0
          %6979 = vmatpush1.bf16.msra.mxu0 0
          %6980 = vmatprep.subr.bf16.mxu0 0
          %6981 = vmatpush1.bf16.msra.mxu0 0
          %6982 = vmatprep.subr.bf16.mxu0 0
          %6983 = vmatpush1.bf16.msra.mxu0 0
          %6984 = vmatprep.subr.bf16.mxu0 0
          %6985 = vmatpush1.bf16.msra.mxu0 0
          %6986 = vmatprep.subr.bf16.mxu0 0
          %6987 = vmatpush1.bf16.msra.mxu0 0
          %6988 = vmatprep.subr.bf16.mxu0 0
          %6989 = vmatpush1.bf16.msra.mxu0 0
          %6990 = vmatprep.mubr.bf16.mxu0 0
          %6991 = vmatmul.mubr.bf16.gmra.mrb[0].mxu0 %v6947
          %v6992 = vpop.f32.mrb[0].mxu0
          %v6993 = vadd.f32 0.0, %v6992
          %v6994 = vpop.f32.mrb[0].mxu0
          %v6995 = vpop.f32.mrb[0].mxu0
          %v6996 = vadd.f32 0.0, %v6995
          %v6997 = vpop.f32.mrb[0].mxu0
          %6998 = vmatprep.mubr.bf16.mxu0 0
          %6999 = vmatmul.mubr.bf16.gmra.mrb[0].mxu0 %v6950
          %v7000 = vpop.f32.mrb[0].mxu0
          %v7001 = vadd.f32 0.0, %v7000
          %v7002 = vpop.f32.mrb[0].mxu0
          %v7003 = vpop.f32.mrb[0].mxu0
          %v7004 = vadd.f32 0.0, %v7003
          %v7005 = vpop.f32.mrb[0].mxu0
          %7006 = vmatprep.mubr.bf16.mxu0 0
          %7007 = vmatmul.mubr.bf16.gmra.mrb[0].mxu0 %v6953
          %v7008 = vpop.f32.mrb[0].mxu0
          %v7009 = vadd.f32 0.0, %v7008
          %v7010 = vpop.f32.mrb[0].mxu0
          %v7011 = vpop.f32.mrb[0].mxu0
          %v7012 = vadd.f32 0.0, %v7011
          %v7013 = vpop.f32.mrb[0].mxu0
          %7014 = vmatprep.mubr.bf16.mxu0 0
          %7015 = vmatmul.mubr.bf16.gmra.mrb[0].mxu0 %v6956
          %v7016 = vpop.f32.mrb[0].mxu0
          %v7017 = vadd.f32 0.0, %v7016
          %v7018 = vpop.f32.mrb[0].mxu0
          %v7019 = vpop.f32.mrb[0].mxu0
          %v7020 = vadd.f32 0.0, %v7019
          %v7021 = vpop.f32.mrb[0].mxu0
          %7022 = vdwg.mxu0
          %v7023 = vadd.f32 %v6919, %v6993
          %v7024 = vadd.f32 %v6920, %v6996
          %v7025 = vadd.f32 %v6921, %v7001
          %v7026 = vadd.f32 %v6922, %v7004
          %v7027 = vadd.f32 %v6923, %v7009
          %v7028 = vadd.f32 %v6924, %v7012
          %v7029 = vadd.f32 %v6925, %v7017
          %v7030 = vadd.f32 %v6926, %v7020
          %s7031 = scalar_lea.vmem %s4, 192
          %v7032 = vld [vmem:[%s7031] sm:$0xf]
          %v7033 = vld [vmem:[%s7031 + $0x4] sm:$0xf]
          %v7035 = vunpack.c.l.b16 %v6250
          %v7036 = vpack.c.b16 %v7035, %v6718
          %v7039 = vunpack.c.l.b16 %v7032
          %v7040 = vunpack.c.l.b16 %v7033
          %v7041 = vpack.c.b16 %v7040, %v7039
          %v7044 = vsel %vm3947, %v7036, 0
          %7046 = vmatprep.subr.bf16.mxu0 0
          %7047 = vmatpush1.bf16.msra.mxu0 %v7041
          %7048 = vmatprep.subr.bf16.mxu0 0
          %7049 = vmatpush1.bf16.msra.mxu0 0
          %7050 = vmatprep.subr.bf16.mxu0 0
          %7051 = vmatpush1.bf16.msra.mxu0 0
          %7052 = vmatprep.subr.bf16.mxu0 0
          %7053 = vmatpush1.bf16.msra.mxu0 0
          %7054 = vmatprep.subr.bf16.mxu0 0
          %7055 = vmatpush1.bf16.msra.mxu0 0
          %7056 = vmatprep.subr.bf16.mxu0 0
          %7057 = vmatpush1.bf16.msra.mxu0 0
          %7058 = vmatprep.subr.bf16.mxu0 0
          %7059 = vmatpush1.bf16.msra.mxu0 0
          %7060 = vmatprep.subr.bf16.mxu0 0
          %7061 = vmatpush1.bf16.msra.mxu0 0
          %7062 = vmatprep.subr.bf16.mxu0 0
          %7063 = vmatpush1.bf16.msra.mxu0 0
          %7064 = vmatprep.subr.bf16.mxu0 0
          %7065 = vmatpush1.bf16.msra.mxu0 0
          %7066 = vmatprep.subr.bf16.mxu0 0
          %7067 = vmatpush1.bf16.msra.mxu0 0
          %7068 = vmatprep.subr.bf16.mxu0 0
          %7069 = vmatpush1.bf16.msra.mxu0 0
          %7070 = vmatprep.subr.bf16.mxu0 0
          %7071 = vmatpush1.bf16.msra.mxu0 0
          %7072 = vmatprep.subr.bf16.mxu0 0
          %7073 = vmatpush1.bf16.msra.mxu0 0
          %7074 = vmatprep.subr.bf16.mxu0 0
          %7075 = vmatpush1.bf16.msra.mxu0 0
          %7076 = vmatprep.subr.bf16.mxu0 0
          %7077 = vmatpush1.bf16.msra.mxu0 0
          %7078 = vmatprep.mubr.bf16.mxu0 0
          %7079 = vmatmul.mubr.bf16.gmra.mrb[0].mxu0 %v6495
          %v7080 = vpop.f32.mrb[0].mxu0
          %v7081 = vadd.f32 0.0, %v7080
          %v7082 = vpop.f32.mrb[0].mxu0
          %v7083 = vpop.f32.mrb[0].mxu0
          %v7084 = vadd.f32 0.0, %v7083
          %v7085 = vpop.f32.mrb[0].mxu0
          %7086 = vmatprep.mubr.bf16.mxu0 0
          %7087 = vmatmul.mubr.bf16.gmra.mrb[0].mxu0 %v6498
          %v7088 = vpop.f32.mrb[0].mxu0
          %v7089 = vadd.f32 0.0, %v7088
          %v7090 = vpop.f32.mrb[0].mxu0
          %v7091 = vpop.f32.mrb[0].mxu0
          %v7092 = vadd.f32 0.0, %v7091
          %v7093 = vpop.f32.mrb[0].mxu0
          %7094 = vmatprep.mubr.bf16.mxu0 0
          %7095 = vmatmul.mubr.bf16.gmra.mrb[0].mxu0 %v6501
          %v7096 = vpop.f32.mrb[0].mxu0
          %v7097 = vadd.f32 0.0, %v7096
          %v7098 = vpop.f32.mrb[0].mxu0
          %v7099 = vpop.f32.mrb[0].mxu0
          %v7100 = vadd.f32 0.0, %v7099
          %v7101 = vpop.f32.mrb[0].mxu0
          %7102 = vmatprep.mubr.bf16.mxu0 0
          %7103 = vmatmul.mubr.bf16.gmra.mrb[0].mxu0 %v7044
          %v7104 = vpop.f32.mrb[0].mxu0
          %v7105 = vadd.f32 0.0, %v7104
          %v7106 = vpop.f32.mrb[0].mxu0
          %v7107 = vpop.f32.mrb[0].mxu0
          %v7108 = vadd.f32 0.0, %v7107
          %v7109 = vpop.f32.mrb[0].mxu0
          %7110 = vdwg.mxu0
          %v7111 = vadd.f32 %v7023, %v7081
          %v7112 = vadd.f32 %v7024, %v7084
          %v7113 = vadd.f32 %v7025, %v7089
          %v7114 = vadd.f32 %v7026, %v7092
          %v7115 = vadd.f32 %v7027, %v7097
          %v7116 = vadd.f32 %v7028, %v7100
          %v7117 = vadd.f32 %v7029, %v7105
          %v7118 = vadd.f32 %v7030, %v7108
          %v7120 = vshrl.u32 %v6250, 16
          %v7122 = vrot.slane %v7120, 4
          %v7123 = vshll.u32 %v6250, 16
          %v7125 = vrot.slane %v7123, 5
          %v7126 = vor.u32 %v7122, %v7125
          %v7127 = vrot.slane %v7126, 4
          %v7129 = vshll.u32 %v6251, 16
          %v7131 = vrot.slane %v7129, 5
          %v7132 = vsel %vm5127, %v7127, %v7131
          %s7133 = scalar_lea.vmem %s4, 200
          %v7134 = vld [vmem:[%s7133] sm:$0xf]
          %v7135 = vld [vmem:[%s7133 + $0x4] sm:$0xf]
          %v7136 = vunpack.c.l.b16 %v7132
          %v7137 = vpack.c.b16 %v7136, %v6831
          %v7140 = vunpack.c.l.b16 %v7134
          %v7141 = vunpack.c.l.b16 %v7135
          %v7142 = vpack.c.b16 %v7141, %v7140
          %v7145 = vsel %vm3947, %v7137, 0
          %7147 = vmatprep.subr.bf16.mxu0 0
          %7148 = vmatpush1.bf16.msra.mxu0 %v7142
          %7149 = vmatprep.subr.bf16.mxu0 0
          %7150 = vmatpush1.bf16.msra.mxu0 0
          %7151 = vmatprep.subr.bf16.mxu0 0
          %7152 = vmatpush1.bf16.msra.mxu0 0
          %7153 = vmatprep.subr.bf16.mxu0 0
          %7154 = vmatpush1.bf16.msra.mxu0 0
          %7155 = vmatprep.subr.bf16.mxu0 0
          %7156 = vmatpush1.bf16.msra.mxu0 0
          %7157 = vmatprep.subr.bf16.mxu0 0
          %7158 = vmatpush1.bf16.msra.mxu0 0
          %7159 = vmatprep.subr.bf16.mxu0 0
          %7160 = vmatpush1.bf16.msra.mxu0 0
          %7161 = vmatprep.subr.bf16.mxu0 0
          %7162 = vmatpush1.bf16.msra.mxu0 0
          %7163 = vmatprep.subr.bf16.mxu0 0
          %7164 = vmatpush1.bf16.msra.mxu0 0
          %7165 = vmatprep.subr.bf16.mxu0 0
          %7166 = vmatpush1.bf16.msra.mxu0 0
          %7167 = vmatprep.subr.bf16.mxu0 0
          %7168 = vmatpush1.bf16.msra.mxu0 0
          %7169 = vmatprep.subr.bf16.mxu0 0
          %7170 = vmatpush1.bf16.msra.mxu0 0
          %7171 = vmatprep.subr.bf16.mxu0 0
          %7172 = vmatpush1.bf16.msra.mxu0 0
          %7173 = vmatprep.subr.bf16.mxu0 0
          %7174 = vmatpush1.bf16.msra.mxu0 0
          %7175 = vmatprep.subr.bf16.mxu0 0
          %7176 = vmatpush1.bf16.msra.mxu0 0
          %7177 = vmatprep.subr.bf16.mxu0 0
          %7178 = vmatpush1.bf16.msra.mxu0 0
          %7179 = vmatprep.mubr.bf16.mxu0 0
          %7180 = vmatmul.mubr.bf16.gmra.mrb[0].mxu0 %v6392
          %v7181 = vpop.f32.mrb[0].mxu0
          %v7182 = vadd.f32 0.0, %v7181
          %v7183 = vpop.f32.mrb[0].mxu0
          %v7184 = vpop.f32.mrb[0].mxu0
          %v7185 = vadd.f32 0.0, %v7184
          %v7186 = vpop.f32.mrb[0].mxu0
          %7187 = vmatprep.mubr.bf16.mxu0 0
          %7188 = vmatmul.mubr.bf16.gmra.mrb[0].mxu0 %v6395
          %v7189 = vpop.f32.mrb[0].mxu0
          %v7190 = vadd.f32 0.0, %v7189
          %v7191 = vpop.f32.mrb[0].mxu0
          %v7192 = vpop.f32.mrb[0].mxu0
          %v7193 = vadd.f32 0.0, %v7192
          %v7194 = vpop.f32.mrb[0].mxu0
          %7195 = vmatprep.mubr.bf16.mxu0 0
          %7196 = vmatmul.mubr.bf16.gmra.mrb[0].mxu0 %v6398
          %v7197 = vpop.f32.mrb[0].mxu0
          %v7198 = vadd.f32 0.0, %v7197
          %v7199 = vpop.f32.mrb[0].mxu0
          %v7200 = vpop.f32.mrb[0].mxu0
          %v7201 = vadd.f32 0.0, %v7200
          %v7202 = vpop.f32.mrb[0].mxu0
          %7203 = vmatprep.mubr.bf16.mxu0 0
          %7204 = vmatmul.mubr.bf16.gmra.mrb[0].mxu0 %v7145
          %v7205 = vpop.f32.mrb[0].mxu0
          %v7206 = vadd.f32 0.0, %v7205
          %v7207 = vpop.f32.mrb[0].mxu0
          %v7208 = vpop.f32.mrb[0].mxu0
          %v7209 = vadd.f32 0.0, %v7208
          %v7210 = vpop.f32.mrb[0].mxu0
          %7211 = vdwg.mxu0
          %v7212 = vadd.f32 %v7111, %v7182
          %v7213 = vadd.f32 %v7112, %v7185
          %v7214 = vadd.f32 %v7113, %v7190
          %v7215 = vadd.f32 %v7114, %v7193
          %v7216 = vadd.f32 %v7115, %v7198
          %v7217 = vadd.f32 %v7116, %v7201
          %v7218 = vadd.f32 %v7117, %v7206
          %v7219 = vadd.f32 %v7118, %v7209
          %v7221 = vrot.slane %v6250, 5
          %v7222 = vrot.slane %v7221, 4
          %v7223 = vrot.slane %v6251, 5
          %v7224 = vsel %vm5451, %v7222, %v7223
          %s7225 = scalar_lea.vmem %s4, 208
          %v7226 = vld [vmem:[%s7225] sm:$0xf]
          %v7227 = vld [vmem:[%s7225 + $0x4] sm:$0xf]
          %v7228 = vunpack.c.l.b16 %v7224
          %v7229 = vpack.c.b16 %v7228, %v6935
          %v7232 = vunpack.c.l.b16 %v7226
          %v7233 = vunpack.c.l.b16 %v7227
          %v7234 = vpack.c.b16 %v7233, %v7232
          %v7237 = vsel %vm3947, %v7229, 0
          %7239 = vmatprep.subr.bf16.mxu0 0
          %7240 = vmatpush1.bf16.msra.mxu0 %v7234
          %7241 = vmatprep.subr.bf16.mxu0 0
          %7242 = vmatpush1.bf16.msra.mxu0 0
          %7243 = vmatprep.subr.bf16.mxu0 0
          %7244 = vmatpush1.bf16.msra.mxu0 0
          %7245 = vmatprep.subr.bf16.mxu0 0
          %7246 = vmatpush1.bf16.msra.mxu0 0
          %7247 = vmatprep.subr.bf16.mxu0 0
          %7248 = vmatpush1.bf16.msra.mxu0 0
          %7249 = vmatprep.subr.bf16.mxu0 0
          %7250 = vmatpush1.bf16.msra.mxu0 0
          %7251 = vmatprep.subr.bf16.mxu0 0
          %7252 = vmatpush1.bf16.msra.mxu0 0
          %7253 = vmatprep.subr.bf16.mxu0 0
          %7254 = vmatpush1.bf16.msra.mxu0 0
          %7255 = vmatprep.subr.bf16.mxu0 0
          %7256 = vmatpush1.bf16.msra.mxu0 0
          %7257 = vmatprep.subr.bf16.mxu0 0
          %7258 = vmatpush1.bf16.msra.mxu0 0
          %7259 = vmatprep.subr.bf16.mxu0 0
          %7260 = vmatpush1.bf16.msra.mxu0 0
          %7261 = vmatprep.subr.bf16.mxu0 0
          %7262 = vmatpush1.bf16.msra.mxu0 0
          %7263 = vmatprep.subr.bf16.mxu0 0
          %7264 = vmatpush1.bf16.msra.mxu0 0
          %7265 = vmatprep.subr.bf16.mxu0 0
          %7266 = vmatpush1.bf16.msra.mxu0 0
          %7267 = vmatprep.subr.bf16.mxu0 0
          %7268 = vmatpush1.bf16.msra.mxu0 0
          %7269 = vmatprep.subr.bf16.mxu0 0
          %7270 = vmatpush1.bf16.msra.mxu0 0
          %7271 = vmatprep.mubr.bf16.mxu0 0
          %7272 = vmatmul.mubr.bf16.gmra.mrb[0].mxu0 %v6633
          %v7273 = vpop.f32.mrb[0].mxu0
          %v7274 = vadd.f32 0.0, %v7273
          %v7275 = vpop.f32.mrb[0].mxu0
          %v7276 = vpop.f32.mrb[0].mxu0
          %v7277 = vadd.f32 0.0, %v7276
          %v7278 = vpop.f32.mrb[0].mxu0
          %7279 = vmatprep.mubr.bf16.mxu0 0
          %7280 = vmatmul.mubr.bf16.gmra.mrb[0].mxu0 %v6636
          %v7281 = vpop.f32.mrb[0].mxu0
          %v7282 = vadd.f32 0.0, %v7281
          %v7283 = vpop.f32.mrb[0].mxu0
          %v7284 = vpop.f32.mrb[0].mxu0
          %v7285 = vadd.f32 0.0, %v7284
          %v7286 = vpop.f32.mrb[0].mxu0
          %7287 = vmatprep.mubr.bf16.mxu0 0
          %7288 = vmatmul.mubr.bf16.gmra.mrb[0].mxu0 %v6639
          %v7289 = vpop.f32.mrb[0].mxu0
          %v7290 = vadd.f32 0.0, %v7289
          %v7291 = vpop.f32.mrb[0].mxu0
          %v7292 = vpop.f32.mrb[0].mxu0
          %v7293 = vadd.f32 0.0, %v7292
          %v7294 = vpop.f32.mrb[0].mxu0
          %7295 = vmatprep.mubr.bf16.mxu0 0
          %7296 = vmatmul.mubr.bf16.gmra.mrb[0].mxu0 %v7237
          %v7297 = vpop.f32.mrb[0].mxu0
          %v7298 = vadd.f32 0.0, %v7297
          %v7299 = vpop.f32.mrb[0].mxu0
          %v7300 = vpop.f32.mrb[0].mxu0
          %v7301 = vadd.f32 0.0, %v7300
          %v7302 = vpop.f32.mrb[0].mxu0
          %7303 = vdwg.mxu0
          %v7304 = vadd.f32 %v7212, %v7274
          %v7305 = vadd.f32 %v7213, %v7277
          %v7306 = vadd.f32 %v7214, %v7282
          %v7307 = vadd.f32 %v7215, %v7285
          %v7308 = vadd.f32 %v7216, %v7290
          %v7309 = vadd.f32 %v7217, %v7293
          %v7310 = vadd.f32 %v7218, %v7298
          %v7311 = vadd.f32 %v7219, %v7301
          %v7312 = vld [vmem:[#allocation3] sm:$0xff]
          %v7313 = vld [vmem:[#allocation3 + $0x8] sm:$0xff]
          %v7314 = vld [vmem:[#allocation3 + $0x10] sm:$0xff]
          %v7315 = vld [vmem:[#allocation3 + $0x18] sm:$0xff]
          %v7316 = vld [vmem:[#allocation3 + $0x20] sm:$0xff]
          %v7317 = vld [vmem:[#allocation3 + $0x28] sm:$0xff]
          %v7318 = vld [vmem:[#allocation3 + $0x30] sm:$0xff]
          %v7319 = vld [vmem:[#allocation3 + $0x38] sm:$0xff]
          %v7320 = vadd.f32 %v7312, %v7304
          %v7321 = vadd.f32 %v7313, %v7305
          %v7322 = vadd.f32 %v7314, %v7306
          %v7323 = vadd.f32 %v7315, %v7307
          %v7324 = vadd.f32 %v7316, %v7308
          %v7325 = vadd.f32 %v7317, %v7309
          %v7326 = vadd.f32 %v7318, %v7310
          %v7327 = vadd.f32 %v7319, %v7311
          %7328 = vst.msk [vmem:[#allocation3] sm:$0xff] %vm3947, %v7320
          %7329 = vst.msk [vmem:[#allocation3 + $0x8] sm:$0xff] %vm3947, %v7321
          %7330 = vst.msk [vmem:[#allocation3 + $0x10] sm:$0xff] %vm3947, %v7322
          %7331 = vst.msk [vmem:[#allocation3 + $0x18] sm:$0xff] %vm3947, %v7323
          %7332 = vst.msk [vmem:[#allocation3 + $0x20] sm:$0xff] %vm3947, %v7324
          %7333 = vst.msk [vmem:[#allocation3 + $0x28] sm:$0xff] %vm3947, %v7325
          %7334 = vst.msk [vmem:[#allocation3 + $0x30] sm:$0xff] %vm3947, %v7326
          %7335 = vst.msk [vmem:[#allocation3 + $0x38] sm:$0xff] %vm3947, %v7327
        $region80: #{resblock3d_forward.1} parent=59 // pred_fallthru
          _
        %v7336 = vld [vmem:[#allocation3] sm:$0xff]
        %v7337 = vld [vmem:[#allocation3 + $0x8] sm:$0xff]
        %v7338 = vld [vmem:[#allocation3 + $0x10] sm:$0xff]
        %v7339 = vld [vmem:[#allocation3 + $0x18] sm:$0xff]
        %v7340 = vld [vmem:[#allocation3 + $0x20] sm:$0xff]
        %v7341 = vld [vmem:[#allocation3 + $0x28] sm:$0xff]
        %v7342 = vld [vmem:[#allocation3 + $0x30] sm:$0xff]
        %v7343 = vld [vmem:[#allocation3 + $0x38] sm:$0xff]
        %v7344 = vld [vmem:[%s5] sm:$0x1]
        %v7346 = vlaneseq
        %v7347 = vshrl.u32 %v7346, 7
        %v7348 = vsub.s32 0, %v7347
        %v7349 = vrot.slane %v7344, %v7348
        %v7351 = vmul.f32 %v7336, %v7349
        %v7352 = vmul.f32 %v7337, %v7349
        %v7353 = vmul.f32 %v7338, %v7349
        %v7354 = vmul.f32 %v7339, %v7349
        %v7355 = vmul.f32 %v7340, %v7349
        %v7356 = vmul.f32 %v7341, %v7349
        %v7357 = vmul.f32 %v7342, %v7349
        %v7358 = vmul.f32 %v7343, %v7349
        %v7359 = vld [vmem:[%s6] sm:$0x1]
        %v7361 = vlaneseq
        %v7362 = vshrl.u32 %v7361, 7
        %v7363 = vsub.s32 0, %v7362
        %v7364 = vrot.slane %v7359, %v7363
        %v7366 = vadd.f32 %v7351, %v7364
        %v7367 = vadd.f32 %v7352, %v7364
        %v7368 = vadd.f32 %v7353, %v7364
        %v7369 = vadd.f32 %v7354, %v7364
        %v7370 = vadd.f32 %v7355, %v7364
        %v7371 = vadd.f32 %v7356, %v7364
        %v7372 = vadd.f32 %v7357, %v7364
        %v7373 = vadd.f32 %v7358, %v7364
        %v7374 = vmax.f32 %v7366, 0.0
        %v7375 = vmax.f32 %v7367, 0.0
        %v7376 = vmax.f32 %v7368, 0.0
        %v7377 = vmax.f32 %v7369, 0.0
        %v7378 = vmax.f32 %v7370, 0.0
        %v7379 = vmax.f32 %v7371, 0.0
        %v7380 = vmax.f32 %v7372, 0.0
        %v7381 = vmax.f32 %v7373, 0.0
        %v7382 = vpack.c.bf16 %v7375, %v7374
        %v7383 = vpack.c.bf16 %v7377, %v7376
        %v7384 = vpack.c.bf16 %v7379, %v7378
        %v7385 = vpack.c.bf16 %v7381, %v7380
        %v7386 = vld [vmem:[%s7] sm:$0xf]
        %v7387 = vld [vmem:[%s7 + $0x4] sm:$0xf]
        %v7390 = vunpack.c.l.b16 %v7386
        %v7391 = vunpack.c.l.b16 %v7387
        %v7392 = vpack.c.b16 %v7391, %v7390
        %v7395 = vsel %vm3947, %v7382, 0
        %v7398 = vsel %vm3947, %v7383, 0
        %v7401 = vsel %vm3947, %v7384, 0
        %v7404 = vsel %vm3947, %v7385, 0
        %7406 = vmatprep.subr.bf16.mxu0 0
        %7407 = vmatpush1.bf16.msra.mxu0 %v7392
        %7408 = vmatprep.subr.bf16.mxu0 0
        %7409 = vmatpush1.bf16.msra.mxu0 0
        %7410 = vmatprep.subr.bf16.mxu0 0
        %7411 = vmatpush1.bf16.msra.mxu0 0
        %7412 = vmatprep.subr.bf16.mxu0 0
        %7413 = vmatpush1.bf16.msra.mxu0 0
        %7414 = vmatprep.subr.bf16.mxu0 0
        %7415 = vmatpush1.bf16.msra.mxu0 0
        %7416 = vmatprep.subr.bf16.mxu0 0
        %7417 = vmatpush1.bf16.msra.mxu0 0
        %7418 = vmatprep.subr.bf16.mxu0 0
        %7419 = vmatpush1.bf16.msra.mxu0 0
        %7420 = vmatprep.subr.bf16.mxu0 0
        %7421 = vmatpush1.bf16.msra.mxu0 0
        %7422 = vmatprep.subr.bf16.mxu0 0
        %7423 = vmatpush1.bf16.msra.mxu0 0
        %7424 = vmatprep.subr.bf16.mxu0 0
        %7425 = vmatpush1.bf16.msra.mxu0 0
        %7426 = vmatprep.subr.bf16.mxu0 0
        %7427 = vmatpush1.bf16.msra.mxu0 0
        %7428 = vmatprep.subr.bf16.mxu0 0
        %7429 = vmatpush1.bf16.msra.mxu0 0
        %7430 = vmatprep.subr.bf16.mxu0 0
        %7431 = vmatpush1.bf16.msra.mxu0 0
        %7432 = vmatprep.subr.bf16.mxu0 0
        %7433 = vmatpush1.bf16.msra.mxu0 0
        %7434 = vmatprep.subr.bf16.mxu0 0
        %7435 = vmatpush1.bf16.msra.mxu0 0
        %7436 = vmatprep.subr.bf16.mxu0 0
        %7437 = vmatpush1.bf16.msra.mxu0 0
        %7438 = vmatprep.mubr.bf16.mxu0 0
        %7439 = vmatmul.mubr.bf16.gmra.mrb[0].mxu0 %v7395
        %v7440 = vpop.f32.mrb[0].mxu0
        %v7441 = vadd.f32 0.0, %v7440
        %v7442 = vpop.f32.mrb[0].mxu0
        %v7443 = vpop.f32.mrb[0].mxu0
        %v7444 = vadd.f32 0.0, %v7443
        %v7445 = vpop.f32.mrb[0].mxu0
        %7446 = vmatprep.mubr.bf16.mxu0 0
        %7447 = vmatmul.mubr.bf16.gmra.mrb[0].mxu0 %v7398
        %v7448 = vpop.f32.mrb[0].mxu0
        %v7449 = vadd.f32 0.0, %v7448
        %v7450 = vpop.f32.mrb[0].mxu0
        %v7451 = vpop.f32.mrb[0].mxu0
        %v7452 = vadd.f32 0.0, %v7451
        %v7453 = vpop.f32.mrb[0].mxu0
        %7454 = vmatprep.mubr.bf16.mxu0 0
        %7455 = vmatmul.mubr.bf16.gmra.mrb[0].mxu0 %v7401
        %v7456 = vpop.f32.mrb[0].mxu0
        %v7457 = vadd.f32 0.0, %v7456
        %v7458 = vpop.f32.mrb[0].mxu0
        %v7459 = vpop.f32.mrb[0].mxu0
        %v7460 = vadd.f32 0.0, %v7459
        %v7461 = vpop.f32.mrb[0].mxu0
        %7462 = vmatprep.mubr.bf16.mxu0 0
        %7463 = vmatmul.mubr.bf16.gmra.mrb[0].mxu0 %v7404
        %v7464 = vpop.f32.mrb[0].mxu0
        %v7465 = vadd.f32 0.0, %v7464
        %v7466 = vpop.f32.mrb[0].mxu0
        %v7467 = vpop.f32.mrb[0].mxu0
        %v7468 = vadd.f32 0.0, %v7467
        %v7469 = vpop.f32.mrb[0].mxu0
        %7470 = vdwg.mxu0
        %v7471 = vld [vmem:[%s8] sm:$0x1]
        %v7473 = vlaneseq
        %v7474 = vshrl.u32 %v7473, 7
        %v7475 = vsub.s32 0, %v7474
        %v7476 = vrot.slane %v7471, %v7475
        %v7478 = vmul.f32 %v7441, %v7476
        %v7479 = vmul.f32 %v7444, %v7476
        %v7480 = vmul.f32 %v7449, %v7476
        %v7481 = vmul.f32 %v7452, %v7476
        %v7482 = vmul.f32 %v7457, %v7476
        %v7483 = vmul.f32 %v7460, %v7476
        %v7484 = vmul.f32 %v7465, %v7476
        %v7485 = vmul.f32 %v7468, %v7476
        %v7486 = vld [vmem:[%s9] sm:$0x1]
        %v7488 = vlaneseq
        %v7489 = vshrl.u32 %v7488, 7
        %v7490 = vsub.s32 0, %v7489
        %v7491 = vrot.slane %v7486, %v7490
        %v7493 = vadd.f32 %v7478, %v7491
        %v7494 = vadd.f32 %v7479, %v7491
        %v7495 = vadd.f32 %v7480, %v7491
        %v7496 = vadd.f32 %v7481, %v7491
        %v7497 = vadd.f32 %v7482, %v7491
        %v7498 = vadd.f32 %v7483, %v7491
        %v7499 = vadd.f32 %v7484, %v7491
        %v7500 = vadd.f32 %v7485, %v7491
        %s7501 = smul.u32 %s5085, 20
        %s7502 = smul.addr %s7501, 4
        %s7503 = scalar_lea.vmem %s371, %s7502
        %v7504 = vld [vmem:[%s7503 + $0x8] sm:$0xf]
        %v7505 = vld [vmem:[%s7503 + $0xc] sm:$0x1]
        %v7506 = vld [vmem:[%s7503 + $0x10] sm:$0xf]
        %v7507 = vld [vmem:[%s7503 + $0x14] sm:$0x1]
        %v7508 = vld [vmem:[%s7503 + $0x18] sm:$0xf]
        %v7509 = vld [vmem:[%s7503 + $0x1c] sm:$0x1]
        %v7510 = vld [vmem:[%s7503 + $0x20] sm:$0xf]
        %v7511 = vld [vmem:[%s7503 + $0x24] sm:$0x1]
        %v7512 = vld [vmem:[%s7503 + $0x28] sm:$0xf]
        %v7513 = vld [vmem:[%s7503 + $0x2c] sm:$0x1]
        %v7514 = vld [vmem:[%s7503 + $0x30] sm:$0xf]
        %v7515 = vld [vmem:[%s7503 + $0x34] sm:$0x1]
        %v7516 = vld [vmem:[%s7503 + $0x38] sm:$0xf]
        %v7517 = vld [vmem:[%s7503 + $0x3c] sm:$0x1]
        %v7518 = vld [vmem:[%s7503 + $0x40] sm:$0xf]
        %v7519 = vld [vmem:[%s7503 + $0x44] sm:$0x1]
        %v7521 = vshrl.u32 %v7504, 16
        %v7523 = vrot.slane %v7521, 4
        %v7524 = vshll.u32 %v7504, 16
        %v7526 = vrot.slane %v7524, 5
        %v7527 = vor.u32 %v7523, %v7526
        %v7528 = vrot.slane %v7527, 4
        %v7530 = vshll.u32 %v7505, 16
        %v7532 = vrot.slane %v7530, 5
        %v7533 = vsel %vm5127, %v7528, %v7532
        %v7535 = vshrl.u32 %v7506, 16
        %v7537 = vrot.slane %v7535, 4
        %v7538 = vshll.u32 %v7506, 16
        %v7540 = vrot.slane %v7538, 5
        %v7541 = vor.u32 %v7537, %v7540
        %v7542 = vrot.slane %v7541, 4
        %v7544 = vshll.u32 %v7507, 16
        %v7546 = vrot.slane %v7544, 5
        %v7547 = vsel %vm5127, %v7542, %v7546
        %v7549 = vshrl.u32 %v7508, 16
        %v7551 = vrot.slane %v7549, 4
        %v7552 = vshll.u32 %v7508, 16
        %v7554 = vrot.slane %v7552, 5
        %v7555 = vor.u32 %v7551, %v7554
        %v7556 = vrot.slane %v7555, 4
        %v7558 = vshll.u32 %v7509, 16
        %v7560 = vrot.slane %v7558, 5
        %v7561 = vsel %vm5127, %v7556, %v7560
        %v7563 = vshrl.u32 %v7510, 16
        %v7565 = vrot.slane %v7563, 4
        %v7566 = vshll.u32 %v7510, 16
        %v7568 = vrot.slane %v7566, 5
        %v7569 = vor.u32 %v7565, %v7568
        %v7570 = vrot.slane %v7569, 4
        %v7572 = vshll.u32 %v7511, 16
        %v7574 = vrot.slane %v7572, 5
        %v7575 = vsel %vm5127, %v7570, %v7574
        %v7577 = vshrl.u32 %v7512, 16
        %v7579 = vrot.slane %v7577, 4
        %v7580 = vshll.u32 %v7512, 16
        %v7582 = vrot.slane %v7580, 5
        %v7583 = vor.u32 %v7579, %v7582
        %v7584 = vrot.slane %v7583, 4
        %v7586 = vshll.u32 %v7513, 16
        %v7588 = vrot.slane %v7586, 5
        %v7589 = vsel %vm5127, %v7584, %v7588
        %v7591 = vshrl.u32 %v7514, 16
        %v7593 = vrot.slane %v7591, 4
        %v7594 = vshll.u32 %v7514, 16
        %v7596 = vrot.slane %v7594, 5
        %v7597 = vor.u32 %v7593, %v7596
        %v7598 = vrot.slane %v7597, 4
        %v7600 = vshll.u32 %v7515, 16
        %v7602 = vrot.slane %v7600, 5
        %v7603 = vsel %vm5127, %v7598, %v7602
        %v7605 = vshrl.u32 %v7516, 16
        %v7607 = vrot.slane %v7605, 4
        %v7608 = vshll.u32 %v7516, 16
        %v7610 = vrot.slane %v7608, 5
        %v7611 = vor.u32 %v7607, %v7610
        %v7612 = vrot.slane %v7611, 4
        %v7614 = vshll.u32 %v7517, 16
        %v7616 = vrot.slane %v7614, 5
        %v7617 = vsel %vm5127, %v7612, %v7616
        %v7619 = vshrl.u32 %v7518, 16
        %v7621 = vrot.slane %v7619, 4
        %v7622 = vshll.u32 %v7518, 16
        %v7624 = vrot.slane %v7622, 5
        %v7625 = vor.u32 %v7621, %v7624
        %v7626 = vrot.slane %v7625, 4
        %v7628 = vshll.u32 %v7519, 16
        %v7630 = vrot.slane %v7628, 5
        %v7631 = vsel %vm5127, %v7626, %v7630
        %v7640 = vunpack.c.l.bf16 %v7533
        %v7641 = vunpack.c.l.bf16 %v7547
        %v7642 = vunpack.c.l.bf16 %v7561
        %v7643 = vunpack.c.l.bf16 %v7575
        %v7644 = vunpack.c.l.bf16 %v7589
        %v7645 = vunpack.c.l.bf16 %v7603
        %v7646 = vunpack.c.l.bf16 %v7617
        %v7647 = vunpack.c.l.bf16 %v7631
        %v7648 = vadd.f32 %v7493, %v7640
        %v7649 = vadd.f32 %v7494, %v7641
        %v7650 = vadd.f32 %v7495, %v7642
        %v7651 = vadd.f32 %v7496, %v7643
        %v7652 = vadd.f32 %v7497, %v7644
        %v7653 = vadd.f32 %v7498, %v7645
        %v7654 = vadd.f32 %v7499, %v7646
        %v7655 = vadd.f32 %v7500, %v7647
        %v7656 = vmax.f32 %v7648, 0.0
        %v7657 = vmax.f32 %v7649, 0.0
        %v7658 = vmax.f32 %v7650, 0.0
        %v7659 = vmax.f32 %v7651, 0.0
        %v7660 = vmax.f32 %v7652, 0.0
        %v7661 = vmax.f32 %v7653, 0.0
        %v7662 = vmax.f32 %v7654, 0.0
        %v7663 = vmax.f32 %v7655, 0.0
        %vm7664 = vcmask 261120
        %7665 = vst.msk [vmem:[%s366] sm:$0xff] %vm7664, %v7656
        %7666 = vst.msk [vmem:[%s366 + $0x8] sm:$0xff] %vm7664, %v7657
        %7667 = vst.msk [vmem:[%s366 + $0x10] sm:$0xff] %vm7664, %v7658
        %7668 = vst.msk [vmem:[%s366 + $0x18] sm:$0xff] %vm7664, %v7659
        %7669 = vst.msk [vmem:[%s366 + $0x20] sm:$0xff] %vm7664, %v7660
        %7670 = vst.msk [vmem:[%s366 + $0x28] sm:$0xff] %vm7664, %v7661
        %7671 = vst.msk [vmem:[%s366 + $0x30] sm:$0xff] %vm7664, %v7662
        %7672 = vst.msk [vmem:[%s366 + $0x38] sm:$0xff] %vm7664, %v7663
        %s7673 = sand.u32 %s261, 1
        %s7674 = scalar_lea.sflag [#allocation5], %s7673
        %s7675 = sand.u32 %s261, 1
        %s7676 = smul.addr %s7675, 64
        %s7677 = scalar_lea.vmem [#allocation4], %s7676
        // Predicated region
        $region81: #{resblock3d_forward.1} parent=59 // pred_check
          %p7678 = pneg %p271
        $region82: #{resblock3d_forward.1} parent=59 // pred_check_branch
          %7680 = sbr.rel (%p7678) target = $region84
        $region83: #{resblock3d_forward.1} parent=59 // pred_region
          %s7682 = ssub.s32 1024, 1024
          %7683 = vsyncadd %s7674, %s7682
          %s7684 = smul.addr %s29, 8
          %s7685 = smul.addr %s28, 64
          %s7686 = sadd.s32 %s7684, %s7685
          %s7687 = smul.addr %s7686, 128
          %s7688 = scalar_lea.hbm %s10, %s7687
          %s7689 = sshll.u32 %s7677, 4
          %s7690 = int_to_ptr.vmem [resolvable:$true] %s7689
          %7695 = dma.vmem_to_hbm [thread:$0]  %s7690, 1024, %s7688, %s7674, 128, 128, 8
        $region84: #{resblock3d_forward.1} parent=59 // pred_fallthru
          _
      $region60: #{resblock3d_forward.1} parent=5 // pred_fallthru
        _
      %p7696 = scmp.le.s32.totalorder 2, %s19
      // Predicated region
      $region85: #{resblock3d_forward.1} parent=5 // pred_check
        %p7697 = pneg %p7696
      $region86: #{resblock3d_forward.1} parent=5 // pred_check_branch
        %7699 = sbr.rel (%p7697) target = $region88
      $region87: #{resblock3d_forward.1} parent=5 // pred_region
        %s7700 = ssub.s32 %s19, 2
        // Predicated region
        $region89: #{resblock3d_forward.1} parent=87 // pred_check
          %p7701 = pneg %p277
        $region90: #{resblock3d_forward.1} parent=87 // pred_check_branch
          %7703 = sbr.rel (%p7701) target = $region92
        $region91: #{resblock3d_forward.1} parent=87 // pred_region
          %s7704 = sand.u32 %s262, 1
          %s7705 = scalar_lea.sflag [#allocation5], %s7704
          %s7706 = sand.u32 %s262, 1
          %s7707 = smul.addr %s7706, 64
          %s7708 = scalar_lea.vmem [#allocation4], %s7707
          %7709 = dma.done %s7705, 1024
        $region92: #{resblock3d_forward.1} parent=87 // pred_fallthru
          _
      $region88: #{resblock3d_forward.1} parent=5 // pred_fallthru
        _
    $region6: #{resblock3d_forward.1} parent=1 // loop_footer
      %s23 = sadd.s32 1, %s19
    $region7: #{resblock3d_forward.1} parent=1 // loop_footer_branch
      %18 = sbr.rel target = $region3
    $region8: #{resblock3d_forward.1} parent=1 // loop_exit
      _
    %7710 = vsyncpa [#allocation5], 1
    %s7711 = scalar_lea.sflag [#allocation5], 1
    %7712 = vsyncpa %s7711, 1

</llo_original>
